<compile_context>
chip_gen: v7x
topology: tpu7x:2x2x1
jax: 0.10.0
libtpu: 0.0.40
codegen_flags: <defaults>
</compile_context>

<pallas_src>
import functools

import numpy as np
import jax
import jax.numpy as jnp
from jax import lax
from jax.experimental import pallas as pl
from jax.experimental.pallas import tpu as pltpu

# ----------------------------- configuration --------------------------------
DIM = 32                 # C
INPUT_RES = (4, 4, 4)    # (D, H, W)
DEPTH = 2                # two blocks: shift=0 then shift=window_size//2
NUM_HEADS = 2
WINDOW_SIZE = 2
MLP_RATIO = 4.0
EPS = 1e-5               # torch.nn.LayerNorm default eps
BATCH = 2
NEG = -1e9               # "never attend" additive mask (exp underflows to 0 in f32)


# ------------------------------ Pallas kernel --------------------------------
def _swin_layer_kernel(x_ref, ln1g_ref, ln1b_ref, qkvw_ref, qkvb_ref,
                       projw_ref, projb_ref, bias_ref, ln2g_ref, ln2b_ref,
                       w1_ref, b1_ref, w2_ref, b2_ref, o_ref,
                       *, depth, num_heads, head_dim, scale):
    C = num_heads * head_dim
    x = x_ref[...]                                           # (BL, C) f32 residual stream

    for blk in range(depth):                                 # static unroll over blocks
        # ---- LayerNorm 1 (one-pass mean / E[x^2]) ----
        mu = jnp.mean(x, axis=-1, keepdims=True)
        ex2 = jnp.mean(x * x, axis=-1, keepdims=True)
        xn = (x - mu) * lax.rsqrt(ex2 - mu * mu + EPS) * ln1g_ref[blk] + ln1b_ref[blk]

        # ---- QKV projection over all tokens of all batch elems (bf16 MXU, f32 acc) ----
        qkv = jnp.dot(xn.astype(jnp.bfloat16), qkvw_ref[blk],
                      preferred_element_type=jnp.float32) + qkvb_ref[blk]   # (BL, 3C)

        # ---- masked full-sequence attention per head (windowing lives in the bias) ----
        y = None
        for h in range(num_heads):                           # static unroll (=2)
            q = qkv[:, h * head_dim:(h + 1) * head_dim].astype(jnp.bfloat16)
            k = qkv[:, C + h * head_dim:C + (h + 1) * head_dim].astype(jnp.bfloat16)
            v = qkv[:, 2 * C + h * head_dim:2 * C + (h + 1) * head_dim].astype(jnp.bfloat16)
            # q @ k^T via dot_general (contract last dims), lane-dense (BL, BL) scores
            s = lax.dot_general(q, k, (((1,), (1,)), ((), ())),
                                preferred_element_type=jnp.float32) * scale
            s = s + bias_ref[blk * num_heads + h]            # rel-pos + shift + window mask
            m = jnp.max(s, axis=-1, keepdims=True)
            p = jnp.exp(s - m)
            p = p * pl.reciprocal(jnp.sum(p, axis=-1, keepdims=True), approx=True)
            o = jnp.dot(p.astype(jnp.bfloat16), v,
                        preferred_element_type=jnp.float32)                 # (BL, hd)
            contrib = jnp.dot(o.astype(jnp.bfloat16), projw_ref[blk * num_heads + h],
                              preferred_element_type=jnp.float32)           # (BL, C)
            y = contrib if y is None else y + contrib
        x = x + y + projb_ref[blk]                           # residual 1 (+ proj bias)

        # ---- LayerNorm 2 + MLP + residual 2 ----
        mu2 = jnp.mean(x, axis=-1, keepdims=True)
        ex22 = jnp.mean(x * x, axis=-1, keepdims=True)
        xn2 = (x - mu2) * lax.rsqrt(ex22 - mu2 * mu2 + EPS) * ln2g_ref[blk] + ln2b_ref[blk]
        hid = jnp.dot(xn2.astype(jnp.bfloat16), w1_ref[blk],
                      preferred_element_type=jnp.float32) + b1_ref[blk]     # (BL, hidden)
        # TODO(synk): PyTorch nn.GELU default is exact (erf); tanh approximation used here.
        hid = jax.nn.gelu(hid, approximate=True)
        mlp = jnp.dot(hid.astype(jnp.bfloat16), w2_ref[blk],
                      preferred_element_type=jnp.float32) + b2_ref[blk]     # (BL, C)
        x = x + mlp

    o_ref[...] = x.astype(o_ref.dtype)


def swin_layer(x, sp, bias):
    """Both SwinTransformerBlocks fused into a single pallas_call."""
    B, L, C = x.shape
    BL = B * L
    hd = C // NUM_HEADS
    hidden = sp["fc1_w"].shape[-1]
    kern = functools.partial(_swin_layer_kernel, depth=DEPTH, num_heads=NUM_HEADS,
                             head_dim=hd, scale=hd ** (-0.5))
    out = pl.pallas_call(
        kern,
        out_shape=jax.ShapeDtypeStruct((BL, C), x.dtype),
        grid=(1,),
        in_specs=[
            pl.BlockSpec((BL, C), lambda i: (0, 0)),                         # x (B*L, C)
            pl.BlockSpec((DEPTH, 1, C), lambda i: (0, 0, 0)),                # ln1 gamma
            pl.BlockSpec((DEPTH, 1, C), lambda i: (0, 0, 0)),                # ln1 beta
            pl.BlockSpec((DEPTH, C, 3 * C), lambda i: (0, 0, 0)),            # qkv W (bf16)
            pl.BlockSpec((DEPTH, 1, 3 * C), lambda i: (0, 0, 0)),            # qkv b
            pl.BlockSpec((DEPTH * NUM_HEADS, hd, C), lambda i: (0, 0, 0)),   # proj W (bf16)
            pl.BlockSpec((DEPTH, 1, C), lambda i: (0, 0, 0)),                # proj b
            pl.BlockSpec((DEPTH * NUM_HEADS, BL, BL), lambda i: (0, 0, 0)),  # attn bias
            pl.BlockSpec((DEPTH, 1, C), lambda i: (0, 0, 0)),                # ln2 gamma
            pl.BlockSpec((DEPTH, 1, C), lambda i: (0, 0, 0)),                # ln2 beta
            pl.BlockSpec((DEPTH, C, hidden), lambda i: (0, 0, 0)),           # fc1 W (bf16)
            pl.BlockSpec((DEPTH, 1, hidden), lambda i: (0, 0, 0)),           # fc1 b
            pl.BlockSpec((DEPTH, hidden, C), lambda i: (0, 0, 0)),           # fc2 W (bf16)
            pl.BlockSpec((DEPTH, 1, C), lambda i: (0, 0, 0)),                # fc2 b
        ],
        out_specs=pl.BlockSpec((BL, C), lambda i: (0, 0)),
        compiler_params=pltpu.CompilerParams(
            dimension_semantics=("arbitrary",)),
    )(x.reshape(BL, C),
      sp["ln1_g"], sp["ln1_b"], sp["qkv_w"], sp["qkv_b"],
      sp["proj_w"], sp["proj_b"], bias,
      sp["ln2_g"], sp["ln2_b"], sp["fc1_w"], sp["fc1_b"], sp["fc2_w"], sp["fc2_b"])
    return out.reshape(B, L, C)


# --------------------- static (host-side) structure setup --------------------
def _window_partition_np(x, ws):
    b, d, h, w, c = x.shape
    x = x.reshape(b, d // ws, ws, h // ws, ws, w // ws, ws, c)
    return x.transpose(0, 1, 3, 5, 2, 4, 6, 7).reshape(-1, ws * ws * ws, c)


def make_relative_position_index(ws):
    coords = np.stack(np.meshgrid(np.arange(ws), np.arange(ws), np.arange(ws),
                                  indexing="ij"))                     # (3,ws,ws,ws)
    cf = coords.reshape(3, -1)
    rel = cf[:, :, None] - cf[:, None, :]                             # (3,n,n)
    rel = rel.transpose(1, 2, 0).astype(np.int64)
    rel[:, :, 0] += ws - 1
    rel[:, :, 1] += ws - 1
    rel[:, :, 2] += ws - 1
    rel[:, :, 0] *= (2 * ws - 1) * (2 * ws - 1)
    rel[:, :, 1] *= (2 * ws - 1)
    return rel.sum(-1).astype(np.int32)                               # (n, n)


def make_attn_mask(input_res, ws, shift):
    D, H, W = input_res
    img = np.zeros((1, D, H, W, 1), np.float32)
    slices = (slice(0, -ws), slice(-ws, -shift), slice(-shift, None))
    cnt = 0
    for d in slices:
        for h in slices:
            for w in slices:
                img[:, d, h, w, :] = cnt
                cnt += 1
    mw = _window_partition_np(img, ws).squeeze(-1)                    # (nW, n)
    am = mw[:, None, :] - mw[:, :, None]
    return np.where(am != 0, -100.0, 0.0).astype(np.float32)          # (nW, n, n)


def make_block_meta(input_res, ws, shift, rpi):
    """Per-token window membership maps in ORIGINAL token order (no data permute)."""
    # TODO(synk): padding path for resolutions not divisible by window_size is not
    # implemented (not needed for INPUT_RES=(4,4,4), ws=2).
    D, H, W = input_res
    L = D * H * W
    n = ws ** 3
    idx = np.arange(L).reshape(D, H, W)
    if shift > 0:
        idx = np.roll(idx, (-shift, -shift, -shift), axis=(0, 1, 2))
    widx = _window_partition_np(idx.reshape(1, D, H, W, 1), ws).reshape(-1)
    pos_of = np.empty(L, np.int64)
    pos_of[widx] = np.arange(L)                   # original token -> windowed position
    window_of = pos_of // n
    pos_in = pos_of % n
    same_win = window_of[:, None] == window_of[None, :]               # (L, L) bool
    rel_idx = rpi[pos_in[:, None], pos_in[None, :]].astype(np.int32)  # (L, L)
    if shift > 0:
        am = make_attn_mask(input_res, ws, shift)                     # (nW, n, n)
        shift_mask = am[window_of[:, None], pos_in[:, None], pos_in[None, :]]
    else:
        shift_mask = np.zeros((L, L), np.float32)
    return same_win, rel_idx, shift_mask.astype(np.float32)


def make_full_bias(rpb_table, same_win, rel_idx, shift_mask, B):
    """(heads, B*L, B*L) bias = rel-pos bias + shift mask, NEG off-window/off-batch."""
    L = rel_idx.shape[0]
    heads = rpb_table.shape[1]
    rpb = rpb_table[rel_idx.reshape(-1)].reshape(L, L, heads)
    rpb = jnp.transpose(rpb, (2, 0, 1))                               # (heads, L, L)
    b64 = jnp.where(jnp.asarray(same_win)[None],
                    rpb + jnp.asarray(shift_mask)[None], NEG)         # (heads, L, L)
    tiled = jnp.tile(b64, (1, B, B))                                  # (heads, BL, BL)
    same_batch = (np.kron(np.eye(B), np.ones((L, L))) > 0)
    return jnp.where(jnp.asarray(same_batch)[None], tiled, NEG)


# ------------------------------- forward pass --------------------------------
def stack_block_params(blocks):
    C = DIM
    hd = C // NUM_HEADS
    hidden = blocks[0]["fc1_w"].shape[1]
    st = lambda name: jnp.stack([b[name] for b in blocks], 0)
    return {
        "ln1_g": st("ln1_g").reshape(DEPTH, 1, C),
        "ln1_b": st("ln1_b").reshape(DEPTH, 1, C),
        "qkv_w": st("qkv_w").astype(jnp.bfloat16),
        "qkv_b": st("qkv_b").reshape(DEPTH, 1, 3 * C),
        "proj_w": st("proj_w").reshape(DEPTH * NUM_HEADS, hd, C).astype(jnp.bfloat16),
        "proj_b": st("proj_b").reshape(DEPTH, 1, C),
        "ln2_g": st("ln2_g").reshape(DEPTH, 1, C),
        "ln2_b": st("ln2_b").reshape(DEPTH, 1, C),
        "fc1_w": st("fc1_w").astype(jnp.bfloat16),
        "fc1_b": st("fc1_b").reshape(DEPTH, 1, hidden),
        "fc2_w": st("fc2_w").astype(jnp.bfloat16),
        "fc2_b": st("fc2_b").reshape(DEPTH, 1, C),
    }


def basic_layer_forward(x, params, *, metas):
    B, L, C = x.shape
    sp = stack_block_params(params["blocks"])
    biases = []
    for i, bp in enumerate(params["blocks"]):
        same_win, rel_idx, shift_mask = metas[i]
        biases.append(make_full_bias(bp["rpb_table"], same_win, rel_idx, shift_mask, B))
    bias = jnp.concatenate(biases, axis=0)       # (DEPTH*heads, B*L, B*L), block-major
    return swin_layer(x, sp, bias)


# --------------------------- parameter initialization ------------------------
def init_params(key):
    ws = WINDOW_SIZE
    C = DIM
    hidden = int(C * MLP_RATIO)
    n_rel = (2 * ws - 1) ** 3
    blocks = []
    for _ in range(DEPTH):
        key, *ks = jax.random.split(key, 7)
        blocks.append({
            "ln1_g": jnp.ones((C,), jnp.float32),
            "ln1_b": jnp.zeros((C,), jnp.float32),
            "qkv_w": 0.02 * jax.random.normal(ks[0], (C, 3 * C), jnp.float32),
            "qkv_b": jnp.zeros((3 * C,), jnp.float32),
            "proj_w": 0.02 * jax.random.normal(ks[1], (C, C), jnp.float32),
            "proj_b": jnp.zeros((C,), jnp.float32),
            "rpb_table": 0.02 * jax.random.normal(ks[2], (n_rel, NUM_HEADS),
                                                  jnp.float32),
            "ln2_g": jnp.ones((C,), jnp.float32),
            "ln2_b": jnp.zeros((C,), jnp.float32),
            "fc1_w": 0.02 * jax.random.normal(ks[3], (C, hidden), jnp.float32),
            "fc1_b": jnp.zeros((hidden,), jnp.float32),
            "fc2_w": 0.02 * jax.random.normal(ks[4], (hidden, C), jnp.float32),
            "fc2_b": jnp.zeros((C,), jnp.float32),
        })
    return {"blocks": blocks}


# ----------------------------------- main -------------------------------------
if __name__ == "__main__":
    D, H, W = INPUT_RES
    L = D * H * W
    assert D % WINDOW_SIZE == 0 and H % WINDOW_SIZE == 0 and W % WINDOW_SIZE == 0

    key = jax.random.PRNGKey(0)
    kx, kp = jax.random.split(key)
    x = jax.random.normal(kx, (BATCH, L, DIM), jnp.float32)
    params = init_params(kp)

    rpi = make_relative_position_index(WINDOW_SIZE)                   # (n, n) np
    metas = []
    for i in range(DEPTH):
        shift = 0 if i % 2 == 0 else WINDOW_SIZE // 2
        metas.append(make_block_meta(INPUT_RES, WINDOW_SIZE, shift, rpi))

    fwd = jax.jit(functools.partial(basic_layer_forward, metas=metas))
    y = fwd(x, params)
    jax.block_until_ready(y)

    assert y.shape == (BATCH, L, DIM) and y.dtype == jnp.float32
    assert bool(jnp.all(jnp.isfinite(y)))
    print("KERNEL_OK")
</pallas_src>

<mosaic_0001>
module attributes {stable_mosaic.version = 11 : i64} {
  func.func @_swin_layer_kernel(%arg0: i32, %arg1: memref<128x32xf32, #tpu.memory_space<vmem>>, %arg2: memref<2x1x32xf32, #tpu.memory_space<vmem>>, %arg3: memref<2x1x32xf32, #tpu.memory_space<vmem>>, %arg4: memref<2x32x96xbf16, #tpu.memory_space<vmem>>, %arg5: memref<2x1x96xf32, #tpu.memory_space<vmem>>, %arg6: memref<4x16x32xbf16, #tpu.memory_space<vmem>>, %arg7: memref<2x1x32xf32, #tpu.memory_space<vmem>>, %arg8: memref<4x128x128xf32, #tpu.memory_space<vmem>>, %arg9: memref<2x1x32xf32, #tpu.memory_space<vmem>>, %arg10: memref<2x1x32xf32, #tpu.memory_space<vmem>>, %arg11: memref<2x32x128xbf16, #tpu.memory_space<vmem>>, %arg12: memref<2x1x128xf32, #tpu.memory_space<vmem>>, %arg13: memref<2x128x32xbf16, #tpu.memory_space<vmem>>, %arg14: memref<2x1x32xf32, #tpu.memory_space<vmem>>, %arg15: memref<128x32xf32, #tpu.memory_space<vmem>>) attributes {dimension_semantics = [#tpu.dimension_semantics<arbitrary>], iteration_bounds = array<i64: 1>, scalar_prefetch = 0 : i64, scratch_operands = 0 : i64, tpu.core_type = #tpu.core_type<tc>, window_params = [{pipeline_mode = #tpu.pipeline_mode<synchronous>, transform_indices = @transform_0, window_bounds = array<i64: 128, 32>}, {pipeline_mode = #tpu.pipeline_mode<synchronous>, transform_indices = @transform_1, window_bounds = array<i64: 2, 1, 32>}, {pipeline_mode = #tpu.pipeline_mode<synchronous>, transform_indices = @transform_2, window_bounds = array<i64: 2, 1, 32>}, {pipeline_mode = #tpu.pipeline_mode<synchronous>, transform_indices = @transform_3, window_bounds = array<i64: 2, 32, 96>}, {pipeline_mode = #tpu.pipeline_mode<synchronous>, transform_indices = @transform_4, window_bounds = array<i64: 2, 1, 96>}, {pipeline_mode = #tpu.pipeline_mode<synchronous>, transform_indices = @transform_5, window_bounds = array<i64: 4, 16, 32>}, {pipeline_mode = #tpu.pipeline_mode<synchronous>, transform_indices = @transform_6, window_bounds = array<i64: 2, 1, 32>}, {pipeline_mode = #tpu.pipeline_mode<synchronous>, transform_indices = @transform_7, window_bounds = array<i64: 4, 128, 128>}, {pipeline_mode = #tpu.pipeline_mode<synchronous>, transform_indices = @transform_8, window_bounds = array<i64: 2, 1, 32>}, {pipeline_mode = #tpu.pipeline_mode<synchronous>, transform_indices = @transform_9, window_bounds = array<i64: 2, 1, 32>}, {pipeline_mode = #tpu.pipeline_mode<synchronous>, transform_indices = @transform_10, window_bounds = array<i64: 2, 32, 128>}, {pipeline_mode = #tpu.pipeline_mode<synchronous>, transform_indices = @transform_11, window_bounds = array<i64: 2, 1, 128>}, {pipeline_mode = #tpu.pipeline_mode<synchronous>, transform_indices = @transform_12, window_bounds = array<i64: 2, 128, 32>}, {pipeline_mode = #tpu.pipeline_mode<synchronous>, transform_indices = @transform_13, window_bounds = array<i64: 2, 1, 32>}, {pipeline_mode = #tpu.pipeline_mode<synchronous>, transform_indices = @transform_14, window_bounds = array<i64: 128, 32>}]} {
    %c0 = arith.constant 0 : index
    %c0_0 = arith.constant 0 : index
    %0 = vector.load %arg1[%c0, %c0_0] : memref<128x32xf32, #tpu.memory_space<vmem>>, vector<128x32xf32>
    %cst = arith.constant dense<0.000000e+00> : vector<128xf32>
    %1 = vector.multi_reduction <add>, %0, %cst [1] : vector<128x32xf32> to vector<128xf32>
    %2 = vector.shape_cast %1 : vector<128xf32> to vector<128x1xf32>
    %cst_1 = arith.constant 3.200000e+01 : f32
    %3 = vector.broadcast %cst_1 : f32 to vector<128x1xf32>
    %4 = arith.divf %2, %3 : vector<128x1xf32>
    %5 = arith.mulf %0, %0 : vector<128x32xf32>
    %cst_2 = arith.constant dense<0.000000e+00> : vector<128xf32>
    %6 = vector.multi_reduction <add>, %5, %cst_2 [1] : vector<128x32xf32> to vector<128xf32>
    %7 = vector.shape_cast %6 : vector<128xf32> to vector<128x1xf32>
    %cst_3 = arith.constant 3.200000e+01 : f32
    %8 = vector.broadcast %cst_3 : f32 to vector<128x1xf32>
    %9 = arith.divf %7, %8 : vector<128x1xf32>
    %10 = vector.broadcast %4 : vector<128x1xf32> to vector<128x32xf32>
    %11 = arith.subf %0, %10 : vector<128x32xf32>
    %12 = arith.mulf %4, %4 : vector<128x1xf32>
    %13 = arith.subf %9, %12 : vector<128x1xf32>
    %cst_4 = arith.constant 9.99999974E-6 : f32
    %14 = vector.broadcast %cst_4 : f32 to vector<128x1xf32>
    %15 = arith.addf %13, %14 : vector<128x1xf32>
    %16 = math.rsqrt %15 : vector<128x1xf32>
    %17 = vector.broadcast %16 : vector<128x1xf32> to vector<128x32xf32>
    %18 = arith.mulf %11, %17 : vector<128x32xf32>
    %c0_5 = arith.constant 0 : index
    %c0_6 = arith.constant 0 : index
    %c0_7 = arith.constant 0 : index
    %19 = vector.load %arg2[%c0_5, %c0_6, %c0_7] : memref<2x1x32xf32, #tpu.memory_space<vmem>>, vector<1x1x32xf32>
    %20 = vector.shape_cast %19 : vector<1x1x32xf32> to vector<1x32xf32>
    %21 = vector.broadcast %20 : vector<1x32xf32> to vector<128x32xf32>
    %22 = arith.mulf %18, %21 : vector<128x32xf32>
    %c0_8 = arith.constant 0 : index
    %c0_9 = arith.constant 0 : index
    %c0_10 = arith.constant 0 : index
    %23 = vector.load %arg3[%c0_8, %c0_9, %c0_10] : memref<2x1x32xf32, #tpu.memory_space<vmem>>, vector<1x1x32xf32>
    %24 = vector.shape_cast %23 : vector<1x1x32xf32> to vector<1x32xf32>
    %25 = vector.broadcast %24 : vector<1x32xf32> to vector<128x32xf32>
    %26 = arith.addf %22, %25 : vector<128x32xf32>
    %27 = arith.truncf %26 : vector<128x32xf32> to vector<128x32xbf16>
    %c0_11 = arith.constant 0 : index
    %c0_12 = arith.constant 0 : index
    %c0_13 = arith.constant 0 : index
    %28 = vector.load %arg4[%c0_11, %c0_12, %c0_13] : memref<2x32x96xbf16, #tpu.memory_space<vmem>>, vector<1x32x96xbf16>
    %29 = vector.shape_cast %28 : vector<1x32x96xbf16> to vector<32x96xbf16>
    %cst_14 = arith.constant dense<0.000000e+00> : vector<128x96xf32>
    %30 = tpu.matmul %27, %29, %cst_14 {dimension_numbers = #tpu.dot_dimension_numbers<[1], [0], [0], [1], [0, 0, 1, 1], [], []>} : vector<128x32xbf16>, vector<32x96xbf16>, vector<128x96xf32> -> vector<128x96xf32>
    %c0_15 = arith.constant 0 : index
    %c0_16 = arith.constant 0 : index
    %c0_17 = arith.constant 0 : index
    %31 = vector.load %arg5[%c0_15, %c0_16, %c0_17] : memref<2x1x96xf32, #tpu.memory_space<vmem>>, vector<1x1x96xf32>
    %32 = vector.shape_cast %31 : vector<1x1x96xf32> to vector<1x96xf32>
    %33 = vector.broadcast %32 : vector<1x96xf32> to vector<128x96xf32>
    %34 = arith.addf %30, %33 : vector<128x96xf32>
    %35 = vector.extract_strided_slice %34 {offsets = [0, 0], sizes = [128, 16], strides = [1, 1]} : vector<128x96xf32> to vector<128x16xf32>
    %36 = arith.truncf %35 : vector<128x16xf32> to vector<128x16xbf16>
    %37 = vector.extract_strided_slice %34 {offsets = [0, 32], sizes = [128, 16], strides = [1, 1]} : vector<128x96xf32> to vector<128x16xf32>
    %38 = arith.truncf %37 : vector<128x16xf32> to vector<128x16xbf16>
    %39 = vector.extract_strided_slice %34 {offsets = [0, 64], sizes = [128, 16], strides = [1, 1]} : vector<128x96xf32> to vector<128x16xf32>
    %40 = arith.truncf %39 : vector<128x16xf32> to vector<128x16xbf16>
    %cst_18 = arith.constant dense<0.000000e+00> : vector<128x128xf32>
    %41 = tpu.matmul %36, %38, %cst_18 {dimension_numbers = #tpu.dot_dimension_numbers<[1], [1], [0], [0], [0, 0, 1, 0], [], []>} : vector<128x16xbf16>, vector<128x16xbf16>, vector<128x128xf32> -> vector<128x128xf32>
    %cst_19 = arith.constant 2.500000e-01 : f32
    %42 = vector.broadcast %cst_19 : f32 to vector<128x128xf32>
    %43 = arith.mulf %41, %42 : vector<128x128xf32>
    %c0_20 = arith.constant 0 : index
    %c0_21 = arith.constant 0 : index
    %c0_22 = arith.constant 0 : index
    %44 = vector.load %arg8[%c0_20, %c0_21, %c0_22] : memref<4x128x128xf32, #tpu.memory_space<vmem>>, vector<1x128x128xf32>
    %45 = vector.shape_cast %44 : vector<1x128x128xf32> to vector<128x128xf32>
    %46 = arith.addf %43, %45 : vector<128x128xf32>
    %cst_23 = arith.constant dense<0xFF800000> : vector<128xf32>
    %47 = vector.multi_reduction <maximumf>, %46, %cst_23 [1] : vector<128x128xf32> to vector<128xf32>
    %48 = vector.shape_cast %47 : vector<128xf32> to vector<128x1xf32>
    %49 = vector.broadcast %48 : vector<128x1xf32> to vector<128x128xf32>
    %50 = arith.subf %46, %49 : vector<128x128xf32>
    %51 = math.exp %50 : vector<128x128xf32>
    %cst_24 = arith.constant dense<0.000000e+00> : vector<128xf32>
    %52 = vector.multi_reduction <add>, %51, %cst_24 [1] : vector<128x128xf32> to vector<128xf32>
    %53 = vector.shape_cast %52 : vector<128xf32> to vector<128x1xf32>
    %54 = tpu.reciprocal %53 {approx = true} : vector<128x1xf32> -> vector<128x1xf32>
    %55 = vector.broadcast %54 : vector<128x1xf32> to vector<128x128xf32>
    %56 = arith.mulf %51, %55 : vector<128x128xf32>
    %57 = arith.truncf %56 : vector<128x128xf32> to vector<128x128xbf16>
    %cst_25 = arith.constant dense<0.000000e+00> : vector<128x16xf32>
    %58 = tpu.matmul %57, %40, %cst_25 {dimension_numbers = #tpu.dot_dimension_numbers<[1], [0], [0], [1], [0, 0, 1, 1], [], []>} : vector<128x128xbf16>, vector<128x16xbf16>, vector<128x16xf32> -> vector<128x16xf32>
    %59 = arith.truncf %58 : vector<128x16xf32> to vector<128x16xbf16>
    %c0_26 = arith.constant 0 : index
    %c0_27 = arith.constant 0 : index
    %c0_28 = arith.constant 0 : index
    %60 = vector.load %arg6[%c0_26, %c0_27, %c0_28] : memref<4x16x32xbf16, #tpu.memory_space<vmem>>, vector<1x16x32xbf16>
    %61 = vector.shape_cast %60 : vector<1x16x32xbf16> to vector<16x32xbf16>
    %cst_29 = arith.constant dense<0.000000e+00> : vector<128x32xf32>
    %62 = tpu.matmul %59, %61, %cst_29 {dimension_numbers = #tpu.dot_dimension_numbers<[1], [0], [0], [1], [0, 0, 1, 1], [], []>} : vector<128x16xbf16>, vector<16x32xbf16>, vector<128x32xf32> -> vector<128x32xf32>
    %63 = vector.extract_strided_slice %34 {offsets = [0, 16], sizes = [128, 16], strides = [1, 1]} : vector<128x96xf32> to vector<128x16xf32>
    %64 = arith.truncf %63 : vector<128x16xf32> to vector<128x16xbf16>
    %65 = vector.extract_strided_slice %34 {offsets = [0, 48], sizes = [128, 16], strides = [1, 1]} : vector<128x96xf32> to vector<128x16xf32>
    %66 = arith.truncf %65 : vector<128x16xf32> to vector<128x16xbf16>
    %67 = vector.extract_strided_slice %34 {offsets = [0, 80], sizes = [128, 16], strides = [1, 1]} : vector<128x96xf32> to vector<128x16xf32>
    %68 = arith.truncf %67 : vector<128x16xf32> to vector<128x16xbf16>
    %cst_30 = arith.constant dense<0.000000e+00> : vector<128x128xf32>
    %69 = tpu.matmul %64, %66, %cst_30 {dimension_numbers = #tpu.dot_dimension_numbers<[1], [1], [0], [0], [0, 0, 1, 0], [], []>} : vector<128x16xbf16>, vector<128x16xbf16>, vector<128x128xf32> -> vector<128x128xf32>
    %cst_31 = arith.constant 2.500000e-01 : f32
    %70 = vector.broadcast %cst_31 : f32 to vector<128x128xf32>
    %71 = arith.mulf %69, %70 : vector<128x128xf32>
    %c1 = arith.constant 1 : index
    %c0_32 = arith.constant 0 : index
    %c0_33 = arith.constant 0 : index
    %72 = vector.load %arg8[%c1, %c0_32, %c0_33] : memref<4x128x128xf32, #tpu.memory_space<vmem>>, vector<1x128x128xf32>
    %73 = vector.shape_cast %72 : vector<1x128x128xf32> to vector<128x128xf32>
    %74 = arith.addf %71, %73 : vector<128x128xf32>
    %cst_34 = arith.constant dense<0xFF800000> : vector<128xf32>
    %75 = vector.multi_reduction <maximumf>, %74, %cst_34 [1] : vector<128x128xf32> to vector<128xf32>
    %76 = vector.shape_cast %75 : vector<128xf32> to vector<128x1xf32>
    %77 = vector.broadcast %76 : vector<128x1xf32> to vector<128x128xf32>
    %78 = arith.subf %74, %77 : vector<128x128xf32>
    %79 = math.exp %78 : vector<128x128xf32>
    %cst_35 = arith.constant dense<0.000000e+00> : vector<128xf32>
    %80 = vector.multi_reduction <add>, %79, %cst_35 [1] : vector<128x128xf32> to vector<128xf32>
    %81 = vector.shape_cast %80 : vector<128xf32> to vector<128x1xf32>
    %82 = tpu.reciprocal %81 {approx = true} : vector<128x1xf32> -> vector<128x1xf32>
    %83 = vector.broadcast %82 : vector<128x1xf32> to vector<128x128xf32>
    %84 = arith.mulf %79, %83 : vector<128x128xf32>
    %85 = arith.truncf %84 : vector<128x128xf32> to vector<128x128xbf16>
    %cst_36 = arith.constant dense<0.000000e+00> : vector<128x16xf32>
    %86 = tpu.matmul %85, %68, %cst_36 {dimension_numbers = #tpu.dot_dimension_numbers<[1], [0], [0], [1], [0, 0, 1, 1], [], []>} : vector<128x128xbf16>, vector<128x16xbf16>, vector<128x16xf32> -> vector<128x16xf32>
    %87 = arith.truncf %86 : vector<128x16xf32> to vector<128x16xbf16>
    %c1_37 = arith.constant 1 : index
    %c0_38 = arith.constant 0 : index
    %c0_39 = arith.constant 0 : index
    %88 = vector.load %arg6[%c1_37, %c0_38, %c0_39] : memref<4x16x32xbf16, #tpu.memory_space<vmem>>, vector<1x16x32xbf16>
    %89 = vector.shape_cast %88 : vector<1x16x32xbf16> to vector<16x32xbf16>
    %cst_40 = arith.constant dense<0.000000e+00> : vector<128x32xf32>
    %90 = tpu.matmul %87, %89, %cst_40 {dimension_numbers = #tpu.dot_dimension_numbers<[1], [0], [0], [1], [0, 0, 1, 1], [], []>} : vector<128x16xbf16>, vector<16x32xbf16>, vector<128x32xf32> -> vector<128x32xf32>
    %91 = arith.addf %62, %90 : vector<128x32xf32>
    %92 = arith.addf %0, %91 : vector<128x32xf32>
    %c0_41 = arith.constant 0 : index
    %c0_42 = arith.constant 0 : index
    %c0_43 = arith.constant 0 : index
    %93 = vector.load %arg7[%c0_41, %c0_42, %c0_43] : memref<2x1x32xf32, #tpu.memory_space<vmem>>, vector<1x1x32xf32>
    %94 = vector.shape_cast %93 : vector<1x1x32xf32> to vector<1x32xf32>
    %95 = vector.broadcast %94 : vector<1x32xf32> to vector<128x32xf32>
    %96 = arith.addf %92, %95 : vector<128x32xf32>
    %cst_44 = arith.constant dense<0.000000e+00> : vector<128xf32>
    %97 = vector.multi_reduction <add>, %96, %cst_44 [1] : vector<128x32xf32> to vector<128xf32>
    %98 = vector.shape_cast %97 : vector<128xf32> to vector<128x1xf32>
    %cst_45 = arith.constant 3.200000e+01 : f32
    %99 = vector.broadcast %cst_45 : f32 to vector<128x1xf32>
    %100 = arith.divf %98, %99 : vector<128x1xf32>
    %101 = arith.mulf %96, %96 : vector<128x32xf32>
    %cst_46 = arith.constant dense<0.000000e+00> : vector<128xf32>
    %102 = vector.multi_reduction <add>, %101, %cst_46 [1] : vector<128x32xf32> to vector<128xf32>
    %103 = vector.shape_cast %102 : vector<128xf32> to vector<128x1xf32>
    %cst_47 = arith.constant 3.200000e+01 : f32
    %104 = vector.broadcast %cst_47 : f32 to vector<128x1xf32>
    %105 = arith.divf %103, %104 : vector<128x1xf32>
    %106 = vector.broadcast %100 : vector<128x1xf32> to vector<128x32xf32>
    %107 = arith.subf %96, %106 : vector<128x32xf32>
    %108 = arith.mulf %100, %100 : vector<128x1xf32>
    %109 = arith.subf %105, %108 : vector<128x1xf32>
    %cst_48 = arith.constant 9.99999974E-6 : f32
    %110 = vector.broadcast %cst_48 : f32 to vector<128x1xf32>
    %111 = arith.addf %109, %110 : vector<128x1xf32>
    %112 = math.rsqrt %111 : vector<128x1xf32>
    %113 = vector.broadcast %112 : vector<128x1xf32> to vector<128x32xf32>
    %114 = arith.mulf %107, %113 : vector<128x32xf32>
    %c0_49 = arith.constant 0 : index
    %c0_50 = arith.constant 0 : index
    %c0_51 = arith.constant 0 : index
    %115 = vector.load %arg9[%c0_49, %c0_50, %c0_51] : memref<2x1x32xf32, #tpu.memory_space<vmem>>, vector<1x1x32xf32>
    %116 = vector.shape_cast %115 : vector<1x1x32xf32> to vector<1x32xf32>
    %117 = vector.broadcast %116 : vector<1x32xf32> to vector<128x32xf32>
    %118 = arith.mulf %114, %117 : vector<128x32xf32>
    %c0_52 = arith.constant 0 : index
    %c0_53 = arith.constant 0 : index
    %c0_54 = arith.constant 0 : index
    %119 = vector.load %arg10[%c0_52, %c0_53, %c0_54] : memref<2x1x32xf32, #tpu.memory_space<vmem>>, vector<1x1x32xf32>
    %120 = vector.shape_cast %119 : vector<1x1x32xf32> to vector<1x32xf32>
    %121 = vector.broadcast %120 : vector<1x32xf32> to vector<128x32xf32>
    %122 = arith.addf %118, %121 : vector<128x32xf32>
    %123 = arith.truncf %122 : vector<128x32xf32> to vector<128x32xbf16>
    %c0_55 = arith.constant 0 : index
    %c0_56 = arith.constant 0 : index
    %c0_57 = arith.constant 0 : index
    %124 = vector.load %arg11[%c0_55, %c0_56, %c0_57] : memref<2x32x128xbf16, #tpu.memory_space<vmem>>, vector<1x32x128xbf16>
    %125 = vector.shape_cast %124 : vector<1x32x128xbf16> to vector<32x128xbf16>
    %cst_58 = arith.constant dense<0.000000e+00> : vector<128x128xf32>
    %126 = tpu.matmul %123, %125, %cst_58 {dimension_numbers = #tpu.dot_dimension_numbers<[1], [0], [0], [1], [0, 0, 1, 1], [], []>} : vector<128x32xbf16>, vector<32x128xbf16>, vector<128x128xf32> -> vector<128x128xf32>
    %c0_59 = arith.constant 0 : index
    %c0_60 = arith.constant 0 : index
    %c0_61 = arith.constant 0 : index
    %127 = vector.load %arg12[%c0_59, %c0_60, %c0_61] : memref<2x1x128xf32, #tpu.memory_space<vmem>>, vector<1x1x128xf32>
    %128 = vector.shape_cast %127 : vector<1x1x128xf32> to vector<1x128xf32>
    %129 = vector.broadcast %128 : vector<1x128xf32> to vector<128x128xf32>
    %130 = arith.addf %126, %129 : vector<128x128xf32>
    %131 = arith.mulf %130, %130 : vector<128x128xf32>
    %132 = arith.mulf %130, %131 : vector<128x128xf32>
    %cst_62 = arith.constant 4.471500e-02 : f32
    %133 = vector.broadcast %cst_62 : f32 to vector<128x128xf32>
    %134 = arith.mulf %133, %132 : vector<128x128xf32>
    %135 = arith.addf %130, %134 : vector<128x128xf32>
    %cst_63 = arith.constant 0.797884583 : f32
    %136 = vector.broadcast %cst_63 : f32 to vector<128x128xf32>
    %137 = arith.mulf %136, %135 : vector<128x128xf32>
    %138 = math.tanh %137 : vector<128x128xf32>
    %cst_64 = arith.constant 1.000000e+00 : f32
    %139 = vector.broadcast %cst_64 : f32 to vector<128x128xf32>
    %140 = arith.addf %139, %138 : vector<128x128xf32>
    %cst_65 = arith.constant 5.000000e-01 : f32
    %141 = vector.broadcast %cst_65 : f32 to vector<128x128xf32>
    %142 = arith.mulf %141, %140 : vector<128x128xf32>
    %143 = arith.mulf %130, %142 : vector<128x128xf32>
    %144 = arith.truncf %143 : vector<128x128xf32> to vector<128x128xbf16>
    %c0_66 = arith.constant 0 : index
    %c0_67 = arith.constant 0 : index
    %c0_68 = arith.constant 0 : index
    %145 = vector.load %arg13[%c0_66, %c0_67, %c0_68] : memref<2x128x32xbf16, #tpu.memory_space<vmem>>, vector<1x128x32xbf16>
    %146 = vector.shape_cast %145 : vector<1x128x32xbf16> to vector<128x32xbf16>
    %cst_69 = arith.constant dense<0.000000e+00> : vector<128x32xf32>
    %147 = tpu.matmul %144, %146, %cst_69 {dimension_numbers = #tpu.dot_dimension_numbers<[1], [0], [0], [1], [0, 0, 1, 1], [], []>} : vector<128x128xbf16>, vector<128x32xbf16>, vector<128x32xf32> -> vector<128x32xf32>
    %c0_70 = arith.constant 0 : index
    %c0_71 = arith.constant 0 : index
    %c0_72 = arith.constant 0 : index
    %148 = vector.load %arg14[%c0_70, %c0_71, %c0_72] : memref<2x1x32xf32, #tpu.memory_space<vmem>>, vector<1x1x32xf32>
    %149 = vector.shape_cast %148 : vector<1x1x32xf32> to vector<1x32xf32>
    %150 = vector.broadcast %149 : vector<1x32xf32> to vector<128x32xf32>
    %151 = arith.addf %147, %150 : vector<128x32xf32>
    %152 = arith.addf %96, %151 : vector<128x32xf32>
    %cst_73 = arith.constant dense<0.000000e+00> : vector<128xf32>
    %153 = vector.multi_reduction <add>, %152, %cst_73 [1] : vector<128x32xf32> to vector<128xf32>
    %154 = vector.shape_cast %153 : vector<128xf32> to vector<128x1xf32>
    %cst_74 = arith.constant 3.200000e+01 : f32
    %155 = vector.broadcast %cst_74 : f32 to vector<128x1xf32>
    %156 = arith.divf %154, %155 : vector<128x1xf32>
    %157 = arith.mulf %152, %152 : vector<128x32xf32>
    %cst_75 = arith.constant dense<0.000000e+00> : vector<128xf32>
    %158 = vector.multi_reduction <add>, %157, %cst_75 [1] : vector<128x32xf32> to vector<128xf32>
    %159 = vector.shape_cast %158 : vector<128xf32> to vector<128x1xf32>
    %cst_76 = arith.constant 3.200000e+01 : f32
    %160 = vector.broadcast %cst_76 : f32 to vector<128x1xf32>
    %161 = arith.divf %159, %160 : vector<128x1xf32>
    %162 = vector.broadcast %156 : vector<128x1xf32> to vector<128x32xf32>
    %163 = arith.subf %152, %162 : vector<128x32xf32>
    %164 = arith.mulf %156, %156 : vector<128x1xf32>
    %165 = arith.subf %161, %164 : vector<128x1xf32>
    %cst_77 = arith.constant 9.99999974E-6 : f32
    %166 = vector.broadcast %cst_77 : f32 to vector<128x1xf32>
    %167 = arith.addf %165, %166 : vector<128x1xf32>
    %168 = math.rsqrt %167 : vector<128x1xf32>
    %169 = vector.broadcast %168 : vector<128x1xf32> to vector<128x32xf32>
    %170 = arith.mulf %163, %169 : vector<128x32xf32>
    %c1_78 = arith.constant 1 : index
    %c0_79 = arith.constant 0 : index
    %c0_80 = arith.constant 0 : index
    %171 = vector.load %arg2[%c1_78, %c0_79, %c0_80] : memref<2x1x32xf32, #tpu.memory_space<vmem>>, vector<1x1x32xf32>
    %172 = vector.shape_cast %171 : vector<1x1x32xf32> to vector<1x32xf32>
    %173 = vector.broadcast %172 : vector<1x32xf32> to vector<128x32xf32>
    %174 = arith.mulf %170, %173 : vector<128x32xf32>
    %c1_81 = arith.constant 1 : index
    %c0_82 = arith.constant 0 : index
    %c0_83 = arith.constant 0 : index
    %175 = vector.load %arg3[%c1_81, %c0_82, %c0_83] : memref<2x1x32xf32, #tpu.memory_space<vmem>>, vector<1x1x32xf32>
    %176 = vector.shape_cast %175 : vector<1x1x32xf32> to vector<1x32xf32>
    %177 = vector.broadcast %176 : vector<1x32xf32> to vector<128x32xf32>
    %178 = arith.addf %174, %177 : vector<128x32xf32>
    %179 = arith.truncf %178 : vector<128x32xf32> to vector<128x32xbf16>
    %c1_84 = arith.constant 1 : index
    %c0_85 = arith.constant 0 : index
    %c0_86 = arith.constant 0 : index
    %180 = vector.load %arg4[%c1_84, %c0_85, %c0_86] : memref<2x32x96xbf16, #tpu.memory_space<vmem>>, vector<1x32x96xbf16>
    %181 = vector.shape_cast %180 : vector<1x32x96xbf16> to vector<32x96xbf16>
    %cst_87 = arith.constant dense<0.000000e+00> : vector<128x96xf32>
    %182 = tpu.matmul %179, %181, %cst_87 {dimension_numbers = #tpu.dot_dimension_numbers<[1], [0], [0], [1], [0, 0, 1, 1], [], []>} : vector<128x32xbf16>, vector<32x96xbf16>, vector<128x96xf32> -> vector<128x96xf32>
    %c1_88 = arith.constant 1 : index
    %c0_89 = arith.constant 0 : index
    %c0_90 = arith.constant 0 : index
    %183 = vector.load %arg5[%c1_88, %c0_89, %c0_90] : memref<2x1x96xf32, #tpu.memory_space<vmem>>, vector<1x1x96xf32>
    %184 = vector.shape_cast %183 : vector<1x1x96xf32> to vector<1x96xf32>
    %185 = vector.broadcast %184 : vector<1x96xf32> to vector<128x96xf32>
    %186 = arith.addf %182, %185 : vector<128x96xf32>
    %187 = vector.extract_strided_slice %186 {offsets = [0, 0], sizes = [128, 16], strides = [1, 1]} : vector<128x96xf32> to vector<128x16xf32>
    %188 = arith.truncf %187 : vector<128x16xf32> to vector<128x16xbf16>
    %189 = vector.extract_strided_slice %186 {offsets = [0, 32], sizes = [128, 16], strides = [1, 1]} : vector<128x96xf32> to vector<128x16xf32>
    %190 = arith.truncf %189 : vector<128x16xf32> to vector<128x16xbf16>
    %191 = vector.extract_strided_slice %186 {offsets = [0, 64], sizes = [128, 16], strides = [1, 1]} : vector<128x96xf32> to vector<128x16xf32>
    %192 = arith.truncf %191 : vector<128x16xf32> to vector<128x16xbf16>
    %cst_91 = arith.constant dense<0.000000e+00> : vector<128x128xf32>
    %193 = tpu.matmul %188, %190, %cst_91 {dimension_numbers = #tpu.dot_dimension_numbers<[1], [1], [0], [0], [0, 0, 1, 0], [], []>} : vector<128x16xbf16>, vector<128x16xbf16>, vector<128x128xf32> -> vector<128x128xf32>
    %cst_92 = arith.constant 2.500000e-01 : f32
    %194 = vector.broadcast %cst_92 : f32 to vector<128x128xf32>
    %195 = arith.mulf %193, %194 : vector<128x128xf32>
    %c2 = arith.constant 2 : index
    %c0_93 = arith.constant 0 : index
    %c0_94 = arith.constant 0 : index
    %196 = vector.load %arg8[%c2, %c0_93, %c0_94] : memref<4x128x128xf32, #tpu.memory_space<vmem>>, vector<1x128x128xf32>
    %197 = vector.shape_cast %196 : vector<1x128x128xf32> to vector<128x128xf32>
    %198 = arith.addf %195, %197 : vector<128x128xf32>
    %cst_95 = arith.constant dense<0xFF800000> : vector<128xf32>
    %199 = vector.multi_reduction <maximumf>, %198, %cst_95 [1] : vector<128x128xf32> to vector<128xf32>
    %200 = vector.shape_cast %199 : vector<128xf32> to vector<128x1xf32>
    %201 = vector.broadcast %200 : vector<128x1xf32> to vector<128x128xf32>
    %202 = arith.subf %198, %201 : vector<128x128xf32>
    %203 = math.exp %202 : vector<128x128xf32>
    %cst_96 = arith.constant dense<0.000000e+00> : vector<128xf32>
    %204 = vector.multi_reduction <add>, %203, %cst_96 [1] : vector<128x128xf32> to vector<128xf32>
    %205 = vector.shape_cast %204 : vector<128xf32> to vector<128x1xf32>
    %206 = tpu.reciprocal %205 {approx = true} : vector<128x1xf32> -> vector<128x1xf32>
    %207 = vector.broadcast %206 : vector<128x1xf32> to vector<128x128xf32>
    %208 = arith.mulf %203, %207 : vector<128x128xf32>
    %209 = arith.truncf %208 : vector<128x128xf32> to vector<128x128xbf16>
    %cst_97 = arith.constant dense<0.000000e+00> : vector<128x16xf32>
    %210 = tpu.matmul %209, %192, %cst_97 {dimension_numbers = #tpu.dot_dimension_numbers<[1], [0], [0], [1], [0, 0, 1, 1], [], []>} : vector<128x128xbf16>, vector<128x16xbf16>, vector<128x16xf32> -> vector<128x16xf32>
    %211 = arith.truncf %210 : vector<128x16xf32> to vector<128x16xbf16>
    %c2_98 = arith.constant 2 : index
    %c0_99 = arith.constant 0 : index
    %c0_100 = arith.constant 0 : index
    %212 = vector.load %arg6[%c2_98, %c0_99, %c0_100] : memref<4x16x32xbf16, #tpu.memory_space<vmem>>, vector<1x16x32xbf16>
    %213 = vector.shape_cast %212 : vector<1x16x32xbf16> to vector<16x32xbf16>
    %cst_101 = arith.constant dense<0.000000e+00> : vector<128x32xf32>
    %214 = tpu.matmul %211, %213, %cst_101 {dimension_numbers = #tpu.dot_dimension_numbers<[1], [0], [0], [1], [0, 0, 1, 1], [], []>} : vector<128x16xbf16>, vector<16x32xbf16>, vector<128x32xf32> -> vector<128x32xf32>
    %215 = vector.extract_strided_slice %186 {offsets = [0, 16], sizes = [128, 16], strides = [1, 1]} : vector<128x96xf32> to vector<128x16xf32>
    %216 = arith.truncf %215 : vector<128x16xf32> to vector<128x16xbf16>
    %217 = vector.extract_strided_slice %186 {offsets = [0, 48], sizes = [128, 16], strides = [1, 1]} : vector<128x96xf32> to vector<128x16xf32>
    %218 = arith.truncf %217 : vector<128x16xf32> to vector<128x16xbf16>
    %219 = vector.extract_strided_slice %186 {offsets = [0, 80], sizes = [128, 16], strides = [1, 1]} : vector<128x96xf32> to vector<128x16xf32>
    %220 = arith.truncf %219 : vector<128x16xf32> to vector<128x16xbf16>
    %cst_102 = arith.constant dense<0.000000e+00> : vector<128x128xf32>
    %221 = tpu.matmul %216, %218, %cst_102 {dimension_numbers = #tpu.dot_dimension_numbers<[1], [1], [0], [0], [0, 0, 1, 0], [], []>} : vector<128x16xbf16>, vector<128x16xbf16>, vector<128x128xf32> -> vector<128x128xf32>
    %cst_103 = arith.constant 2.500000e-01 : f32
    %222 = vector.broadcast %cst_103 : f32 to vector<128x128xf32>
    %223 = arith.mulf %221, %222 : vector<128x128xf32>
    %c3 = arith.constant 3 : index
    %c0_104 = arith.constant 0 : index
    %c0_105 = arith.constant 0 : index
    %224 = vector.load %arg8[%c3, %c0_104, %c0_105] : memref<4x128x128xf32, #tpu.memory_space<vmem>>, vector<1x128x128xf32>
    %225 = vector.shape_cast %224 : vector<1x128x128xf32> to vector<128x128xf32>
    %226 = arith.addf %223, %225 : vector<128x128xf32>
    %cst_106 = arith.constant dense<0xFF800000> : vector<128xf32>
    %227 = vector.multi_reduction <maximumf>, %226, %cst_106 [1] : vector<128x128xf32> to vector<128xf32>
    %228 = vector.shape_cast %227 : vector<128xf32> to vector<128x1xf32>
    %229 = vector.broadcast %228 : vector<128x1xf32> to vector<128x128xf32>
    %230 = arith.subf %226, %229 : vector<128x128xf32>
    %231 = math.exp %230 : vector<128x128xf32>
    %cst_107 = arith.constant dense<0.000000e+00> : vector<128xf32>
    %232 = vector.multi_reduction <add>, %231, %cst_107 [1] : vector<128x128xf32> to vector<128xf32>
    %233 = vector.shape_cast %232 : vector<128xf32> to vector<128x1xf32>
    %234 = tpu.reciprocal %233 {approx = true} : vector<128x1xf32> -> vector<128x1xf32>
    %235 = vector.broadcast %234 : vector<128x1xf32> to vector<128x128xf32>
    %236 = arith.mulf %231, %235 : vector<128x128xf32>
    %237 = arith.truncf %236 : vector<128x128xf32> to vector<128x128xbf16>
    %cst_108 = arith.constant dense<0.000000e+00> : vector<128x16xf32>
    %238 = tpu.matmul %237, %220, %cst_108 {dimension_numbers = #tpu.dot_dimension_numbers<[1], [0], [0], [1], [0, 0, 1, 1], [], []>} : vector<128x128xbf16>, vector<128x16xbf16>, vector<128x16xf32> -> vector<128x16xf32>
    %239 = arith.truncf %238 : vector<128x16xf32> to vector<128x16xbf16>
    %c3_109 = arith.constant 3 : index
    %c0_110 = arith.constant 0 : index
    %c0_111 = arith.constant 0 : index
    %240 = vector.load %arg6[%c3_109, %c0_110, %c0_111] : memref<4x16x32xbf16, #tpu.memory_space<vmem>>, vector<1x16x32xbf16>
    %241 = vector.shape_cast %240 : vector<1x16x32xbf16> to vector<16x32xbf16>
    %cst_112 = arith.constant dense<0.000000e+00> : vector<128x32xf32>
    %242 = tpu.matmul %239, %241, %cst_112 {dimension_numbers = #tpu.dot_dimension_numbers<[1], [0], [0], [1], [0, 0, 1, 1], [], []>} : vector<128x16xbf16>, vector<16x32xbf16>, vector<128x32xf32> -> vector<128x32xf32>
    %243 = arith.addf %214, %242 : vector<128x32xf32>
    %244 = arith.addf %152, %243 : vector<128x32xf32>
    %c1_113 = arith.constant 1 : index
    %c0_114 = arith.constant 0 : index
    %c0_115 = arith.constant 0 : index
    %245 = vector.load %arg7[%c1_113, %c0_114, %c0_115] : memref<2x1x32xf32, #tpu.memory_space<vmem>>, vector<1x1x32xf32>
    %246 = vector.shape_cast %245 : vector<1x1x32xf32> to vector<1x32xf32>
    %247 = vector.broadcast %246 : vector<1x32xf32> to vector<128x32xf32>
    %248 = arith.addf %244, %247 : vector<128x32xf32>
    %cst_116 = arith.constant dense<0.000000e+00> : vector<128xf32>
    %249 = vector.multi_reduction <add>, %248, %cst_116 [1] : vector<128x32xf32> to vector<128xf32>
    %250 = vector.shape_cast %249 : vector<128xf32> to vector<128x1xf32>
    %cst_117 = arith.constant 3.200000e+01 : f32
    %251 = vector.broadcast %cst_117 : f32 to vector<128x1xf32>
    %252 = arith.divf %250, %251 : vector<128x1xf32>
    %253 = arith.mulf %248, %248 : vector<128x32xf32>
    %cst_118 = arith.constant dense<0.000000e+00> : vector<128xf32>
    %254 = vector.multi_reduction <add>, %253, %cst_118 [1] : vector<128x32xf32> to vector<128xf32>
    %255 = vector.shape_cast %254 : vector<128xf32> to vector<128x1xf32>
    %cst_119 = arith.constant 3.200000e+01 : f32
    %256 = vector.broadcast %cst_119 : f32 to vector<128x1xf32>
    %257 = arith.divf %255, %256 : vector<128x1xf32>
    %258 = vector.broadcast %252 : vector<128x1xf32> to vector<128x32xf32>
    %259 = arith.subf %248, %258 : vector<128x32xf32>
    %260 = arith.mulf %252, %252 : vector<128x1xf32>
    %261 = arith.subf %257, %260 : vector<128x1xf32>
    %cst_120 = arith.constant 9.99999974E-6 : f32
    %262 = vector.broadcast %cst_120 : f32 to vector<128x1xf32>
    %263 = arith.addf %261, %262 : vector<128x1xf32>
    %264 = math.rsqrt %263 : vector<128x1xf32>
    %265 = vector.broadcast %264 : vector<128x1xf32> to vector<128x32xf32>
    %266 = arith.mulf %259, %265 : vector<128x32xf32>
    %c1_121 = arith.constant 1 : index
    %c0_122 = arith.constant 0 : index
    %c0_123 = arith.constant 0 : index
    %267 = vector.load %arg9[%c1_121, %c0_122, %c0_123] : memref<2x1x32xf32, #tpu.memory_space<vmem>>, vector<1x1x32xf32>
    %268 = vector.shape_cast %267 : vector<1x1x32xf32> to vector<1x32xf32>
    %269 = vector.broadcast %268 : vector<1x32xf32> to vector<128x32xf32>
    %270 = arith.mulf %266, %269 : vector<128x32xf32>
    %c1_124 = arith.constant 1 : index
    %c0_125 = arith.constant 0 : index
    %c0_126 = arith.constant 0 : index
    %271 = vector.load %arg10[%c1_124, %c0_125, %c0_126] : memref<2x1x32xf32, #tpu.memory_space<vmem>>, vector<1x1x32xf32>
    %272 = vector.shape_cast %271 : vector<1x1x32xf32> to vector<1x32xf32>
    %273 = vector.broadcast %272 : vector<1x32xf32> to vector<128x32xf32>
    %274 = arith.addf %270, %273 : vector<128x32xf32>
    %275 = arith.truncf %274 : vector<128x32xf32> to vector<128x32xbf16>
    %c1_127 = arith.constant 1 : index
    %c0_128 = arith.constant 0 : index
    %c0_129 = arith.constant 0 : index
    %276 = vector.load %arg11[%c1_127, %c0_128, %c0_129] : memref<2x32x128xbf16, #tpu.memory_space<vmem>>, vector<1x32x128xbf16>
    %277 = vector.shape_cast %276 : vector<1x32x128xbf16> to vector<32x128xbf16>
    %cst_130 = arith.constant dense<0.000000e+00> : vector<128x128xf32>
    %278 = tpu.matmul %275, %277, %cst_130 {dimension_numbers = #tpu.dot_dimension_numbers<[1], [0], [0], [1], [0, 0, 1, 1], [], []>} : vector<128x32xbf16>, vector<32x128xbf16>, vector<128x128xf32> -> vector<128x128xf32>
    %c1_131 = arith.constant 1 : index
    %c0_132 = arith.constant 0 : index
    %c0_133 = arith.constant 0 : index
    %279 = vector.load %arg12[%c1_131, %c0_132, %c0_133] : memref<2x1x128xf32, #tpu.memory_space<vmem>>, vector<1x1x128xf32>
    %280 = vector.shape_cast %279 : vector<1x1x128xf32> to vector<1x128xf32>
    %281 = vector.broadcast %280 : vector<1x128xf32> to vector<128x128xf32>
    %282 = arith.addf %278, %281 : vector<128x128xf32>
    %283 = arith.mulf %282, %282 : vector<128x128xf32>
    %284 = arith.mulf %282, %283 : vector<128x128xf32>
    %cst_134 = arith.constant 4.471500e-02 : f32
    %285 = vector.broadcast %cst_134 : f32 to vector<128x128xf32>
    %286 = arith.mulf %285, %284 : vector<128x128xf32>
    %287 = arith.addf %282, %286 : vector<128x128xf32>
    %cst_135 = arith.constant 0.797884583 : f32
    %288 = vector.broadcast %cst_135 : f32 to vector<128x128xf32>
    %289 = arith.mulf %288, %287 : vector<128x128xf32>
    %290 = math.tanh %289 : vector<128x128xf32>
    %cst_136 = arith.constant 1.000000e+00 : f32
    %291 = vector.broadcast %cst_136 : f32 to vector<128x128xf32>
    %292 = arith.addf %291, %290 : vector<128x128xf32>
    %cst_137 = arith.constant 5.000000e-01 : f32
    %293 = vector.broadcast %cst_137 : f32 to vector<128x128xf32>
    %294 = arith.mulf %293, %292 : vector<128x128xf32>
    %295 = arith.mulf %282, %294 : vector<128x128xf32>
    %296 = arith.truncf %295 : vector<128x128xf32> to vector<128x128xbf16>
    %c1_138 = arith.constant 1 : index
    %c0_139 = arith.constant 0 : index
    %c0_140 = arith.constant 0 : index
    %297 = vector.load %arg13[%c1_138, %c0_139, %c0_140] : memref<2x128x32xbf16, #tpu.memory_space<vmem>>, vector<1x128x32xbf16>
    %298 = vector.shape_cast %297 : vector<1x128x32xbf16> to vector<128x32xbf16>
    %cst_141 = arith.constant dense<0.000000e+00> : vector<128x32xf32>
    %299 = tpu.matmul %296, %298, %cst_141 {dimension_numbers = #tpu.dot_dimension_numbers<[1], [0], [0], [1], [0, 0, 1, 1], [], []>} : vector<128x128xbf16>, vector<128x32xbf16>, vector<128x32xf32> -> vector<128x32xf32>
    %c1_142 = arith.constant 1 : index
    %c0_143 = arith.constant 0 : index
    %c0_144 = arith.constant 0 : index
    %300 = vector.load %arg14[%c1_142, %c0_143, %c0_144] : memref<2x1x32xf32, #tpu.memory_space<vmem>>, vector<1x1x32xf32>
    %301 = vector.shape_cast %300 : vector<1x1x32xf32> to vector<1x32xf32>
    %302 = vector.broadcast %301 : vector<1x32xf32> to vector<128x32xf32>
    %303 = arith.addf %299, %302 : vector<128x32xf32>
    %304 = arith.addf %248, %303 : vector<128x32xf32>
    %c0_145 = arith.constant 0 : index
    %c0_146 = arith.constant 0 : index
    %305 = vector.load %arg15[%c0_145, %c0_146] : memref<128x32xf32, #tpu.memory_space<vmem>>, vector<128x32xf32>
    tpu.vector_store %arg15[%c0_145, %c0_146], %304 {strides = array<i32>} : memref<128x32xf32, #tpu.memory_space<vmem>>, vector<128x32xf32>,
    return
  }
  func.func @transform_0(%arg0: i32) -> (i32, i32) {
    %c0_i32 = arith.constant 0 : i32
    %c0_i32_0 = arith.constant 0 : i32
    %c0_i32_1 = arith.constant 0 : i32
    return %c0_i32, %c0_i32_0 : i32, i32
  }
  func.func @transform_1(%arg0: i32) -> (i32, i32, i32) {
    %c0_i32 = arith.constant 0 : i32
    %c0_i32_0 = arith.constant 0 : i32
    %c0_i32_1 = arith.constant 0 : i32
    %c0_i32_2 = arith.constant 0 : i32
    return %c0_i32, %c0_i32_0, %c0_i32_1 : i32, i32, i32
  }
  func.func @transform_2(%arg0: i32) -> (i32, i32, i32) {
    %c0_i32 = arith.constant 0 : i32
    %c0_i32_0 = arith.constant 0 : i32
    %c0_i32_1 = arith.constant 0 : i32
    %c0_i32_2 = arith.constant 0 : i32
    return %c0_i32, %c0_i32_0, %c0_i32_1 : i32, i32, i32
  }
  func.func @transform_3(%arg0: i32) -> (i32, i32, i32) {
    %c0_i32 = arith.constant 0 : i32
    %c0_i32_0 = arith.constant 0 : i32
    %c0_i32_1 = arith.constant 0 : i32
    %c0_i32_2 = arith.constant 0 : i32
    return %c0_i32, %c0_i32_0, %c0_i32_1 : i32, i32, i32
  }
  func.func @transform_4(%arg0: i32) -> (i32, i32, i32) {
    %c0_i32 = arith.constant 0 : i32
    %c0_i32_0 = arith.constant 0 : i32
    %c0_i32_1 = arith.constant 0 : i32
    %c0_i32_2 = arith.constant 0 : i32
    return %c0_i32, %c0_i32_0, %c0_i32_1 : i32, i32, i32
  }
  func.func @transform_5(%arg0: i32) -> (i32, i32, i32) {
    %c0_i32 = arith.constant 0 : i32
    %c0_i32_0 = arith.constant 0 : i32
    %c0_i32_1 = arith.constant 0 : i32
    %c0_i32_2 = arith.constant 0 : i32
    return %c0_i32, %c0_i32_0, %c0_i32_1 : i32, i32, i32
  }
  func.func @transform_6(%arg0: i32) -> (i32, i32, i32) {
    %c0_i32 = arith.constant 0 : i32
    %c0_i32_0 = arith.constant 0 : i32
    %c0_i32_1 = arith.constant 0 : i32
    %c0_i32_2 = arith.constant 0 : i32
    return %c0_i32, %c0_i32_0, %c0_i32_1 : i32, i32, i32
  }
  func.func @transform_7(%arg0: i32) -> (i32, i32, i32) {
    %c0_i32 = arith.constant 0 : i32
    %c0_i32_0 = arith.constant 0 : i32
    %c0_i32_1 = arith.constant 0 : i32
    %c0_i32_2 = arith.constant 0 : i32
    return %c0_i32, %c0_i32_0, %c0_i32_1 : i32, i32, i32
  }
  func.func @transform_8(%arg0: i32) -> (i32, i32, i32) {
    %c0_i32 = arith.constant 0 : i32
    %c0_i32_0 = arith.constant 0 : i32
    %c0_i32_1 = arith.constant 0 : i32
    %c0_i32_2 = arith.constant 0 : i32
    return %c0_i32, %c0_i32_0, %c0_i32_1 : i32, i32, i32
  }
  func.func @transform_9(%arg0: i32) -> (i32, i32, i32) {
    %c0_i32 = arith.constant 0 : i32
    %c0_i32_0 = arith.constant 0 : i32
    %c0_i32_1 = arith.constant 0 : i32
    %c0_i32_2 = arith.constant 0 : i32
    return %c0_i32, %c0_i32_0, %c0_i32_1 : i32, i32, i32
  }
  func.func @transform_10(%arg0: i32) -> (i32, i32, i32) {
    %c0_i32 = arith.constant 0 : i32
    %c0_i32_0 = arith.constant 0 : i32
    %c0_i32_1 = arith.constant 0 : i32
    %c0_i32_2 = arith.constant 0 : i32
    return %c0_i32, %c0_i32_0, %c0_i32_1 : i32, i32, i32
  }
  func.func @transform_11(%arg0: i32) -> (i32, i32, i32) {
    %c0_i32 = arith.constant 0 : i32
    %c0_i32_0 = arith.constant 0 : i32
    %c0_i32_1 = arith.constant 0 : i32
    %c0_i32_2 = arith.constant 0 : i32
    return %c0_i32, %c0_i32_0, %c0_i32_1 : i32, i32, i32
  }
  func.func @transform_12(%arg0: i32) -> (i32, i32, i32) {
    %c0_i32 = arith.constant 0 : i32
    %c0_i32_0 = arith.constant 0 : i32
    %c0_i32_1 = arith.constant 0 : i32
    %c0_i32_2 = arith.constant 0 : i32
    return %c0_i32, %c0_i32_0, %c0_i32_1 : i32, i32, i32
  }
  func.func @transform_13(%arg0: i32) -> (i32, i32, i32) {
    %c0_i32 = arith.constant 0 : i32
    %c0_i32_0 = arith.constant 0 : i32
    %c0_i32_1 = arith.constant 0 : i32
    %c0_i32_2 = arith.constant 0 : i32
    return %c0_i32, %c0_i32_0, %c0_i32_1 : i32, i32, i32
  }
  func.func @transform_14(%arg0: i32) -> (i32, i32) {
    %c0_i32 = arith.constant 0 : i32
    %c0_i32_0 = arith.constant 0 : i32
    %c0_i32_1 = arith.constant 0 : i32
    return %c0_i32, %c0_i32_0 : i32, i32
  }
}

</mosaic_0001>

<llo_original>
// kernel: tile.14
$region0: #{tile.14}
  %s0 = inlined_call_operand.vmem [shape: f32[2,2,64,2,64], index: 0, kind: input, shape index: {}]
  %s1 = inlined_call_operand.vmem [shape: f32[2,128,128], index: 1, kind: output, shape index: {}]
  $region1: #{tile.14} parent=0
    #allocation0 [shape = 'u8[1048576]{0}', space=vmem, size = 0x100000, scoped, tag = 'scoped mem for input reshape']
    %s3 = sshllo.u32 0, 2
    %s4 = smul.addr 2, 255
    %s5 = scalar_lea.vmem %s0, %s4
    %v6 = vld [vmem:[%s5] sm:%s3]
    %s7 = scalar_lea.vmem [#allocation0], 2040
    %8 = vst [vmem:[%s7] sm:%s3] %v6
    %s9 = smul.addr 2, 254
    %s10 = scalar_lea.vmem %s0, %s9
    %v11 = vld [vmem:[%s10] sm:%s3]
    %s12 = scalar_lea.vmem [#allocation0], 2032
    %13 = vst [vmem:[%s12] sm:%s3] %v11
    %s14 = smul.addr 2, 253
    %s15 = scalar_lea.vmem %s0, %s14
    %v16 = vld [vmem:[%s15] sm:%s3]
    %s17 = scalar_lea.vmem [#allocation0], 2024
    %18 = vst [vmem:[%s17] sm:%s3] %v16
    %s19 = smul.addr 2, 252
    %s20 = scalar_lea.vmem %s0, %s19
    %v21 = vld [vmem:[%s20] sm:%s3]
    %s22 = scalar_lea.vmem [#allocation0], 2016
    %23 = vst [vmem:[%s22] sm:%s3] %v21
    %s24 = smul.addr 2, 251
    %s25 = scalar_lea.vmem %s0, %s24
    %v26 = vld [vmem:[%s25] sm:%s3]
    %s27 = scalar_lea.vmem [#allocation0], 2008
    %28 = vst [vmem:[%s27] sm:%s3] %v26
    %s29 = smul.addr 2, 250
    %s30 = scalar_lea.vmem %s0, %s29
    %v31 = vld [vmem:[%s30] sm:%s3]
    %s32 = scalar_lea.vmem [#allocation0], 2000
    %33 = vst [vmem:[%s32] sm:%s3] %v31
    %s34 = smul.addr 2, 249
    %s35 = scalar_lea.vmem %s0, %s34
    %v36 = vld [vmem:[%s35] sm:%s3]
    %s37 = scalar_lea.vmem [#allocation0], 1992
    %38 = vst [vmem:[%s37] sm:%s3] %v36
    %s39 = smul.addr 2, 248
    %s40 = scalar_lea.vmem %s0, %s39
    %v41 = vld [vmem:[%s40] sm:%s3]
    %s42 = scalar_lea.vmem [#allocation0], 1984
    %43 = vst [vmem:[%s42] sm:%s3] %v41
    %s44 = smul.addr 2, 247
    %s45 = scalar_lea.vmem %s0, %s44
    %v46 = vld [vmem:[%s45] sm:%s3]
    %s47 = scalar_lea.vmem [#allocation0], 1976
    %48 = vst [vmem:[%s47] sm:%s3] %v46
    %s49 = smul.addr 2, 246
    %s50 = scalar_lea.vmem %s0, %s49
    %v51 = vld [vmem:[%s50] sm:%s3]
    %s52 = scalar_lea.vmem [#allocation0], 1968
    %53 = vst [vmem:[%s52] sm:%s3] %v51
    %s54 = smul.addr 2, 245
    %s55 = scalar_lea.vmem %s0, %s54
    %v56 = vld [vmem:[%s55] sm:%s3]
    %s57 = scalar_lea.vmem [#allocation0], 1960
    %58 = vst [vmem:[%s57] sm:%s3] %v56
    %s59 = smul.addr 2, 244
    %s60 = scalar_lea.vmem %s0, %s59
    %v61 = vld [vmem:[%s60] sm:%s3]
    %s62 = scalar_lea.vmem [#allocation0], 1952
    %63 = vst [vmem:[%s62] sm:%s3] %v61
    %s64 = smul.addr 2, 243
    %s65 = scalar_lea.vmem %s0, %s64
    %v66 = vld [vmem:[%s65] sm:%s3]
    %s67 = scalar_lea.vmem [#allocation0], 1944
    %68 = vst [vmem:[%s67] sm:%s3] %v66
    %s69 = smul.addr 2, 242
    %s70 = scalar_lea.vmem %s0, %s69
    %v71 = vld [vmem:[%s70] sm:%s3]
    %s72 = scalar_lea.vmem [#allocation0], 1936
    %73 = vst [vmem:[%s72] sm:%s3] %v71
    %s74 = smul.addr 2, 241
    %s75 = scalar_lea.vmem %s0, %s74
    %v76 = vld [vmem:[%s75] sm:%s3]
    %s77 = scalar_lea.vmem [#allocation0], 1928
    %78 = vst [vmem:[%s77] sm:%s3] %v76
    %s79 = smul.addr 2, 240
    %s80 = scalar_lea.vmem %s0, %s79
    %v81 = vld [vmem:[%s80] sm:%s3]
    %s82 = scalar_lea.vmem [#allocation0], 1920
    %83 = vst [vmem:[%s82] sm:%s3] %v81
    %s84 = smul.addr 2, 239
    %s85 = scalar_lea.vmem %s0, %s84
    %v86 = vld [vmem:[%s85] sm:%s3]
    %s87 = scalar_lea.vmem [#allocation0], 1912
    %88 = vst [vmem:[%s87] sm:%s3] %v86
    %s89 = smul.addr 2, 238
    %s90 = scalar_lea.vmem %s0, %s89
    %v91 = vld [vmem:[%s90] sm:%s3]
    %s92 = scalar_lea.vmem [#allocation0], 1904
    %93 = vst [vmem:[%s92] sm:%s3] %v91
    %s94 = smul.addr 2, 237
    %s95 = scalar_lea.vmem %s0, %s94
    %v96 = vld [vmem:[%s95] sm:%s3]
    %s97 = scalar_lea.vmem [#allocation0], 1896
    %98 = vst [vmem:[%s97] sm:%s3] %v96
    %s99 = smul.addr 2, 236
    %s100 = scalar_lea.vmem %s0, %s99
    %v101 = vld [vmem:[%s100] sm:%s3]
    %s102 = scalar_lea.vmem [#allocation0], 1888
    %103 = vst [vmem:[%s102] sm:%s3] %v101
    %s104 = smul.addr 2, 235
    %s105 = scalar_lea.vmem %s0, %s104
    %v106 = vld [vmem:[%s105] sm:%s3]
    %s107 = scalar_lea.vmem [#allocation0], 1880
    %108 = vst [vmem:[%s107] sm:%s3] %v106
    %s109 = smul.addr 2, 234
    %s110 = scalar_lea.vmem %s0, %s109
    %v111 = vld [vmem:[%s110] sm:%s3]
    %s112 = scalar_lea.vmem [#allocation0], 1872
    %113 = vst [vmem:[%s112] sm:%s3] %v111
    %s114 = smul.addr 2, 233
    %s115 = scalar_lea.vmem %s0, %s114
    %v116 = vld [vmem:[%s115] sm:%s3]
    %s117 = scalar_lea.vmem [#allocation0], 1864
    %118 = vst [vmem:[%s117] sm:%s3] %v116
    %s119 = smul.addr 2, 232
    %s120 = scalar_lea.vmem %s0, %s119
    %v121 = vld [vmem:[%s120] sm:%s3]
    %s122 = scalar_lea.vmem [#allocation0], 1856
    %123 = vst [vmem:[%s122] sm:%s3] %v121
    %s124 = smul.addr 2, 231
    %s125 = scalar_lea.vmem %s0, %s124
    %v126 = vld [vmem:[%s125] sm:%s3]
    %s127 = scalar_lea.vmem [#allocation0], 1848
    %128 = vst [vmem:[%s127] sm:%s3] %v126
    %s129 = smul.addr 2, 230
    %s130 = scalar_lea.vmem %s0, %s129
    %v131 = vld [vmem:[%s130] sm:%s3]
    %s132 = scalar_lea.vmem [#allocation0], 1840
    %133 = vst [vmem:[%s132] sm:%s3] %v131
    %s134 = smul.addr 2, 229
    %s135 = scalar_lea.vmem %s0, %s134
    %v136 = vld [vmem:[%s135] sm:%s3]
    %s137 = scalar_lea.vmem [#allocation0], 1832
    %138 = vst [vmem:[%s137] sm:%s3] %v136
    %s139 = smul.addr 2, 228
    %s140 = scalar_lea.vmem %s0, %s139
    %v141 = vld [vmem:[%s140] sm:%s3]
    %s142 = scalar_lea.vmem [#allocation0], 1824
    %143 = vst [vmem:[%s142] sm:%s3] %v141
    %s144 = smul.addr 2, 227
    %s145 = scalar_lea.vmem %s0, %s144
    %v146 = vld [vmem:[%s145] sm:%s3]
    %s147 = scalar_lea.vmem [#allocation0], 1816
    %148 = vst [vmem:[%s147] sm:%s3] %v146
    %s149 = smul.addr 2, 226
    %s150 = scalar_lea.vmem %s0, %s149
    %v151 = vld [vmem:[%s150] sm:%s3]
    %s152 = scalar_lea.vmem [#allocation0], 1808
    %153 = vst [vmem:[%s152] sm:%s3] %v151
    %s154 = smul.addr 2, 225
    %s155 = scalar_lea.vmem %s0, %s154
    %v156 = vld [vmem:[%s155] sm:%s3]
    %s157 = scalar_lea.vmem [#allocation0], 1800
    %158 = vst [vmem:[%s157] sm:%s3] %v156
    %s159 = smul.addr 2, 224
    %s160 = scalar_lea.vmem %s0, %s159
    %v161 = vld [vmem:[%s160] sm:%s3]
    %s162 = scalar_lea.vmem [#allocation0], 1792
    %163 = vst [vmem:[%s162] sm:%s3] %v161
    %s164 = smul.addr 2, 223
    %s165 = scalar_lea.vmem %s0, %s164
    %v166 = vld [vmem:[%s165] sm:%s3]
    %s167 = scalar_lea.vmem [#allocation0], 1784
    %168 = vst [vmem:[%s167] sm:%s3] %v166
    %s169 = smul.addr 2, 222
    %s170 = scalar_lea.vmem %s0, %s169
    %v171 = vld [vmem:[%s170] sm:%s3]
    %s172 = scalar_lea.vmem [#allocation0], 1776
    %173 = vst [vmem:[%s172] sm:%s3] %v171
    %s174 = smul.addr 2, 221
    %s175 = scalar_lea.vmem %s0, %s174
    %v176 = vld [vmem:[%s175] sm:%s3]
    %s177 = scalar_lea.vmem [#allocation0], 1768
    %178 = vst [vmem:[%s177] sm:%s3] %v176
    %s179 = smul.addr 2, 220
    %s180 = scalar_lea.vmem %s0, %s179
    %v181 = vld [vmem:[%s180] sm:%s3]
    %s182 = scalar_lea.vmem [#allocation0], 1760
    %183 = vst [vmem:[%s182] sm:%s3] %v181
    %s184 = smul.addr 2, 219
    %s185 = scalar_lea.vmem %s0, %s184
    %v186 = vld [vmem:[%s185] sm:%s3]
    %s187 = scalar_lea.vmem [#allocation0], 1752
    %188 = vst [vmem:[%s187] sm:%s3] %v186
    %s189 = smul.addr 2, 218
    %s190 = scalar_lea.vmem %s0, %s189
    %v191 = vld [vmem:[%s190] sm:%s3]
    %s192 = scalar_lea.vmem [#allocation0], 1744
    %193 = vst [vmem:[%s192] sm:%s3] %v191
    %s194 = smul.addr 2, 217
    %s195 = scalar_lea.vmem %s0, %s194
    %v196 = vld [vmem:[%s195] sm:%s3]
    %s197 = scalar_lea.vmem [#allocation0], 1736
    %198 = vst [vmem:[%s197] sm:%s3] %v196
    %s199 = smul.addr 2, 216
    %s200 = scalar_lea.vmem %s0, %s199
    %v201 = vld [vmem:[%s200] sm:%s3]
    %s202 = scalar_lea.vmem [#allocation0], 1728
    %203 = vst [vmem:[%s202] sm:%s3] %v201
    %s204 = smul.addr 2, 215
    %s205 = scalar_lea.vmem %s0, %s204
    %v206 = vld [vmem:[%s205] sm:%s3]
    %s207 = scalar_lea.vmem [#allocation0], 1720
    %208 = vst [vmem:[%s207] sm:%s3] %v206
    %s209 = smul.addr 2, 214
    %s210 = scalar_lea.vmem %s0, %s209
    %v211 = vld [vmem:[%s210] sm:%s3]
    %s212 = scalar_lea.vmem [#allocation0], 1712
    %213 = vst [vmem:[%s212] sm:%s3] %v211
    %s214 = smul.addr 2, 213
    %s215 = scalar_lea.vmem %s0, %s214
    %v216 = vld [vmem:[%s215] sm:%s3]
    %s217 = scalar_lea.vmem [#allocation0], 1704
    %218 = vst [vmem:[%s217] sm:%s3] %v216
    %s219 = smul.addr 2, 212
    %s220 = scalar_lea.vmem %s0, %s219
    %v221 = vld [vmem:[%s220] sm:%s3]
    %s222 = scalar_lea.vmem [#allocation0], 1696
    %223 = vst [vmem:[%s222] sm:%s3] %v221
    %s224 = smul.addr 2, 211
    %s225 = scalar_lea.vmem %s0, %s224
    %v226 = vld [vmem:[%s225] sm:%s3]
    %s227 = scalar_lea.vmem [#allocation0], 1688
    %228 = vst [vmem:[%s227] sm:%s3] %v226
    %s229 = smul.addr 2, 210
    %s230 = scalar_lea.vmem %s0, %s229
    %v231 = vld [vmem:[%s230] sm:%s3]
    %s232 = scalar_lea.vmem [#allocation0], 1680
    %233 = vst [vmem:[%s232] sm:%s3] %v231
    %s234 = smul.addr 2, 209
    %s235 = scalar_lea.vmem %s0, %s234
    %v236 = vld [vmem:[%s235] sm:%s3]
    %s237 = scalar_lea.vmem [#allocation0], 1672
    %238 = vst [vmem:[%s237] sm:%s3] %v236
    %s239 = smul.addr 2, 208
    %s240 = scalar_lea.vmem %s0, %s239
    %v241 = vld [vmem:[%s240] sm:%s3]
    %s242 = scalar_lea.vmem [#allocation0], 1664
    %243 = vst [vmem:[%s242] sm:%s3] %v241
    %s244 = smul.addr 2, 207
    %s245 = scalar_lea.vmem %s0, %s244
    %v246 = vld [vmem:[%s245] sm:%s3]
    %s247 = scalar_lea.vmem [#allocation0], 1656
    %248 = vst [vmem:[%s247] sm:%s3] %v246
    %s249 = smul.addr 2, 206
    %s250 = scalar_lea.vmem %s0, %s249
    %v251 = vld [vmem:[%s250] sm:%s3]
    %s252 = scalar_lea.vmem [#allocation0], 1648
    %253 = vst [vmem:[%s252] sm:%s3] %v251
    %s254 = smul.addr 2, 205
    %s255 = scalar_lea.vmem %s0, %s254
    %v256 = vld [vmem:[%s255] sm:%s3]
    %s257 = scalar_lea.vmem [#allocation0], 1640
    %258 = vst [vmem:[%s257] sm:%s3] %v256
    %s259 = smul.addr 2, 204
    %s260 = scalar_lea.vmem %s0, %s259
    %v261 = vld [vmem:[%s260] sm:%s3]
    %s262 = scalar_lea.vmem [#allocation0], 1632
    %263 = vst [vmem:[%s262] sm:%s3] %v261
    %s264 = smul.addr 2, 203
    %s265 = scalar_lea.vmem %s0, %s264
    %v266 = vld [vmem:[%s265] sm:%s3]
    %s267 = scalar_lea.vmem [#allocation0], 1624
    %268 = vst [vmem:[%s267] sm:%s3] %v266
    %s269 = smul.addr 2, 202
    %s270 = scalar_lea.vmem %s0, %s269
    %v271 = vld [vmem:[%s270] sm:%s3]
    %s272 = scalar_lea.vmem [#allocation0], 1616
    %273 = vst [vmem:[%s272] sm:%s3] %v271
    %s274 = smul.addr 2, 201
    %s275 = scalar_lea.vmem %s0, %s274
    %v276 = vld [vmem:[%s275] sm:%s3]
    %s277 = scalar_lea.vmem [#allocation0], 1608
    %278 = vst [vmem:[%s277] sm:%s3] %v276
    %s279 = smul.addr 2, 200
    %s280 = scalar_lea.vmem %s0, %s279
    %v281 = vld [vmem:[%s280] sm:%s3]
    %s282 = scalar_lea.vmem [#allocation0], 1600
    %283 = vst [vmem:[%s282] sm:%s3] %v281
    %s284 = smul.addr 2, 199
    %s285 = scalar_lea.vmem %s0, %s284
    %v286 = vld [vmem:[%s285] sm:%s3]
    %s287 = scalar_lea.vmem [#allocation0], 1592
    %288 = vst [vmem:[%s287] sm:%s3] %v286
    %s289 = smul.addr 2, 198
    %s290 = scalar_lea.vmem %s0, %s289
    %v291 = vld [vmem:[%s290] sm:%s3]
    %s292 = scalar_lea.vmem [#allocation0], 1584
    %293 = vst [vmem:[%s292] sm:%s3] %v291
    %s294 = smul.addr 2, 197
    %s295 = scalar_lea.vmem %s0, %s294
    %v296 = vld [vmem:[%s295] sm:%s3]
    %s297 = scalar_lea.vmem [#allocation0], 1576
    %298 = vst [vmem:[%s297] sm:%s3] %v296
    %s299 = smul.addr 2, 196
    %s300 = scalar_lea.vmem %s0, %s299
    %v301 = vld [vmem:[%s300] sm:%s3]
    %s302 = scalar_lea.vmem [#allocation0], 1568
    %303 = vst [vmem:[%s302] sm:%s3] %v301
    %s304 = smul.addr 2, 195
    %s305 = scalar_lea.vmem %s0, %s304
    %v306 = vld [vmem:[%s305] sm:%s3]
    %s307 = scalar_lea.vmem [#allocation0], 1560
    %308 = vst [vmem:[%s307] sm:%s3] %v306
    %s309 = smul.addr 2, 194
    %s310 = scalar_lea.vmem %s0, %s309
    %v311 = vld [vmem:[%s310] sm:%s3]
    %s312 = scalar_lea.vmem [#allocation0], 1552
    %313 = vst [vmem:[%s312] sm:%s3] %v311
    %s314 = smul.addr 2, 193
    %s315 = scalar_lea.vmem %s0, %s314
    %v316 = vld [vmem:[%s315] sm:%s3]
    %s317 = scalar_lea.vmem [#allocation0], 1544
    %318 = vst [vmem:[%s317] sm:%s3] %v316
    %s319 = smul.addr 2, 192
    %s320 = scalar_lea.vmem %s0, %s319
    %v321 = vld [vmem:[%s320] sm:%s3]
    %s322 = scalar_lea.vmem [#allocation0], 1536
    %323 = vst [vmem:[%s322] sm:%s3] %v321
    %s324 = smul.addr 2, 191
    %s325 = scalar_lea.vmem %s0, %s324
    %v326 = vld [vmem:[%s325] sm:%s3]
    %s327 = scalar_lea.vmem [#allocation0], 1528
    %328 = vst [vmem:[%s327] sm:%s3] %v326
    %s329 = smul.addr 2, 190
    %s330 = scalar_lea.vmem %s0, %s329
    %v331 = vld [vmem:[%s330] sm:%s3]
    %s332 = scalar_lea.vmem [#allocation0], 1520
    %333 = vst [vmem:[%s332] sm:%s3] %v331
    %s334 = smul.addr 2, 189
    %s335 = scalar_lea.vmem %s0, %s334
    %v336 = vld [vmem:[%s335] sm:%s3]
    %s337 = scalar_lea.vmem [#allocation0], 1512
    %338 = vst [vmem:[%s337] sm:%s3] %v336
    %s339 = smul.addr 2, 188
    %s340 = scalar_lea.vmem %s0, %s339
    %v341 = vld [vmem:[%s340] sm:%s3]
    %s342 = scalar_lea.vmem [#allocation0], 1504
    %343 = vst [vmem:[%s342] sm:%s3] %v341
    %s344 = smul.addr 2, 187
    %s345 = scalar_lea.vmem %s0, %s344
    %v346 = vld [vmem:[%s345] sm:%s3]
    %s347 = scalar_lea.vmem [#allocation0], 1496
    %348 = vst [vmem:[%s347] sm:%s3] %v346
    %s349 = smul.addr 2, 186
    %s350 = scalar_lea.vmem %s0, %s349
    %v351 = vld [vmem:[%s350] sm:%s3]
    %s352 = scalar_lea.vmem [#allocation0], 1488
    %353 = vst [vmem:[%s352] sm:%s3] %v351
    %s354 = smul.addr 2, 185
    %s355 = scalar_lea.vmem %s0, %s354
    %v356 = vld [vmem:[%s355] sm:%s3]
    %s357 = scalar_lea.vmem [#allocation0], 1480
    %358 = vst [vmem:[%s357] sm:%s3] %v356
    %s359 = smul.addr 2, 184
    %s360 = scalar_lea.vmem %s0, %s359
    %v361 = vld [vmem:[%s360] sm:%s3]
    %s362 = scalar_lea.vmem [#allocation0], 1472
    %363 = vst [vmem:[%s362] sm:%s3] %v361
    %s364 = smul.addr 2, 183
    %s365 = scalar_lea.vmem %s0, %s364
    %v366 = vld [vmem:[%s365] sm:%s3]
    %s367 = scalar_lea.vmem [#allocation0], 1464
    %368 = vst [vmem:[%s367] sm:%s3] %v366
    %s369 = smul.addr 2, 182
    %s370 = scalar_lea.vmem %s0, %s369
    %v371 = vld [vmem:[%s370] sm:%s3]
    %s372 = scalar_lea.vmem [#allocation0], 1456
    %373 = vst [vmem:[%s372] sm:%s3] %v371
    %s374 = smul.addr 2, 181
    %s375 = scalar_lea.vmem %s0, %s374
    %v376 = vld [vmem:[%s375] sm:%s3]
    %s377 = scalar_lea.vmem [#allocation0], 1448
    %378 = vst [vmem:[%s377] sm:%s3] %v376
    %s379 = smul.addr 2, 180
    %s380 = scalar_lea.vmem %s0, %s379
    %v381 = vld [vmem:[%s380] sm:%s3]
    %s382 = scalar_lea.vmem [#allocation0], 1440
    %383 = vst [vmem:[%s382] sm:%s3] %v381
    %s384 = smul.addr 2, 179
    %s385 = scalar_lea.vmem %s0, %s384
    %v386 = vld [vmem:[%s385] sm:%s3]
    %s387 = scalar_lea.vmem [#allocation0], 1432
    %388 = vst [vmem:[%s387] sm:%s3] %v386
    %s389 = smul.addr 2, 178
    %s390 = scalar_lea.vmem %s0, %s389
    %v391 = vld [vmem:[%s390] sm:%s3]
    %s392 = scalar_lea.vmem [#allocation0], 1424
    %393 = vst [vmem:[%s392] sm:%s3] %v391
    %s394 = smul.addr 2, 177
    %s395 = scalar_lea.vmem %s0, %s394
    %v396 = vld [vmem:[%s395] sm:%s3]
    %s397 = scalar_lea.vmem [#allocation0], 1416
    %398 = vst [vmem:[%s397] sm:%s3] %v396
    %s399 = smul.addr 2, 176
    %s400 = scalar_lea.vmem %s0, %s399
    %v401 = vld [vmem:[%s400] sm:%s3]
    %s402 = scalar_lea.vmem [#allocation0], 1408
    %403 = vst [vmem:[%s402] sm:%s3] %v401
    %s404 = smul.addr 2, 175
    %s405 = scalar_lea.vmem %s0, %s404
    %v406 = vld [vmem:[%s405] sm:%s3]
    %s407 = scalar_lea.vmem [#allocation0], 1400
    %408 = vst [vmem:[%s407] sm:%s3] %v406
    %s409 = smul.addr 2, 174
    %s410 = scalar_lea.vmem %s0, %s409
    %v411 = vld [vmem:[%s410] sm:%s3]
    %s412 = scalar_lea.vmem [#allocation0], 1392
    %413 = vst [vmem:[%s412] sm:%s3] %v411
    %s414 = smul.addr 2, 173
    %s415 = scalar_lea.vmem %s0, %s414
    %v416 = vld [vmem:[%s415] sm:%s3]
    %s417 = scalar_lea.vmem [#allocation0], 1384
    %418 = vst [vmem:[%s417] sm:%s3] %v416
    %s419 = smul.addr 2, 172
    %s420 = scalar_lea.vmem %s0, %s419
    %v421 = vld [vmem:[%s420] sm:%s3]
    %s422 = scalar_lea.vmem [#allocation0], 1376
    %423 = vst [vmem:[%s422] sm:%s3] %v421
    %s424 = smul.addr 2, 171
    %s425 = scalar_lea.vmem %s0, %s424
    %v426 = vld [vmem:[%s425] sm:%s3]
    %s427 = scalar_lea.vmem [#allocation0], 1368
    %428 = vst [vmem:[%s427] sm:%s3] %v426
    %s429 = smul.addr 2, 170
    %s430 = scalar_lea.vmem %s0, %s429
    %v431 = vld [vmem:[%s430] sm:%s3]
    %s432 = scalar_lea.vmem [#allocation0], 1360
    %433 = vst [vmem:[%s432] sm:%s3] %v431
    %s434 = smul.addr 2, 169
    %s435 = scalar_lea.vmem %s0, %s434
    %v436 = vld [vmem:[%s435] sm:%s3]
    %s437 = scalar_lea.vmem [#allocation0], 1352
    %438 = vst [vmem:[%s437] sm:%s3] %v436
    %s439 = smul.addr 2, 168
    %s440 = scalar_lea.vmem %s0, %s439
    %v441 = vld [vmem:[%s440] sm:%s3]
    %s442 = scalar_lea.vmem [#allocation0], 1344
    %443 = vst [vmem:[%s442] sm:%s3] %v441
    %s444 = smul.addr 2, 167
    %s445 = scalar_lea.vmem %s0, %s444
    %v446 = vld [vmem:[%s445] sm:%s3]
    %s447 = scalar_lea.vmem [#allocation0], 1336
    %448 = vst [vmem:[%s447] sm:%s3] %v446
    %s449 = smul.addr 2, 166
    %s450 = scalar_lea.vmem %s0, %s449
    %v451 = vld [vmem:[%s450] sm:%s3]
    %s452 = scalar_lea.vmem [#allocation0], 1328
    %453 = vst [vmem:[%s452] sm:%s3] %v451
    %s454 = smul.addr 2, 165
    %s455 = scalar_lea.vmem %s0, %s454
    %v456 = vld [vmem:[%s455] sm:%s3]
    %s457 = scalar_lea.vmem [#allocation0], 1320
    %458 = vst [vmem:[%s457] sm:%s3] %v456
    %s459 = smul.addr 2, 164
    %s460 = scalar_lea.vmem %s0, %s459
    %v461 = vld [vmem:[%s460] sm:%s3]
    %s462 = scalar_lea.vmem [#allocation0], 1312
    %463 = vst [vmem:[%s462] sm:%s3] %v461
    %s464 = smul.addr 2, 163
    %s465 = scalar_lea.vmem %s0, %s464
    %v466 = vld [vmem:[%s465] sm:%s3]
    %s467 = scalar_lea.vmem [#allocation0], 1304
    %468 = vst [vmem:[%s467] sm:%s3] %v466
    %s469 = smul.addr 2, 162
    %s470 = scalar_lea.vmem %s0, %s469
    %v471 = vld [vmem:[%s470] sm:%s3]
    %s472 = scalar_lea.vmem [#allocation0], 1296
    %473 = vst [vmem:[%s472] sm:%s3] %v471
    %s474 = smul.addr 2, 161
    %s475 = scalar_lea.vmem %s0, %s474
    %v476 = vld [vmem:[%s475] sm:%s3]
    %s477 = scalar_lea.vmem [#allocation0], 1288
    %478 = vst [vmem:[%s477] sm:%s3] %v476
    %s479 = smul.addr 2, 160
    %s480 = scalar_lea.vmem %s0, %s479
    %v481 = vld [vmem:[%s480] sm:%s3]
    %s482 = scalar_lea.vmem [#allocation0], 1280
    %483 = vst [vmem:[%s482] sm:%s3] %v481
    %s484 = smul.addr 2, 159
    %s485 = scalar_lea.vmem %s0, %s484
    %v486 = vld [vmem:[%s485] sm:%s3]
    %s487 = scalar_lea.vmem [#allocation0], 1272
    %488 = vst [vmem:[%s487] sm:%s3] %v486
    %s489 = smul.addr 2, 158
    %s490 = scalar_lea.vmem %s0, %s489
    %v491 = vld [vmem:[%s490] sm:%s3]
    %s492 = scalar_lea.vmem [#allocation0], 1264
    %493 = vst [vmem:[%s492] sm:%s3] %v491
    %s494 = smul.addr 2, 157
    %s495 = scalar_lea.vmem %s0, %s494
    %v496 = vld [vmem:[%s495] sm:%s3]
    %s497 = scalar_lea.vmem [#allocation0], 1256
    %498 = vst [vmem:[%s497] sm:%s3] %v496
    %s499 = smul.addr 2, 156
    %s500 = scalar_lea.vmem %s0, %s499
    %v501 = vld [vmem:[%s500] sm:%s3]
    %s502 = scalar_lea.vmem [#allocation0], 1248
    %503 = vst [vmem:[%s502] sm:%s3] %v501
    %s504 = smul.addr 2, 155
    %s505 = scalar_lea.vmem %s0, %s504
    %v506 = vld [vmem:[%s505] sm:%s3]
    %s507 = scalar_lea.vmem [#allocation0], 1240
    %508 = vst [vmem:[%s507] sm:%s3] %v506
    %s509 = smul.addr 2, 154
    %s510 = scalar_lea.vmem %s0, %s509
    %v511 = vld [vmem:[%s510] sm:%s3]
    %s512 = scalar_lea.vmem [#allocation0], 1232
    %513 = vst [vmem:[%s512] sm:%s3] %v511
    %s514 = smul.addr 2, 153
    %s515 = scalar_lea.vmem %s0, %s514
    %v516 = vld [vmem:[%s515] sm:%s3]
    %s517 = scalar_lea.vmem [#allocation0], 1224
    %518 = vst [vmem:[%s517] sm:%s3] %v516
    %s519 = smul.addr 2, 152
    %s520 = scalar_lea.vmem %s0, %s519
    %v521 = vld [vmem:[%s520] sm:%s3]
    %s522 = scalar_lea.vmem [#allocation0], 1216
    %523 = vst [vmem:[%s522] sm:%s3] %v521
    %s524 = smul.addr 2, 151
    %s525 = scalar_lea.vmem %s0, %s524
    %v526 = vld [vmem:[%s525] sm:%s3]
    %s527 = scalar_lea.vmem [#allocation0], 1208
    %528 = vst [vmem:[%s527] sm:%s3] %v526
    %s529 = smul.addr 2, 150
    %s530 = scalar_lea.vmem %s0, %s529
    %v531 = vld [vmem:[%s530] sm:%s3]
    %s532 = scalar_lea.vmem [#allocation0], 1200
    %533 = vst [vmem:[%s532] sm:%s3] %v531
    %s534 = smul.addr 2, 149
    %s535 = scalar_lea.vmem %s0, %s534
    %v536 = vld [vmem:[%s535] sm:%s3]
    %s537 = scalar_lea.vmem [#allocation0], 1192
    %538 = vst [vmem:[%s537] sm:%s3] %v536
    %s539 = smul.addr 2, 148
    %s540 = scalar_lea.vmem %s0, %s539
    %v541 = vld [vmem:[%s540] sm:%s3]
    %s542 = scalar_lea.vmem [#allocation0], 1184
    %543 = vst [vmem:[%s542] sm:%s3] %v541
    %s544 = smul.addr 2, 147
    %s545 = scalar_lea.vmem %s0, %s544
    %v546 = vld [vmem:[%s545] sm:%s3]
    %s547 = scalar_lea.vmem [#allocation0], 1176
    %548 = vst [vmem:[%s547] sm:%s3] %v546
    %s549 = smul.addr 2, 146
    %s550 = scalar_lea.vmem %s0, %s549
    %v551 = vld [vmem:[%s550] sm:%s3]
    %s552 = scalar_lea.vmem [#allocation0], 1168
    %553 = vst [vmem:[%s552] sm:%s3] %v551
    %s554 = smul.addr 2, 145
    %s555 = scalar_lea.vmem %s0, %s554
    %v556 = vld [vmem:[%s555] sm:%s3]
    %s557 = scalar_lea.vmem [#allocation0], 1160
    %558 = vst [vmem:[%s557] sm:%s3] %v556
    %s559 = smul.addr 2, 144
    %s560 = scalar_lea.vmem %s0, %s559
    %v561 = vld [vmem:[%s560] sm:%s3]
    %s562 = scalar_lea.vmem [#allocation0], 1152
    %563 = vst [vmem:[%s562] sm:%s3] %v561
    %s564 = smul.addr 2, 143
    %s565 = scalar_lea.vmem %s0, %s564
    %v566 = vld [vmem:[%s565] sm:%s3]
    %s567 = scalar_lea.vmem [#allocation0], 1144
    %568 = vst [vmem:[%s567] sm:%s3] %v566
    %s569 = smul.addr 2, 142
    %s570 = scalar_lea.vmem %s0, %s569
    %v571 = vld [vmem:[%s570] sm:%s3]
    %s572 = scalar_lea.vmem [#allocation0], 1136
    %573 = vst [vmem:[%s572] sm:%s3] %v571
    %s574 = smul.addr 2, 141
    %s575 = scalar_lea.vmem %s0, %s574
    %v576 = vld [vmem:[%s575] sm:%s3]
    %s577 = scalar_lea.vmem [#allocation0], 1128
    %578 = vst [vmem:[%s577] sm:%s3] %v576
    %s579 = smul.addr 2, 140
    %s580 = scalar_lea.vmem %s0, %s579
    %v581 = vld [vmem:[%s580] sm:%s3]
    %s582 = scalar_lea.vmem [#allocation0], 1120
    %583 = vst [vmem:[%s582] sm:%s3] %v581
    %s584 = smul.addr 2, 139
    %s585 = scalar_lea.vmem %s0, %s584
    %v586 = vld [vmem:[%s585] sm:%s3]
    %s587 = scalar_lea.vmem [#allocation0], 1112
    %588 = vst [vmem:[%s587] sm:%s3] %v586
    %s589 = smul.addr 2, 138
    %s590 = scalar_lea.vmem %s0, %s589
    %v591 = vld [vmem:[%s590] sm:%s3]
    %s592 = scalar_lea.vmem [#allocation0], 1104
    %593 = vst [vmem:[%s592] sm:%s3] %v591
    %s594 = smul.addr 2, 137
    %s595 = scalar_lea.vmem %s0, %s594
    %v596 = vld [vmem:[%s595] sm:%s3]
    %s597 = scalar_lea.vmem [#allocation0], 1096
    %598 = vst [vmem:[%s597] sm:%s3] %v596
    %s599 = smul.addr 2, 136
    %s600 = scalar_lea.vmem %s0, %s599
    %v601 = vld [vmem:[%s600] sm:%s3]
    %s602 = scalar_lea.vmem [#allocation0], 1088
    %603 = vst [vmem:[%s602] sm:%s3] %v601
    %s604 = smul.addr 2, 135
    %s605 = scalar_lea.vmem %s0, %s604
    %v606 = vld [vmem:[%s605] sm:%s3]
    %s607 = scalar_lea.vmem [#allocation0], 1080
    %608 = vst [vmem:[%s607] sm:%s3] %v606
    %s609 = smul.addr 2, 134
    %s610 = scalar_lea.vmem %s0, %s609
    %v611 = vld [vmem:[%s610] sm:%s3]
    %s612 = scalar_lea.vmem [#allocation0], 1072
    %613 = vst [vmem:[%s612] sm:%s3] %v611
    %s614 = smul.addr 2, 133
    %s615 = scalar_lea.vmem %s0, %s614
    %v616 = vld [vmem:[%s615] sm:%s3]
    %s617 = scalar_lea.vmem [#allocation0], 1064
    %618 = vst [vmem:[%s617] sm:%s3] %v616
    %s619 = smul.addr 2, 132
    %s620 = scalar_lea.vmem %s0, %s619
    %v621 = vld [vmem:[%s620] sm:%s3]
    %s622 = scalar_lea.vmem [#allocation0], 1056
    %623 = vst [vmem:[%s622] sm:%s3] %v621
    %s624 = smul.addr 2, 131
    %s625 = scalar_lea.vmem %s0, %s624
    %v626 = vld [vmem:[%s625] sm:%s3]
    %s627 = scalar_lea.vmem [#allocation0], 1048
    %628 = vst [vmem:[%s627] sm:%s3] %v626
    %s629 = smul.addr 2, 130
    %s630 = scalar_lea.vmem %s0, %s629
    %v631 = vld [vmem:[%s630] sm:%s3]
    %s632 = scalar_lea.vmem [#allocation0], 1040
    %633 = vst [vmem:[%s632] sm:%s3] %v631
    %s634 = smul.addr 2, 129
    %s635 = scalar_lea.vmem %s0, %s634
    %v636 = vld [vmem:[%s635] sm:%s3]
    %s637 = scalar_lea.vmem [#allocation0], 1032
    %638 = vst [vmem:[%s637] sm:%s3] %v636
    %s639 = smul.addr 2, 128
    %s640 = scalar_lea.vmem %s0, %s639
    %v641 = vld [vmem:[%s640] sm:%s3]
    %s642 = scalar_lea.vmem [#allocation0], 1024
    %643 = vst [vmem:[%s642] sm:%s3] %v641
    %s644 = smul.addr 2, 127
    %s645 = scalar_lea.vmem %s0, %s644
    %v646 = vld [vmem:[%s645] sm:%s3]
    %s647 = scalar_lea.vmem [#allocation0], 1016
    %648 = vst [vmem:[%s647] sm:%s3] %v646
    %s649 = smul.addr 2, 126
    %s650 = scalar_lea.vmem %s0, %s649
    %v651 = vld [vmem:[%s650] sm:%s3]
    %s652 = scalar_lea.vmem [#allocation0], 1008
    %653 = vst [vmem:[%s652] sm:%s3] %v651
    %s654 = smul.addr 2, 125
    %s655 = scalar_lea.vmem %s0, %s654
    %v656 = vld [vmem:[%s655] sm:%s3]
    %s657 = scalar_lea.vmem [#allocation0], 1000
    %658 = vst [vmem:[%s657] sm:%s3] %v656
    %s659 = smul.addr 2, 124
    %s660 = scalar_lea.vmem %s0, %s659
    %v661 = vld [vmem:[%s660] sm:%s3]
    %s662 = scalar_lea.vmem [#allocation0], 992
    %663 = vst [vmem:[%s662] sm:%s3] %v661
    %s664 = smul.addr 2, 123
    %s665 = scalar_lea.vmem %s0, %s664
    %v666 = vld [vmem:[%s665] sm:%s3]
    %s667 = scalar_lea.vmem [#allocation0], 984
    %668 = vst [vmem:[%s667] sm:%s3] %v666
    %s669 = smul.addr 2, 122
    %s670 = scalar_lea.vmem %s0, %s669
    %v671 = vld [vmem:[%s670] sm:%s3]
    %s672 = scalar_lea.vmem [#allocation0], 976
    %673 = vst [vmem:[%s672] sm:%s3] %v671
    %s674 = smul.addr 2, 121
    %s675 = scalar_lea.vmem %s0, %s674
    %v676 = vld [vmem:[%s675] sm:%s3]
    %s677 = scalar_lea.vmem [#allocation0], 968
    %678 = vst [vmem:[%s677] sm:%s3] %v676
    %s679 = smul.addr 2, 120
    %s680 = scalar_lea.vmem %s0, %s679
    %v681 = vld [vmem:[%s680] sm:%s3]
    %s682 = scalar_lea.vmem [#allocation0], 960
    %683 = vst [vmem:[%s682] sm:%s3] %v681
    %s684 = smul.addr 2, 119
    %s685 = scalar_lea.vmem %s0, %s684
    %v686 = vld [vmem:[%s685] sm:%s3]
    %s687 = scalar_lea.vmem [#allocation0], 952
    %688 = vst [vmem:[%s687] sm:%s3] %v686
    %s689 = smul.addr 2, 118
    %s690 = scalar_lea.vmem %s0, %s689
    %v691 = vld [vmem:[%s690] sm:%s3]
    %s692 = scalar_lea.vmem [#allocation0], 944
    %693 = vst [vmem:[%s692] sm:%s3] %v691
    %s694 = smul.addr 2, 117
    %s695 = scalar_lea.vmem %s0, %s694
    %v696 = vld [vmem:[%s695] sm:%s3]
    %s697 = scalar_lea.vmem [#allocation0], 936
    %698 = vst [vmem:[%s697] sm:%s3] %v696
    %s699 = smul.addr 2, 116
    %s700 = scalar_lea.vmem %s0, %s699
    %v701 = vld [vmem:[%s700] sm:%s3]
    %s702 = scalar_lea.vmem [#allocation0], 928
    %703 = vst [vmem:[%s702] sm:%s3] %v701
    %s704 = smul.addr 2, 115
    %s705 = scalar_lea.vmem %s0, %s704
    %v706 = vld [vmem:[%s705] sm:%s3]
    %s707 = scalar_lea.vmem [#allocation0], 920
    %708 = vst [vmem:[%s707] sm:%s3] %v706
    %s709 = smul.addr 2, 114
    %s710 = scalar_lea.vmem %s0, %s709
    %v711 = vld [vmem:[%s710] sm:%s3]
    %s712 = scalar_lea.vmem [#allocation0], 912
    %713 = vst [vmem:[%s712] sm:%s3] %v711
    %s714 = smul.addr 2, 113
    %s715 = scalar_lea.vmem %s0, %s714
    %v716 = vld [vmem:[%s715] sm:%s3]
    %s717 = scalar_lea.vmem [#allocation0], 904
    %718 = vst [vmem:[%s717] sm:%s3] %v716
    %s719 = smul.addr 2, 112
    %s720 = scalar_lea.vmem %s0, %s719
    %v721 = vld [vmem:[%s720] sm:%s3]
    %s722 = scalar_lea.vmem [#allocation0], 896
    %723 = vst [vmem:[%s722] sm:%s3] %v721
    %s724 = smul.addr 2, 111
    %s725 = scalar_lea.vmem %s0, %s724
    %v726 = vld [vmem:[%s725] sm:%s3]
    %s727 = scalar_lea.vmem [#allocation0], 888
    %728 = vst [vmem:[%s727] sm:%s3] %v726
    %s729 = smul.addr 2, 110
    %s730 = scalar_lea.vmem %s0, %s729
    %v731 = vld [vmem:[%s730] sm:%s3]
    %s732 = scalar_lea.vmem [#allocation0], 880
    %733 = vst [vmem:[%s732] sm:%s3] %v731
    %s734 = smul.addr 2, 109
    %s735 = scalar_lea.vmem %s0, %s734
    %v736 = vld [vmem:[%s735] sm:%s3]
    %s737 = scalar_lea.vmem [#allocation0], 872
    %738 = vst [vmem:[%s737] sm:%s3] %v736
    %s739 = smul.addr 2, 108
    %s740 = scalar_lea.vmem %s0, %s739
    %v741 = vld [vmem:[%s740] sm:%s3]
    %s742 = scalar_lea.vmem [#allocation0], 864
    %743 = vst [vmem:[%s742] sm:%s3] %v741
    %s744 = smul.addr 2, 107
    %s745 = scalar_lea.vmem %s0, %s744
    %v746 = vld [vmem:[%s745] sm:%s3]
    %s747 = scalar_lea.vmem [#allocation0], 856
    %748 = vst [vmem:[%s747] sm:%s3] %v746
    %s749 = smul.addr 2, 106
    %s750 = scalar_lea.vmem %s0, %s749
    %v751 = vld [vmem:[%s750] sm:%s3]
    %s752 = scalar_lea.vmem [#allocation0], 848
    %753 = vst [vmem:[%s752] sm:%s3] %v751
    %s754 = smul.addr 2, 105
    %s755 = scalar_lea.vmem %s0, %s754
    %v756 = vld [vmem:[%s755] sm:%s3]
    %s757 = scalar_lea.vmem [#allocation0], 840
    %758 = vst [vmem:[%s757] sm:%s3] %v756
    %s759 = smul.addr 2, 104
    %s760 = scalar_lea.vmem %s0, %s759
    %v761 = vld [vmem:[%s760] sm:%s3]
    %s762 = scalar_lea.vmem [#allocation0], 832
    %763 = vst [vmem:[%s762] sm:%s3] %v761
    %s764 = smul.addr 2, 103
    %s765 = scalar_lea.vmem %s0, %s764
    %v766 = vld [vmem:[%s765] sm:%s3]
    %s767 = scalar_lea.vmem [#allocation0], 824
    %768 = vst [vmem:[%s767] sm:%s3] %v766
    %s769 = smul.addr 2, 102
    %s770 = scalar_lea.vmem %s0, %s769
    %v771 = vld [vmem:[%s770] sm:%s3]
    %s772 = scalar_lea.vmem [#allocation0], 816
    %773 = vst [vmem:[%s772] sm:%s3] %v771
    %s774 = smul.addr 2, 101
    %s775 = scalar_lea.vmem %s0, %s774
    %v776 = vld [vmem:[%s775] sm:%s3]
    %s777 = scalar_lea.vmem [#allocation0], 808
    %778 = vst [vmem:[%s777] sm:%s3] %v776
    %s779 = smul.addr 2, 100
    %s780 = scalar_lea.vmem %s0, %s779
    %v781 = vld [vmem:[%s780] sm:%s3]
    %s782 = scalar_lea.vmem [#allocation0], 800
    %783 = vst [vmem:[%s782] sm:%s3] %v781
    %s784 = smul.addr 2, 99
    %s785 = scalar_lea.vmem %s0, %s784
    %v786 = vld [vmem:[%s785] sm:%s3]
    %s787 = scalar_lea.vmem [#allocation0], 792
    %788 = vst [vmem:[%s787] sm:%s3] %v786
    %s789 = smul.addr 2, 98
    %s790 = scalar_lea.vmem %s0, %s789
    %v791 = vld [vmem:[%s790] sm:%s3]
    %s792 = scalar_lea.vmem [#allocation0], 784
    %793 = vst [vmem:[%s792] sm:%s3] %v791
    %s794 = smul.addr 2, 97
    %s795 = scalar_lea.vmem %s0, %s794
    %v796 = vld [vmem:[%s795] sm:%s3]
    %s797 = scalar_lea.vmem [#allocation0], 776
    %798 = vst [vmem:[%s797] sm:%s3] %v796
    %s799 = smul.addr 2, 96
    %s800 = scalar_lea.vmem %s0, %s799
    %v801 = vld [vmem:[%s800] sm:%s3]
    %s802 = scalar_lea.vmem [#allocation0], 768
    %803 = vst [vmem:[%s802] sm:%s3] %v801
    %s804 = smul.addr 2, 95
    %s805 = scalar_lea.vmem %s0, %s804
    %v806 = vld [vmem:[%s805] sm:%s3]
    %s807 = scalar_lea.vmem [#allocation0], 760
    %808 = vst [vmem:[%s807] sm:%s3] %v806
    %s809 = smul.addr 2, 94
    %s810 = scalar_lea.vmem %s0, %s809
    %v811 = vld [vmem:[%s810] sm:%s3]
    %s812 = scalar_lea.vmem [#allocation0], 752
    %813 = vst [vmem:[%s812] sm:%s3] %v811
    %s814 = smul.addr 2, 93
    %s815 = scalar_lea.vmem %s0, %s814
    %v816 = vld [vmem:[%s815] sm:%s3]
    %s817 = scalar_lea.vmem [#allocation0], 744
    %818 = vst [vmem:[%s817] sm:%s3] %v816
    %s819 = smul.addr 2, 92
    %s820 = scalar_lea.vmem %s0, %s819
    %v821 = vld [vmem:[%s820] sm:%s3]
    %s822 = scalar_lea.vmem [#allocation0], 736
    %823 = vst [vmem:[%s822] sm:%s3] %v821
    %s824 = smul.addr 2, 91
    %s825 = scalar_lea.vmem %s0, %s824
    %v826 = vld [vmem:[%s825] sm:%s3]
    %s827 = scalar_lea.vmem [#allocation0], 728
    %828 = vst [vmem:[%s827] sm:%s3] %v826
    %s829 = smul.addr 2, 90
    %s830 = scalar_lea.vmem %s0, %s829
    %v831 = vld [vmem:[%s830] sm:%s3]
    %s832 = scalar_lea.vmem [#allocation0], 720
    %833 = vst [vmem:[%s832] sm:%s3] %v831
    %s834 = smul.addr 2, 89
    %s835 = scalar_lea.vmem %s0, %s834
    %v836 = vld [vmem:[%s835] sm:%s3]
    %s837 = scalar_lea.vmem [#allocation0], 712
    %838 = vst [vmem:[%s837] sm:%s3] %v836
    %s839 = smul.addr 2, 88
    %s840 = scalar_lea.vmem %s0, %s839
    %v841 = vld [vmem:[%s840] sm:%s3]
    %s842 = scalar_lea.vmem [#allocation0], 704
    %843 = vst [vmem:[%s842] sm:%s3] %v841
    %s844 = smul.addr 2, 87
    %s845 = scalar_lea.vmem %s0, %s844
    %v846 = vld [vmem:[%s845] sm:%s3]
    %s847 = scalar_lea.vmem [#allocation0], 696
    %848 = vst [vmem:[%s847] sm:%s3] %v846
    %s849 = smul.addr 2, 86
    %s850 = scalar_lea.vmem %s0, %s849
    %v851 = vld [vmem:[%s850] sm:%s3]
    %s852 = scalar_lea.vmem [#allocation0], 688
    %853 = vst [vmem:[%s852] sm:%s3] %v851
    %s854 = smul.addr 2, 85
    %s855 = scalar_lea.vmem %s0, %s854
    %v856 = vld [vmem:[%s855] sm:%s3]
    %s857 = scalar_lea.vmem [#allocation0], 680
    %858 = vst [vmem:[%s857] sm:%s3] %v856
    %s859 = smul.addr 2, 84
    %s860 = scalar_lea.vmem %s0, %s859
    %v861 = vld [vmem:[%s860] sm:%s3]
    %s862 = scalar_lea.vmem [#allocation0], 672
    %863 = vst [vmem:[%s862] sm:%s3] %v861
    %s864 = smul.addr 2, 83
    %s865 = scalar_lea.vmem %s0, %s864
    %v866 = vld [vmem:[%s865] sm:%s3]
    %s867 = scalar_lea.vmem [#allocation0], 664
    %868 = vst [vmem:[%s867] sm:%s3] %v866
    %s869 = smul.addr 2, 82
    %s870 = scalar_lea.vmem %s0, %s869
    %v871 = vld [vmem:[%s870] sm:%s3]
    %s872 = scalar_lea.vmem [#allocation0], 656
    %873 = vst [vmem:[%s872] sm:%s3] %v871
    %s874 = smul.addr 2, 81
    %s875 = scalar_lea.vmem %s0, %s874
    %v876 = vld [vmem:[%s875] sm:%s3]
    %s877 = scalar_lea.vmem [#allocation0], 648
    %878 = vst [vmem:[%s877] sm:%s3] %v876
    %s879 = smul.addr 2, 80
    %s880 = scalar_lea.vmem %s0, %s879
    %v881 = vld [vmem:[%s880] sm:%s3]
    %s882 = scalar_lea.vmem [#allocation0], 640
    %883 = vst [vmem:[%s882] sm:%s3] %v881
    %s884 = smul.addr 2, 79
    %s885 = scalar_lea.vmem %s0, %s884
    %v886 = vld [vmem:[%s885] sm:%s3]
    %s887 = scalar_lea.vmem [#allocation0], 632
    %888 = vst [vmem:[%s887] sm:%s3] %v886
    %s889 = smul.addr 2, 78
    %s890 = scalar_lea.vmem %s0, %s889
    %v891 = vld [vmem:[%s890] sm:%s3]
    %s892 = scalar_lea.vmem [#allocation0], 624
    %893 = vst [vmem:[%s892] sm:%s3] %v891
    %s894 = smul.addr 2, 77
    %s895 = scalar_lea.vmem %s0, %s894
    %v896 = vld [vmem:[%s895] sm:%s3]
    %s897 = scalar_lea.vmem [#allocation0], 616
    %898 = vst [vmem:[%s897] sm:%s3] %v896
    %s899 = smul.addr 2, 76
    %s900 = scalar_lea.vmem %s0, %s899
    %v901 = vld [vmem:[%s900] sm:%s3]
    %s902 = scalar_lea.vmem [#allocation0], 608
    %903 = vst [vmem:[%s902] sm:%s3] %v901
    %s904 = smul.addr 2, 75
    %s905 = scalar_lea.vmem %s0, %s904
    %v906 = vld [vmem:[%s905] sm:%s3]
    %s907 = scalar_lea.vmem [#allocation0], 600
    %908 = vst [vmem:[%s907] sm:%s3] %v906
    %s909 = smul.addr 2, 74
    %s910 = scalar_lea.vmem %s0, %s909
    %v911 = vld [vmem:[%s910] sm:%s3]
    %s912 = scalar_lea.vmem [#allocation0], 592
    %913 = vst [vmem:[%s912] sm:%s3] %v911
    %s914 = smul.addr 2, 73
    %s915 = scalar_lea.vmem %s0, %s914
    %v916 = vld [vmem:[%s915] sm:%s3]
    %s917 = scalar_lea.vmem [#allocation0], 584
    %918 = vst [vmem:[%s917] sm:%s3] %v916
    %s919 = smul.addr 2, 72
    %s920 = scalar_lea.vmem %s0, %s919
    %v921 = vld [vmem:[%s920] sm:%s3]
    %s922 = scalar_lea.vmem [#allocation0], 576
    %923 = vst [vmem:[%s922] sm:%s3] %v921
    %s924 = smul.addr 2, 71
    %s925 = scalar_lea.vmem %s0, %s924
    %v926 = vld [vmem:[%s925] sm:%s3]
    %s927 = scalar_lea.vmem [#allocation0], 568
    %928 = vst [vmem:[%s927] sm:%s3] %v926
    %s929 = smul.addr 2, 70
    %s930 = scalar_lea.vmem %s0, %s929
    %v931 = vld [vmem:[%s930] sm:%s3]
    %s932 = scalar_lea.vmem [#allocation0], 560
    %933 = vst [vmem:[%s932] sm:%s3] %v931
    %s934 = smul.addr 2, 69
    %s935 = scalar_lea.vmem %s0, %s934
    %v936 = vld [vmem:[%s935] sm:%s3]
    %s937 = scalar_lea.vmem [#allocation0], 552
    %938 = vst [vmem:[%s937] sm:%s3] %v936
    %s939 = smul.addr 2, 68
    %s940 = scalar_lea.vmem %s0, %s939
    %v941 = vld [vmem:[%s940] sm:%s3]
    %s942 = scalar_lea.vmem [#allocation0], 544
    %943 = vst [vmem:[%s942] sm:%s3] %v941
    %s944 = smul.addr 2, 67
    %s945 = scalar_lea.vmem %s0, %s944
    %v946 = vld [vmem:[%s945] sm:%s3]
    %s947 = scalar_lea.vmem [#allocation0], 536
    %948 = vst [vmem:[%s947] sm:%s3] %v946
    %s949 = smul.addr 2, 66
    %s950 = scalar_lea.vmem %s0, %s949
    %v951 = vld [vmem:[%s950] sm:%s3]
    %s952 = scalar_lea.vmem [#allocation0], 528
    %953 = vst [vmem:[%s952] sm:%s3] %v951
    %s954 = smul.addr 2, 65
    %s955 = scalar_lea.vmem %s0, %s954
    %v956 = vld [vmem:[%s955] sm:%s3]
    %s957 = scalar_lea.vmem [#allocation0], 520
    %958 = vst [vmem:[%s957] sm:%s3] %v956
    %s959 = smul.addr 2, 64
    %s960 = scalar_lea.vmem %s0, %s959
    %v961 = vld [vmem:[%s960] sm:%s3]
    %s962 = scalar_lea.vmem [#allocation0], 512
    %963 = vst [vmem:[%s962] sm:%s3] %v961
    %s964 = smul.addr 2, 63
    %s965 = scalar_lea.vmem %s0, %s964
    %v966 = vld [vmem:[%s965] sm:%s3]
    %s967 = scalar_lea.vmem [#allocation0], 504
    %968 = vst [vmem:[%s967] sm:%s3] %v966
    %s969 = smul.addr 2, 62
    %s970 = scalar_lea.vmem %s0, %s969
    %v971 = vld [vmem:[%s970] sm:%s3]
    %s972 = scalar_lea.vmem [#allocation0], 496
    %973 = vst [vmem:[%s972] sm:%s3] %v971
    %s974 = smul.addr 2, 61
    %s975 = scalar_lea.vmem %s0, %s974
    %v976 = vld [vmem:[%s975] sm:%s3]
    %s977 = scalar_lea.vmem [#allocation0], 488
    %978 = vst [vmem:[%s977] sm:%s3] %v976
    %s979 = smul.addr 2, 60
    %s980 = scalar_lea.vmem %s0, %s979
    %v981 = vld [vmem:[%s980] sm:%s3]
    %s982 = scalar_lea.vmem [#allocation0], 480
    %983 = vst [vmem:[%s982] sm:%s3] %v981
    %s984 = smul.addr 2, 59
    %s985 = scalar_lea.vmem %s0, %s984
    %v986 = vld [vmem:[%s985] sm:%s3]
    %s987 = scalar_lea.vmem [#allocation0], 472
    %988 = vst [vmem:[%s987] sm:%s3] %v986
    %s989 = smul.addr 2, 58
    %s990 = scalar_lea.vmem %s0, %s989
    %v991 = vld [vmem:[%s990] sm:%s3]
    %s992 = scalar_lea.vmem [#allocation0], 464
    %993 = vst [vmem:[%s992] sm:%s3] %v991
    %s994 = smul.addr 2, 57
    %s995 = scalar_lea.vmem %s0, %s994
    %v996 = vld [vmem:[%s995] sm:%s3]
    %s997 = scalar_lea.vmem [#allocation0], 456
    %998 = vst [vmem:[%s997] sm:%s3] %v996
    %s999 = smul.addr 2, 56
    %s1000 = scalar_lea.vmem %s0, %s999
    %v1001 = vld [vmem:[%s1000] sm:%s3]
    %s1002 = scalar_lea.vmem [#allocation0], 448
    %1003 = vst [vmem:[%s1002] sm:%s3] %v1001
    %s1004 = smul.addr 2, 55
    %s1005 = scalar_lea.vmem %s0, %s1004
    %v1006 = vld [vmem:[%s1005] sm:%s3]
    %s1007 = scalar_lea.vmem [#allocation0], 440
    %1008 = vst [vmem:[%s1007] sm:%s3] %v1006
    %s1009 = smul.addr 2, 54
    %s1010 = scalar_lea.vmem %s0, %s1009
    %v1011 = vld [vmem:[%s1010] sm:%s3]
    %s1012 = scalar_lea.vmem [#allocation0], 432
    %1013 = vst [vmem:[%s1012] sm:%s3] %v1011
    %s1014 = smul.addr 2, 53
    %s1015 = scalar_lea.vmem %s0, %s1014
    %v1016 = vld [vmem:[%s1015] sm:%s3]
    %s1017 = scalar_lea.vmem [#allocation0], 424
    %1018 = vst [vmem:[%s1017] sm:%s3] %v1016
    %s1019 = smul.addr 2, 52
    %s1020 = scalar_lea.vmem %s0, %s1019
    %v1021 = vld [vmem:[%s1020] sm:%s3]
    %s1022 = scalar_lea.vmem [#allocation0], 416
    %1023 = vst [vmem:[%s1022] sm:%s3] %v1021
    %s1024 = smul.addr 2, 51
    %s1025 = scalar_lea.vmem %s0, %s1024
    %v1026 = vld [vmem:[%s1025] sm:%s3]
    %s1027 = scalar_lea.vmem [#allocation0], 408
    %1028 = vst [vmem:[%s1027] sm:%s3] %v1026
    %s1029 = smul.addr 2, 50
    %s1030 = scalar_lea.vmem %s0, %s1029
    %v1031 = vld [vmem:[%s1030] sm:%s3]
    %s1032 = scalar_lea.vmem [#allocation0], 400
    %1033 = vst [vmem:[%s1032] sm:%s3] %v1031
    %s1034 = smul.addr 2, 49
    %s1035 = scalar_lea.vmem %s0, %s1034
    %v1036 = vld [vmem:[%s1035] sm:%s3]
    %s1037 = scalar_lea.vmem [#allocation0], 392
    %1038 = vst [vmem:[%s1037] sm:%s3] %v1036
    %s1039 = smul.addr 2, 48
    %s1040 = scalar_lea.vmem %s0, %s1039
    %v1041 = vld [vmem:[%s1040] sm:%s3]
    %s1042 = scalar_lea.vmem [#allocation0], 384
    %1043 = vst [vmem:[%s1042] sm:%s3] %v1041
    %s1044 = smul.addr 2, 47
    %s1045 = scalar_lea.vmem %s0, %s1044
    %v1046 = vld [vmem:[%s1045] sm:%s3]
    %s1047 = scalar_lea.vmem [#allocation0], 376
    %1048 = vst [vmem:[%s1047] sm:%s3] %v1046
    %s1049 = smul.addr 2, 46
    %s1050 = scalar_lea.vmem %s0, %s1049
    %v1051 = vld [vmem:[%s1050] sm:%s3]
    %s1052 = scalar_lea.vmem [#allocation0], 368
    %1053 = vst [vmem:[%s1052] sm:%s3] %v1051
    %s1054 = smul.addr 2, 45
    %s1055 = scalar_lea.vmem %s0, %s1054
    %v1056 = vld [vmem:[%s1055] sm:%s3]
    %s1057 = scalar_lea.vmem [#allocation0], 360
    %1058 = vst [vmem:[%s1057] sm:%s3] %v1056
    %s1059 = smul.addr 2, 44
    %s1060 = scalar_lea.vmem %s0, %s1059
    %v1061 = vld [vmem:[%s1060] sm:%s3]
    %s1062 = scalar_lea.vmem [#allocation0], 352
    %1063 = vst [vmem:[%s1062] sm:%s3] %v1061
    %s1064 = smul.addr 2, 43
    %s1065 = scalar_lea.vmem %s0, %s1064
    %v1066 = vld [vmem:[%s1065] sm:%s3]
    %s1067 = scalar_lea.vmem [#allocation0], 344
    %1068 = vst [vmem:[%s1067] sm:%s3] %v1066
    %s1069 = smul.addr 2, 42
    %s1070 = scalar_lea.vmem %s0, %s1069
    %v1071 = vld [vmem:[%s1070] sm:%s3]
    %s1072 = scalar_lea.vmem [#allocation0], 336
    %1073 = vst [vmem:[%s1072] sm:%s3] %v1071
    %s1074 = smul.addr 2, 41
    %s1075 = scalar_lea.vmem %s0, %s1074
    %v1076 = vld [vmem:[%s1075] sm:%s3]
    %s1077 = scalar_lea.vmem [#allocation0], 328
    %1078 = vst [vmem:[%s1077] sm:%s3] %v1076
    %s1079 = smul.addr 2, 40
    %s1080 = scalar_lea.vmem %s0, %s1079
    %v1081 = vld [vmem:[%s1080] sm:%s3]
    %s1082 = scalar_lea.vmem [#allocation0], 320
    %1083 = vst [vmem:[%s1082] sm:%s3] %v1081
    %s1084 = smul.addr 2, 39
    %s1085 = scalar_lea.vmem %s0, %s1084
    %v1086 = vld [vmem:[%s1085] sm:%s3]
    %s1087 = scalar_lea.vmem [#allocation0], 312
    %1088 = vst [vmem:[%s1087] sm:%s3] %v1086
    %s1089 = smul.addr 2, 38
    %s1090 = scalar_lea.vmem %s0, %s1089
    %v1091 = vld [vmem:[%s1090] sm:%s3]
    %s1092 = scalar_lea.vmem [#allocation0], 304
    %1093 = vst [vmem:[%s1092] sm:%s3] %v1091
    %s1094 = smul.addr 2, 37
    %s1095 = scalar_lea.vmem %s0, %s1094
    %v1096 = vld [vmem:[%s1095] sm:%s3]
    %s1097 = scalar_lea.vmem [#allocation0], 296
    %1098 = vst [vmem:[%s1097] sm:%s3] %v1096
    %s1099 = smul.addr 2, 36
    %s1100 = scalar_lea.vmem %s0, %s1099
    %v1101 = vld [vmem:[%s1100] sm:%s3]
    %s1102 = scalar_lea.vmem [#allocation0], 288
    %1103 = vst [vmem:[%s1102] sm:%s3] %v1101
    %s1104 = smul.addr 2, 35
    %s1105 = scalar_lea.vmem %s0, %s1104
    %v1106 = vld [vmem:[%s1105] sm:%s3]
    %s1107 = scalar_lea.vmem [#allocation0], 280
    %1108 = vst [vmem:[%s1107] sm:%s3] %v1106
    %s1109 = smul.addr 2, 34
    %s1110 = scalar_lea.vmem %s0, %s1109
    %v1111 = vld [vmem:[%s1110] sm:%s3]
    %s1112 = scalar_lea.vmem [#allocation0], 272
    %1113 = vst [vmem:[%s1112] sm:%s3] %v1111
    %s1114 = smul.addr 2, 33
    %s1115 = scalar_lea.vmem %s0, %s1114
    %v1116 = vld [vmem:[%s1115] sm:%s3]
    %s1117 = scalar_lea.vmem [#allocation0], 264
    %1118 = vst [vmem:[%s1117] sm:%s3] %v1116
    %s1119 = smul.addr 2, 32
    %s1120 = scalar_lea.vmem %s0, %s1119
    %v1121 = vld [vmem:[%s1120] sm:%s3]
    %s1122 = scalar_lea.vmem [#allocation0], 256
    %1123 = vst [vmem:[%s1122] sm:%s3] %v1121
    %s1124 = smul.addr 2, 31
    %s1125 = scalar_lea.vmem %s0, %s1124
    %v1126 = vld [vmem:[%s1125] sm:%s3]
    %s1127 = scalar_lea.vmem [#allocation0], 248
    %1128 = vst [vmem:[%s1127] sm:%s3] %v1126
    %s1129 = smul.addr 2, 30
    %s1130 = scalar_lea.vmem %s0, %s1129
    %v1131 = vld [vmem:[%s1130] sm:%s3]
    %s1132 = scalar_lea.vmem [#allocation0], 240
    %1133 = vst [vmem:[%s1132] sm:%s3] %v1131
    %s1134 = smul.addr 2, 29
    %s1135 = scalar_lea.vmem %s0, %s1134
    %v1136 = vld [vmem:[%s1135] sm:%s3]
    %s1137 = scalar_lea.vmem [#allocation0], 232
    %1138 = vst [vmem:[%s1137] sm:%s3] %v1136
    %s1139 = smul.addr 2, 28
    %s1140 = scalar_lea.vmem %s0, %s1139
    %v1141 = vld [vmem:[%s1140] sm:%s3]
    %s1142 = scalar_lea.vmem [#allocation0], 224
    %1143 = vst [vmem:[%s1142] sm:%s3] %v1141
    %s1144 = smul.addr 2, 27
    %s1145 = scalar_lea.vmem %s0, %s1144
    %v1146 = vld [vmem:[%s1145] sm:%s3]
    %s1147 = scalar_lea.vmem [#allocation0], 216
    %1148 = vst [vmem:[%s1147] sm:%s3] %v1146
    %s1149 = smul.addr 2, 26
    %s1150 = scalar_lea.vmem %s0, %s1149
    %v1151 = vld [vmem:[%s1150] sm:%s3]
    %s1152 = scalar_lea.vmem [#allocation0], 208
    %1153 = vst [vmem:[%s1152] sm:%s3] %v1151
    %s1154 = smul.addr 2, 25
    %s1155 = scalar_lea.vmem %s0, %s1154
    %v1156 = vld [vmem:[%s1155] sm:%s3]
    %s1157 = scalar_lea.vmem [#allocation0], 200
    %1158 = vst [vmem:[%s1157] sm:%s3] %v1156
    %s1159 = smul.addr 2, 24
    %s1160 = scalar_lea.vmem %s0, %s1159
    %v1161 = vld [vmem:[%s1160] sm:%s3]
    %s1162 = scalar_lea.vmem [#allocation0], 192
    %1163 = vst [vmem:[%s1162] sm:%s3] %v1161
    %s1164 = smul.addr 2, 23
    %s1165 = scalar_lea.vmem %s0, %s1164
    %v1166 = vld [vmem:[%s1165] sm:%s3]
    %s1167 = scalar_lea.vmem [#allocation0], 184
    %1168 = vst [vmem:[%s1167] sm:%s3] %v1166
    %s1169 = smul.addr 2, 22
    %s1170 = scalar_lea.vmem %s0, %s1169
    %v1171 = vld [vmem:[%s1170] sm:%s3]
    %s1172 = scalar_lea.vmem [#allocation0], 176
    %1173 = vst [vmem:[%s1172] sm:%s3] %v1171
    %s1174 = smul.addr 2, 21
    %s1175 = scalar_lea.vmem %s0, %s1174
    %v1176 = vld [vmem:[%s1175] sm:%s3]
    %s1177 = scalar_lea.vmem [#allocation0], 168
    %1178 = vst [vmem:[%s1177] sm:%s3] %v1176
    %s1179 = smul.addr 2, 20
    %s1180 = scalar_lea.vmem %s0, %s1179
    %v1181 = vld [vmem:[%s1180] sm:%s3]
    %s1182 = scalar_lea.vmem [#allocation0], 160
    %1183 = vst [vmem:[%s1182] sm:%s3] %v1181
    %s1184 = smul.addr 2, 19
    %s1185 = scalar_lea.vmem %s0, %s1184
    %v1186 = vld [vmem:[%s1185] sm:%s3]
    %s1187 = scalar_lea.vmem [#allocation0], 152
    %1188 = vst [vmem:[%s1187] sm:%s3] %v1186
    %s1189 = smul.addr 2, 18
    %s1190 = scalar_lea.vmem %s0, %s1189
    %v1191 = vld [vmem:[%s1190] sm:%s3]
    %s1192 = scalar_lea.vmem [#allocation0], 144
    %1193 = vst [vmem:[%s1192] sm:%s3] %v1191
    %s1194 = smul.addr 2, 17
    %s1195 = scalar_lea.vmem %s0, %s1194
    %v1196 = vld [vmem:[%s1195] sm:%s3]
    %s1197 = scalar_lea.vmem [#allocation0], 136
    %1198 = vst [vmem:[%s1197] sm:%s3] %v1196
    %s1199 = smul.addr 2, 16
    %s1200 = scalar_lea.vmem %s0, %s1199
    %v1201 = vld [vmem:[%s1200] sm:%s3]
    %s1202 = scalar_lea.vmem [#allocation0], 128
    %1203 = vst [vmem:[%s1202] sm:%s3] %v1201
    %s1204 = smul.addr 2, 15
    %s1205 = scalar_lea.vmem %s0, %s1204
    %v1206 = vld [vmem:[%s1205] sm:%s3]
    %s1207 = scalar_lea.vmem [#allocation0], 120
    %1208 = vst [vmem:[%s1207] sm:%s3] %v1206
    %s1209 = smul.addr 2, 14
    %s1210 = scalar_lea.vmem %s0, %s1209
    %v1211 = vld [vmem:[%s1210] sm:%s3]
    %s1212 = scalar_lea.vmem [#allocation0], 112
    %1213 = vst [vmem:[%s1212] sm:%s3] %v1211
    %s1214 = smul.addr 2, 13
    %s1215 = scalar_lea.vmem %s0, %s1214
    %v1216 = vld [vmem:[%s1215] sm:%s3]
    %s1217 = scalar_lea.vmem [#allocation0], 104
    %1218 = vst [vmem:[%s1217] sm:%s3] %v1216
    %s1219 = smul.addr 2, 12
    %s1220 = scalar_lea.vmem %s0, %s1219
    %v1221 = vld [vmem:[%s1220] sm:%s3]
    %s1222 = scalar_lea.vmem [#allocation0], 96
    %1223 = vst [vmem:[%s1222] sm:%s3] %v1221
    %s1224 = smul.addr 2, 11
    %s1225 = scalar_lea.vmem %s0, %s1224
    %v1226 = vld [vmem:[%s1225] sm:%s3]
    %s1227 = scalar_lea.vmem [#allocation0], 88
    %1228 = vst [vmem:[%s1227] sm:%s3] %v1226
    %s1229 = smul.addr 2, 10
    %s1230 = scalar_lea.vmem %s0, %s1229
    %v1231 = vld [vmem:[%s1230] sm:%s3]
    %s1232 = scalar_lea.vmem [#allocation0], 80
    %1233 = vst [vmem:[%s1232] sm:%s3] %v1231
    %s1234 = smul.addr 2, 9
    %s1235 = scalar_lea.vmem %s0, %s1234
    %v1236 = vld [vmem:[%s1235] sm:%s3]
    %s1237 = scalar_lea.vmem [#allocation0], 72
    %1238 = vst [vmem:[%s1237] sm:%s3] %v1236
    %s1239 = smul.addr 2, 8
    %s1240 = scalar_lea.vmem %s0, %s1239
    %v1241 = vld [vmem:[%s1240] sm:%s3]
    %s1242 = scalar_lea.vmem [#allocation0], 64
    %1243 = vst [vmem:[%s1242] sm:%s3] %v1241
    %s1244 = smul.addr 2, 7
    %s1245 = scalar_lea.vmem %s0, %s1244
    %v1246 = vld [vmem:[%s1245] sm:%s3]
    %s1247 = scalar_lea.vmem [#allocation0], 56
    %1248 = vst [vmem:[%s1247] sm:%s3] %v1246
    %s1249 = smul.addr 2, 6
    %s1250 = scalar_lea.vmem %s0, %s1249
    %v1251 = vld [vmem:[%s1250] sm:%s3]
    %s1252 = scalar_lea.vmem [#allocation0], 48
    %1253 = vst [vmem:[%s1252] sm:%s3] %v1251
    %s1254 = smul.addr 2, 5
    %s1255 = scalar_lea.vmem %s0, %s1254
    %v1256 = vld [vmem:[%s1255] sm:%s3]
    %s1257 = scalar_lea.vmem [#allocation0], 40
    %1258 = vst [vmem:[%s1257] sm:%s3] %v1256
    %s1259 = smul.addr 2, 4
    %s1260 = scalar_lea.vmem %s0, %s1259
    %v1261 = vld [vmem:[%s1260] sm:%s3]
    %s1262 = scalar_lea.vmem [#allocation0], 32
    %1263 = vst [vmem:[%s1262] sm:%s3] %v1261
    %s1264 = smul.addr 2, 3
    %s1265 = scalar_lea.vmem %s0, %s1264
    %v1266 = vld [vmem:[%s1265] sm:%s3]
    %s1267 = scalar_lea.vmem [#allocation0], 24
    %1268 = vst [vmem:[%s1267] sm:%s3] %v1266
    %s1269 = smul.addr 2, 2
    %s1270 = scalar_lea.vmem %s0, %s1269
    %v1271 = vld [vmem:[%s1270] sm:%s3]
    %s1272 = scalar_lea.vmem [#allocation0], 16
    %1273 = vst [vmem:[%s1272] sm:%s3] %v1271
    %s1274 = scalar_lea.vmem %s0, 2
    %v1275 = vld [vmem:[%s1274] sm:%s3]
    %s1276 = scalar_lea.vmem [#allocation0], 8
    %1277 = vst [vmem:[%s1276] sm:%s3] %v1275
    %v1278 = vld [vmem:[%s0] sm:%s3]
    %1279 = vst [vmem:[#allocation0] sm:%s3] %v1278
    %v1280 = vld [vmem:[#allocation0] ss:$8 sm:$0xf]
    %v1281 = vld [vmem:[#allocation0] ss:$8 sm:$0xf0]
    %vm1282 = vcmask 1047556
    %v1283 = vsel %vm1282, %v1281, %v1280
    %vm1284 = vcmask 523264
    %1285 = vst.msk [vmem:[%s1] sm:$0xff] %vm1284, %v1283
    %s1286 = scalar_lea.vmem [#allocation0], 64
    %v1287 = vld [vmem:[%s1286] ss:$8 sm:$0xf]
    %s1288 = scalar_lea.vmem [#allocation0], 64
    %v1289 = vld [vmem:[%s1288] ss:$8 sm:$0xf0]
    %vm1290 = vcmask 1047556
    %v1291 = vsel %vm1290, %v1289, %v1287
    %vm1292 = vcmask 523264
    %s1293 = scalar_lea.vmem %s1, 8
    %1294 = vst.msk [vmem:[%s1293] sm:$0xff] %vm1292, %v1291
    %s1295 = scalar_lea.vmem [#allocation0], 128
    %v1296 = vld [vmem:[%s1295] ss:$8 sm:$0xf]
    %s1297 = scalar_lea.vmem [#allocation0], 128
    %v1298 = vld [vmem:[%s1297] ss:$8 sm:$0xf0]
    %vm1299 = vcmask 1047556
    %v1300 = vsel %vm1299, %v1298, %v1296
    %vm1301 = vcmask 523264
    %s1302 = scalar_lea.vmem %s1, 16
    %1303 = vst.msk [vmem:[%s1302] sm:$0xff] %vm1301, %v1300
    %s1304 = scalar_lea.vmem [#allocation0], 192
    %v1305 = vld [vmem:[%s1304] ss:$8 sm:$0xf]
    %s1306 = scalar_lea.vmem [#allocation0], 192
    %v1307 = vld [vmem:[%s1306] ss:$8 sm:$0xf0]
    %vm1308 = vcmask 1047556
    %v1309 = vsel %vm1308, %v1307, %v1305
    %vm1310 = vcmask 523264
    %s1311 = scalar_lea.vmem %s1, 24
    %1312 = vst.msk [vmem:[%s1311] sm:$0xff] %vm1310, %v1309
    %s1313 = scalar_lea.vmem [#allocation0], 256
    %v1314 = vld [vmem:[%s1313] ss:$8 sm:$0xf]
    %s1315 = scalar_lea.vmem [#allocation0], 256
    %v1316 = vld [vmem:[%s1315] ss:$8 sm:$0xf0]
    %vm1317 = vcmask 1047556
    %v1318 = vsel %vm1317, %v1316, %v1314
    %vm1319 = vcmask 523264
    %s1320 = scalar_lea.vmem %s1, 32
    %1321 = vst.msk [vmem:[%s1320] sm:$0xff] %vm1319, %v1318
    %s1322 = scalar_lea.vmem [#allocation0], 320
    %v1323 = vld [vmem:[%s1322] ss:$8 sm:$0xf]
    %s1324 = scalar_lea.vmem [#allocation0], 320
    %v1325 = vld [vmem:[%s1324] ss:$8 sm:$0xf0]
    %vm1326 = vcmask 1047556
    %v1327 = vsel %vm1326, %v1325, %v1323
    %vm1328 = vcmask 523264
    %s1329 = scalar_lea.vmem %s1, 40
    %1330 = vst.msk [vmem:[%s1329] sm:$0xff] %vm1328, %v1327
    %s1331 = scalar_lea.vmem [#allocation0], 384
    %v1332 = vld [vmem:[%s1331] ss:$8 sm:$0xf]
    %s1333 = scalar_lea.vmem [#allocation0], 384
    %v1334 = vld [vmem:[%s1333] ss:$8 sm:$0xf0]
    %vm1335 = vcmask 1047556
    %v1336 = vsel %vm1335, %v1334, %v1332
    %vm1337 = vcmask 523264
    %s1338 = scalar_lea.vmem %s1, 48
    %1339 = vst.msk [vmem:[%s1338] sm:$0xff] %vm1337, %v1336
    %s1340 = scalar_lea.vmem [#allocation0], 448
    %v1341 = vld [vmem:[%s1340] ss:$8 sm:$0xf]
    %s1342 = scalar_lea.vmem [#allocation0], 448
    %v1343 = vld [vmem:[%s1342] ss:$8 sm:$0xf0]
    %vm1344 = vcmask 1047556
    %v1345 = vsel %vm1344, %v1343, %v1341
    %vm1346 = vcmask 523264
    %s1347 = scalar_lea.vmem %s1, 56
    %1348 = vst.msk [vmem:[%s1347] sm:$0xff] %vm1346, %v1345
    %s1349 = scalar_lea.vmem [#allocation0], 512
    %v1350 = vld [vmem:[%s1349] ss:$8 sm:$0xf]
    %s1351 = scalar_lea.vmem [#allocation0], 512
    %v1352 = vld [vmem:[%s1351] ss:$8 sm:$0xf0]
    %vm1353 = vcmask 1047556
    %v1354 = vsel %vm1353, %v1352, %v1350
    %vm1355 = vcmask 523264
    %s1356 = scalar_lea.vmem %s1, 64
    %1357 = vst.msk [vmem:[%s1356] sm:$0xff] %vm1355, %v1354
    %s1358 = scalar_lea.vmem [#allocation0], 576
    %v1359 = vld [vmem:[%s1358] ss:$8 sm:$0xf]
    %s1360 = scalar_lea.vmem [#allocation0], 576
    %v1361 = vld [vmem:[%s1360] ss:$8 sm:$0xf0]
    %vm1362 = vcmask 1047556
    %v1363 = vsel %vm1362, %v1361, %v1359
    %vm1364 = vcmask 523264
    %s1365 = scalar_lea.vmem %s1, 72
    %1366 = vst.msk [vmem:[%s1365] sm:$0xff] %vm1364, %v1363
    %s1367 = scalar_lea.vmem [#allocation0], 640
    %v1368 = vld [vmem:[%s1367] ss:$8 sm:$0xf]
    %s1369 = scalar_lea.vmem [#allocation0], 640
    %v1370 = vld [vmem:[%s1369] ss:$8 sm:$0xf0]
    %vm1371 = vcmask 1047556
    %v1372 = vsel %vm1371, %v1370, %v1368
    %vm1373 = vcmask 523264
    %s1374 = scalar_lea.vmem %s1, 80
    %1375 = vst.msk [vmem:[%s1374] sm:$0xff] %vm1373, %v1372
    %s1376 = scalar_lea.vmem [#allocation0], 704
    %v1377 = vld [vmem:[%s1376] ss:$8 sm:$0xf]
    %s1378 = scalar_lea.vmem [#allocation0], 704
    %v1379 = vld [vmem:[%s1378] ss:$8 sm:$0xf0]
    %vm1380 = vcmask 1047556
    %v1381 = vsel %vm1380, %v1379, %v1377
    %vm1382 = vcmask 523264
    %s1383 = scalar_lea.vmem %s1, 88
    %1384 = vst.msk [vmem:[%s1383] sm:$0xff] %vm1382, %v1381
    %s1385 = scalar_lea.vmem [#allocation0], 768
    %v1386 = vld [vmem:[%s1385] ss:$8 sm:$0xf]
    %s1387 = scalar_lea.vmem [#allocation0], 768
    %v1388 = vld [vmem:[%s1387] ss:$8 sm:$0xf0]
    %vm1389 = vcmask 1047556
    %v1390 = vsel %vm1389, %v1388, %v1386
    %vm1391 = vcmask 523264
    %s1392 = scalar_lea.vmem %s1, 96
    %1393 = vst.msk [vmem:[%s1392] sm:$0xff] %vm1391, %v1390
    %s1394 = scalar_lea.vmem [#allocation0], 832
    %v1395 = vld [vmem:[%s1394] ss:$8 sm:$0xf]
    %s1396 = scalar_lea.vmem [#allocation0], 832
    %v1397 = vld [vmem:[%s1396] ss:$8 sm:$0xf0]
    %vm1398 = vcmask 1047556
    %v1399 = vsel %vm1398, %v1397, %v1395
    %vm1400 = vcmask 523264
    %s1401 = scalar_lea.vmem %s1, 104
    %1402 = vst.msk [vmem:[%s1401] sm:$0xff] %vm1400, %v1399
    %s1403 = scalar_lea.vmem [#allocation0], 896
    %v1404 = vld [vmem:[%s1403] ss:$8 sm:$0xf]
    %s1405 = scalar_lea.vmem [#allocation0], 896
    %v1406 = vld [vmem:[%s1405] ss:$8 sm:$0xf0]
    %vm1407 = vcmask 1047556
    %v1408 = vsel %vm1407, %v1406, %v1404
    %vm1409 = vcmask 523264
    %s1410 = scalar_lea.vmem %s1, 112
    %1411 = vst.msk [vmem:[%s1410] sm:$0xff] %vm1409, %v1408
    %s1412 = scalar_lea.vmem [#allocation0], 960
    %v1413 = vld [vmem:[%s1412] ss:$8 sm:$0xf]
    %s1414 = scalar_lea.vmem [#allocation0], 960
    %v1415 = vld [vmem:[%s1414] ss:$8 sm:$0xf0]
    %vm1416 = vcmask 1047556
    %v1417 = vsel %vm1416, %v1415, %v1413
    %vm1418 = vcmask 523264
    %s1419 = scalar_lea.vmem %s1, 120
    %1420 = vst.msk [vmem:[%s1419] sm:$0xff] %vm1418, %v1417
    %s1421 = scalar_lea.vmem [#allocation0], 1024
    %v1422 = vld [vmem:[%s1421] ss:$8 sm:$0xf]
    %s1423 = scalar_lea.vmem [#allocation0], 1024
    %v1424 = vld [vmem:[%s1423] ss:$8 sm:$0xf0]
    %vm1425 = vcmask 1047556
    %v1426 = vsel %vm1425, %v1424, %v1422
    %vm1427 = vcmask 523264
    %s1428 = scalar_lea.vmem %s1, 128
    %1429 = vst.msk [vmem:[%s1428] sm:$0xff] %vm1427, %v1426
    %s1430 = scalar_lea.vmem [#allocation0], 1088
    %v1431 = vld [vmem:[%s1430] ss:$8 sm:$0xf]
    %s1432 = scalar_lea.vmem [#allocation0], 1088
    %v1433 = vld [vmem:[%s1432] ss:$8 sm:$0xf0]
    %vm1434 = vcmask 1047556
    %v1435 = vsel %vm1434, %v1433, %v1431
    %vm1436 = vcmask 523264
    %s1437 = scalar_lea.vmem %s1, 136
    %1438 = vst.msk [vmem:[%s1437] sm:$0xff] %vm1436, %v1435
    %s1439 = scalar_lea.vmem [#allocation0], 1152
    %v1440 = vld [vmem:[%s1439] ss:$8 sm:$0xf]
    %s1441 = scalar_lea.vmem [#allocation0], 1152
    %v1442 = vld [vmem:[%s1441] ss:$8 sm:$0xf0]
    %vm1443 = vcmask 1047556
    %v1444 = vsel %vm1443, %v1442, %v1440
    %vm1445 = vcmask 523264
    %s1446 = scalar_lea.vmem %s1, 144
    %1447 = vst.msk [vmem:[%s1446] sm:$0xff] %vm1445, %v1444
    %s1448 = scalar_lea.vmem [#allocation0], 1216
    %v1449 = vld [vmem:[%s1448] ss:$8 sm:$0xf]
    %s1450 = scalar_lea.vmem [#allocation0], 1216
    %v1451 = vld [vmem:[%s1450] ss:$8 sm:$0xf0]
    %vm1452 = vcmask 1047556
    %v1453 = vsel %vm1452, %v1451, %v1449
    %vm1454 = vcmask 523264
    %s1455 = scalar_lea.vmem %s1, 152
    %1456 = vst.msk [vmem:[%s1455] sm:$0xff] %vm1454, %v1453
    %s1457 = scalar_lea.vmem [#allocation0], 1280
    %v1458 = vld [vmem:[%s1457] ss:$8 sm:$0xf]
    %s1459 = scalar_lea.vmem [#allocation0], 1280
    %v1460 = vld [vmem:[%s1459] ss:$8 sm:$0xf0]
    %vm1461 = vcmask 1047556
    %v1462 = vsel %vm1461, %v1460, %v1458
    %vm1463 = vcmask 523264
    %s1464 = scalar_lea.vmem %s1, 160
    %1465 = vst.msk [vmem:[%s1464] sm:$0xff] %vm1463, %v1462
    %s1466 = scalar_lea.vmem [#allocation0], 1344
    %v1467 = vld [vmem:[%s1466] ss:$8 sm:$0xf]
    %s1468 = scalar_lea.vmem [#allocation0], 1344
    %v1469 = vld [vmem:[%s1468] ss:$8 sm:$0xf0]
    %vm1470 = vcmask 1047556
    %v1471 = vsel %vm1470, %v1469, %v1467
    %vm1472 = vcmask 523264
    %s1473 = scalar_lea.vmem %s1, 168
    %1474 = vst.msk [vmem:[%s1473] sm:$0xff] %vm1472, %v1471
    %s1475 = scalar_lea.vmem [#allocation0], 1408
    %v1476 = vld [vmem:[%s1475] ss:$8 sm:$0xf]
    %s1477 = scalar_lea.vmem [#allocation0], 1408
    %v1478 = vld [vmem:[%s1477] ss:$8 sm:$0xf0]
    %vm1479 = vcmask 1047556
    %v1480 = vsel %vm1479, %v1478, %v1476
    %vm1481 = vcmask 523264
    %s1482 = scalar_lea.vmem %s1, 176
    %1483 = vst.msk [vmem:[%s1482] sm:$0xff] %vm1481, %v1480
    %s1484 = scalar_lea.vmem [#allocation0], 1472
    %v1485 = vld [vmem:[%s1484] ss:$8 sm:$0xf]
    %s1486 = scalar_lea.vmem [#allocation0], 1472
    %v1487 = vld [vmem:[%s1486] ss:$8 sm:$0xf0]
    %vm1488 = vcmask 1047556
    %v1489 = vsel %vm1488, %v1487, %v1485
    %vm1490 = vcmask 523264
    %s1491 = scalar_lea.vmem %s1, 184
    %1492 = vst.msk [vmem:[%s1491] sm:$0xff] %vm1490, %v1489
    %s1493 = scalar_lea.vmem [#allocation0], 1536
    %v1494 = vld [vmem:[%s1493] ss:$8 sm:$0xf]
    %s1495 = scalar_lea.vmem [#allocation0], 1536
    %v1496 = vld [vmem:[%s1495] ss:$8 sm:$0xf0]
    %vm1497 = vcmask 1047556
    %v1498 = vsel %vm1497, %v1496, %v1494
    %vm1499 = vcmask 523264
    %s1500 = scalar_lea.vmem %s1, 192
    %1501 = vst.msk [vmem:[%s1500] sm:$0xff] %vm1499, %v1498
    %s1502 = scalar_lea.vmem [#allocation0], 1600
    %v1503 = vld [vmem:[%s1502] ss:$8 sm:$0xf]
    %s1504 = scalar_lea.vmem [#allocation0], 1600
    %v1505 = vld [vmem:[%s1504] ss:$8 sm:$0xf0]
    %vm1506 = vcmask 1047556
    %v1507 = vsel %vm1506, %v1505, %v1503
    %vm1508 = vcmask 523264
    %s1509 = scalar_lea.vmem %s1, 200
    %1510 = vst.msk [vmem:[%s1509] sm:$0xff] %vm1508, %v1507
    %s1511 = scalar_lea.vmem [#allocation0], 1664
    %v1512 = vld [vmem:[%s1511] ss:$8 sm:$0xf]
    %s1513 = scalar_lea.vmem [#allocation0], 1664
    %v1514 = vld [vmem:[%s1513] ss:$8 sm:$0xf0]
    %vm1515 = vcmask 1047556
    %v1516 = vsel %vm1515, %v1514, %v1512
    %vm1517 = vcmask 523264
    %s1518 = scalar_lea.vmem %s1, 208
    %1519 = vst.msk [vmem:[%s1518] sm:$0xff] %vm1517, %v1516
    %s1520 = scalar_lea.vmem [#allocation0], 1728
    %v1521 = vld [vmem:[%s1520] ss:$8 sm:$0xf]
    %s1522 = scalar_lea.vmem [#allocation0], 1728
    %v1523 = vld [vmem:[%s1522] ss:$8 sm:$0xf0]
    %vm1524 = vcmask 1047556
    %v1525 = vsel %vm1524, %v1523, %v1521
    %vm1526 = vcmask 523264
    %s1527 = scalar_lea.vmem %s1, 216
    %1528 = vst.msk [vmem:[%s1527] sm:$0xff] %vm1526, %v1525
    %s1529 = scalar_lea.vmem [#allocation0], 1792
    %v1530 = vld [vmem:[%s1529] ss:$8 sm:$0xf]
    %s1531 = scalar_lea.vmem [#allocation0], 1792
    %v1532 = vld [vmem:[%s1531] ss:$8 sm:$0xf0]
    %vm1533 = vcmask 1047556
    %v1534 = vsel %vm1533, %v1532, %v1530
    %vm1535 = vcmask 523264
    %s1536 = scalar_lea.vmem %s1, 224
    %1537 = vst.msk [vmem:[%s1536] sm:$0xff] %vm1535, %v1534
    %s1538 = scalar_lea.vmem [#allocation0], 1856
    %v1539 = vld [vmem:[%s1538] ss:$8 sm:$0xf]
    %s1540 = scalar_lea.vmem [#allocation0], 1856
    %v1541 = vld [vmem:[%s1540] ss:$8 sm:$0xf0]
    %vm1542 = vcmask 1047556
    %v1543 = vsel %vm1542, %v1541, %v1539
    %vm1544 = vcmask 523264
    %s1545 = scalar_lea.vmem %s1, 232
    %1546 = vst.msk [vmem:[%s1545] sm:$0xff] %vm1544, %v1543
    %s1547 = scalar_lea.vmem [#allocation0], 1920
    %v1548 = vld [vmem:[%s1547] ss:$8 sm:$0xf]
    %s1549 = scalar_lea.vmem [#allocation0], 1920
    %v1550 = vld [vmem:[%s1549] ss:$8 sm:$0xf0]
    %vm1551 = vcmask 1047556
    %v1552 = vsel %vm1551, %v1550, %v1548
    %vm1553 = vcmask 523264
    %s1554 = scalar_lea.vmem %s1, 240
    %1555 = vst.msk [vmem:[%s1554] sm:$0xff] %vm1553, %v1552
    %s1556 = scalar_lea.vmem [#allocation0], 1984
    %v1557 = vld [vmem:[%s1556] ss:$8 sm:$0xf]
    %s1558 = scalar_lea.vmem [#allocation0], 1984
    %v1559 = vld [vmem:[%s1558] ss:$8 sm:$0xf0]
    %vm1560 = vcmask 1047556
    %v1561 = vsel %vm1560, %v1559, %v1557
    %vm1562 = vcmask 523264
    %s1563 = scalar_lea.vmem %s1, 248
    %1564 = vst.msk [vmem:[%s1563] sm:$0xff] %vm1562, %v1561
    %s1565 = scalar_lea.vmem [#allocation0], 1
    %v1566 = vld [vmem:[%s1565] ss:$8 sm:$0xf]
    %s1567 = scalar_lea.vmem [#allocation0], 1
    %v1568 = vld [vmem:[%s1567] ss:$8 sm:$0xf0]
    %vm1569 = vcmask 1047556
    %v1570 = vsel %vm1569, %v1568, %v1566
    %1571 = vrot.lane.b32.xlu0 %v1570, 64
    %v1572 = vpop.permute.xlu0 %1571
    %vm1573 = vcmask 1048064
    %1574 = vst.msk [vmem:[%s1] sm:$0xff] %vm1573, %v1572
    %s1575 = scalar_lea.vmem [#allocation0], 257
    %v1576 = vld [vmem:[%s1575] ss:$8 sm:$0xf]
    %s1577 = scalar_lea.vmem [#allocation0], 257
    %v1578 = vld [vmem:[%s1577] ss:$8 sm:$0xf0]
    %vm1579 = vcmask 1047556
    %v1580 = vsel %vm1579, %v1578, %v1576
    %1581 = vrot.lane.b32.xlu0 %v1580, 64
    %v1582 = vpop.permute.xlu0 %1581
    %vm1583 = vcmask 1048064
    %s1584 = scalar_lea.vmem %s1, 32
    %1585 = vst.msk [vmem:[%s1584] sm:$0xff] %vm1583, %v1582
    %s1586 = scalar_lea.vmem [#allocation0], 513
    %v1587 = vld [vmem:[%s1586] ss:$8 sm:$0xf]
    %s1588 = scalar_lea.vmem [#allocation0], 513
    %v1589 = vld [vmem:[%s1588] ss:$8 sm:$0xf0]
    %vm1590 = vcmask 1047556
    %v1591 = vsel %vm1590, %v1589, %v1587
    %1592 = vrot.lane.b32.xlu0 %v1591, 64
    %v1593 = vpop.permute.xlu0 %1592
    %vm1594 = vcmask 1048064
    %s1595 = scalar_lea.vmem %s1, 64
    %1596 = vst.msk [vmem:[%s1595] sm:$0xff] %vm1594, %v1593
    %s1597 = scalar_lea.vmem [#allocation0], 769
    %v1598 = vld [vmem:[%s1597] ss:$8 sm:$0xf]
    %s1599 = scalar_lea.vmem [#allocation0], 769
    %v1600 = vld [vmem:[%s1599] ss:$8 sm:$0xf0]
    %vm1601 = vcmask 1047556
    %v1602 = vsel %vm1601, %v1600, %v1598
    %1603 = vrot.lane.b32.xlu0 %v1602, 64
    %v1604 = vpop.permute.xlu0 %1603
    %vm1605 = vcmask 1048064
    %s1606 = scalar_lea.vmem %s1, 96
    %1607 = vst.msk [vmem:[%s1606] sm:$0xff] %vm1605, %v1604
    %s1608 = scalar_lea.vmem [#allocation0], 1025
    %v1609 = vld [vmem:[%s1608] ss:$8 sm:$0xf]
    %s1610 = scalar_lea.vmem [#allocation0], 1025
    %v1611 = vld [vmem:[%s1610] ss:$8 sm:$0xf0]
    %vm1612 = vcmask 1047556
    %v1613 = vsel %vm1612, %v1611, %v1609
    %1614 = vrot.lane.b32.xlu0 %v1613, 64
    %v1615 = vpop.permute.xlu0 %1614
    %vm1616 = vcmask 1048064
    %s1617 = scalar_lea.vmem %s1, 128
    %1618 = vst.msk [vmem:[%s1617] sm:$0xff] %vm1616, %v1615
    %s1619 = scalar_lea.vmem [#allocation0], 1281
    %v1620 = vld [vmem:[%s1619] ss:$8 sm:$0xf]
    %s1621 = scalar_lea.vmem [#allocation0], 1281
    %v1622 = vld [vmem:[%s1621] ss:$8 sm:$0xf0]
    %vm1623 = vcmask 1047556
    %v1624 = vsel %vm1623, %v1622, %v1620
    %1625 = vrot.lane.b32.xlu0 %v1624, 64
    %v1626 = vpop.permute.xlu0 %1625
    %vm1627 = vcmask 1048064
    %s1628 = scalar_lea.vmem %s1, 160
    %1629 = vst.msk [vmem:[%s1628] sm:$0xff] %vm1627, %v1626
    %s1630 = scalar_lea.vmem [#allocation0], 1537
    %v1631 = vld [vmem:[%s1630] ss:$8 sm:$0xf]
    %s1632 = scalar_lea.vmem [#allocation0], 1537
    %v1633 = vld [vmem:[%s1632] ss:$8 sm:$0xf0]
    %vm1634 = vcmask 1047556
    %v1635 = vsel %vm1634, %v1633, %v1631
    %1636 = vrot.lane.b32.xlu0 %v1635, 64
    %v1637 = vpop.permute.xlu0 %1636
    %vm1638 = vcmask 1048064
    %s1639 = scalar_lea.vmem %s1, 192
    %1640 = vst.msk [vmem:[%s1639] sm:$0xff] %vm1638, %v1637
    %s1641 = scalar_lea.vmem [#allocation0], 1793
    %v1642 = vld [vmem:[%s1641] ss:$8 sm:$0xf]
    %s1643 = scalar_lea.vmem [#allocation0], 1793
    %v1644 = vld [vmem:[%s1643] ss:$8 sm:$0xf0]
    %vm1645 = vcmask 1047556
    %v1646 = vsel %vm1645, %v1644, %v1642
    %1647 = vrot.lane.b32.xlu0 %v1646, 64
    %v1648 = vpop.permute.xlu0 %1647
    %vm1649 = vcmask 1048064
    %s1650 = scalar_lea.vmem %s1, 224
    %1651 = vst.msk [vmem:[%s1650] sm:$0xff] %vm1649, %v1648
    %s1652 = scalar_lea.vmem [#allocation0], 65
    %v1653 = vld [vmem:[%s1652] ss:$8 sm:$0xf]
    %s1654 = scalar_lea.vmem [#allocation0], 65
    %v1655 = vld [vmem:[%s1654] ss:$8 sm:$0xf0]
    %vm1656 = vcmask 1047556
    %v1657 = vsel %vm1656, %v1655, %v1653
    %1658 = vrot.lane.b32.xlu0 %v1657, 64
    %v1659 = vpop.permute.xlu0 %1658
    %vm1660 = vcmask 1048064
    %s1661 = scalar_lea.vmem %s1, 8
    %1662 = vst.msk [vmem:[%s1661] sm:$0xff] %vm1660, %v1659
    %s1663 = scalar_lea.vmem [#allocation0], 321
    %v1664 = vld [vmem:[%s1663] ss:$8 sm:$0xf]
    %s1665 = scalar_lea.vmem [#allocation0], 321
    %v1666 = vld [vmem:[%s1665] ss:$8 sm:$0xf0]
    %vm1667 = vcmask 1047556
    %v1668 = vsel %vm1667, %v1666, %v1664
    %1669 = vrot.lane.b32.xlu0 %v1668, 64
    %v1670 = vpop.permute.xlu0 %1669
    %vm1671 = vcmask 1048064
    %s1672 = scalar_lea.vmem %s1, 40
    %1673 = vst.msk [vmem:[%s1672] sm:$0xff] %vm1671, %v1670
    %s1674 = scalar_lea.vmem [#allocation0], 577
    %v1675 = vld [vmem:[%s1674] ss:$8 sm:$0xf]
    %s1676 = scalar_lea.vmem [#allocation0], 577
    %v1677 = vld [vmem:[%s1676] ss:$8 sm:$0xf0]
    %vm1678 = vcmask 1047556
    %v1679 = vsel %vm1678, %v1677, %v1675
    %1680 = vrot.lane.b32.xlu0 %v1679, 64
    %v1681 = vpop.permute.xlu0 %1680
    %vm1682 = vcmask 1048064
    %s1683 = scalar_lea.vmem %s1, 72
    %1684 = vst.msk [vmem:[%s1683] sm:$0xff] %vm1682, %v1681
    %s1685 = scalar_lea.vmem [#allocation0], 833
    %v1686 = vld [vmem:[%s1685] ss:$8 sm:$0xf]
    %s1687 = scalar_lea.vmem [#allocation0], 833
    %v1688 = vld [vmem:[%s1687] ss:$8 sm:$0xf0]
    %vm1689 = vcmask 1047556
    %v1690 = vsel %vm1689, %v1688, %v1686
    %1691 = vrot.lane.b32.xlu0 %v1690, 64
    %v1692 = vpop.permute.xlu0 %1691
    %vm1693 = vcmask 1048064
    %s1694 = scalar_lea.vmem %s1, 104
    %1695 = vst.msk [vmem:[%s1694] sm:$0xff] %vm1693, %v1692
    %s1696 = scalar_lea.vmem [#allocation0], 1089
    %v1697 = vld [vmem:[%s1696] ss:$8 sm:$0xf]
    %s1698 = scalar_lea.vmem [#allocation0], 1089
    %v1699 = vld [vmem:[%s1698] ss:$8 sm:$0xf0]
    %vm1700 = vcmask 1047556
    %v1701 = vsel %vm1700, %v1699, %v1697
    %1702 = vrot.lane.b32.xlu0 %v1701, 64
    %v1703 = vpop.permute.xlu0 %1702
    %vm1704 = vcmask 1048064
    %s1705 = scalar_lea.vmem %s1, 136
    %1706 = vst.msk [vmem:[%s1705] sm:$0xff] %vm1704, %v1703
    %s1707 = scalar_lea.vmem [#allocation0], 1345
    %v1708 = vld [vmem:[%s1707] ss:$8 sm:$0xf]
    %s1709 = scalar_lea.vmem [#allocation0], 1345
    %v1710 = vld [vmem:[%s1709] ss:$8 sm:$0xf0]
    %vm1711 = vcmask 1047556
    %v1712 = vsel %vm1711, %v1710, %v1708
    %1713 = vrot.lane.b32.xlu0 %v1712, 64
    %v1714 = vpop.permute.xlu0 %1713
    %vm1715 = vcmask 1048064
    %s1716 = scalar_lea.vmem %s1, 168
    %1717 = vst.msk [vmem:[%s1716] sm:$0xff] %vm1715, %v1714
    %s1718 = scalar_lea.vmem [#allocation0], 1601
    %v1719 = vld [vmem:[%s1718] ss:$8 sm:$0xf]
    %s1720 = scalar_lea.vmem [#allocation0], 1601
    %v1721 = vld [vmem:[%s1720] ss:$8 sm:$0xf0]
    %vm1722 = vcmask 1047556
    %v1723 = vsel %vm1722, %v1721, %v1719
    %1724 = vrot.lane.b32.xlu0 %v1723, 64
    %v1725 = vpop.permute.xlu0 %1724
    %vm1726 = vcmask 1048064
    %s1727 = scalar_lea.vmem %s1, 200
    %1728 = vst.msk [vmem:[%s1727] sm:$0xff] %vm1726, %v1725
    %s1729 = scalar_lea.vmem [#allocation0], 1857
    %v1730 = vld [vmem:[%s1729] ss:$8 sm:$0xf]
    %s1731 = scalar_lea.vmem [#allocation0], 1857
    %v1732 = vld [vmem:[%s1731] ss:$8 sm:$0xf0]
    %vm1733 = vcmask 1047556
    %v1734 = vsel %vm1733, %v1732, %v1730
    %1735 = vrot.lane.b32.xlu0 %v1734, 64
    %v1736 = vpop.permute.xlu0 %1735
    %vm1737 = vcmask 1048064
    %s1738 = scalar_lea.vmem %s1, 232
    %1739 = vst.msk [vmem:[%s1738] sm:$0xff] %vm1737, %v1736
    %s1740 = scalar_lea.vmem [#allocation0], 129
    %v1741 = vld [vmem:[%s1740] ss:$8 sm:$0xf]
    %s1742 = scalar_lea.vmem [#allocation0], 129
    %v1743 = vld [vmem:[%s1742] ss:$8 sm:$0xf0]
    %vm1744 = vcmask 1047556
    %v1745 = vsel %vm1744, %v1743, %v1741
    %1746 = vrot.lane.b32.xlu0 %v1745, 64
    %v1747 = vpop.permute.xlu0 %1746
    %vm1748 = vcmask 1048064
    %s1749 = scalar_lea.vmem %s1, 16
    %1750 = vst.msk [vmem:[%s1749] sm:$0xff] %vm1748, %v1747
    %s1751 = scalar_lea.vmem [#allocation0], 385
    %v1752 = vld [vmem:[%s1751] ss:$8 sm:$0xf]
    %s1753 = scalar_lea.vmem [#allocation0], 385
    %v1754 = vld [vmem:[%s1753] ss:$8 sm:$0xf0]
    %vm1755 = vcmask 1047556
    %v1756 = vsel %vm1755, %v1754, %v1752
    %1757 = vrot.lane.b32.xlu0 %v1756, 64
    %v1758 = vpop.permute.xlu0 %1757
    %vm1759 = vcmask 1048064
    %s1760 = scalar_lea.vmem %s1, 48
    %1761 = vst.msk [vmem:[%s1760] sm:$0xff] %vm1759, %v1758
    %s1762 = scalar_lea.vmem [#allocation0], 641
    %v1763 = vld [vmem:[%s1762] ss:$8 sm:$0xf]
    %s1764 = scalar_lea.vmem [#allocation0], 641
    %v1765 = vld [vmem:[%s1764] ss:$8 sm:$0xf0]
    %vm1766 = vcmask 1047556
    %v1767 = vsel %vm1766, %v1765, %v1763
    %1768 = vrot.lane.b32.xlu0 %v1767, 64
    %v1769 = vpop.permute.xlu0 %1768
    %vm1770 = vcmask 1048064
    %s1771 = scalar_lea.vmem %s1, 80
    %1772 = vst.msk [vmem:[%s1771] sm:$0xff] %vm1770, %v1769
    %s1773 = scalar_lea.vmem [#allocation0], 897
    %v1774 = vld [vmem:[%s1773] ss:$8 sm:$0xf]
    %s1775 = scalar_lea.vmem [#allocation0], 897
    %v1776 = vld [vmem:[%s1775] ss:$8 sm:$0xf0]
    %vm1777 = vcmask 1047556
    %v1778 = vsel %vm1777, %v1776, %v1774
    %1779 = vrot.lane.b32.xlu0 %v1778, 64
    %v1780 = vpop.permute.xlu0 %1779
    %vm1781 = vcmask 1048064
    %s1782 = scalar_lea.vmem %s1, 112
    %1783 = vst.msk [vmem:[%s1782] sm:$0xff] %vm1781, %v1780
    %s1784 = scalar_lea.vmem [#allocation0], 1153
    %v1785 = vld [vmem:[%s1784] ss:$8 sm:$0xf]
    %s1786 = scalar_lea.vmem [#allocation0], 1153
    %v1787 = vld [vmem:[%s1786] ss:$8 sm:$0xf0]
    %vm1788 = vcmask 1047556
    %v1789 = vsel %vm1788, %v1787, %v1785
    %1790 = vrot.lane.b32.xlu0 %v1789, 64
    %v1791 = vpop.permute.xlu0 %1790
    %vm1792 = vcmask 1048064
    %s1793 = scalar_lea.vmem %s1, 144
    %1794 = vst.msk [vmem:[%s1793] sm:$0xff] %vm1792, %v1791
    %s1795 = scalar_lea.vmem [#allocation0], 1409
    %v1796 = vld [vmem:[%s1795] ss:$8 sm:$0xf]
    %s1797 = scalar_lea.vmem [#allocation0], 1409
    %v1798 = vld [vmem:[%s1797] ss:$8 sm:$0xf0]
    %vm1799 = vcmask 1047556
    %v1800 = vsel %vm1799, %v1798, %v1796
    %1801 = vrot.lane.b32.xlu0 %v1800, 64
    %v1802 = vpop.permute.xlu0 %1801
    %vm1803 = vcmask 1048064
    %s1804 = scalar_lea.vmem %s1, 176
    %1805 = vst.msk [vmem:[%s1804] sm:$0xff] %vm1803, %v1802
    %s1806 = scalar_lea.vmem [#allocation0], 1665
    %v1807 = vld [vmem:[%s1806] ss:$8 sm:$0xf]
    %s1808 = scalar_lea.vmem [#allocation0], 1665
    %v1809 = vld [vmem:[%s1808] ss:$8 sm:$0xf0]
    %vm1810 = vcmask 1047556
    %v1811 = vsel %vm1810, %v1809, %v1807
    %1812 = vrot.lane.b32.xlu0 %v1811, 64
    %v1813 = vpop.permute.xlu0 %1812
    %vm1814 = vcmask 1048064
    %s1815 = scalar_lea.vmem %s1, 208
    %1816 = vst.msk [vmem:[%s1815] sm:$0xff] %vm1814, %v1813
    %s1817 = scalar_lea.vmem [#allocation0], 1921
    %v1818 = vld [vmem:[%s1817] ss:$8 sm:$0xf]
    %s1819 = scalar_lea.vmem [#allocation0], 1921
    %v1820 = vld [vmem:[%s1819] ss:$8 sm:$0xf0]
    %vm1821 = vcmask 1047556
    %v1822 = vsel %vm1821, %v1820, %v1818
    %1823 = vrot.lane.b32.xlu0 %v1822, 64
    %v1824 = vpop.permute.xlu0 %1823
    %vm1825 = vcmask 1048064
    %s1826 = scalar_lea.vmem %s1, 240
    %1827 = vst.msk [vmem:[%s1826] sm:$0xff] %vm1825, %v1824
    %s1828 = scalar_lea.vmem [#allocation0], 193
    %v1829 = vld [vmem:[%s1828] ss:$8 sm:$0xf]
    %s1830 = scalar_lea.vmem [#allocation0], 193
    %v1831 = vld [vmem:[%s1830] ss:$8 sm:$0xf0]
    %vm1832 = vcmask 1047556
    %v1833 = vsel %vm1832, %v1831, %v1829
    %1834 = vrot.lane.b32.xlu0 %v1833, 64
    %v1835 = vpop.permute.xlu0 %1834
    %vm1836 = vcmask 1048064
    %s1837 = scalar_lea.vmem %s1, 24
    %1838 = vst.msk [vmem:[%s1837] sm:$0xff] %vm1836, %v1835
    %s1839 = scalar_lea.vmem [#allocation0], 449
    %v1840 = vld [vmem:[%s1839] ss:$8 sm:$0xf]
    %s1841 = scalar_lea.vmem [#allocation0], 449
    %v1842 = vld [vmem:[%s1841] ss:$8 sm:$0xf0]
    %vm1843 = vcmask 1047556
    %v1844 = vsel %vm1843, %v1842, %v1840
    %1845 = vrot.lane.b32.xlu0 %v1844, 64
    %v1846 = vpop.permute.xlu0 %1845
    %vm1847 = vcmask 1048064
    %s1848 = scalar_lea.vmem %s1, 56
    %1849 = vst.msk [vmem:[%s1848] sm:$0xff] %vm1847, %v1846
    %s1850 = scalar_lea.vmem [#allocation0], 705
    %v1851 = vld [vmem:[%s1850] ss:$8 sm:$0xf]
    %s1852 = scalar_lea.vmem [#allocation0], 705
    %v1853 = vld [vmem:[%s1852] ss:$8 sm:$0xf0]
    %vm1854 = vcmask 1047556
    %v1855 = vsel %vm1854, %v1853, %v1851
    %1856 = vrot.lane.b32.xlu0 %v1855, 64
    %v1857 = vpop.permute.xlu0 %1856
    %vm1858 = vcmask 1048064
    %s1859 = scalar_lea.vmem %s1, 88
    %1860 = vst.msk [vmem:[%s1859] sm:$0xff] %vm1858, %v1857
    %s1861 = scalar_lea.vmem [#allocation0], 961
    %v1862 = vld [vmem:[%s1861] ss:$8 sm:$0xf]
    %s1863 = scalar_lea.vmem [#allocation0], 961
    %v1864 = vld [vmem:[%s1863] ss:$8 sm:$0xf0]
    %vm1865 = vcmask 1047556
    %v1866 = vsel %vm1865, %v1864, %v1862
    %1867 = vrot.lane.b32.xlu0 %v1866, 64
    %v1868 = vpop.permute.xlu0 %1867
    %vm1869 = vcmask 1048064
    %s1870 = scalar_lea.vmem %s1, 120
    %1871 = vst.msk [vmem:[%s1870] sm:$0xff] %vm1869, %v1868
    %s1872 = scalar_lea.vmem [#allocation0], 1217
    %v1873 = vld [vmem:[%s1872] ss:$8 sm:$0xf]
    %s1874 = scalar_lea.vmem [#allocation0], 1217
    %v1875 = vld [vmem:[%s1874] ss:$8 sm:$0xf0]
    %vm1876 = vcmask 1047556
    %v1877 = vsel %vm1876, %v1875, %v1873
    %1878 = vrot.lane.b32.xlu0 %v1877, 64
    %v1879 = vpop.permute.xlu0 %1878
    %vm1880 = vcmask 1048064
    %s1881 = scalar_lea.vmem %s1, 152
    %1882 = vst.msk [vmem:[%s1881] sm:$0xff] %vm1880, %v1879
    %s1883 = scalar_lea.vmem [#allocation0], 1473
    %v1884 = vld [vmem:[%s1883] ss:$8 sm:$0xf]
    %s1885 = scalar_lea.vmem [#allocation0], 1473
    %v1886 = vld [vmem:[%s1885] ss:$8 sm:$0xf0]
    %vm1887 = vcmask 1047556
    %v1888 = vsel %vm1887, %v1886, %v1884
    %1889 = vrot.lane.b32.xlu0 %v1888, 64
    %v1890 = vpop.permute.xlu0 %1889
    %vm1891 = vcmask 1048064
    %s1892 = scalar_lea.vmem %s1, 184
    %1893 = vst.msk [vmem:[%s1892] sm:$0xff] %vm1891, %v1890
    %s1894 = scalar_lea.vmem [#allocation0], 1729
    %v1895 = vld [vmem:[%s1894] ss:$8 sm:$0xf]
    %s1896 = scalar_lea.vmem [#allocation0], 1729
    %v1897 = vld [vmem:[%s1896] ss:$8 sm:$0xf0]
    %vm1898 = vcmask 1047556
    %v1899 = vsel %vm1898, %v1897, %v1895
    %1900 = vrot.lane.b32.xlu0 %v1899, 64
    %v1901 = vpop.permute.xlu0 %1900
    %vm1902 = vcmask 1048064
    %s1903 = scalar_lea.vmem %s1, 216
    %1904 = vst.msk [vmem:[%s1903] sm:$0xff] %vm1902, %v1901
    %s1905 = scalar_lea.vmem [#allocation0], 1985
    %v1906 = vld [vmem:[%s1905] ss:$8 sm:$0xf]
    %s1907 = scalar_lea.vmem [#allocation0], 1985
    %v1908 = vld [vmem:[%s1907] ss:$8 sm:$0xf0]
    %vm1909 = vcmask 1047556
    %v1910 = vsel %vm1909, %v1908, %v1906
    %1911 = vrot.lane.b32.xlu0 %v1910, 64
    %v1912 = vpop.permute.xlu0 %1911
    %vm1913 = vcmask 1048064
    %s1914 = scalar_lea.vmem %s1, 248
    %1915 = vst.msk [vmem:[%s1914] sm:$0xff] %vm1913, %v1912

// kernel: basic_layer_forward.1
$region0: #{basic_layer_forward.1}
  #allocation0 [shape = 'u32[]', space=smem, size = 0x4, offset = 0x4, fixed_abs, tag = 'smem constant byte address 0x4 - core index']
  #allocation1 [shape = 'u32[144,128]{1,0:T(1,128)}', space=vmem, size = 0x12000, scoped, tag = 'internal scratch']
  %s0 = inlined_call_operand.vmem [shape: f32[128,32], index: 0, kind: input, shape index: {}]
  %s1 = inlined_call_operand.vmem [shape: f32[2,1,32], index: 1, kind: input, shape index: {}]
  %s2 = inlined_call_operand.vmem [shape: f32[2,1,32], index: 2, kind: input, shape index: {}]
  %s3 = inlined_call_operand.vmem [shape: bf16[2,32,96], index: 3, kind: input, shape index: {}]
  %s4 = inlined_call_operand.vmem [shape: f32[2,1,96], index: 4, kind: input, shape index: {}]
  %s5 = inlined_call_operand.vmem [shape: bf16[4,16,32], index: 5, kind: input, shape index: {}]
  %s6 = inlined_call_operand.vmem [shape: f32[2,1,32], index: 6, kind: input, shape index: {}]
  %s7 = inlined_call_operand.vmem [shape: f32[4,128,128], index: 7, kind: input, shape index: {}]
  %s8 = inlined_call_operand.vmem [shape: f32[2,1,32], index: 8, kind: input, shape index: {}]
  %s9 = inlined_call_operand.vmem [shape: f32[2,1,32], index: 9, kind: input, shape index: {}]
  %s10 = inlined_call_operand.vmem [shape: bf16[2,32,128], index: 10, kind: input, shape index: {}]
  %s11 = inlined_call_operand.vmem [shape: f32[2,1,128], index: 11, kind: input, shape index: {}]
  %s12 = inlined_call_operand.vmem [shape: bf16[2,128,32], index: 12, kind: input, shape index: {}]
  %s13 = inlined_call_operand.vmem [shape: f32[2,1,32], index: 13, kind: input, shape index: {}]
  %s14 = inlined_call_operand.vmem [shape: f32[128,32], index: 14, kind: output, shape index: {}]
  %s15 = sld [smem:[#allocation0]]
  $region66: #{basic_layer_forward.1} parent=0
    _
  %s17 = ssub.s32 1, %s15
  %s18 = scalar_select 0, %s17, %s15
  // Predicated region
  $region2: #{basic_layer_forward.1} parent=0 // pred_check
    _
  $region3: #{basic_layer_forward.1} parent=0 // pred_check_branch
    %20 = sbr.rel (0) target = $region5
  $region4: #{basic_layer_forward.1} parent=0 // pred_region
    _
  $region5: #{basic_layer_forward.1} parent=0 // pred_fallthru
    _
  // Predicated region
  $region6: #{basic_layer_forward.1} parent=0 // pred_check
    _
  $region7: #{basic_layer_forward.1} parent=0 // pred_check_branch
    %22 = sbr.rel (0) target = $region9
  $region8: #{basic_layer_forward.1} parent=0 // pred_region
    _
  $region9: #{basic_layer_forward.1} parent=0 // pred_fallthru
    _
  // Predicated region
  $region10: #{basic_layer_forward.1} parent=0 // pred_check
    _
  $region11: #{basic_layer_forward.1} parent=0 // pred_check_branch
    %24 = sbr.rel (0) target = $region13
  $region12: #{basic_layer_forward.1} parent=0 // pred_region
    _
  $region13: #{basic_layer_forward.1} parent=0 // pred_fallthru
    _
  // Predicated region
  $region14: #{basic_layer_forward.1} parent=0 // pred_check
    _
  $region15: #{basic_layer_forward.1} parent=0 // pred_check_branch
    %26 = sbr.rel (0) target = $region17
  $region16: #{basic_layer_forward.1} parent=0 // pred_region
    _
  $region17: #{basic_layer_forward.1} parent=0 // pred_fallthru
    _
  // Predicated region
  $region18: #{basic_layer_forward.1} parent=0 // pred_check
    _
  $region19: #{basic_layer_forward.1} parent=0 // pred_check_branch
    %28 = sbr.rel (0) target = $region21
  $region20: #{basic_layer_forward.1} parent=0 // pred_region
    _
  $region21: #{basic_layer_forward.1} parent=0 // pred_fallthru
    _
  // Predicated region
  $region22: #{basic_layer_forward.1} parent=0 // pred_check
    _
  $region23: #{basic_layer_forward.1} parent=0 // pred_check_branch
    %30 = sbr.rel (0) target = $region25
  $region24: #{basic_layer_forward.1} parent=0 // pred_region
    _
  $region25: #{basic_layer_forward.1} parent=0 // pred_fallthru
    _
  // Predicated region
  $region26: #{basic_layer_forward.1} parent=0 // pred_check
    _
  $region27: #{basic_layer_forward.1} parent=0 // pred_check_branch
    %32 = sbr.rel (0) target = $region29
  $region28: #{basic_layer_forward.1} parent=0 // pred_region
    _
  $region29: #{basic_layer_forward.1} parent=0 // pred_fallthru
    _
  // Predicated region
  $region30: #{basic_layer_forward.1} parent=0 // pred_check
    _
  $region31: #{basic_layer_forward.1} parent=0 // pred_check_branch
    %34 = sbr.rel (0) target = $region33
  $region32: #{basic_layer_forward.1} parent=0 // pred_region
    _
  $region33: #{basic_layer_forward.1} parent=0 // pred_fallthru
    _
  // Predicated region
  $region34: #{basic_layer_forward.1} parent=0 // pred_check
    _
  $region35: #{basic_layer_forward.1} parent=0 // pred_check_branch
    %36 = sbr.rel (0) target = $region37
  $region36: #{basic_layer_forward.1} parent=0 // pred_region
    _
  $region37: #{basic_layer_forward.1} parent=0 // pred_fallthru
    _
  // Predicated region
  $region38: #{basic_layer_forward.1} parent=0 // pred_check
    _
  $region39: #{basic_layer_forward.1} parent=0 // pred_check_branch
    %38 = sbr.rel (0) target = $region41
  $region40: #{basic_layer_forward.1} parent=0 // pred_region
    _
  $region41: #{basic_layer_forward.1} parent=0 // pred_fallthru
    _
  // Predicated region
  $region42: #{basic_layer_forward.1} parent=0 // pred_check
    _
  $region43: #{basic_layer_forward.1} parent=0 // pred_check_branch
    %40 = sbr.rel (0) target = $region45
  $region44: #{basic_layer_forward.1} parent=0 // pred_region
    _
  $region45: #{basic_layer_forward.1} parent=0 // pred_fallthru
    _
  // Predicated region
  $region46: #{basic_layer_forward.1} parent=0 // pred_check
    _
  $region47: #{basic_layer_forward.1} parent=0 // pred_check_branch
    %42 = sbr.rel (0) target = $region49
  $region48: #{basic_layer_forward.1} parent=0 // pred_region
    _
  $region49: #{basic_layer_forward.1} parent=0 // pred_fallthru
    _
  // Predicated region
  $region50: #{basic_layer_forward.1} parent=0 // pred_check
    _
  $region51: #{basic_layer_forward.1} parent=0 // pred_check_branch
    %44 = sbr.rel (0) target = $region53
  $region52: #{basic_layer_forward.1} parent=0 // pred_region
    _
  $region53: #{basic_layer_forward.1} parent=0 // pred_fallthru
    _
  // Predicated region
  $region54: #{basic_layer_forward.1} parent=0 // pred_check
    _
  $region55: #{basic_layer_forward.1} parent=0 // pred_check_branch
    %46 = sbr.rel (0) target = $region57
  $region56: #{basic_layer_forward.1} parent=0 // pred_region
    _
  $region57: #{basic_layer_forward.1} parent=0 // pred_fallthru
    _
  %v48 = vld [vmem:[%s0] sm:$0xff]
  %v49 = vld [vmem:[%s0 + $0x8] sm:$0xff]
  %v50 = vld [vmem:[%s0 + $0x10] sm:$0xff]
  %v51 = vld [vmem:[%s0 + $0x18] sm:$0xff]
  %v52 = vld [vmem:[%s0 + $0x20] sm:$0xff]
  %v53 = vld [vmem:[%s0 + $0x28] sm:$0xff]
  %v54 = vld [vmem:[%s0 + $0x30] sm:$0xff]
  %v55 = vld [vmem:[%s0 + $0x38] sm:$0xff]
  %v56 = vld [vmem:[%s0 + $0x40] sm:$0xff]
  %v57 = vld [vmem:[%s0 + $0x48] sm:$0xff]
  %v58 = vld [vmem:[%s0 + $0x50] sm:$0xff]
  %v59 = vld [vmem:[%s0 + $0x58] sm:$0xff]
  %v60 = vld [vmem:[%s0 + $0x60] sm:$0xff]
  %v61 = vld [vmem:[%s0 + $0x68] sm:$0xff]
  %v62 = vld [vmem:[%s0 + $0x70] sm:$0xff]
  %v63 = vld [vmem:[%s0 + $0x78] sm:$0xff]
  %vm64 = vcmask 261120
  %v65 = vsel %vm64, %v48, 0.0
  %66 = vadd.xlane.f32.xlu0 %v65
  %v67 = vpop.xlane.xlu0 %66
  %v68 = vsel %vm64, %v49, 0.0
  %69 = vadd.xlane.f32.xlu0 %v68
  %v70 = vpop.xlane.xlu0 %69
  %v71 = vsel %vm64, %v50, 0.0
  %72 = vadd.xlane.f32.xlu0 %v71
  %v73 = vpop.xlane.xlu0 %72
  %v74 = vsel %vm64, %v51, 0.0
  %75 = vadd.xlane.f32.xlu0 %v74
  %v76 = vpop.xlane.xlu0 %75
  %v77 = vsel %vm64, %v52, 0.0
  %78 = vadd.xlane.f32.xlu0 %v77
  %v79 = vpop.xlane.xlu0 %78
  %v80 = vsel %vm64, %v53, 0.0
  %81 = vadd.xlane.f32.xlu0 %v80
  %v82 = vpop.xlane.xlu0 %81
  %v83 = vsel %vm64, %v54, 0.0
  %84 = vadd.xlane.f32.xlu0 %v83
  %v85 = vpop.xlane.xlu0 %84
  %v86 = vsel %vm64, %v55, 0.0
  %87 = vadd.xlane.f32.xlu0 %v86
  %v88 = vpop.xlane.xlu0 %87
  %v89 = vsel %vm64, %v56, 0.0
  %90 = vadd.xlane.f32.xlu0 %v89
  %v91 = vpop.xlane.xlu0 %90
  %v92 = vsel %vm64, %v57, 0.0
  %93 = vadd.xlane.f32.xlu0 %v92
  %v94 = vpop.xlane.xlu0 %93
  %v95 = vsel %vm64, %v58, 0.0
  %96 = vadd.xlane.f32.xlu0 %v95
  %v97 = vpop.xlane.xlu0 %96
  %v98 = vsel %vm64, %v59, 0.0
  %99 = vadd.xlane.f32.xlu0 %v98
  %v100 = vpop.xlane.xlu0 %99
  %v101 = vsel %vm64, %v60, 0.0
  %102 = vadd.xlane.f32.xlu0 %v101
  %v103 = vpop.xlane.xlu0 %102
  %v104 = vsel %vm64, %v61, 0.0
  %105 = vadd.xlane.f32.xlu0 %v104
  %v106 = vpop.xlane.xlu0 %105
  %v107 = vsel %vm64, %v62, 0.0
  %108 = vadd.xlane.f32.xlu0 %v107
  %v109 = vpop.xlane.xlu0 %108
  %v110 = vsel %vm64, %v63, 0.0
  %111 = vadd.xlane.f32.xlu0 %v110
  %v112 = vpop.xlane.xlu0 %111
  %v113 = vrcp.pop 32.0
  %v114 = vmul.f32 %v67, %v113
  %v115 = vmul.f32 %v70, %v113
  %v116 = vmul.f32 %v73, %v113
  %v117 = vmul.f32 %v76, %v113
  %v118 = vmul.f32 %v79, %v113
  %v119 = vmul.f32 %v82, %v113
  %v120 = vmul.f32 %v85, %v113
  %v121 = vmul.f32 %v88, %v113
  %v122 = vmul.f32 %v91, %v113
  %v123 = vmul.f32 %v94, %v113
  %v124 = vmul.f32 %v97, %v113
  %v125 = vmul.f32 %v100, %v113
  %v126 = vmul.f32 %v103, %v113
  %v127 = vmul.f32 %v106, %v113
  %v128 = vmul.f32 %v109, %v113
  %v129 = vmul.f32 %v112, %v113
  %v130 = vmul.f32 %v48, %v48
  %v131 = vmul.f32 %v49, %v49
  %v132 = vmul.f32 %v50, %v50
  %v133 = vmul.f32 %v51, %v51
  %v134 = vmul.f32 %v52, %v52
  %v135 = vmul.f32 %v53, %v53
  %v136 = vmul.f32 %v54, %v54
  %v137 = vmul.f32 %v55, %v55
  %v138 = vmul.f32 %v56, %v56
  %v139 = vmul.f32 %v57, %v57
  %v140 = vmul.f32 %v58, %v58
  %v141 = vmul.f32 %v59, %v59
  %v142 = vmul.f32 %v60, %v60
  %v143 = vmul.f32 %v61, %v61
  %v144 = vmul.f32 %v62, %v62
  %v145 = vmul.f32 %v63, %v63
  %v146 = vsel %vm64, %v130, 0.0
  %147 = vadd.xlane.f32.xlu0 %v146
  %v148 = vpop.xlane.xlu0 %147
  %v149 = vsel %vm64, %v131, 0.0
  %150 = vadd.xlane.f32.xlu0 %v149
  %v151 = vpop.xlane.xlu0 %150
  %v152 = vsel %vm64, %v132, 0.0
  %153 = vadd.xlane.f32.xlu0 %v152
  %v154 = vpop.xlane.xlu0 %153
  %v155 = vsel %vm64, %v133, 0.0
  %156 = vadd.xlane.f32.xlu0 %v155
  %v157 = vpop.xlane.xlu0 %156
  %v158 = vsel %vm64, %v134, 0.0
  %159 = vadd.xlane.f32.xlu0 %v158
  %v160 = vpop.xlane.xlu0 %159
  %v161 = vsel %vm64, %v135, 0.0
  %162 = vadd.xlane.f32.xlu0 %v161
  %v163 = vpop.xlane.xlu0 %162
  %v164 = vsel %vm64, %v136, 0.0
  %165 = vadd.xlane.f32.xlu0 %v164
  %v166 = vpop.xlane.xlu0 %165
  %v167 = vsel %vm64, %v137, 0.0
  %168 = vadd.xlane.f32.xlu0 %v167
  %v169 = vpop.xlane.xlu0 %168
  %v170 = vsel %vm64, %v138, 0.0
  %171 = vadd.xlane.f32.xlu0 %v170
  %v172 = vpop.xlane.xlu0 %171
  %v173 = vsel %vm64, %v139, 0.0
  %174 = vadd.xlane.f32.xlu0 %v173
  %v175 = vpop.xlane.xlu0 %174
  %v176 = vsel %vm64, %v140, 0.0
  %177 = vadd.xlane.f32.xlu0 %v176
  %v178 = vpop.xlane.xlu0 %177
  %v179 = vsel %vm64, %v141, 0.0
  %180 = vadd.xlane.f32.xlu0 %v179
  %v181 = vpop.xlane.xlu0 %180
  %v182 = vsel %vm64, %v142, 0.0
  %183 = vadd.xlane.f32.xlu0 %v182
  %v184 = vpop.xlane.xlu0 %183
  %v185 = vsel %vm64, %v143, 0.0
  %186 = vadd.xlane.f32.xlu0 %v185
  %v187 = vpop.xlane.xlu0 %186
  %v188 = vsel %vm64, %v144, 0.0
  %189 = vadd.xlane.f32.xlu0 %v188
  %v190 = vpop.xlane.xlu0 %189
  %v191 = vsel %vm64, %v145, 0.0
  %192 = vadd.xlane.f32.xlu0 %v191
  %v193 = vpop.xlane.xlu0 %192
  %v194 = vmul.f32 %v148, %v113
  %v195 = vmul.f32 %v151, %v113
  %v196 = vmul.f32 %v154, %v113
  %v197 = vmul.f32 %v157, %v113
  %v198 = vmul.f32 %v160, %v113
  %v199 = vmul.f32 %v163, %v113
  %v200 = vmul.f32 %v166, %v113
  %v201 = vmul.f32 %v169, %v113
  %v202 = vmul.f32 %v172, %v113
  %v203 = vmul.f32 %v175, %v113
  %v204 = vmul.f32 %v178, %v113
  %v205 = vmul.f32 %v181, %v113
  %v206 = vmul.f32 %v184, %v113
  %v207 = vmul.f32 %v187, %v113
  %v208 = vmul.f32 %v190, %v113
  %v209 = vmul.f32 %v193, %v113
  %v210 = vsub.f32 %v48, %v114
  %v211 = vsub.f32 %v49, %v115
  %v212 = vsub.f32 %v50, %v116
  %v213 = vsub.f32 %v51, %v117
  %v214 = vsub.f32 %v52, %v118
  %v215 = vsub.f32 %v53, %v119
  %v216 = vsub.f32 %v54, %v120
  %v217 = vsub.f32 %v55, %v121
  %v218 = vsub.f32 %v56, %v122
  %v219 = vsub.f32 %v57, %v123
  %v220 = vsub.f32 %v58, %v124
  %v221 = vsub.f32 %v59, %v125
  %v222 = vsub.f32 %v60, %v126
  %v223 = vsub.f32 %v61, %v127
  %v224 = vsub.f32 %v62, %v128
  %v225 = vsub.f32 %v63, %v129
  %v226 = vmul.f32 %v114, %v114
  %v227 = vmul.f32 %v115, %v115
  %v228 = vmul.f32 %v116, %v116
  %v229 = vmul.f32 %v117, %v117
  %v230 = vmul.f32 %v118, %v118
  %v231 = vmul.f32 %v119, %v119
  %v232 = vmul.f32 %v120, %v120
  %v233 = vmul.f32 %v121, %v121
  %v234 = vmul.f32 %v122, %v122
  %v235 = vmul.f32 %v123, %v123
  %v236 = vmul.f32 %v124, %v124
  %v237 = vmul.f32 %v125, %v125
  %v238 = vmul.f32 %v126, %v126
  %v239 = vmul.f32 %v127, %v127
  %v240 = vmul.f32 %v128, %v128
  %v241 = vmul.f32 %v129, %v129
  %v242 = vsub.f32 %v194, %v226
  %v243 = vsub.f32 %v195, %v227
  %v244 = vsub.f32 %v196, %v228
  %v245 = vsub.f32 %v197, %v229
  %v246 = vsub.f32 %v198, %v230
  %v247 = vsub.f32 %v199, %v231
  %v248 = vsub.f32 %v200, %v232
  %v249 = vsub.f32 %v201, %v233
  %v250 = vsub.f32 %v202, %v234
  %v251 = vsub.f32 %v203, %v235
  %v252 = vsub.f32 %v204, %v236
  %v253 = vsub.f32 %v205, %v237
  %v254 = vsub.f32 %v206, %v238
  %v255 = vsub.f32 %v207, %v239
  %v256 = vsub.f32 %v208, %v240
  %v257 = vsub.f32 %v209, %v241
  %v258 = vadd.f32 %v242, 1e-05
  %v259 = vadd.f32 %v243, 1e-05
  %v260 = vadd.f32 %v244, 1e-05
  %v261 = vadd.f32 %v245, 1e-05
  %v262 = vadd.f32 %v246, 1e-05
  %v263 = vadd.f32 %v247, 1e-05
  %v264 = vadd.f32 %v248, 1e-05
  %v265 = vadd.f32 %v249, 1e-05
  %v266 = vadd.f32 %v250, 1e-05
  %v267 = vadd.f32 %v251, 1e-05
  %v268 = vadd.f32 %v252, 1e-05
  %v269 = vadd.f32 %v253, 1e-05
  %v270 = vadd.f32 %v254, 1e-05
  %v271 = vadd.f32 %v255, 1e-05
  %v272 = vadd.f32 %v256, 1e-05
  %v273 = vadd.f32 %v257, 1e-05
  %v274 = vrsqrt.pop %v258
  %v275 = vrsqrt.pop %v259
  %v276 = vrsqrt.pop %v260
  %v277 = vrsqrt.pop %v261
  %v278 = vrsqrt.pop %v262
  %v279 = vrsqrt.pop %v263
  %v280 = vrsqrt.pop %v264
  %v281 = vrsqrt.pop %v265
  %v282 = vrsqrt.pop %v266
  %v283 = vrsqrt.pop %v267
  %v284 = vrsqrt.pop %v268
  %v285 = vrsqrt.pop %v269
  %v286 = vrsqrt.pop %v270
  %v287 = vrsqrt.pop %v271
  %v288 = vrsqrt.pop %v272
  %v289 = vrsqrt.pop %v273
  %v290 = vmul.f32 %v210, %v274
  %v291 = vmul.f32 %v211, %v275
  %v292 = vmul.f32 %v212, %v276
  %v293 = vmul.f32 %v213, %v277
  %v294 = vmul.f32 %v214, %v278
  %v295 = vmul.f32 %v215, %v279
  %v296 = vmul.f32 %v216, %v280
  %v297 = vmul.f32 %v217, %v281
  %v298 = vmul.f32 %v218, %v282
  %v299 = vmul.f32 %v219, %v283
  %v300 = vmul.f32 %v220, %v284
  %v301 = vmul.f32 %v221, %v285
  %v302 = vmul.f32 %v222, %v286
  %v303 = vmul.f32 %v223, %v287
  %v304 = vmul.f32 %v224, %v288
  %v305 = vmul.f32 %v225, %v289
  %v306 = vld [vmem:[%s1] sm:$0x1]
  %v308 = vlaneseq
  %v309 = vshrl.u32 %v308, 7
  %v310 = vsub.s32 0, %v309
  %v311 = vrot.slane %v306, %v310
  %v313 = vmul.f32 %v290, %v311
  %v314 = vmul.f32 %v291, %v311
  %v315 = vmul.f32 %v292, %v311
  %v316 = vmul.f32 %v293, %v311
  %v317 = vmul.f32 %v294, %v311
  %v318 = vmul.f32 %v295, %v311
  %v319 = vmul.f32 %v296, %v311
  %v320 = vmul.f32 %v297, %v311
  %v321 = vmul.f32 %v298, %v311
  %v322 = vmul.f32 %v299, %v311
  %v323 = vmul.f32 %v300, %v311
  %v324 = vmul.f32 %v301, %v311
  %v325 = vmul.f32 %v302, %v311
  %v326 = vmul.f32 %v303, %v311
  %v327 = vmul.f32 %v304, %v311
  %v328 = vmul.f32 %v305, %v311
  %v329 = vld [vmem:[%s2] sm:$0x1]
  %v331 = vlaneseq
  %v332 = vshrl.u32 %v331, 7
  %v333 = vsub.s32 0, %v332
  %v334 = vrot.slane %v329, %v333
  %v336 = vadd.f32 %v313, %v334
  %v337 = vadd.f32 %v314, %v334
  %v338 = vadd.f32 %v315, %v334
  %v339 = vadd.f32 %v316, %v334
  %v340 = vadd.f32 %v317, %v334
  %v341 = vadd.f32 %v318, %v334
  %v342 = vadd.f32 %v319, %v334
  %v343 = vadd.f32 %v320, %v334
  %v344 = vadd.f32 %v321, %v334
  %v345 = vadd.f32 %v322, %v334
  %v346 = vadd.f32 %v323, %v334
  %v347 = vadd.f32 %v324, %v334
  %v348 = vadd.f32 %v325, %v334
  %v349 = vadd.f32 %v326, %v334
  %v350 = vadd.f32 %v327, %v334
  %v351 = vadd.f32 %v328, %v334
  %v352 = vpack.c.bf16 %v337, %v336
  %v353 = vpack.c.bf16 %v339, %v338
  %v354 = vpack.c.bf16 %v341, %v340
  %v355 = vpack.c.bf16 %v343, %v342
  %v356 = vpack.c.bf16 %v345, %v344
  %v357 = vpack.c.bf16 %v347, %v346
  %v358 = vpack.c.bf16 %v349, %v348
  %v359 = vpack.c.bf16 %v351, %v350
  %v360 = vld [vmem:[%s3] sm:$0xf]
  %v361 = vld [vmem:[%s3 + $0x4] sm:$0xf]
  %v362 = vld [vmem:[%s3 + $0x8] sm:$0xf]
  %v363 = vld [vmem:[%s3 + $0xc] sm:$0xf]
  %v364 = vld [vmem:[%s4] sm:$0x1]
  %v366 = vlaneseq
  %v367 = vshrl.u32 %v366, 7
  %v368 = vsub.s32 0, %v367
  %v369 = vrot.slane %v364, %v368
  %v375 = vunpack.c.l.b16 %v360
  %v376 = vunpack.c.l.b16 %v361
  %v377 = vunpack.c.l.b16 %v362
  %v378 = vunpack.c.l.b16 %v363
  %v379 = vpack.c.b16 %v376, %v375
  %v380 = vpack.c.b16 %v378, %v377
  %v384 = vsel %vm64, %v352, 0
  %v387 = vsel %vm64, %v353, 0
  %v390 = vsel %vm64, %v354, 0
  %v393 = vsel %vm64, %v355, 0
  %v396 = vsel %vm64, %v356, 0
  %v399 = vsel %vm64, %v357, 0
  %v402 = vsel %vm64, %v358, 0
  %v405 = vsel %vm64, %v359, 0
  %407 = vmatprep.subr.bf16.mxu0 0
  %408 = vmatpush1.bf16.msra.mxu0 %v379
  %409 = vmatprep.subr.bf16.mxu0 0
  %410 = vmatpush1.bf16.msra.mxu0 %v380
  %411 = vmatprep.subr.bf16.mxu0 0
  %412 = vmatpush1.bf16.msra.mxu0 0
  %413 = vmatprep.subr.bf16.mxu0 0
  %414 = vmatpush1.bf16.msra.mxu0 0
  %415 = vmatprep.subr.bf16.mxu0 0
  %416 = vmatpush1.bf16.msra.mxu0 0
  %417 = vmatprep.subr.bf16.mxu0 0
  %418 = vmatpush1.bf16.msra.mxu0 0
  %419 = vmatprep.subr.bf16.mxu0 0
  %420 = vmatpush1.bf16.msra.mxu0 0
  %421 = vmatprep.subr.bf16.mxu0 0
  %422 = vmatpush1.bf16.msra.mxu0 0
  %423 = vmatprep.subr.bf16.mxu0 0
  %424 = vmatpush1.bf16.msra.mxu0 0
  %425 = vmatprep.subr.bf16.mxu0 0
  %426 = vmatpush1.bf16.msra.mxu0 0
  %427 = vmatprep.subr.bf16.mxu0 0
  %428 = vmatpush1.bf16.msra.mxu0 0
  %429 = vmatprep.subr.bf16.mxu0 0
  %430 = vmatpush1.bf16.msra.mxu0 0
  %431 = vmatprep.subr.bf16.mxu0 0
  %432 = vmatpush1.bf16.msra.mxu0 0
  %433 = vmatprep.subr.bf16.mxu0 0
  %434 = vmatpush1.bf16.msra.mxu0 0
  %435 = vmatprep.subr.bf16.mxu0 0
  %436 = vmatpush1.bf16.msra.mxu0 0
  %437 = vmatprep.subr.bf16.mxu0 0
  %438 = vmatpush1.bf16.msra.mxu0 0
  %439 = vmatprep.mubr.bf16.mxu0 0
  %440 = vmatmul.mubr.bf16.gmra.mrb[0].mxu0 %v384
  %v441 = vpop.f32.mrb[0].mxu0
  %v442 = vadd.f32 %v369, %v441
  %v443 = vpop.f32.mrb[0].mxu0
  %v444 = vpop.f32.mrb[0].mxu0
  %v445 = vadd.f32 %v369, %v444
  %v446 = vpop.f32.mrb[0].mxu0
  %447 = vmatprep.mubr.bf16.mxu0 0
  %448 = vmatmul.mubr.bf16.gmra.mrb[0].mxu0 %v387
  %v449 = vpop.f32.mrb[0].mxu0
  %v450 = vadd.f32 %v369, %v449
  %v451 = vpop.f32.mrb[0].mxu0
  %v452 = vpop.f32.mrb[0].mxu0
  %v453 = vadd.f32 %v369, %v452
  %v454 = vpop.f32.mrb[0].mxu0
  %455 = vmatprep.mubr.bf16.mxu0 0
  %456 = vmatmul.mubr.bf16.gmra.mrb[0].mxu0 %v390
  %v457 = vpop.f32.mrb[0].mxu0
  %v458 = vadd.f32 %v369, %v457
  %v459 = vpop.f32.mrb[0].mxu0
  %v460 = vpop.f32.mrb[0].mxu0
  %v461 = vadd.f32 %v369, %v460
  %v462 = vpop.f32.mrb[0].mxu0
  %463 = vmatprep.mubr.bf16.mxu0 0
  %464 = vmatmul.mubr.bf16.gmra.mrb[0].mxu0 %v393
  %v465 = vpop.f32.mrb[0].mxu0
  %v466 = vadd.f32 %v369, %v465
  %v467 = vpop.f32.mrb[0].mxu0
  %v468 = vpop.f32.mrb[0].mxu0
  %v469 = vadd.f32 %v369, %v468
  %v470 = vpop.f32.mrb[0].mxu0
  %471 = vmatprep.mubr.bf16.mxu0 0
  %472 = vmatmul.mubr.bf16.gmra.mrb[0].mxu0 %v396
  %v473 = vpop.f32.mrb[0].mxu0
  %v474 = vadd.f32 %v369, %v473
  %v475 = vpop.f32.mrb[0].mxu0
  %v476 = vpop.f32.mrb[0].mxu0
  %v477 = vadd.f32 %v369, %v476
  %v478 = vpop.f32.mrb[0].mxu0
  %479 = vmatprep.mubr.bf16.mxu0 0
  %480 = vmatmul.mubr.bf16.gmra.mrb[0].mxu0 %v399
  %v481 = vpop.f32.mrb[0].mxu0
  %v482 = vadd.f32 %v369, %v481
  %v483 = vpop.f32.mrb[0].mxu0
  %v484 = vpop.f32.mrb[0].mxu0
  %v485 = vadd.f32 %v369, %v484
  %v486 = vpop.f32.mrb[0].mxu0
  %487 = vmatprep.mubr.bf16.mxu0 0
  %488 = vmatmul.mubr.bf16.gmra.mrb[0].mxu0 %v402
  %v489 = vpop.f32.mrb[0].mxu0
  %v490 = vadd.f32 %v369, %v489
  %v491 = vpop.f32.mrb[0].mxu0
  %v492 = vpop.f32.mrb[0].mxu0
  %v493 = vadd.f32 %v369, %v492
  %v494 = vpop.f32.mrb[0].mxu0
  %495 = vmatprep.mubr.bf16.mxu0 0
  %496 = vmatmul.mubr.bf16.gmra.mrb[0].mxu0 %v405
  %v497 = vpop.f32.mrb[0].mxu0
  %v498 = vadd.f32 %v369, %v497
  %v499 = vpop.f32.mrb[0].mxu0
  %v500 = vpop.f32.mrb[0].mxu0
  %v501 = vadd.f32 %v369, %v500
  %v502 = vpop.f32.mrb[0].mxu0
  %503 = vdwg.mxu0
  %v504 = vpack.c.bf16 %v445, %v442
  %v505 = vpack.c.bf16 %v453, %v450
  %v506 = vpack.c.bf16 %v461, %v458
  %v507 = vpack.c.bf16 %v469, %v466
  %v508 = vpack.c.bf16 %v477, %v474
  %v509 = vpack.c.bf16 %v485, %v482
  %v510 = vpack.c.bf16 %v493, %v490
  %v511 = vpack.c.bf16 %v501, %v498
  %520 = vrot.lane.b32.xlu0 %v504, 96
  %v521 = vpop.permute.xlu0 %520
  %522 = vrot.lane.b32.xlu0 %v505, 96
  %v523 = vpop.permute.xlu0 %522
  %524 = vrot.lane.b32.xlu0 %v506, 96
  %v525 = vpop.permute.xlu0 %524
  %526 = vrot.lane.b32.xlu0 %v507, 96
  %v527 = vpop.permute.xlu0 %526
  %528 = vrot.lane.b32.xlu0 %v508, 96
  %v529 = vpop.permute.xlu0 %528
  %530 = vrot.lane.b32.xlu0 %v509, 96
  %v531 = vpop.permute.xlu0 %530
  %532 = vrot.lane.b32.xlu0 %v510, 96
  %v533 = vpop.permute.xlu0 %532
  %534 = vrot.lane.b32.xlu0 %v511, 96
  %v535 = vpop.permute.xlu0 %534
  %vm536 = vcmask 130048
  %v538 = vsel %vm536, %v504, 0
  %v541 = vsel %vm536, %v505, 0
  %v544 = vsel %vm536, %v506, 0
  %v547 = vsel %vm536, %v507, 0
  %v550 = vsel %vm536, %v508, 0
  %v553 = vsel %vm536, %v509, 0
  %v556 = vsel %vm536, %v510, 0
  %v559 = vsel %vm536, %v511, 0
  %v562 = vsel %vm536, %v521, 0
  %v565 = vsel %vm536, %v523, 0
  %v568 = vsel %vm536, %v525, 0
  %v571 = vsel %vm536, %v527, 0
  %v574 = vsel %vm536, %v529, 0
  %v577 = vsel %vm536, %v531, 0
  %v580 = vsel %vm536, %v533, 0
  %v583 = vsel %vm536, %v535, 0
  %585 = vmatprep.subr.bf16.mxu0 0
  %586 = vmatpush1.bf16.xpose.msra.mxu0 %v562
  %587 = vmatprep.subr.bf16.mxu0 0
  %588 = vmatpush1.bf16.xpose.msra.mxu0 %v565
  %589 = vmatprep.subr.bf16.mxu0 0
  %590 = vmatpush1.bf16.xpose.msra.mxu0 %v568
  %591 = vmatprep.subr.bf16.mxu0 0
  %592 = vmatpush1.bf16.xpose.msra.mxu0 %v571
  %593 = vmatprep.subr.bf16.mxu0 0
  %594 = vmatpush1.bf16.xpose.msra.mxu0 %v574
  %595 = vmatprep.subr.bf16.mxu0 0
  %596 = vmatpush1.bf16.xpose.msra.mxu0 %v577
  %597 = vmatprep.subr.bf16.mxu0 0
  %598 = vmatpush1.bf16.xpose.msra.mxu0 %v580
  %599 = vmatprep.subr.bf16.mxu0 0
  %600 = vmatpush1.bf16.xpose.msra.mxu0 %v583
  %601 = vmatprep.subr.bf16.mxu0 0
  %602 = vmatpush1.bf16.xpose.msra.mxu0 0
  %603 = vmatprep.subr.bf16.mxu0 0
  %604 = vmatpush1.bf16.xpose.msra.mxu0 0
  %605 = vmatprep.subr.bf16.mxu0 0
  %606 = vmatpush1.bf16.xpose.msra.mxu0 0
  %607 = vmatprep.subr.bf16.mxu0 0
  %608 = vmatpush1.bf16.xpose.msra.mxu0 0
  %609 = vmatprep.subr.bf16.mxu0 0
  %610 = vmatpush1.bf16.xpose.msra.mxu0 0
  %611 = vmatprep.subr.bf16.mxu0 0
  %612 = vmatpush1.bf16.xpose.msra.mxu0 0
  %613 = vmatprep.subr.bf16.mxu0 0
  %614 = vmatpush1.bf16.xpose.msra.mxu0 0
  %615 = vmatprep.subr.bf16.mxu0 0
  %616 = vmatpush1.bf16.xpose.msra.mxu0 0
  %617 = vmatprep.mubr.bf16.mxu0 0
  %618 = vmatmul.mubr.bf16.gmra.mrb[0].mxu0 %v538
  %v619 = vpop.f32.mrb[0].mxu0
  %v620 = vadd.f32 0.0, %v619
  %v621 = vpop.f32.mrb[0].mxu0
  %v622 = vpop.f32.mrb[0].mxu0
  %v623 = vadd.f32 0.0, %v622
  %v624 = vpop.f32.mrb[0].mxu0
  %625 = vmatprep.mubr.bf16.mxu0 0
  %626 = vmatmul.mubr.bf16.gmra.mrb[0].mxu0 %v541
  %v627 = vpop.f32.mrb[0].mxu0
  %v628 = vadd.f32 0.0, %v627
  %v629 = vpop.f32.mrb[0].mxu0
  %v630 = vpop.f32.mrb[0].mxu0
  %v631 = vadd.f32 0.0, %v630
  %v632 = vpop.f32.mrb[0].mxu0
  %633 = vmatprep.mubr.bf16.mxu0 0
  %634 = vmatmul.mubr.bf16.gmra.mrb[0].mxu0 %v544
  %v635 = vpop.f32.mrb[0].mxu0
  %v636 = vadd.f32 0.0, %v635
  %v637 = vpop.f32.mrb[0].mxu0
  %v638 = vpop.f32.mrb[0].mxu0
  %v639 = vadd.f32 0.0, %v638
  %v640 = vpop.f32.mrb[0].mxu0
  %641 = vmatprep.mubr.bf16.mxu0 0
  %642 = vmatmul.mubr.bf16.gmra.mrb[0].mxu0 %v547
  %v643 = vpop.f32.mrb[0].mxu0
  %v644 = vadd.f32 0.0, %v643
  %v645 = vpop.f32.mrb[0].mxu0
  %v646 = vpop.f32.mrb[0].mxu0
  %v647 = vadd.f32 0.0, %v646
  %v648 = vpop.f32.mrb[0].mxu0
  %649 = vmatprep.mubr.bf16.mxu0 0
  %650 = vmatmul.mubr.bf16.gmra.mrb[0].mxu0 %v550
  %v651 = vpop.f32.mrb[0].mxu0
  %v652 = vadd.f32 0.0, %v651
  %v653 = vpop.f32.mrb[0].mxu0
  %v654 = vpop.f32.mrb[0].mxu0
  %v655 = vadd.f32 0.0, %v654
  %v656 = vpop.f32.mrb[0].mxu0
  %657 = vmatprep.mubr.bf16.mxu0 0
  %658 = vmatmul.mubr.bf16.gmra.mrb[0].mxu0 %v553
  %v659 = vpop.f32.mrb[0].mxu0
  %v660 = vadd.f32 0.0, %v659
  %v661 = vpop.f32.mrb[0].mxu0
  %v662 = vpop.f32.mrb[0].mxu0
  %v663 = vadd.f32 0.0, %v662
  %v664 = vpop.f32.mrb[0].mxu0
  %665 = vmatprep.mubr.bf16.mxu0 0
  %666 = vmatmul.mubr.bf16.gmra.mrb[0].mxu0 %v556
  %v667 = vpop.f32.mrb[0].mxu0
  %v668 = vadd.f32 0.0, %v667
  %v669 = vpop.f32.mrb[0].mxu0
  %v670 = vpop.f32.mrb[0].mxu0
  %v671 = vadd.f32 0.0, %v670
  %v672 = vpop.f32.mrb[0].mxu0
  %673 = vmatprep.mubr.bf16.mxu0 0
  %674 = vmatmul.mubr.bf16.gmra.mrb[0].mxu0 %v559
  %v675 = vpop.f32.mrb[0].mxu0
  %v676 = vadd.f32 0.0, %v675
  %v677 = vpop.f32.mrb[0].mxu0
  %v678 = vpop.f32.mrb[0].mxu0
  %v679 = vadd.f32 0.0, %v678
  %v680 = vpop.f32.mrb[0].mxu0
  %681 = vdwg.mxu0
  %v682 = vmul.f32 %v620, 0.25
  %v683 = vmul.f32 %v623, 0.25
  %v684 = vmul.f32 %v628, 0.25
  %v685 = vmul.f32 %v631, 0.25
  %v686 = vmul.f32 %v636, 0.25
  %v687 = vmul.f32 %v639, 0.25
  %v688 = vmul.f32 %v644, 0.25
  %v689 = vmul.f32 %v647, 0.25
  %v690 = vmul.f32 %v652, 0.25
  %v691 = vmul.f32 %v655, 0.25
  %v692 = vmul.f32 %v660, 0.25
  %v693 = vmul.f32 %v663, 0.25
  %v694 = vmul.f32 %v668, 0.25
  %v695 = vmul.f32 %v671, 0.25
  %v696 = vmul.f32 %v676, 0.25
  %v697 = vmul.f32 %v679, 0.25
  %v698 = vld [vmem:[%s7] sm:$0xff]
  %v699 = vld [vmem:[%s7 + $0x8] sm:$0xff]
  %v700 = vld [vmem:[%s7 + $0x10] sm:$0xff]
  %v701 = vld [vmem:[%s7 + $0x18] sm:$0xff]
  %v702 = vld [vmem:[%s7 + $0x20] sm:$0xff]
  %v703 = vld [vmem:[%s7 + $0x28] sm:$0xff]
  %v704 = vld [vmem:[%s7 + $0x30] sm:$0xff]
  %v705 = vld [vmem:[%s7 + $0x38] sm:$0xff]
  %v706 = vld [vmem:[%s7 + $0x40] sm:$0xff]
  %v707 = vld [vmem:[%s7 + $0x48] sm:$0xff]
  %v708 = vld [vmem:[%s7 + $0x50] sm:$0xff]
  %v709 = vld [vmem:[%s7 + $0x58] sm:$0xff]
  %v710 = vld [vmem:[%s7 + $0x60] sm:$0xff]
  %v711 = vld [vmem:[%s7 + $0x68] sm:$0xff]
  %v712 = vld [vmem:[%s7 + $0x70] sm:$0xff]
  %v713 = vld [vmem:[%s7 + $0x78] sm:$0xff]
  %v714 = vadd.f32 %v682, %v698
  %v715 = vadd.f32 %v683, %v699
  %v716 = vadd.f32 %v684, %v700
  %v717 = vadd.f32 %v685, %v701
  %v718 = vadd.f32 %v686, %v702
  %v719 = vadd.f32 %v687, %v703
  %v720 = vadd.f32 %v688, %v704
  %v721 = vadd.f32 %v689, %v705
  %v722 = vadd.f32 %v690, %v706
  %v723 = vadd.f32 %v691, %v707
  %v724 = vadd.f32 %v692, %v708
  %v725 = vadd.f32 %v693, %v709
  %v726 = vadd.f32 %v694, %v710
  %v727 = vadd.f32 %v695, %v711
  %v728 = vadd.f32 %v696, %v712
  %v729 = vadd.f32 %v697, %v713
  %730 = vmax.xlane.f32.xlu0 %v714
  %v731 = vpop.xlane.xlu0 %730
  %732 = vmax.xlane.f32.xlu0 %v715
  %v733 = vpop.xlane.xlu0 %732
  %734 = vmax.xlane.f32.xlu0 %v716
  %v735 = vpop.xlane.xlu0 %734
  %736 = vmax.xlane.f32.xlu0 %v717
  %v737 = vpop.xlane.xlu0 %736
  %738 = vmax.xlane.f32.xlu0 %v718
  %v739 = vpop.xlane.xlu0 %738
  %740 = vmax.xlane.f32.xlu0 %v719
  %v741 = vpop.xlane.xlu0 %740
  %742 = vmax.xlane.f32.xlu0 %v720
  %v743 = vpop.xlane.xlu0 %742
  %744 = vmax.xlane.f32.xlu0 %v721
  %v745 = vpop.xlane.xlu0 %744
  %746 = vmax.xlane.f32.xlu0 %v722
  %v747 = vpop.xlane.xlu0 %746
  %748 = vmax.xlane.f32.xlu0 %v723
  %v749 = vpop.xlane.xlu0 %748
  %750 = vmax.xlane.f32.xlu0 %v724
  %v751 = vpop.xlane.xlu0 %750
  %752 = vmax.xlane.f32.xlu0 %v725
  %v753 = vpop.xlane.xlu0 %752
  %754 = vmax.xlane.f32.xlu0 %v726
  %v755 = vpop.xlane.xlu0 %754
  %756 = vmax.xlane.f32.xlu0 %v727
  %v757 = vpop.xlane.xlu0 %756
  %758 = vmax.xlane.f32.xlu0 %v728
  %v759 = vpop.xlane.xlu0 %758
  %760 = vmax.xlane.f32.xlu0 %v729
  %v761 = vpop.xlane.xlu0 %760
  %v762 = vsub.f32 %v714, %v731
  %v763 = vsub.f32 %v715, %v733
  %v764 = vsub.f32 %v716, %v735
  %v765 = vsub.f32 %v717, %v737
  %v766 = vsub.f32 %v718, %v739
  %v767 = vsub.f32 %v719, %v741
  %v768 = vsub.f32 %v720, %v743
  %v769 = vsub.f32 %v721, %v745
  %v770 = vsub.f32 %v722, %v747
  %v771 = vsub.f32 %v723, %v749
  %v772 = vsub.f32 %v724, %v751
  %v773 = vsub.f32 %v725, %v753
  %v774 = vsub.f32 %v726, %v755
  %v775 = vsub.f32 %v727, %v757
  %v776 = vsub.f32 %v728, %v759
  %v777 = vsub.f32 %v729, %v761
  %v778 = vmul.f32 %v762, 1.442695
  %v779 = vpow.pop %v778
  %v780 = vmul.f32 %v763, 1.442695
  %v781 = vpow.pop %v780
  %v782 = vmul.f32 %v764, 1.442695
  %v783 = vpow.pop %v782
  %v784 = vmul.f32 %v765, 1.442695
  %v785 = vpow.pop %v784
  %v786 = vmul.f32 %v766, 1.442695
  %v787 = vpow.pop %v786
  %v788 = vmul.f32 %v767, 1.442695
  %v789 = vpow.pop %v788
  %v790 = vmul.f32 %v768, 1.442695
  %v791 = vpow.pop %v790
  %v792 = vmul.f32 %v769, 1.442695
  %v793 = vpow.pop %v792
  %v794 = vmul.f32 %v770, 1.442695
  %v795 = vpow.pop %v794
  %v796 = vmul.f32 %v771, 1.442695
  %v797 = vpow.pop %v796
  %v798 = vmul.f32 %v772, 1.442695
  %v799 = vpow.pop %v798
  %v800 = vmul.f32 %v773, 1.442695
  %v801 = vpow.pop %v800
  %v802 = vmul.f32 %v774, 1.442695
  %v803 = vpow.pop %v802
  %v804 = vmul.f32 %v775, 1.442695
  %v805 = vpow.pop %v804
  %v806 = vmul.f32 %v776, 1.442695
  %v807 = vpow.pop %v806
  %v808 = vmul.f32 %v777, 1.442695
  %v809 = vpow.pop %v808
  %810 = vadd.xlane.f32.xlu0 %v779
  %v811 = vpop.xlane.xlu0 %810
  %812 = vadd.xlane.f32.xlu0 %v781
  %v813 = vpop.xlane.xlu0 %812
  %814 = vadd.xlane.f32.xlu0 %v783
  %v815 = vpop.xlane.xlu0 %814
  %816 = vadd.xlane.f32.xlu0 %v785
  %v817 = vpop.xlane.xlu0 %816
  %818 = vadd.xlane.f32.xlu0 %v787
  %v819 = vpop.xlane.xlu0 %818
  %820 = vadd.xlane.f32.xlu0 %v789
  %v821 = vpop.xlane.xlu0 %820
  %822 = vadd.xlane.f32.xlu0 %v791
  %v823 = vpop.xlane.xlu0 %822
  %824 = vadd.xlane.f32.xlu0 %v793
  %v825 = vpop.xlane.xlu0 %824
  %826 = vadd.xlane.f32.xlu0 %v795
  %v827 = vpop.xlane.xlu0 %826
  %828 = vadd.xlane.f32.xlu0 %v797
  %v829 = vpop.xlane.xlu0 %828
  %830 = vadd.xlane.f32.xlu0 %v799
  %v831 = vpop.xlane.xlu0 %830
  %832 = vadd.xlane.f32.xlu0 %v801
  %v833 = vpop.xlane.xlu0 %832
  %834 = vadd.xlane.f32.xlu0 %v803
  %v835 = vpop.xlane.xlu0 %834
  %836 = vadd.xlane.f32.xlu0 %v805
  %v837 = vpop.xlane.xlu0 %836
  %838 = vadd.xlane.f32.xlu0 %v807
  %v839 = vpop.xlane.xlu0 %838
  %840 = vadd.xlane.f32.xlu0 %v809
  %v841 = vpop.xlane.xlu0 %840
  %v842 = vrcp.pop %v811
  %v843 = vrcp.pop %v813
  %v844 = vrcp.pop %v815
  %v845 = vrcp.pop %v817
  %v846 = vrcp.pop %v819
  %v847 = vrcp.pop %v821
  %v848 = vrcp.pop %v823
  %v849 = vrcp.pop %v825
  %v850 = vrcp.pop %v827
  %v851 = vrcp.pop %v829
  %v852 = vrcp.pop %v831
  %v853 = vrcp.pop %v833
  %v854 = vrcp.pop %v835
  %v855 = vrcp.pop %v837
  %v856 = vrcp.pop %v839
  %v857 = vrcp.pop %v841
  %v858 = vmul.f32 %v779, %v842
  %v859 = vmul.f32 %v781, %v843
  %v860 = vmul.f32 %v783, %v844
  %v861 = vmul.f32 %v785, %v845
  %v862 = vmul.f32 %v787, %v846
  %v863 = vmul.f32 %v789, %v847
  %v864 = vmul.f32 %v791, %v848
  %v865 = vmul.f32 %v793, %v849
  %v866 = vmul.f32 %v795, %v850
  %v867 = vmul.f32 %v797, %v851
  %v868 = vmul.f32 %v799, %v852
  %v869 = vmul.f32 %v801, %v853
  %v870 = vmul.f32 %v803, %v854
  %v871 = vmul.f32 %v805, %v855
  %v872 = vmul.f32 %v807, %v856
  %v873 = vmul.f32 %v809, %v857
  %v874 = vpack.c.bf16 %v859, %v858
  %v875 = vpack.c.bf16 %v861, %v860
  %v876 = vpack.c.bf16 %v863, %v862
  %v877 = vpack.c.bf16 %v865, %v864
  %v878 = vpack.c.bf16 %v867, %v866
  %v879 = vpack.c.bf16 %v869, %v868
  %v880 = vpack.c.bf16 %v871, %v870
  %v881 = vpack.c.bf16 %v873, %v872
  %882 = vrot.lane.b32.xlu0 %v504, 64
  %v883 = vpop.permute.xlu0 %882
  %884 = vrot.lane.b32.xlu0 %v505, 64
  %v885 = vpop.permute.xlu0 %884
  %886 = vrot.lane.b32.xlu0 %v506, 64
  %v887 = vpop.permute.xlu0 %886
  %888 = vrot.lane.b32.xlu0 %v507, 64
  %v889 = vpop.permute.xlu0 %888
  %890 = vrot.lane.b32.xlu0 %v508, 64
  %v891 = vpop.permute.xlu0 %890
  %892 = vrot.lane.b32.xlu0 %v509, 64
  %v893 = vpop.permute.xlu0 %892
  %894 = vrot.lane.b32.xlu0 %v510, 64
  %v895 = vpop.permute.xlu0 %894
  %896 = vrot.lane.b32.xlu0 %v511, 64
  %v897 = vpop.permute.xlu0 %896
  %906 = vmatprep.subr.bf16.mxu0 0
  %907 = vmatpush1.bf16.msra.mxu0 %v883
  %908 = vmatprep.subr.bf16.mxu0 0
  %909 = vmatpush1.bf16.msra.mxu0 %v885
  %910 = vmatprep.subr.bf16.mxu0 0
  %911 = vmatpush1.bf16.msra.mxu0 %v887
  %912 = vmatprep.subr.bf16.mxu0 0
  %913 = vmatpush1.bf16.msra.mxu0 %v889
  %914 = vmatprep.subr.bf16.mxu0 0
  %915 = vmatpush1.bf16.msra.mxu0 %v891
  %916 = vmatprep.subr.bf16.mxu0 0
  %917 = vmatpush1.bf16.msra.mxu0 %v893
  %918 = vmatprep.subr.bf16.mxu0 0
  %919 = vmatpush1.bf16.msra.mxu0 %v895
  %920 = vmatprep.subr.bf16.mxu0 0
  %921 = vmatpush1.bf16.msra.mxu0 %v897
  %922 = vmatprep.subr.bf16.mxu0 0
  %923 = vmatpush1.bf16.msra.mxu0 0
  %924 = vmatprep.subr.bf16.mxu0 0
  %925 = vmatpush1.bf16.msra.mxu0 0
  %926 = vmatprep.subr.bf16.mxu0 0
  %927 = vmatpush1.bf16.msra.mxu0 0
  %928 = vmatprep.subr.bf16.mxu0 0
  %929 = vmatpush1.bf16.msra.mxu0 0
  %930 = vmatprep.subr.bf16.mxu0 0
  %931 = vmatpush1.bf16.msra.mxu0 0
  %932 = vmatprep.subr.bf16.mxu0 0
  %933 = vmatpush1.bf16.msra.mxu0 0
  %934 = vmatprep.subr.bf16.mxu0 0
  %935 = vmatpush1.bf16.msra.mxu0 0
  %936 = vmatprep.subr.bf16.mxu0 0
  %937 = vmatpush1.bf16.msra.mxu0 0
  %938 = vmatprep.mubr.bf16.mxu0 0
  %939 = vmatmul.mubr.bf16.gmra.mrb[0].mxu0 %v874
  %v940 = vpop.f32.mrb[0].mxu0
  %v941 = vadd.f32 0.0, %v940
  %v942 = vpop.f32.mrb[0].mxu0
  %v943 = vpop.f32.mrb[0].mxu0
  %v944 = vadd.f32 0.0, %v943
  %v945 = vpop.f32.mrb[0].mxu0
  %946 = vmatprep.mubr.bf16.mxu0 0
  %947 = vmatmul.mubr.bf16.gmra.mrb[0].mxu0 %v875
  %v948 = vpop.f32.mrb[0].mxu0
  %v949 = vadd.f32 0.0, %v948
  %v950 = vpop.f32.mrb[0].mxu0
  %v951 = vpop.f32.mrb[0].mxu0
  %v952 = vadd.f32 0.0, %v951
  %v953 = vpop.f32.mrb[0].mxu0
  %954 = vmatprep.mubr.bf16.mxu0 0
  %955 = vmatmul.mubr.bf16.gmra.mrb[0].mxu0 %v876
  %v956 = vpop.f32.mrb[0].mxu0
  %v957 = vadd.f32 0.0, %v956
  %v958 = vpop.f32.mrb[0].mxu0
  %v959 = vpop.f32.mrb[0].mxu0
  %v960 = vadd.f32 0.0, %v959
  %v961 = vpop.f32.mrb[0].mxu0
  %962 = vmatprep.mubr.bf16.mxu0 0
  %963 = vmatmul.mubr.bf16.gmra.mrb[0].mxu0 %v877
  %v964 = vpop.f32.mrb[0].mxu0
  %v965 = vadd.f32 0.0, %v964
  %v966 = vpop.f32.mrb[0].mxu0
  %v967 = vpop.f32.mrb[0].mxu0
  %v968 = vadd.f32 0.0, %v967
  %v969 = vpop.f32.mrb[0].mxu0
  %970 = vmatprep.mubr.bf16.mxu0 0
  %971 = vmatmul.mubr.bf16.gmra.mrb[0].mxu0 %v878
  %v972 = vpop.f32.mrb[0].mxu0
  %v973 = vadd.f32 0.0, %v972
  %v974 = vpop.f32.mrb[0].mxu0
  %v975 = vpop.f32.mrb[0].mxu0
  %v976 = vadd.f32 0.0, %v975
  %v977 = vpop.f32.mrb[0].mxu0
  %978 = vmatprep.mubr.bf16.mxu0 0
  %979 = vmatmul.mubr.bf16.gmra.mrb[0].mxu0 %v879
  %v980 = vpop.f32.mrb[0].mxu0
  %v981 = vadd.f32 0.0, %v980
  %v982 = vpop.f32.mrb[0].mxu0
  %v983 = vpop.f32.mrb[0].mxu0
  %v984 = vadd.f32 0.0, %v983
  %v985 = vpop.f32.mrb[0].mxu0
  %986 = vmatprep.mubr.bf16.mxu0 0
  %987 = vmatmul.mubr.bf16.gmra.mrb[0].mxu0 %v880
  %v988 = vpop.f32.mrb[0].mxu0
  %v989 = vadd.f32 0.0, %v988
  %v990 = vpop.f32.mrb[0].mxu0
  %v991 = vpop.f32.mrb[0].mxu0
  %v992 = vadd.f32 0.0, %v991
  %v993 = vpop.f32.mrb[0].mxu0
  %994 = vmatprep.mubr.bf16.mxu0 0
  %995 = vmatmul.mubr.bf16.gmra.mrb[0].mxu0 %v881
  %v996 = vpop.f32.mrb[0].mxu0
  %v997 = vadd.f32 0.0, %v996
  %v998 = vpop.f32.mrb[0].mxu0
  %v999 = vpop.f32.mrb[0].mxu0
  %v1000 = vadd.f32 0.0, %v999
  %v1001 = vpop.f32.mrb[0].mxu0
  %1002 = vdwg.mxu0
  %v1003 = vpack.c.bf16 %v944, %v941
  %v1004 = vpack.c.bf16 %v952, %v949
  %v1005 = vpack.c.bf16 %v960, %v957
  %v1006 = vpack.c.bf16 %v968, %v965
  %v1007 = vpack.c.bf16 %v976, %v973
  %v1008 = vpack.c.bf16 %v984, %v981
  %v1009 = vpack.c.bf16 %v992, %v989
  %v1010 = vpack.c.bf16 %v1000, %v997
  %v1011 = vld [vmem:[%s5] sm:$0xf]
  %v1012 = vld [vmem:[%s5 + $0x4] sm:$0xf]
  %1013 = vrot.lane.b32.xlu0 %v504, 112
  %v1014 = vpop.permute.xlu0 %1013
  %1015 = vrot.lane.b32.xlu0 %v505, 112
  %v1016 = vpop.permute.xlu0 %1015
  %1017 = vrot.lane.b32.xlu0 %v506, 112
  %v1018 = vpop.permute.xlu0 %1017
  %1019 = vrot.lane.b32.xlu0 %v507, 112
  %v1020 = vpop.permute.xlu0 %1019
  %1021 = vrot.lane.b32.xlu0 %v508, 112
  %v1022 = vpop.permute.xlu0 %1021
  %1023 = vrot.lane.b32.xlu0 %v509, 112
  %v1024 = vpop.permute.xlu0 %1023
  %1025 = vrot.lane.b32.xlu0 %v510, 112
  %v1026 = vpop.permute.xlu0 %1025
  %1027 = vrot.lane.b32.xlu0 %v511, 112
  %v1028 = vpop.permute.xlu0 %1027
  %1029 = vrot.lane.b32.xlu0 %v504, 80
  %v1030 = vpop.permute.xlu0 %1029
  %1031 = vrot.lane.b32.xlu0 %v505, 80
  %v1032 = vpop.permute.xlu0 %1031
  %1033 = vrot.lane.b32.xlu0 %v506, 80
  %v1034 = vpop.permute.xlu0 %1033
  %1035 = vrot.lane.b32.xlu0 %v507, 80
  %v1036 = vpop.permute.xlu0 %1035
  %1037 = vrot.lane.b32.xlu0 %v508, 80
  %v1038 = vpop.permute.xlu0 %1037
  %1039 = vrot.lane.b32.xlu0 %v509, 80
  %v1040 = vpop.permute.xlu0 %1039
  %1041 = vrot.lane.b32.xlu0 %v510, 80
  %v1042 = vpop.permute.xlu0 %1041
  %1043 = vrot.lane.b32.xlu0 %v511, 80
  %v1044 = vpop.permute.xlu0 %1043
  %v1046 = vsel %vm536, %v1014, 0
  %v1049 = vsel %vm536, %v1016, 0
  %v1052 = vsel %vm536, %v1018, 0
  %v1055 = vsel %vm536, %v1020, 0
  %v1058 = vsel %vm536, %v1022, 0
  %v1061 = vsel %vm536, %v1024, 0
  %v1064 = vsel %vm536, %v1026, 0
  %v1067 = vsel %vm536, %v1028, 0
  %v1070 = vsel %vm536, %v1030, 0
  %v1073 = vsel %vm536, %v1032, 0
  %v1076 = vsel %vm536, %v1034, 0
  %v1079 = vsel %vm536, %v1036, 0
  %v1082 = vsel %vm536, %v1038, 0
  %v1085 = vsel %vm536, %v1040, 0
  %v1088 = vsel %vm536, %v1042, 0
  %v1091 = vsel %vm536, %v1044, 0
  %1093 = vmatprep.subr.bf16.mxu0 0
  %1094 = vmatpush1.bf16.xpose.msra.mxu0 %v1070
  %1095 = vmatprep.subr.bf16.mxu0 0
  %1096 = vmatpush1.bf16.xpose.msra.mxu0 %v1073
  %1097 = vmatprep.subr.bf16.mxu0 0
  %1098 = vmatpush1.bf16.xpose.msra.mxu0 %v1076
  %1099 = vmatprep.subr.bf16.mxu0 0
  %1100 = vmatpush1.bf16.xpose.msra.mxu0 %v1079
  %1101 = vmatprep.subr.bf16.mxu0 0
  %1102 = vmatpush1.bf16.xpose.msra.mxu0 %v1082
  %1103 = vmatprep.subr.bf16.mxu0 0
  %1104 = vmatpush1.bf16.xpose.msra.mxu0 %v1085
  %1105 = vmatprep.subr.bf16.mxu0 0
  %1106 = vmatpush1.bf16.xpose.msra.mxu0 %v1088
  %1107 = vmatprep.subr.bf16.mxu0 0
  %1108 = vmatpush1.bf16.xpose.msra.mxu0 %v1091
  %1109 = vmatprep.subr.bf16.mxu0 0
  %1110 = vmatpush1.bf16.xpose.msra.mxu0 0
  %1111 = vmatprep.subr.bf16.mxu0 0
  %1112 = vmatpush1.bf16.xpose.msra.mxu0 0
  %1113 = vmatprep.subr.bf16.mxu0 0
  %1114 = vmatpush1.bf16.xpose.msra.mxu0 0
  %1115 = vmatprep.subr.bf16.mxu0 0
  %1116 = vmatpush1.bf16.xpose.msra.mxu0 0
  %1117 = vmatprep.subr.bf16.mxu0 0
  %1118 = vmatpush1.bf16.xpose.msra.mxu0 0
  %1119 = vmatprep.subr.bf16.mxu0 0
  %1120 = vmatpush1.bf16.xpose.msra.mxu0 0
  %1121 = vmatprep.subr.bf16.mxu0 0
  %1122 = vmatpush1.bf16.xpose.msra.mxu0 0
  %1123 = vmatprep.subr.bf16.mxu0 0
  %1124 = vmatpush1.bf16.xpose.msra.mxu0 0
  %1125 = vmatprep.mubr.bf16.mxu0 0
  %1126 = vmatmul.mubr.bf16.gmra.mrb[0].mxu0 %v1046
  %v1127 = vpop.f32.mrb[0].mxu0
  %v1128 = vadd.f32 0.0, %v1127
  %v1129 = vpop.f32.mrb[0].mxu0
  %v1130 = vpop.f32.mrb[0].mxu0
  %v1131 = vadd.f32 0.0, %v1130
  %v1132 = vpop.f32.mrb[0].mxu0
  %1133 = vmatprep.mubr.bf16.mxu0 0
  %1134 = vmatmul.mubr.bf16.gmra.mrb[0].mxu0 %v1049
  %v1135 = vpop.f32.mrb[0].mxu0
  %v1136 = vadd.f32 0.0, %v1135
  %v1137 = vpop.f32.mrb[0].mxu0
  %v1138 = vpop.f32.mrb[0].mxu0
  %v1139 = vadd.f32 0.0, %v1138
  %v1140 = vpop.f32.mrb[0].mxu0
  %1141 = vmatprep.mubr.bf16.mxu0 0
  %1142 = vmatmul.mubr.bf16.gmra.mrb[0].mxu0 %v1052
  %v1143 = vpop.f32.mrb[0].mxu0
  %v1144 = vadd.f32 0.0, %v1143
  %v1145 = vpop.f32.mrb[0].mxu0
  %v1146 = vpop.f32.mrb[0].mxu0
  %v1147 = vadd.f32 0.0, %v1146
  %v1148 = vpop.f32.mrb[0].mxu0
  %1149 = vmatprep.mubr.bf16.mxu0 0
  %1150 = vmatmul.mubr.bf16.gmra.mrb[0].mxu0 %v1055
  %v1151 = vpop.f32.mrb[0].mxu0
  %v1152 = vadd.f32 0.0, %v1151
  %v1153 = vpop.f32.mrb[0].mxu0
  %v1154 = vpop.f32.mrb[0].mxu0
  %v1155 = vadd.f32 0.0, %v1154
  %v1156 = vpop.f32.mrb[0].mxu0
  %1157 = vmatprep.mubr.bf16.mxu0 0
  %1158 = vmatmul.mubr.bf16.gmra.mrb[0].mxu0 %v1058
  %v1159 = vpop.f32.mrb[0].mxu0
  %v1160 = vadd.f32 0.0, %v1159
  %v1161 = vpop.f32.mrb[0].mxu0
  %v1162 = vpop.f32.mrb[0].mxu0
  %v1163 = vadd.f32 0.0, %v1162
  %v1164 = vpop.f32.mrb[0].mxu0
  %1165 = vmatprep.mubr.bf16.mxu0 0
  %1166 = vmatmul.mubr.bf16.gmra.mrb[0].mxu0 %v1061
  %v1167 = vpop.f32.mrb[0].mxu0
  %v1168 = vadd.f32 0.0, %v1167
  %v1169 = vpop.f32.mrb[0].mxu0
  %v1170 = vpop.f32.mrb[0].mxu0
  %v1171 = vadd.f32 0.0, %v1170
  %v1172 = vpop.f32.mrb[0].mxu0
  %1173 = vmatprep.mubr.bf16.mxu0 0
  %1174 = vmatmul.mubr.bf16.gmra.mrb[0].mxu0 %v1064
  %v1175 = vpop.f32.mrb[0].mxu0
  %v1176 = vadd.f32 0.0, %v1175
  %v1177 = vpop.f32.mrb[0].mxu0
  %v1178 = vpop.f32.mrb[0].mxu0
  %v1179 = vadd.f32 0.0, %v1178
  %v1180 = vpop.f32.mrb[0].mxu0
  %1181 = vmatprep.mubr.bf16.mxu0 0
  %1182 = vmatmul.mubr.bf16.gmra.mrb[0].mxu0 %v1067
  %v1183 = vpop.f32.mrb[0].mxu0
  %v1184 = vadd.f32 0.0, %v1183
  %v1185 = vpop.f32.mrb[0].mxu0
  %v1186 = vpop.f32.mrb[0].mxu0
  %v1187 = vadd.f32 0.0, %v1186
  %v1188 = vpop.f32.mrb[0].mxu0
  %1189 = vdwg.mxu0
  %v1190 = vmul.f32 %v1128, 0.25
  %v1191 = vmul.f32 %v1131, 0.25
  %v1192 = vmul.f32 %v1136, 0.25
  %v1193 = vmul.f32 %v1139, 0.25
  %v1194 = vmul.f32 %v1144, 0.25
  %v1195 = vmul.f32 %v1147, 0.25
  %v1196 = vmul.f32 %v1152, 0.25
  %v1197 = vmul.f32 %v1155, 0.25
  %v1198 = vmul.f32 %v1160, 0.25
  %v1199 = vmul.f32 %v1163, 0.25
  %v1200 = vmul.f32 %v1168, 0.25
  %v1201 = vmul.f32 %v1171, 0.25
  %v1202 = vmul.f32 %v1176, 0.25
  %v1203 = vmul.f32 %v1179, 0.25
  %v1204 = vmul.f32 %v1184, 0.25
  %v1205 = vmul.f32 %v1187, 0.25
  %s1206 = scalar_lea.vmem %s7, 128
  %v1207 = vld [vmem:[%s1206] sm:$0xff]
  %v1208 = vld [vmem:[%s1206 + $0x8] sm:$0xff]
  %v1209 = vld [vmem:[%s1206 + $0x10] sm:$0xff]
  %v1210 = vld [vmem:[%s1206 + $0x18] sm:$0xff]
  %v1211 = vld [vmem:[%s1206 + $0x20] sm:$0xff]
  %v1212 = vld [vmem:[%s1206 + $0x28] sm:$0xff]
  %v1213 = vld [vmem:[%s1206 + $0x30] sm:$0xff]
  %v1214 = vld [vmem:[%s1206 + $0x38] sm:$0xff]
  %v1215 = vld [vmem:[%s1206 + $0x40] sm:$0xff]
  %v1216 = vld [vmem:[%s1206 + $0x48] sm:$0xff]
  %v1217 = vld [vmem:[%s1206 + $0x50] sm:$0xff]
  %v1218 = vld [vmem:[%s1206 + $0x58] sm:$0xff]
  %v1219 = vld [vmem:[%s1206 + $0x60] sm:$0xff]
  %v1220 = vld [vmem:[%s1206 + $0x68] sm:$0xff]
  %v1221 = vld [vmem:[%s1206 + $0x70] sm:$0xff]
  %v1222 = vld [vmem:[%s1206 + $0x78] sm:$0xff]
  %v1223 = vadd.f32 %v1190, %v1207
  %v1224 = vadd.f32 %v1191, %v1208
  %v1225 = vadd.f32 %v1192, %v1209
  %v1226 = vadd.f32 %v1193, %v1210
  %v1227 = vadd.f32 %v1194, %v1211
  %v1228 = vadd.f32 %v1195, %v1212
  %v1229 = vadd.f32 %v1196, %v1213
  %v1230 = vadd.f32 %v1197, %v1214
  %v1231 = vadd.f32 %v1198, %v1215
  %v1232 = vadd.f32 %v1199, %v1216
  %v1233 = vadd.f32 %v1200, %v1217
  %v1234 = vadd.f32 %v1201, %v1218
  %v1235 = vadd.f32 %v1202, %v1219
  %v1236 = vadd.f32 %v1203, %v1220
  %v1237 = vadd.f32 %v1204, %v1221
  %v1238 = vadd.f32 %v1205, %v1222
  %1239 = vmax.xlane.f32.xlu0 %v1223
  %v1240 = vpop.xlane.xlu0 %1239
  %1241 = vmax.xlane.f32.xlu0 %v1224
  %v1242 = vpop.xlane.xlu0 %1241
  %1243 = vmax.xlane.f32.xlu0 %v1225
  %v1244 = vpop.xlane.xlu0 %1243
  %1245 = vmax.xlane.f32.xlu0 %v1226
  %v1246 = vpop.xlane.xlu0 %1245
  %1247 = vmax.xlane.f32.xlu0 %v1227
  %v1248 = vpop.xlane.xlu0 %1247
  %1249 = vmax.xlane.f32.xlu0 %v1228
  %v1250 = vpop.xlane.xlu0 %1249
  %1251 = vmax.xlane.f32.xlu0 %v1229
  %v1252 = vpop.xlane.xlu0 %1251
  %1253 = vmax.xlane.f32.xlu0 %v1230
  %v1254 = vpop.xlane.xlu0 %1253
  %1255 = vmax.xlane.f32.xlu0 %v1231
  %v1256 = vpop.xlane.xlu0 %1255
  %1257 = vmax.xlane.f32.xlu0 %v1232
  %v1258 = vpop.xlane.xlu0 %1257
  %1259 = vmax.xlane.f32.xlu0 %v1233
  %v1260 = vpop.xlane.xlu0 %1259
  %1261 = vmax.xlane.f32.xlu0 %v1234
  %v1262 = vpop.xlane.xlu0 %1261
  %1263 = vmax.xlane.f32.xlu0 %v1235
  %v1264 = vpop.xlane.xlu0 %1263
  %1265 = vmax.xlane.f32.xlu0 %v1236
  %v1266 = vpop.xlane.xlu0 %1265
  %1267 = vmax.xlane.f32.xlu0 %v1237
  %v1268 = vpop.xlane.xlu0 %1267
  %1269 = vmax.xlane.f32.xlu0 %v1238
  %v1270 = vpop.xlane.xlu0 %1269
  %v1271 = vsub.f32 %v1223, %v1240
  %v1272 = vsub.f32 %v1224, %v1242
  %v1273 = vsub.f32 %v1225, %v1244
  %v1274 = vsub.f32 %v1226, %v1246
  %v1275 = vsub.f32 %v1227, %v1248
  %v1276 = vsub.f32 %v1228, %v1250
  %v1277 = vsub.f32 %v1229, %v1252
  %v1278 = vsub.f32 %v1230, %v1254
  %v1279 = vsub.f32 %v1231, %v1256
  %v1280 = vsub.f32 %v1232, %v1258
  %v1281 = vsub.f32 %v1233, %v1260
  %v1282 = vsub.f32 %v1234, %v1262
  %v1283 = vsub.f32 %v1235, %v1264
  %v1284 = vsub.f32 %v1236, %v1266
  %v1285 = vsub.f32 %v1237, %v1268
  %v1286 = vsub.f32 %v1238, %v1270
  %v1287 = vmul.f32 %v1271, 1.442695
  %v1288 = vpow.pop %v1287
  %v1289 = vmul.f32 %v1272, 1.442695
  %v1290 = vpow.pop %v1289
  %v1291 = vmul.f32 %v1273, 1.442695
  %v1292 = vpow.pop %v1291
  %v1293 = vmul.f32 %v1274, 1.442695
  %v1294 = vpow.pop %v1293
  %v1295 = vmul.f32 %v1275, 1.442695
  %v1296 = vpow.pop %v1295
  %v1297 = vmul.f32 %v1276, 1.442695
  %v1298 = vpow.pop %v1297
  %v1299 = vmul.f32 %v1277, 1.442695
  %v1300 = vpow.pop %v1299
  %v1301 = vmul.f32 %v1278, 1.442695
  %v1302 = vpow.pop %v1301
  %v1303 = vmul.f32 %v1279, 1.442695
  %v1304 = vpow.pop %v1303
  %v1305 = vmul.f32 %v1280, 1.442695
  %v1306 = vpow.pop %v1305
  %v1307 = vmul.f32 %v1281, 1.442695
  %v1308 = vpow.pop %v1307
  %v1309 = vmul.f32 %v1282, 1.442695
  %v1310 = vpow.pop %v1309
  %v1311 = vmul.f32 %v1283, 1.442695
  %v1312 = vpow.pop %v1311
  %v1313 = vmul.f32 %v1284, 1.442695
  %v1314 = vpow.pop %v1313
  %v1315 = vmul.f32 %v1285, 1.442695
  %v1316 = vpow.pop %v1315
  %v1317 = vmul.f32 %v1286, 1.442695
  %v1318 = vpow.pop %v1317
  %1319 = vadd.xlane.f32.xlu0 %v1288
  %v1320 = vpop.xlane.xlu0 %1319
  %1321 = vadd.xlane.f32.xlu0 %v1290
  %v1322 = vpop.xlane.xlu0 %1321
  %1323 = vadd.xlane.f32.xlu0 %v1292
  %v1324 = vpop.xlane.xlu0 %1323
  %1325 = vadd.xlane.f32.xlu0 %v1294
  %v1326 = vpop.xlane.xlu0 %1325
  %1327 = vadd.xlane.f32.xlu0 %v1296
  %v1328 = vpop.xlane.xlu0 %1327
  %1329 = vadd.xlane.f32.xlu0 %v1298
  %v1330 = vpop.xlane.xlu0 %1329
  %1331 = vadd.xlane.f32.xlu0 %v1300
  %v1332 = vpop.xlane.xlu0 %1331
  %1333 = vadd.xlane.f32.xlu0 %v1302
  %v1334 = vpop.xlane.xlu0 %1333
  %1335 = vadd.xlane.f32.xlu0 %v1304
  %v1336 = vpop.xlane.xlu0 %1335
  %1337 = vadd.xlane.f32.xlu0 %v1306
  %v1338 = vpop.xlane.xlu0 %1337
  %1339 = vadd.xlane.f32.xlu0 %v1308
  %v1340 = vpop.xlane.xlu0 %1339
  %1341 = vadd.xlane.f32.xlu0 %v1310
  %v1342 = vpop.xlane.xlu0 %1341
  %1343 = vadd.xlane.f32.xlu0 %v1312
  %v1344 = vpop.xlane.xlu0 %1343
  %1345 = vadd.xlane.f32.xlu0 %v1314
  %v1346 = vpop.xlane.xlu0 %1345
  %1347 = vadd.xlane.f32.xlu0 %v1316
  %v1348 = vpop.xlane.xlu0 %1347
  %1349 = vadd.xlane.f32.xlu0 %v1318
  %v1350 = vpop.xlane.xlu0 %1349
  %v1351 = vrcp.pop %v1320
  %v1352 = vrcp.pop %v1322
  %v1353 = vrcp.pop %v1324
  %v1354 = vrcp.pop %v1326
  %v1355 = vrcp.pop %v1328
  %v1356 = vrcp.pop %v1330
  %v1357 = vrcp.pop %v1332
  %v1358 = vrcp.pop %v1334
  %v1359 = vrcp.pop %v1336
  %v1360 = vrcp.pop %v1338
  %v1361 = vrcp.pop %v1340
  %v1362 = vrcp.pop %v1342
  %v1363 = vrcp.pop %v1344
  %v1364 = vrcp.pop %v1346
  %v1365 = vrcp.pop %v1348
  %v1366 = vrcp.pop %v1350
  %v1367 = vmul.f32 %v1288, %v1351
  %v1368 = vmul.f32 %v1290, %v1352
  %v1369 = vmul.f32 %v1292, %v1353
  %v1370 = vmul.f32 %v1294, %v1354
  %v1371 = vmul.f32 %v1296, %v1355
  %v1372 = vmul.f32 %v1298, %v1356
  %v1373 = vmul.f32 %v1300, %v1357
  %v1374 = vmul.f32 %v1302, %v1358
  %v1375 = vmul.f32 %v1304, %v1359
  %v1376 = vmul.f32 %v1306, %v1360
  %v1377 = vmul.f32 %v1308, %v1361
  %v1378 = vmul.f32 %v1310, %v1362
  %v1379 = vmul.f32 %v1312, %v1363
  %v1380 = vmul.f32 %v1314, %v1364
  %v1381 = vmul.f32 %v1316, %v1365
  %v1382 = vmul.f32 %v1318, %v1366
  %v1383 = vpack.c.bf16 %v1368, %v1367
  %v1384 = vpack.c.bf16 %v1370, %v1369
  %v1385 = vpack.c.bf16 %v1372, %v1371
  %v1386 = vpack.c.bf16 %v1374, %v1373
  %v1387 = vpack.c.bf16 %v1376, %v1375
  %v1388 = vpack.c.bf16 %v1378, %v1377
  %v1389 = vpack.c.bf16 %v1380, %v1379
  %v1390 = vpack.c.bf16 %v1382, %v1381
  %1391 = vrot.lane.b32.xlu0 %v504, 48
  %v1392 = vpop.permute.xlu0 %1391
  %1393 = vrot.lane.b32.xlu0 %v505, 48
  %v1394 = vpop.permute.xlu0 %1393
  %1395 = vrot.lane.b32.xlu0 %v506, 48
  %v1396 = vpop.permute.xlu0 %1395
  %1397 = vrot.lane.b32.xlu0 %v507, 48
  %v1398 = vpop.permute.xlu0 %1397
  %1399 = vrot.lane.b32.xlu0 %v508, 48
  %v1400 = vpop.permute.xlu0 %1399
  %1401 = vrot.lane.b32.xlu0 %v509, 48
  %v1402 = vpop.permute.xlu0 %1401
  %1403 = vrot.lane.b32.xlu0 %v510, 48
  %v1404 = vpop.permute.xlu0 %1403
  %1405 = vrot.lane.b32.xlu0 %v511, 48
  %v1406 = vpop.permute.xlu0 %1405
  %1415 = vmatprep.subr.bf16.mxu0 0
  %1416 = vmatpush1.bf16.msra.mxu0 %v1392
  %1417 = vmatprep.subr.bf16.mxu0 0
  %1418 = vmatpush1.bf16.msra.mxu0 %v1394
  %1419 = vmatprep.subr.bf16.mxu0 0
  %1420 = vmatpush1.bf16.msra.mxu0 %v1396
  %1421 = vmatprep.subr.bf16.mxu0 0
  %1422 = vmatpush1.bf16.msra.mxu0 %v1398
  %1423 = vmatprep.subr.bf16.mxu0 0
  %1424 = vmatpush1.bf16.msra.mxu0 %v1400
  %1425 = vmatprep.subr.bf16.mxu0 0
  %1426 = vmatpush1.bf16.msra.mxu0 %v1402
  %1427 = vmatprep.subr.bf16.mxu0 0
  %1428 = vmatpush1.bf16.msra.mxu0 %v1404
  %1429 = vmatprep.subr.bf16.mxu0 0
  %1430 = vmatpush1.bf16.msra.mxu0 %v1406
  %1431 = vmatprep.subr.bf16.mxu0 0
  %1432 = vmatpush1.bf16.msra.mxu0 0
  %1433 = vmatprep.subr.bf16.mxu0 0
  %1434 = vmatpush1.bf16.msra.mxu0 0
  %1435 = vmatprep.subr.bf16.mxu0 0
  %1436 = vmatpush1.bf16.msra.mxu0 0
  %1437 = vmatprep.subr.bf16.mxu0 0
  %1438 = vmatpush1.bf16.msra.mxu0 0
  %1439 = vmatprep.subr.bf16.mxu0 0
  %1440 = vmatpush1.bf16.msra.mxu0 0
  %1441 = vmatprep.subr.bf16.mxu0 0
  %1442 = vmatpush1.bf16.msra.mxu0 0
  %1443 = vmatprep.subr.bf16.mxu0 0
  %1444 = vmatpush1.bf16.msra.mxu0 0
  %1445 = vmatprep.subr.bf16.mxu0 0
  %1446 = vmatpush1.bf16.msra.mxu0 0
  %1447 = vmatprep.mubr.bf16.mxu0 0
  %1448 = vmatmul.mubr.bf16.gmra.mrb[0].mxu0 %v1383
  %v1449 = vpop.f32.mrb[0].mxu0
  %v1450 = vadd.f32 0.0, %v1449
  %v1451 = vpop.f32.mrb[0].mxu0
  %v1452 = vpop.f32.mrb[0].mxu0
  %v1453 = vadd.f32 0.0, %v1452
  %v1454 = vpop.f32.mrb[0].mxu0
  %1455 = vmatprep.mubr.bf16.mxu0 0
  %1456 = vmatmul.mubr.bf16.gmra.mrb[0].mxu0 %v1384
  %v1457 = vpop.f32.mrb[0].mxu0
  %v1458 = vadd.f32 0.0, %v1457
  %v1459 = vpop.f32.mrb[0].mxu0
  %v1460 = vpop.f32.mrb[0].mxu0
  %v1461 = vadd.f32 0.0, %v1460
  %v1462 = vpop.f32.mrb[0].mxu0
  %1463 = vmatprep.mubr.bf16.mxu0 0
  %1464 = vmatmul.mubr.bf16.gmra.mrb[0].mxu0 %v1385
  %v1465 = vpop.f32.mrb[0].mxu0
  %v1466 = vadd.f32 0.0, %v1465
  %v1467 = vpop.f32.mrb[0].mxu0
  %v1468 = vpop.f32.mrb[0].mxu0
  %v1469 = vadd.f32 0.0, %v1468
  %v1470 = vpop.f32.mrb[0].mxu0
  %1471 = vmatprep.mubr.bf16.mxu0 0
  %1472 = vmatmul.mubr.bf16.gmra.mrb[0].mxu0 %v1386
  %v1473 = vpop.f32.mrb[0].mxu0
  %v1474 = vadd.f32 0.0, %v1473
  %v1475 = vpop.f32.mrb[0].mxu0
  %v1476 = vpop.f32.mrb[0].mxu0
  %v1477 = vadd.f32 0.0, %v1476
  %v1478 = vpop.f32.mrb[0].mxu0
  %1479 = vmatprep.mubr.bf16.mxu0 0
  %1480 = vmatmul.mubr.bf16.gmra.mrb[0].mxu0 %v1387
  %v1481 = vpop.f32.mrb[0].mxu0
  %v1482 = vadd.f32 0.0, %v1481
  %v1483 = vpop.f32.mrb[0].mxu0
  %v1484 = vpop.f32.mrb[0].mxu0
  %v1485 = vadd.f32 0.0, %v1484
  %v1486 = vpop.f32.mrb[0].mxu0
  %1487 = vmatprep.mubr.bf16.mxu0 0
  %1488 = vmatmul.mubr.bf16.gmra.mrb[0].mxu0 %v1388
  %v1489 = vpop.f32.mrb[0].mxu0
  %v1490 = vadd.f32 0.0, %v1489
  %v1491 = vpop.f32.mrb[0].mxu0
  %v1492 = vpop.f32.mrb[0].mxu0
  %v1493 = vadd.f32 0.0, %v1492
  %v1494 = vpop.f32.mrb[0].mxu0
  %1495 = vmatprep.mubr.bf16.mxu0 0
  %1496 = vmatmul.mubr.bf16.gmra.mrb[0].mxu0 %v1389
  %v1497 = vpop.f32.mrb[0].mxu0
  %v1498 = vadd.f32 0.0, %v1497
  %v1499 = vpop.f32.mrb[0].mxu0
  %v1500 = vpop.f32.mrb[0].mxu0
  %v1501 = vadd.f32 0.0, %v1500
  %v1502 = vpop.f32.mrb[0].mxu0
  %1503 = vmatprep.mubr.bf16.mxu0 0
  %1504 = vmatmul.mubr.bf16.gmra.mrb[0].mxu0 %v1390
  %v1505 = vpop.f32.mrb[0].mxu0
  %v1506 = vadd.f32 0.0, %v1505
  %v1507 = vpop.f32.mrb[0].mxu0
  %v1508 = vpop.f32.mrb[0].mxu0
  %v1509 = vadd.f32 0.0, %v1508
  %v1510 = vpop.f32.mrb[0].mxu0
  %1511 = vdwg.mxu0
  %v1512 = vpack.c.bf16 %v1453, %v1450
  %v1513 = vpack.c.bf16 %v1461, %v1458
  %v1514 = vpack.c.bf16 %v1469, %v1466
  %v1515 = vpack.c.bf16 %v1477, %v1474
  %v1516 = vpack.c.bf16 %v1485, %v1482
  %v1517 = vpack.c.bf16 %v1493, %v1490
  %v1518 = vpack.c.bf16 %v1501, %v1498
  %v1519 = vpack.c.bf16 %v1509, %v1506
  %s1520 = scalar_lea.vmem %s5, 8
  %v1521 = vld [vmem:[%s1520] sm:$0xf]
  %v1522 = vld [vmem:[%s1520 + $0x4] sm:$0xf]
  %v1525 = vunpack.c.l.b16 %v1521
  %v1526 = vunpack.c.l.b16 %v1522
  %v1527 = vpack.c.b16 %v1526, %v1525
  %v1530 = vsel %vm536, %v1512, 0
  %v1533 = vsel %vm536, %v1513, 0
  %v1536 = vsel %vm536, %v1514, 0
  %v1539 = vsel %vm536, %v1515, 0
  %v1542 = vsel %vm536, %v1516, 0
  %v1545 = vsel %vm536, %v1517, 0
  %v1548 = vsel %vm536, %v1518, 0
  %v1551 = vsel %vm536, %v1519, 0
  %1553 = vmatprep.subr.bf16.mxu0 0
  %1554 = vmatpush1.bf16.msra.mxu0 %v1527
  %1555 = vmatprep.subr.bf16.mxu0 0
  %1556 = vmatpush1.bf16.msra.mxu0 0
  %1557 = vmatprep.subr.bf16.mxu0 0
  %1558 = vmatpush1.bf16.msra.mxu0 0
  %1559 = vmatprep.subr.bf16.mxu0 0
  %1560 = vmatpush1.bf16.msra.mxu0 0
  %1561 = vmatprep.subr.bf16.mxu0 0
  %1562 = vmatpush1.bf16.msra.mxu0 0
  %1563 = vmatprep.subr.bf16.mxu0 0
  %1564 = vmatpush1.bf16.msra.mxu0 0
  %1565 = vmatprep.subr.bf16.mxu0 0
  %1566 = vmatpush1.bf16.msra.mxu0 0
  %1567 = vmatprep.subr.bf16.mxu0 0
  %1568 = vmatpush1.bf16.msra.mxu0 0
  %1569 = vmatprep.subr.bf16.mxu0 0
  %1570 = vmatpush1.bf16.msra.mxu0 0
  %1571 = vmatprep.subr.bf16.mxu0 0
  %1572 = vmatpush1.bf16.msra.mxu0 0
  %1573 = vmatprep.subr.bf16.mxu0 0
  %1574 = vmatpush1.bf16.msra.mxu0 0
  %1575 = vmatprep.subr.bf16.mxu0 0
  %1576 = vmatpush1.bf16.msra.mxu0 0
  %1577 = vmatprep.subr.bf16.mxu0 0
  %1578 = vmatpush1.bf16.msra.mxu0 0
  %1579 = vmatprep.subr.bf16.mxu0 0
  %1580 = vmatpush1.bf16.msra.mxu0 0
  %1581 = vmatprep.subr.bf16.mxu0 0
  %1582 = vmatpush1.bf16.msra.mxu0 0
  %1583 = vmatprep.subr.bf16.mxu0 0
  %1584 = vmatpush1.bf16.msra.mxu0 0
  %1585 = vmatprep.mubr.bf16.mxu0 0
  %1586 = vmatmul.mubr.bf16.gmra.mrb[0].mxu0 %v1530
  %v1587 = vpop.f32.mrb[0].mxu0
  %v1588 = vadd.f32 0.0, %v1587
  %v1589 = vpop.f32.mrb[0].mxu0
  %v1590 = vpop.f32.mrb[0].mxu0
  %v1591 = vadd.f32 0.0, %v1590
  %v1592 = vpop.f32.mrb[0].mxu0
  %1593 = vmatprep.mubr.bf16.mxu0 0
  %1594 = vmatmul.mubr.bf16.gmra.mrb[0].mxu0 %v1533
  %v1595 = vpop.f32.mrb[0].mxu0
  %v1596 = vadd.f32 0.0, %v1595
  %v1597 = vpop.f32.mrb[0].mxu0
  %v1598 = vpop.f32.mrb[0].mxu0
  %v1599 = vadd.f32 0.0, %v1598
  %v1600 = vpop.f32.mrb[0].mxu0
  %1601 = vmatprep.mubr.bf16.mxu0 0
  %1602 = vmatmul.mubr.bf16.gmra.mrb[0].mxu0 %v1536
  %v1603 = vpop.f32.mrb[0].mxu0
  %v1604 = vadd.f32 0.0, %v1603
  %v1605 = vpop.f32.mrb[0].mxu0
  %v1606 = vpop.f32.mrb[0].mxu0
  %v1607 = vadd.f32 0.0, %v1606
  %v1608 = vpop.f32.mrb[0].mxu0
  %1609 = vmatprep.mubr.bf16.mxu0 0
  %1610 = vmatmul.mubr.bf16.gmra.mrb[0].mxu0 %v1539
  %v1611 = vpop.f32.mrb[0].mxu0
  %v1612 = vadd.f32 0.0, %v1611
  %v1613 = vpop.f32.mrb[0].mxu0
  %v1614 = vpop.f32.mrb[0].mxu0
  %v1615 = vadd.f32 0.0, %v1614
  %v1616 = vpop.f32.mrb[0].mxu0
  %1617 = vmatprep.mubr.bf16.mxu0 0
  %1618 = vmatmul.mubr.bf16.gmra.mrb[0].mxu0 %v1542
  %v1619 = vpop.f32.mrb[0].mxu0
  %v1620 = vadd.f32 0.0, %v1619
  %v1621 = vpop.f32.mrb[0].mxu0
  %v1622 = vpop.f32.mrb[0].mxu0
  %v1623 = vadd.f32 0.0, %v1622
  %v1624 = vpop.f32.mrb[0].mxu0
  %1625 = vmatprep.mubr.bf16.mxu0 0
  %1626 = vmatmul.mubr.bf16.gmra.mrb[0].mxu0 %v1545
  %v1627 = vpop.f32.mrb[0].mxu0
  %v1628 = vadd.f32 0.0, %v1627
  %v1629 = vpop.f32.mrb[0].mxu0
  %v1630 = vpop.f32.mrb[0].mxu0
  %v1631 = vadd.f32 0.0, %v1630
  %v1632 = vpop.f32.mrb[0].mxu0
  %1633 = vmatprep.mubr.bf16.mxu0 0
  %1634 = vmatmul.mubr.bf16.gmra.mrb[0].mxu0 %v1548
  %v1635 = vpop.f32.mrb[0].mxu0
  %v1636 = vadd.f32 0.0, %v1635
  %v1637 = vpop.f32.mrb[0].mxu0
  %v1638 = vpop.f32.mrb[0].mxu0
  %v1639 = vadd.f32 0.0, %v1638
  %v1640 = vpop.f32.mrb[0].mxu0
  %1641 = vmatprep.mubr.bf16.mxu0 0
  %1642 = vmatmul.mubr.bf16.gmra.mrb[0].mxu0 %v1551
  %v1643 = vpop.f32.mrb[0].mxu0
  %v1644 = vadd.f32 0.0, %v1643
  %v1645 = vpop.f32.mrb[0].mxu0
  %v1646 = vpop.f32.mrb[0].mxu0
  %v1647 = vadd.f32 0.0, %v1646
  %v1648 = vpop.f32.mrb[0].mxu0
  %1649 = vdwg.mxu0
  %v1652 = vunpack.c.l.b16 %v1011
  %v1653 = vunpack.c.l.b16 %v1012
  %v1654 = vpack.c.b16 %v1653, %v1652
  %v1657 = vsel %vm536, %v1003, 0
  %v1660 = vsel %vm536, %v1004, 0
  %v1663 = vsel %vm536, %v1005, 0
  %v1666 = vsel %vm536, %v1006, 0
  %v1669 = vsel %vm536, %v1007, 0
  %v1672 = vsel %vm536, %v1008, 0
  %v1675 = vsel %vm536, %v1009, 0
  %v1678 = vsel %vm536, %v1010, 0
  %1680 = vmatprep.subr.bf16.mxu0 0
  %1681 = vmatpush1.bf16.msra.mxu0 %v1654
  %1682 = vmatprep.subr.bf16.mxu0 0
  %1683 = vmatpush1.bf16.msra.mxu0 0
  %1684 = vmatprep.subr.bf16.mxu0 0
  %1685 = vmatpush1.bf16.msra.mxu0 0
  %1686 = vmatprep.subr.bf16.mxu0 0
  %1687 = vmatpush1.bf16.msra.mxu0 0
  %1688 = vmatprep.subr.bf16.mxu0 0
  %1689 = vmatpush1.bf16.msra.mxu0 0
  %1690 = vmatprep.subr.bf16.mxu0 0
  %1691 = vmatpush1.bf16.msra.mxu0 0
  %1692 = vmatprep.subr.bf16.mxu0 0
  %1693 = vmatpush1.bf16.msra.mxu0 0
  %1694 = vmatprep.subr.bf16.mxu0 0
  %1695 = vmatpush1.bf16.msra.mxu0 0
  %1696 = vmatprep.subr.bf16.mxu0 0
  %1697 = vmatpush1.bf16.msra.mxu0 0
  %1698 = vmatprep.subr.bf16.mxu0 0
  %1699 = vmatpush1.bf16.msra.mxu0 0
  %1700 = vmatprep.subr.bf16.mxu0 0
  %1701 = vmatpush1.bf16.msra.mxu0 0
  %1702 = vmatprep.subr.bf16.mxu0 0
  %1703 = vmatpush1.bf16.msra.mxu0 0
  %1704 = vmatprep.subr.bf16.mxu0 0
  %1705 = vmatpush1.bf16.msra.mxu0 0
  %1706 = vmatprep.subr.bf16.mxu0 0
  %1707 = vmatpush1.bf16.msra.mxu0 0
  %1708 = vmatprep.subr.bf16.mxu0 0
  %1709 = vmatpush1.bf16.msra.mxu0 0
  %1710 = vmatprep.subr.bf16.mxu0 0
  %1711 = vmatpush1.bf16.msra.mxu0 0
  %1712 = vmatprep.mubr.bf16.mxu0 0
  %1713 = vmatmul.mubr.bf16.gmra.mrb[0].mxu0 %v1657
  %v1714 = vpop.f32.mrb[0].mxu0
  %v1715 = vadd.f32 %v1588, %v1714
  %v1716 = vpop.f32.mrb[0].mxu0
  %v1717 = vpop.f32.mrb[0].mxu0
  %v1718 = vadd.f32 %v1591, %v1717
  %v1719 = vpop.f32.mrb[0].mxu0
  %1720 = vmatprep.mubr.bf16.mxu0 0
  %1721 = vmatmul.mubr.bf16.gmra.mrb[0].mxu0 %v1660
  %v1722 = vpop.f32.mrb[0].mxu0
  %v1723 = vadd.f32 %v1596, %v1722
  %v1724 = vpop.f32.mrb[0].mxu0
  %v1725 = vpop.f32.mrb[0].mxu0
  %v1726 = vadd.f32 %v1599, %v1725
  %v1727 = vpop.f32.mrb[0].mxu0
  %1728 = vmatprep.mubr.bf16.mxu0 0
  %1729 = vmatmul.mubr.bf16.gmra.mrb[0].mxu0 %v1663
  %v1730 = vpop.f32.mrb[0].mxu0
  %v1731 = vadd.f32 %v1604, %v1730
  %v1732 = vpop.f32.mrb[0].mxu0
  %v1733 = vpop.f32.mrb[0].mxu0
  %v1734 = vadd.f32 %v1607, %v1733
  %v1735 = vpop.f32.mrb[0].mxu0
  %1736 = vmatprep.mubr.bf16.mxu0 0
  %1737 = vmatmul.mubr.bf16.gmra.mrb[0].mxu0 %v1666
  %v1738 = vpop.f32.mrb[0].mxu0
  %v1739 = vadd.f32 %v1612, %v1738
  %v1740 = vpop.f32.mrb[0].mxu0
  %v1741 = vpop.f32.mrb[0].mxu0
  %v1742 = vadd.f32 %v1615, %v1741
  %v1743 = vpop.f32.mrb[0].mxu0
  %1744 = vmatprep.mubr.bf16.mxu0 0
  %1745 = vmatmul.mubr.bf16.gmra.mrb[0].mxu0 %v1669
  %v1746 = vpop.f32.mrb[0].mxu0
  %v1747 = vadd.f32 %v1620, %v1746
  %v1748 = vpop.f32.mrb[0].mxu0
  %v1749 = vpop.f32.mrb[0].mxu0
  %v1750 = vadd.f32 %v1623, %v1749
  %v1751 = vpop.f32.mrb[0].mxu0
  %1752 = vmatprep.mubr.bf16.mxu0 0
  %1753 = vmatmul.mubr.bf16.gmra.mrb[0].mxu0 %v1672
  %v1754 = vpop.f32.mrb[0].mxu0
  %v1755 = vadd.f32 %v1628, %v1754
  %v1756 = vpop.f32.mrb[0].mxu0
  %v1757 = vpop.f32.mrb[0].mxu0
  %v1758 = vadd.f32 %v1631, %v1757
  %v1759 = vpop.f32.mrb[0].mxu0
  %1760 = vmatprep.mubr.bf16.mxu0 0
  %1761 = vmatmul.mubr.bf16.gmra.mrb[0].mxu0 %v1675
  %v1762 = vpop.f32.mrb[0].mxu0
  %v1763 = vadd.f32 %v1636, %v1762
  %v1764 = vpop.f32.mrb[0].mxu0
  %v1765 = vpop.f32.mrb[0].mxu0
  %v1766 = vadd.f32 %v1639, %v1765
  %v1767 = vpop.f32.mrb[0].mxu0
  %1768 = vmatprep.mubr.bf16.mxu0 0
  %1769 = vmatmul.mubr.bf16.gmra.mrb[0].mxu0 %v1678
  %v1770 = vpop.f32.mrb[0].mxu0
  %v1771 = vadd.f32 %v1644, %v1770
  %v1772 = vpop.f32.mrb[0].mxu0
  %v1773 = vpop.f32.mrb[0].mxu0
  %v1774 = vadd.f32 %v1647, %v1773
  %v1775 = vpop.f32.mrb[0].mxu0
  %1776 = vdwg.mxu0
  %v1777 = vadd.f32 %v48, %v1715
  %v1778 = vadd.f32 %v49, %v1718
  %v1779 = vadd.f32 %v50, %v1723
  %v1780 = vadd.f32 %v51, %v1726
  %v1781 = vadd.f32 %v52, %v1731
  %v1782 = vadd.f32 %v53, %v1734
  %v1783 = vadd.f32 %v54, %v1739
  %v1784 = vadd.f32 %v55, %v1742
  %v1785 = vadd.f32 %v56, %v1747
  %v1786 = vadd.f32 %v57, %v1750
  %v1787 = vadd.f32 %v58, %v1755
  %v1788 = vadd.f32 %v59, %v1758
  %v1789 = vadd.f32 %v60, %v1763
  %v1790 = vadd.f32 %v61, %v1766
  %v1791 = vadd.f32 %v62, %v1771
  %v1792 = vadd.f32 %v63, %v1774
  %v1793 = vld [vmem:[%s6] sm:$0x1]
  %v1795 = vlaneseq
  %v1796 = vshrl.u32 %v1795, 7
  %v1797 = vsub.s32 0, %v1796
  %v1798 = vrot.slane %v1793, %v1797
  %v1800 = vadd.f32 %v1777, %v1798
  %v1801 = vadd.f32 %v1778, %v1798
  %v1802 = vadd.f32 %v1779, %v1798
  %v1803 = vadd.f32 %v1780, %v1798
  %v1804 = vadd.f32 %v1781, %v1798
  %v1805 = vadd.f32 %v1782, %v1798
  %v1806 = vadd.f32 %v1783, %v1798
  %v1807 = vadd.f32 %v1784, %v1798
  %v1808 = vadd.f32 %v1785, %v1798
  %v1809 = vadd.f32 %v1786, %v1798
  %v1810 = vadd.f32 %v1787, %v1798
  %v1811 = vadd.f32 %v1788, %v1798
  %v1812 = vadd.f32 %v1789, %v1798
  %v1813 = vadd.f32 %v1790, %v1798
  %v1814 = vadd.f32 %v1791, %v1798
  %v1815 = vadd.f32 %v1792, %v1798
  %v1816 = vsel %vm64, %v1800, 0.0
  %1817 = vadd.xlane.f32.xlu0 %v1816
  %v1818 = vpop.xlane.xlu0 %1817
  %v1819 = vsel %vm64, %v1801, 0.0
  %1820 = vadd.xlane.f32.xlu0 %v1819
  %v1821 = vpop.xlane.xlu0 %1820
  %v1822 = vsel %vm64, %v1802, 0.0
  %1823 = vadd.xlane.f32.xlu0 %v1822
  %v1824 = vpop.xlane.xlu0 %1823
  %v1825 = vsel %vm64, %v1803, 0.0
  %1826 = vadd.xlane.f32.xlu0 %v1825
  %v1827 = vpop.xlane.xlu0 %1826
  %v1828 = vsel %vm64, %v1804, 0.0
  %1829 = vadd.xlane.f32.xlu0 %v1828
  %v1830 = vpop.xlane.xlu0 %1829
  %v1831 = vsel %vm64, %v1805, 0.0
  %1832 = vadd.xlane.f32.xlu0 %v1831
  %v1833 = vpop.xlane.xlu0 %1832
  %v1834 = vsel %vm64, %v1806, 0.0
  %1835 = vadd.xlane.f32.xlu0 %v1834
  %v1836 = vpop.xlane.xlu0 %1835
  %v1837 = vsel %vm64, %v1807, 0.0
  %1838 = vadd.xlane.f32.xlu0 %v1837
  %v1839 = vpop.xlane.xlu0 %1838
  %v1840 = vsel %vm64, %v1808, 0.0
  %1841 = vadd.xlane.f32.xlu0 %v1840
  %v1842 = vpop.xlane.xlu0 %1841
  %v1843 = vsel %vm64, %v1809, 0.0
  %1844 = vadd.xlane.f32.xlu0 %v1843
  %v1845 = vpop.xlane.xlu0 %1844
  %v1846 = vsel %vm64, %v1810, 0.0
  %1847 = vadd.xlane.f32.xlu0 %v1846
  %v1848 = vpop.xlane.xlu0 %1847
  %v1849 = vsel %vm64, %v1811, 0.0
  %1850 = vadd.xlane.f32.xlu0 %v1849
  %v1851 = vpop.xlane.xlu0 %1850
  %v1852 = vsel %vm64, %v1812, 0.0
  %1853 = vadd.xlane.f32.xlu0 %v1852
  %v1854 = vpop.xlane.xlu0 %1853
  %v1855 = vsel %vm64, %v1813, 0.0
  %1856 = vadd.xlane.f32.xlu0 %v1855
  %v1857 = vpop.xlane.xlu0 %1856
  %v1858 = vsel %vm64, %v1814, 0.0
  %1859 = vadd.xlane.f32.xlu0 %v1858
  %v1860 = vpop.xlane.xlu0 %1859
  %v1861 = vsel %vm64, %v1815, 0.0
  %1862 = vadd.xlane.f32.xlu0 %v1861
  %v1863 = vpop.xlane.xlu0 %1862
  %v1864 = vmul.f32 %v1818, %v113
  %v1865 = vmul.f32 %v1821, %v113
  %v1866 = vmul.f32 %v1824, %v113
  %v1867 = vmul.f32 %v1827, %v113
  %v1868 = vmul.f32 %v1830, %v113
  %v1869 = vmul.f32 %v1833, %v113
  %v1870 = vmul.f32 %v1836, %v113
  %v1871 = vmul.f32 %v1839, %v113
  %v1872 = vmul.f32 %v1842, %v113
  %v1873 = vmul.f32 %v1845, %v113
  %v1874 = vmul.f32 %v1848, %v113
  %v1875 = vmul.f32 %v1851, %v113
  %v1876 = vmul.f32 %v1854, %v113
  %v1877 = vmul.f32 %v1857, %v113
  %v1878 = vmul.f32 %v1860, %v113
  %v1879 = vmul.f32 %v1863, %v113
  %v1880 = vmul.f32 %v1800, %v1800
  %v1881 = vmul.f32 %v1801, %v1801
  %v1882 = vmul.f32 %v1802, %v1802
  %v1883 = vmul.f32 %v1803, %v1803
  %v1884 = vmul.f32 %v1804, %v1804
  %v1885 = vmul.f32 %v1805, %v1805
  %v1886 = vmul.f32 %v1806, %v1806
  %v1887 = vmul.f32 %v1807, %v1807
  %v1888 = vmul.f32 %v1808, %v1808
  %v1889 = vmul.f32 %v1809, %v1809
  %v1890 = vmul.f32 %v1810, %v1810
  %v1891 = vmul.f32 %v1811, %v1811
  %v1892 = vmul.f32 %v1812, %v1812
  %v1893 = vmul.f32 %v1813, %v1813
  %v1894 = vmul.f32 %v1814, %v1814
  %v1895 = vmul.f32 %v1815, %v1815
  %v1896 = vsel %vm64, %v1880, 0.0
  %1897 = vadd.xlane.f32.xlu0 %v1896
  %v1898 = vpop.xlane.xlu0 %1897
  %v1899 = vsel %vm64, %v1881, 0.0
  %1900 = vadd.xlane.f32.xlu0 %v1899
  %v1901 = vpop.xlane.xlu0 %1900
  %v1902 = vsel %vm64, %v1882, 0.0
  %1903 = vadd.xlane.f32.xlu0 %v1902
  %v1904 = vpop.xlane.xlu0 %1903
  %v1905 = vsel %vm64, %v1883, 0.0
  %1906 = vadd.xlane.f32.xlu0 %v1905
  %v1907 = vpop.xlane.xlu0 %1906
  %v1908 = vsel %vm64, %v1884, 0.0
  %1909 = vadd.xlane.f32.xlu0 %v1908
  %v1910 = vpop.xlane.xlu0 %1909
  %v1911 = vsel %vm64, %v1885, 0.0
  %1912 = vadd.xlane.f32.xlu0 %v1911
  %v1913 = vpop.xlane.xlu0 %1912
  %v1914 = vsel %vm64, %v1886, 0.0
  %1915 = vadd.xlane.f32.xlu0 %v1914
  %v1916 = vpop.xlane.xlu0 %1915
  %v1917 = vsel %vm64, %v1887, 0.0
  %1918 = vadd.xlane.f32.xlu0 %v1917
  %v1919 = vpop.xlane.xlu0 %1918
  %v1920 = vsel %vm64, %v1888, 0.0
  %1921 = vadd.xlane.f32.xlu0 %v1920
  %v1922 = vpop.xlane.xlu0 %1921
  %v1923 = vsel %vm64, %v1889, 0.0
  %1924 = vadd.xlane.f32.xlu0 %v1923
  %v1925 = vpop.xlane.xlu0 %1924
  %v1926 = vsel %vm64, %v1890, 0.0
  %1927 = vadd.xlane.f32.xlu0 %v1926
  %v1928 = vpop.xlane.xlu0 %1927
  %v1929 = vsel %vm64, %v1891, 0.0
  %1930 = vadd.xlane.f32.xlu0 %v1929
  %v1931 = vpop.xlane.xlu0 %1930
  %v1932 = vsel %vm64, %v1892, 0.0
  %1933 = vadd.xlane.f32.xlu0 %v1932
  %v1934 = vpop.xlane.xlu0 %1933
  %v1935 = vsel %vm64, %v1893, 0.0
  %1936 = vadd.xlane.f32.xlu0 %v1935
  %v1937 = vpop.xlane.xlu0 %1936
  %v1938 = vsel %vm64, %v1894, 0.0
  %1939 = vadd.xlane.f32.xlu0 %v1938
  %v1940 = vpop.xlane.xlu0 %1939
  %v1941 = vsel %vm64, %v1895, 0.0
  %1942 = vadd.xlane.f32.xlu0 %v1941
  %v1943 = vpop.xlane.xlu0 %1942
  %v1944 = vmul.f32 %v1898, %v113
  %v1945 = vmul.f32 %v1901, %v113
  %v1946 = vmul.f32 %v1904, %v113
  %v1947 = vmul.f32 %v1907, %v113
  %v1948 = vmul.f32 %v1910, %v113
  %v1949 = vmul.f32 %v1913, %v113
  %v1950 = vmul.f32 %v1916, %v113
  %v1951 = vmul.f32 %v1919, %v113
  %v1952 = vmul.f32 %v1922, %v113
  %v1953 = vmul.f32 %v1925, %v113
  %v1954 = vmul.f32 %v1928, %v113
  %v1955 = vmul.f32 %v1931, %v113
  %v1956 = vmul.f32 %v1934, %v113
  %v1957 = vmul.f32 %v1937, %v113
  %v1958 = vmul.f32 %v1940, %v113
  %v1959 = vmul.f32 %v1943, %v113
  %v1960 = vsub.f32 %v1800, %v1864
  %v1961 = vsub.f32 %v1801, %v1865
  %v1962 = vsub.f32 %v1802, %v1866
  %v1963 = vsub.f32 %v1803, %v1867
  %v1964 = vsub.f32 %v1804, %v1868
  %v1965 = vsub.f32 %v1805, %v1869
  %v1966 = vsub.f32 %v1806, %v1870
  %v1967 = vsub.f32 %v1807, %v1871
  %v1968 = vsub.f32 %v1808, %v1872
  %v1969 = vsub.f32 %v1809, %v1873
  %v1970 = vsub.f32 %v1810, %v1874
  %v1971 = vsub.f32 %v1811, %v1875
  %v1972 = vsub.f32 %v1812, %v1876
  %v1973 = vsub.f32 %v1813, %v1877
  %v1974 = vsub.f32 %v1814, %v1878
  %v1975 = vsub.f32 %v1815, %v1879
  %v1976 = vmul.f32 %v1864, %v1864
  %v1977 = vmul.f32 %v1865, %v1865
  %v1978 = vmul.f32 %v1866, %v1866
  %v1979 = vmul.f32 %v1867, %v1867
  %v1980 = vmul.f32 %v1868, %v1868
  %v1981 = vmul.f32 %v1869, %v1869
  %v1982 = vmul.f32 %v1870, %v1870
  %v1983 = vmul.f32 %v1871, %v1871
  %v1984 = vmul.f32 %v1872, %v1872
  %v1985 = vmul.f32 %v1873, %v1873
  %v1986 = vmul.f32 %v1874, %v1874
  %v1987 = vmul.f32 %v1875, %v1875
  %v1988 = vmul.f32 %v1876, %v1876
  %v1989 = vmul.f32 %v1877, %v1877
  %v1990 = vmul.f32 %v1878, %v1878
  %v1991 = vmul.f32 %v1879, %v1879
  %v1992 = vsub.f32 %v1944, %v1976
  %v1993 = vsub.f32 %v1945, %v1977
  %v1994 = vsub.f32 %v1946, %v1978
  %v1995 = vsub.f32 %v1947, %v1979
  %v1996 = vsub.f32 %v1948, %v1980
  %v1997 = vsub.f32 %v1949, %v1981
  %v1998 = vsub.f32 %v1950, %v1982
  %v1999 = vsub.f32 %v1951, %v1983
  %v2000 = vsub.f32 %v1952, %v1984
  %v2001 = vsub.f32 %v1953, %v1985
  %v2002 = vsub.f32 %v1954, %v1986
  %v2003 = vsub.f32 %v1955, %v1987
  %v2004 = vsub.f32 %v1956, %v1988
  %v2005 = vsub.f32 %v1957, %v1989
  %v2006 = vsub.f32 %v1958, %v1990
  %v2007 = vsub.f32 %v1959, %v1991
  %v2008 = vadd.f32 %v1992, 1e-05
  %v2009 = vadd.f32 %v1993, 1e-05
  %v2010 = vadd.f32 %v1994, 1e-05
  %v2011 = vadd.f32 %v1995, 1e-05
  %v2012 = vadd.f32 %v1996, 1e-05
  %v2013 = vadd.f32 %v1997, 1e-05
  %v2014 = vadd.f32 %v1998, 1e-05
  %v2015 = vadd.f32 %v1999, 1e-05
  %v2016 = vadd.f32 %v2000, 1e-05
  %v2017 = vadd.f32 %v2001, 1e-05
  %v2018 = vadd.f32 %v2002, 1e-05
  %v2019 = vadd.f32 %v2003, 1e-05
  %v2020 = vadd.f32 %v2004, 1e-05
  %v2021 = vadd.f32 %v2005, 1e-05
  %v2022 = vadd.f32 %v2006, 1e-05
  %v2023 = vadd.f32 %v2007, 1e-05
  %v2024 = vrsqrt.pop %v2008
  %v2025 = vrsqrt.pop %v2009
  %v2026 = vrsqrt.pop %v2010
  %v2027 = vrsqrt.pop %v2011
  %v2028 = vrsqrt.pop %v2012
  %v2029 = vrsqrt.pop %v2013
  %v2030 = vrsqrt.pop %v2014
  %v2031 = vrsqrt.pop %v2015
  %v2032 = vrsqrt.pop %v2016
  %v2033 = vrsqrt.pop %v2017
  %v2034 = vrsqrt.pop %v2018
  %v2035 = vrsqrt.pop %v2019
  %v2036 = vrsqrt.pop %v2020
  %v2037 = vrsqrt.pop %v2021
  %v2038 = vrsqrt.pop %v2022
  %v2039 = vrsqrt.pop %v2023
  %v2040 = vmul.f32 %v1960, %v2024
  %v2041 = vmul.f32 %v1961, %v2025
  %v2042 = vmul.f32 %v1962, %v2026
  %v2043 = vmul.f32 %v1963, %v2027
  %v2044 = vmul.f32 %v1964, %v2028
  %v2045 = vmul.f32 %v1965, %v2029
  %v2046 = vmul.f32 %v1966, %v2030
  %v2047 = vmul.f32 %v1967, %v2031
  %v2048 = vmul.f32 %v1968, %v2032
  %v2049 = vmul.f32 %v1969, %v2033
  %v2050 = vmul.f32 %v1970, %v2034
  %v2051 = vmul.f32 %v1971, %v2035
  %v2052 = vmul.f32 %v1972, %v2036
  %v2053 = vmul.f32 %v1973, %v2037
  %v2054 = vmul.f32 %v1974, %v2038
  %v2055 = vmul.f32 %v1975, %v2039
  %v2056 = vld [vmem:[%s8] sm:$0x1]
  %v2058 = vlaneseq
  %v2059 = vshrl.u32 %v2058, 7
  %v2060 = vsub.s32 0, %v2059
  %v2061 = vrot.slane %v2056, %v2060
  %v2063 = vmul.f32 %v2040, %v2061
  %v2064 = vmul.f32 %v2041, %v2061
  %v2065 = vmul.f32 %v2042, %v2061
  %v2066 = vmul.f32 %v2043, %v2061
  %v2067 = vmul.f32 %v2044, %v2061
  %v2068 = vmul.f32 %v2045, %v2061
  %v2069 = vmul.f32 %v2046, %v2061
  %v2070 = vmul.f32 %v2047, %v2061
  %v2071 = vmul.f32 %v2048, %v2061
  %v2072 = vmul.f32 %v2049, %v2061
  %v2073 = vmul.f32 %v2050, %v2061
  %v2074 = vmul.f32 %v2051, %v2061
  %v2075 = vmul.f32 %v2052, %v2061
  %v2076 = vmul.f32 %v2053, %v2061
  %v2077 = vmul.f32 %v2054, %v2061
  %v2078 = vmul.f32 %v2055, %v2061
  %v2079 = vld [vmem:[%s9] sm:$0x1]
  %v2081 = vlaneseq
  %v2082 = vshrl.u32 %v2081, 7
  %v2083 = vsub.s32 0, %v2082
  %v2084 = vrot.slane %v2079, %v2083
  %v2086 = vadd.f32 %v2063, %v2084
  %v2087 = vadd.f32 %v2064, %v2084
  %v2088 = vadd.f32 %v2065, %v2084
  %v2089 = vadd.f32 %v2066, %v2084
  %v2090 = vadd.f32 %v2067, %v2084
  %v2091 = vadd.f32 %v2068, %v2084
  %v2092 = vadd.f32 %v2069, %v2084
  %v2093 = vadd.f32 %v2070, %v2084
  %v2094 = vadd.f32 %v2071, %v2084
  %v2095 = vadd.f32 %v2072, %v2084
  %v2096 = vadd.f32 %v2073, %v2084
  %v2097 = vadd.f32 %v2074, %v2084
  %v2098 = vadd.f32 %v2075, %v2084
  %v2099 = vadd.f32 %v2076, %v2084
  %v2100 = vadd.f32 %v2077, %v2084
  %v2101 = vadd.f32 %v2078, %v2084
  %v2102 = vpack.c.bf16 %v2087, %v2086
  %v2103 = vpack.c.bf16 %v2089, %v2088
  %v2104 = vpack.c.bf16 %v2091, %v2090
  %v2105 = vpack.c.bf16 %v2093, %v2092
  %v2106 = vpack.c.bf16 %v2095, %v2094
  %v2107 = vpack.c.bf16 %v2097, %v2096
  %v2108 = vpack.c.bf16 %v2099, %v2098
  %v2109 = vpack.c.bf16 %v2101, %v2100
  %v2110 = vld [vmem:[%s10] sm:$0xf]
  %v2111 = vld [vmem:[%s10 + $0x4] sm:$0xf]
  %v2112 = vld [vmem:[%s10 + $0x8] sm:$0xf]
  %v2113 = vld [vmem:[%s10 + $0xc] sm:$0xf]
  %v2114 = vld [vmem:[%s11] sm:$0x1]
  %v2116 = vlaneseq
  %v2117 = vshrl.u32 %v2116, 7
  %v2118 = vsub.s32 0, %v2117
  %v2119 = vrot.slane %v2114, %v2118
  %v2125 = vunpack.c.l.b16 %v2110
  %v2126 = vunpack.c.l.b16 %v2111
  %v2127 = vunpack.c.l.b16 %v2112
  %v2128 = vunpack.c.l.b16 %v2113
  %v2129 = vpack.c.b16 %v2126, %v2125
  %v2130 = vpack.c.b16 %v2128, %v2127
  %v2134 = vsel %vm64, %v2102, 0
  %v2137 = vsel %vm64, %v2103, 0
  %v2140 = vsel %vm64, %v2104, 0
  %v2143 = vsel %vm64, %v2105, 0
  %v2146 = vsel %vm64, %v2106, 0
  %v2149 = vsel %vm64, %v2107, 0
  %v2152 = vsel %vm64, %v2108, 0
  %v2155 = vsel %vm64, %v2109, 0
  %2157 = vmatprep.subr.bf16.mxu0 0
  %2158 = vmatpush1.bf16.msra.mxu0 %v2129
  %2159 = vmatprep.subr.bf16.mxu0 0
  %2160 = vmatpush1.bf16.msra.mxu0 %v2130
  %2161 = vmatprep.subr.bf16.mxu0 0
  %2162 = vmatpush1.bf16.msra.mxu0 0
  %2163 = vmatprep.subr.bf16.mxu0 0
  %2164 = vmatpush1.bf16.msra.mxu0 0
  %2165 = vmatprep.subr.bf16.mxu0 0
  %2166 = vmatpush1.bf16.msra.mxu0 0
  %2167 = vmatprep.subr.bf16.mxu0 0
  %2168 = vmatpush1.bf16.msra.mxu0 0
  %2169 = vmatprep.subr.bf16.mxu0 0
  %2170 = vmatpush1.bf16.msra.mxu0 0
  %2171 = vmatprep.subr.bf16.mxu0 0
  %2172 = vmatpush1.bf16.msra.mxu0 0
  %2173 = vmatprep.subr.bf16.mxu0 0
  %2174 = vmatpush1.bf16.msra.mxu0 0
  %2175 = vmatprep.subr.bf16.mxu0 0
  %2176 = vmatpush1.bf16.msra.mxu0 0
  %2177 = vmatprep.subr.bf16.mxu0 0
  %2178 = vmatpush1.bf16.msra.mxu0 0
  %2179 = vmatprep.subr.bf16.mxu0 0
  %2180 = vmatpush1.bf16.msra.mxu0 0
  %2181 = vmatprep.subr.bf16.mxu0 0
  %2182 = vmatpush1.bf16.msra.mxu0 0
  %2183 = vmatprep.subr.bf16.mxu0 0
  %2184 = vmatpush1.bf16.msra.mxu0 0
  %2185 = vmatprep.subr.bf16.mxu0 0
  %2186 = vmatpush1.bf16.msra.mxu0 0
  %2187 = vmatprep.subr.bf16.mxu0 0
  %2188 = vmatpush1.bf16.msra.mxu0 0
  %2189 = vmatprep.mubr.bf16.mxu0 0
  %2190 = vmatmul.mubr.bf16.gmra.mrb[0].mxu0 %v2134
  %v2191 = vpop.f32.mrb[0].mxu0
  %v2192 = vadd.f32 %v2119, %v2191
  %v2193 = vpop.f32.mrb[0].mxu0
  %v2194 = vpop.f32.mrb[0].mxu0
  %v2195 = vadd.f32 %v2119, %v2194
  %v2196 = vpop.f32.mrb[0].mxu0
  %2197 = vmatprep.mubr.bf16.mxu0 0
  %2198 = vmatmul.mubr.bf16.gmra.mrb[0].mxu0 %v2137
  %v2199 = vpop.f32.mrb[0].mxu0
  %v2200 = vadd.f32 %v2119, %v2199
  %v2201 = vpop.f32.mrb[0].mxu0
  %v2202 = vpop.f32.mrb[0].mxu0
  %v2203 = vadd.f32 %v2119, %v2202
  %v2204 = vpop.f32.mrb[0].mxu0
  %2205 = vmatprep.mubr.bf16.mxu0 0
  %2206 = vmatmul.mubr.bf16.gmra.mrb[0].mxu0 %v2140
  %v2207 = vpop.f32.mrb[0].mxu0
  %v2208 = vadd.f32 %v2119, %v2207
  %v2209 = vpop.f32.mrb[0].mxu0
  %v2210 = vpop.f32.mrb[0].mxu0
  %v2211 = vadd.f32 %v2119, %v2210
  %v2212 = vpop.f32.mrb[0].mxu0
  %2213 = vmatprep.mubr.bf16.mxu0 0
  %2214 = vmatmul.mubr.bf16.gmra.mrb[0].mxu0 %v2143
  %v2215 = vpop.f32.mrb[0].mxu0
  %v2216 = vadd.f32 %v2119, %v2215
  %v2217 = vpop.f32.mrb[0].mxu0
  %v2218 = vpop.f32.mrb[0].mxu0
  %v2219 = vadd.f32 %v2119, %v2218
  %v2220 = vpop.f32.mrb[0].mxu0
  %2221 = vmatprep.mubr.bf16.mxu0 0
  %2222 = vmatmul.mubr.bf16.gmra.mrb[0].mxu0 %v2146
  %v2223 = vpop.f32.mrb[0].mxu0
  %v2224 = vadd.f32 %v2119, %v2223
  %v2225 = vpop.f32.mrb[0].mxu0
  %v2226 = vpop.f32.mrb[0].mxu0
  %v2227 = vadd.f32 %v2119, %v2226
  %v2228 = vpop.f32.mrb[0].mxu0
  %2229 = vmatprep.mubr.bf16.mxu0 0
  %2230 = vmatmul.mubr.bf16.gmra.mrb[0].mxu0 %v2149
  %v2231 = vpop.f32.mrb[0].mxu0
  %v2232 = vadd.f32 %v2119, %v2231
  %v2233 = vpop.f32.mrb[0].mxu0
  %v2234 = vpop.f32.mrb[0].mxu0
  %v2235 = vadd.f32 %v2119, %v2234
  %v2236 = vpop.f32.mrb[0].mxu0
  %2237 = vmatprep.mubr.bf16.mxu0 0
  %2238 = vmatmul.mubr.bf16.gmra.mrb[0].mxu0 %v2152
  %v2239 = vpop.f32.mrb[0].mxu0
  %v2240 = vadd.f32 %v2119, %v2239
  %v2241 = vpop.f32.mrb[0].mxu0
  %v2242 = vpop.f32.mrb[0].mxu0
  %v2243 = vadd.f32 %v2119, %v2242
  %v2244 = vpop.f32.mrb[0].mxu0
  %2245 = vmatprep.mubr.bf16.mxu0 0
  %2246 = vmatmul.mubr.bf16.gmra.mrb[0].mxu0 %v2155
  %v2247 = vpop.f32.mrb[0].mxu0
  %v2248 = vadd.f32 %v2119, %v2247
  %v2249 = vpop.f32.mrb[0].mxu0
  %v2250 = vpop.f32.mrb[0].mxu0
  %v2251 = vadd.f32 %v2119, %v2250
  %v2252 = vpop.f32.mrb[0].mxu0
  %2253 = vdwg.mxu0
  %v2254 = vmul.f32 %v2192, %v2192
  %v2255 = vmul.f32 %v2195, %v2195
  %v2256 = vmul.f32 %v2200, %v2200
  %v2257 = vmul.f32 %v2203, %v2203
  %v2258 = vmul.f32 %v2208, %v2208
  %v2259 = vmul.f32 %v2211, %v2211
  %v2260 = vmul.f32 %v2216, %v2216
  %v2261 = vmul.f32 %v2219, %v2219
  %v2262 = vmul.f32 %v2224, %v2224
  %v2263 = vmul.f32 %v2227, %v2227
  %v2264 = vmul.f32 %v2232, %v2232
  %v2265 = vmul.f32 %v2235, %v2235
  %v2266 = vmul.f32 %v2240, %v2240
  %v2267 = vmul.f32 %v2243, %v2243
  %v2268 = vmul.f32 %v2248, %v2248
  %v2269 = vmul.f32 %v2251, %v2251
  %v2270 = vmul.f32 %v2192, %v2254
  %v2271 = vmul.f32 %v2195, %v2255
  %v2272 = vmul.f32 %v2200, %v2256
  %v2273 = vmul.f32 %v2203, %v2257
  %v2274 = vmul.f32 %v2208, %v2258
  %v2275 = vmul.f32 %v2211, %v2259
  %v2276 = vmul.f32 %v2216, %v2260
  %v2277 = vmul.f32 %v2219, %v2261
  %v2278 = vmul.f32 %v2224, %v2262
  %v2279 = vmul.f32 %v2227, %v2263
  %v2280 = vmul.f32 %v2232, %v2264
  %v2281 = vmul.f32 %v2235, %v2265
  %v2282 = vmul.f32 %v2240, %v2266
  %v2283 = vmul.f32 %v2243, %v2267
  %v2284 = vmul.f32 %v2248, %v2268
  %v2285 = vmul.f32 %v2251, %v2269
  %v2286 = vmul.f32 %v2270, 0.044715
  %v2287 = vmul.f32 %v2271, 0.044715
  %v2288 = vmul.f32 %v2272, 0.044715
  %v2289 = vmul.f32 %v2273, 0.044715
  %v2290 = vmul.f32 %v2274, 0.044715
  %v2291 = vmul.f32 %v2275, 0.044715
  %v2292 = vmul.f32 %v2276, 0.044715
  %v2293 = vmul.f32 %v2277, 0.044715
  %v2294 = vmul.f32 %v2278, 0.044715
  %v2295 = vmul.f32 %v2279, 0.044715
  %v2296 = vmul.f32 %v2280, 0.044715
  %v2297 = vmul.f32 %v2281, 0.044715
  %v2298 = vmul.f32 %v2282, 0.044715
  %v2299 = vmul.f32 %v2283, 0.044715
  %v2300 = vmul.f32 %v2284, 0.044715
  %v2301 = vmul.f32 %v2285, 0.044715
  %v2302 = vadd.f32 %v2192, %v2286
  %v2303 = vadd.f32 %v2195, %v2287
  %v2304 = vadd.f32 %v2200, %v2288
  %v2305 = vadd.f32 %v2203, %v2289
  %v2306 = vadd.f32 %v2208, %v2290
  %v2307 = vadd.f32 %v2211, %v2291
  %v2308 = vadd.f32 %v2216, %v2292
  %v2309 = vadd.f32 %v2219, %v2293
  %v2310 = vadd.f32 %v2224, %v2294
  %v2311 = vadd.f32 %v2227, %v2295
  %v2312 = vadd.f32 %v2232, %v2296
  %v2313 = vadd.f32 %v2235, %v2297
  %v2314 = vadd.f32 %v2240, %v2298
  %v2315 = vadd.f32 %v2243, %v2299
  %v2316 = vadd.f32 %v2248, %v2300
  %v2317 = vadd.f32 %v2251, %v2301
  %v2318 = vmul.f32 %v2302, 0.7978846
  %v2319 = vmul.f32 %v2303, 0.7978846
  %v2320 = vmul.f32 %v2304, 0.7978846
  %v2321 = vmul.f32 %v2305, 0.7978846
  %v2322 = vmul.f32 %v2306, 0.7978846
  %v2323 = vmul.f32 %v2307, 0.7978846
  %v2324 = vmul.f32 %v2308, 0.7978846
  %v2325 = vmul.f32 %v2309, 0.7978846
  %v2326 = vmul.f32 %v2310, 0.7978846
  %v2327 = vmul.f32 %v2311, 0.7978846
  %v2328 = vmul.f32 %v2312, 0.7978846
  %v2329 = vmul.f32 %v2313, 0.7978846
  %v2330 = vmul.f32 %v2314, 0.7978846
  %v2331 = vmul.f32 %v2315, 0.7978846
  %v2332 = vmul.f32 %v2316, 0.7978846
  %v2333 = vmul.f32 %v2317, 0.7978846
  %v2334 = vtanh.pop %v2318
  %v2335 = vtanh.pop %v2319
  %v2336 = vtanh.pop %v2320
  %v2337 = vtanh.pop %v2321
  %v2338 = vtanh.pop %v2322
  %v2339 = vtanh.pop %v2323
  %v2340 = vtanh.pop %v2324
  %v2341 = vtanh.pop %v2325
  %v2342 = vtanh.pop %v2326
  %v2343 = vtanh.pop %v2327
  %v2344 = vtanh.pop %v2328
  %v2345 = vtanh.pop %v2329
  %v2346 = vtanh.pop %v2330
  %v2347 = vtanh.pop %v2331
  %v2348 = vtanh.pop %v2332
  %v2349 = vtanh.pop %v2333
  %v2350 = vadd.f32 %v2334, 1.0
  %v2351 = vadd.f32 %v2335, 1.0
  %v2352 = vadd.f32 %v2336, 1.0
  %v2353 = vadd.f32 %v2337, 1.0
  %v2354 = vadd.f32 %v2338, 1.0
  %v2355 = vadd.f32 %v2339, 1.0
  %v2356 = vadd.f32 %v2340, 1.0
  %v2357 = vadd.f32 %v2341, 1.0
  %v2358 = vadd.f32 %v2342, 1.0
  %v2359 = vadd.f32 %v2343, 1.0
  %v2360 = vadd.f32 %v2344, 1.0
  %v2361 = vadd.f32 %v2345, 1.0
  %v2362 = vadd.f32 %v2346, 1.0
  %v2363 = vadd.f32 %v2347, 1.0
  %v2364 = vadd.f32 %v2348, 1.0
  %v2365 = vadd.f32 %v2349, 1.0
  %v2366 = vmul.f32 %v2350, 0.5
  %v2367 = vmul.f32 %v2351, 0.5
  %v2368 = vmul.f32 %v2352, 0.5
  %v2369 = vmul.f32 %v2353, 0.5
  %v2370 = vmul.f32 %v2354, 0.5
  %v2371 = vmul.f32 %v2355, 0.5
  %v2372 = vmul.f32 %v2356, 0.5
  %v2373 = vmul.f32 %v2357, 0.5
  %v2374 = vmul.f32 %v2358, 0.5
  %v2375 = vmul.f32 %v2359, 0.5
  %v2376 = vmul.f32 %v2360, 0.5
  %v2377 = vmul.f32 %v2361, 0.5
  %v2378 = vmul.f32 %v2362, 0.5
  %v2379 = vmul.f32 %v2363, 0.5
  %v2380 = vmul.f32 %v2364, 0.5
  %v2381 = vmul.f32 %v2365, 0.5
  %v2382 = vmul.f32 %v2192, %v2366
  %v2383 = vmul.f32 %v2195, %v2367
  %v2384 = vmul.f32 %v2200, %v2368
  %v2385 = vmul.f32 %v2203, %v2369
  %v2386 = vmul.f32 %v2208, %v2370
  %v2387 = vmul.f32 %v2211, %v2371
  %v2388 = vmul.f32 %v2216, %v2372
  %v2389 = vmul.f32 %v2219, %v2373
  %v2390 = vmul.f32 %v2224, %v2374
  %v2391 = vmul.f32 %v2227, %v2375
  %v2392 = vmul.f32 %v2232, %v2376
  %v2393 = vmul.f32 %v2235, %v2377
  %v2394 = vmul.f32 %v2240, %v2378
  %v2395 = vmul.f32 %v2243, %v2379
  %v2396 = vmul.f32 %v2248, %v2380
  %v2397 = vmul.f32 %v2251, %v2381
  %v2398 = vpack.c.bf16 %v2383, %v2382
  %v2399 = vpack.c.bf16 %v2385, %v2384
  %v2400 = vpack.c.bf16 %v2387, %v2386
  %v2401 = vpack.c.bf16 %v2389, %v2388
  %v2402 = vpack.c.bf16 %v2391, %v2390
  %v2403 = vpack.c.bf16 %v2393, %v2392
  %v2404 = vpack.c.bf16 %v2395, %v2394
  %v2405 = vpack.c.bf16 %v2397, %v2396
  %v2406 = vld [vmem:[%s12] sm:$0xf]
  %v2407 = vld [vmem:[%s12 + $0x4] sm:$0xf]
  %v2408 = vld [vmem:[%s12 + $0x8] sm:$0xf]
  %v2409 = vld [vmem:[%s12 + $0xc] sm:$0xf]
  %v2410 = vld [vmem:[%s12 + $0x10] sm:$0xf]
  %v2411 = vld [vmem:[%s12 + $0x14] sm:$0xf]
  %v2412 = vld [vmem:[%s12 + $0x18] sm:$0xf]
  %v2413 = vld [vmem:[%s12 + $0x1c] sm:$0xf]
  %v2414 = vld [vmem:[%s12 + $0x20] sm:$0xf]
  %v2415 = vld [vmem:[%s12 + $0x24] sm:$0xf]
  %v2416 = vld [vmem:[%s12 + $0x28] sm:$0xf]
  %v2417 = vld [vmem:[%s12 + $0x2c] sm:$0xf]
  %v2418 = vld [vmem:[%s12 + $0x30] sm:$0xf]
  %v2419 = vld [vmem:[%s12 + $0x34] sm:$0xf]
  %v2420 = vld [vmem:[%s12 + $0x38] sm:$0xf]
  %v2421 = vld [vmem:[%s12 + $0x3c] sm:$0xf]
  %v2422 = vld [vmem:[%s13] sm:$0x1]
  %v2424 = vlaneseq
  %v2425 = vshrl.u32 %v2424, 7
  %v2426 = vsub.s32 0, %v2425
  %v2427 = vrot.slane %v2422, %v2426
  %v2445 = vunpack.c.l.b16 %v2406
  %v2446 = vunpack.c.l.b16 %v2407
  %v2447 = vunpack.c.l.b16 %v2408
  %v2448 = vunpack.c.l.b16 %v2409
  %v2449 = vunpack.c.l.b16 %v2410
  %v2450 = vunpack.c.l.b16 %v2411
  %v2451 = vunpack.c.l.b16 %v2412
  %v2452 = vunpack.c.l.b16 %v2413
  %v2453 = vunpack.c.l.b16 %v2414
  %v2454 = vunpack.c.l.b16 %v2415
  %v2455 = vunpack.c.l.b16 %v2416
  %v2456 = vunpack.c.l.b16 %v2417
  %v2457 = vunpack.c.l.b16 %v2418
  %v2458 = vunpack.c.l.b16 %v2419
  %v2459 = vunpack.c.l.b16 %v2420
  %v2460 = vunpack.c.l.b16 %v2421
  %v2461 = vpack.c.b16 %v2446, %v2445
  %v2462 = vpack.c.b16 %v2448, %v2447
  %v2463 = vpack.c.b16 %v2450, %v2449
  %v2464 = vpack.c.b16 %v2452, %v2451
  %v2465 = vpack.c.b16 %v2454, %v2453
  %v2466 = vpack.c.b16 %v2456, %v2455
  %v2467 = vpack.c.b16 %v2458, %v2457
  %v2468 = vpack.c.b16 %v2460, %v2459
  %2477 = vmatprep.subr.bf16.mxu0 0
  %2478 = vmatpush1.bf16.msra.mxu0 %v2461
  %2479 = vmatprep.subr.bf16.mxu0 0
  %2480 = vmatpush1.bf16.msra.mxu0 %v2462
  %2481 = vmatprep.subr.bf16.mxu0 0
  %2482 = vmatpush1.bf16.msra.mxu0 %v2463
  %2483 = vmatprep.subr.bf16.mxu0 0
  %2484 = vmatpush1.bf16.msra.mxu0 %v2464
  %2485 = vmatprep.subr.bf16.mxu0 0
  %2486 = vmatpush1.bf16.msra.mxu0 %v2465
  %2487 = vmatprep.subr.bf16.mxu0 0
  %2488 = vmatpush1.bf16.msra.mxu0 %v2466
  %2489 = vmatprep.subr.bf16.mxu0 0
  %2490 = vmatpush1.bf16.msra.mxu0 %v2467
  %2491 = vmatprep.subr.bf16.mxu0 0
  %2492 = vmatpush1.bf16.msra.mxu0 %v2468
  %2493 = vmatprep.subr.bf16.mxu0 0
  %2494 = vmatpush1.bf16.msra.mxu0 0
  %2495 = vmatprep.subr.bf16.mxu0 0
  %2496 = vmatpush1.bf16.msra.mxu0 0
  %2497 = vmatprep.subr.bf16.mxu0 0
  %2498 = vmatpush1.bf16.msra.mxu0 0
  %2499 = vmatprep.subr.bf16.mxu0 0
  %2500 = vmatpush1.bf16.msra.mxu0 0
  %2501 = vmatprep.subr.bf16.mxu0 0
  %2502 = vmatpush1.bf16.msra.mxu0 0
  %2503 = vmatprep.subr.bf16.mxu0 0
  %2504 = vmatpush1.bf16.msra.mxu0 0
  %2505 = vmatprep.subr.bf16.mxu0 0
  %2506 = vmatpush1.bf16.msra.mxu0 0
  %2507 = vmatprep.subr.bf16.mxu0 0
  %2508 = vmatpush1.bf16.msra.mxu0 0
  %2509 = vmatprep.mubr.bf16.mxu0 0
  %2510 = vmatmul.mubr.bf16.gmra.mrb[0].mxu0 %v2398
  %v2511 = vpop.f32.mrb[0].mxu0
  %v2512 = vadd.f32 %v2427, %v2511
  %v2513 = vpop.f32.mrb[0].mxu0
  %v2514 = vpop.f32.mrb[0].mxu0
  %v2515 = vadd.f32 %v2427, %v2514
  %v2516 = vpop.f32.mrb[0].mxu0
  %2517 = vmatprep.mubr.bf16.mxu0 0
  %2518 = vmatmul.mubr.bf16.gmra.mrb[0].mxu0 %v2399
  %v2519 = vpop.f32.mrb[0].mxu0
  %v2520 = vadd.f32 %v2427, %v2519
  %v2521 = vpop.f32.mrb[0].mxu0
  %v2522 = vpop.f32.mrb[0].mxu0
  %v2523 = vadd.f32 %v2427, %v2522
  %v2524 = vpop.f32.mrb[0].mxu0
  %2525 = vmatprep.mubr.bf16.mxu0 0
  %2526 = vmatmul.mubr.bf16.gmra.mrb[0].mxu0 %v2400
  %v2527 = vpop.f32.mrb[0].mxu0
  %v2528 = vadd.f32 %v2427, %v2527
  %v2529 = vpop.f32.mrb[0].mxu0
  %v2530 = vpop.f32.mrb[0].mxu0
  %v2531 = vadd.f32 %v2427, %v2530
  %v2532 = vpop.f32.mrb[0].mxu0
  %2533 = vmatprep.mubr.bf16.mxu0 0
  %2534 = vmatmul.mubr.bf16.gmra.mrb[0].mxu0 %v2401
  %v2535 = vpop.f32.mrb[0].mxu0
  %v2536 = vadd.f32 %v2427, %v2535
  %v2537 = vpop.f32.mrb[0].mxu0
  %v2538 = vpop.f32.mrb[0].mxu0
  %v2539 = vadd.f32 %v2427, %v2538
  %v2540 = vpop.f32.mrb[0].mxu0
  %2541 = vmatprep.mubr.bf16.mxu0 0
  %2542 = vmatmul.mubr.bf16.gmra.mrb[0].mxu0 %v2402
  %v2543 = vpop.f32.mrb[0].mxu0
  %v2544 = vadd.f32 %v2427, %v2543
  %v2545 = vpop.f32.mrb[0].mxu0
  %v2546 = vpop.f32.mrb[0].mxu0
  %v2547 = vadd.f32 %v2427, %v2546
  %v2548 = vpop.f32.mrb[0].mxu0
  %2549 = vmatprep.mubr.bf16.mxu0 0
  %2550 = vmatmul.mubr.bf16.gmra.mrb[0].mxu0 %v2403
  %v2551 = vpop.f32.mrb[0].mxu0
  %v2552 = vadd.f32 %v2427, %v2551
  %v2553 = vpop.f32.mrb[0].mxu0
  %v2554 = vpop.f32.mrb[0].mxu0
  %v2555 = vadd.f32 %v2427, %v2554
  %v2556 = vpop.f32.mrb[0].mxu0
  %2557 = vmatprep.mubr.bf16.mxu0 0
  %2558 = vmatmul.mubr.bf16.gmra.mrb[0].mxu0 %v2404
  %v2559 = vpop.f32.mrb[0].mxu0
  %v2560 = vadd.f32 %v2427, %v2559
  %v2561 = vpop.f32.mrb[0].mxu0
  %v2562 = vpop.f32.mrb[0].mxu0
  %v2563 = vadd.f32 %v2427, %v2562
  %v2564 = vpop.f32.mrb[0].mxu0
  %2565 = vmatprep.mubr.bf16.mxu0 0
  %2566 = vmatmul.mubr.bf16.gmra.mrb[0].mxu0 %v2405
  %v2567 = vpop.f32.mrb[0].mxu0
  %v2568 = vadd.f32 %v2427, %v2567
  %v2569 = vpop.f32.mrb[0].mxu0
  %v2570 = vpop.f32.mrb[0].mxu0
  %v2571 = vadd.f32 %v2427, %v2570
  %v2572 = vpop.f32.mrb[0].mxu0
  %2573 = vdwg.mxu0
  %v2574 = vadd.f32 %v1800, %v2512
  %v2575 = vadd.f32 %v1801, %v2515
  %v2576 = vadd.f32 %v1802, %v2520
  %v2577 = vadd.f32 %v1803, %v2523
  %v2578 = vadd.f32 %v1804, %v2528
  %v2579 = vadd.f32 %v1805, %v2531
  %v2580 = vadd.f32 %v1806, %v2536
  %v2581 = vadd.f32 %v1807, %v2539
  %v2582 = vadd.f32 %v1808, %v2544
  %v2583 = vadd.f32 %v1809, %v2547
  %v2584 = vadd.f32 %v1810, %v2552
  %v2585 = vadd.f32 %v1811, %v2555
  %v2586 = vadd.f32 %v1812, %v2560
  %v2587 = vadd.f32 %v1813, %v2563
  %v2588 = vadd.f32 %v1814, %v2568
  %v2589 = vadd.f32 %v1815, %v2571
  %v2590 = vsel %vm64, %v2574, 0.0
  %2591 = vadd.xlane.f32.xlu0 %v2590
  %v2592 = vpop.xlane.xlu0 %2591
  %v2593 = vsel %vm64, %v2575, 0.0
  %2594 = vadd.xlane.f32.xlu0 %v2593
  %v2595 = vpop.xlane.xlu0 %2594
  %v2596 = vsel %vm64, %v2576, 0.0
  %2597 = vadd.xlane.f32.xlu0 %v2596
  %v2598 = vpop.xlane.xlu0 %2597
  %v2599 = vsel %vm64, %v2577, 0.0
  %2600 = vadd.xlane.f32.xlu0 %v2599
  %v2601 = vpop.xlane.xlu0 %2600
  %v2602 = vsel %vm64, %v2578, 0.0
  %2603 = vadd.xlane.f32.xlu0 %v2602
  %v2604 = vpop.xlane.xlu0 %2603
  %v2605 = vsel %vm64, %v2579, 0.0
  %2606 = vadd.xlane.f32.xlu0 %v2605
  %v2607 = vpop.xlane.xlu0 %2606
  %v2608 = vsel %vm64, %v2580, 0.0
  %2609 = vadd.xlane.f32.xlu0 %v2608
  %v2610 = vpop.xlane.xlu0 %2609
  %v2611 = vsel %vm64, %v2581, 0.0
  %2612 = vadd.xlane.f32.xlu0 %v2611
  %v2613 = vpop.xlane.xlu0 %2612
  %v2614 = vsel %vm64, %v2582, 0.0
  %2615 = vadd.xlane.f32.xlu0 %v2614
  %v2616 = vpop.xlane.xlu0 %2615
  %v2617 = vsel %vm64, %v2583, 0.0
  %2618 = vadd.xlane.f32.xlu0 %v2617
  %v2619 = vpop.xlane.xlu0 %2618
  %v2620 = vsel %vm64, %v2584, 0.0
  %2621 = vadd.xlane.f32.xlu0 %v2620
  %v2622 = vpop.xlane.xlu0 %2621
  %v2623 = vsel %vm64, %v2585, 0.0
  %2624 = vadd.xlane.f32.xlu0 %v2623
  %v2625 = vpop.xlane.xlu0 %2624
  %v2626 = vsel %vm64, %v2586, 0.0
  %2627 = vadd.xlane.f32.xlu0 %v2626
  %v2628 = vpop.xlane.xlu0 %2627
  %v2629 = vsel %vm64, %v2587, 0.0
  %2630 = vadd.xlane.f32.xlu0 %v2629
  %v2631 = vpop.xlane.xlu0 %2630
  %v2632 = vsel %vm64, %v2588, 0.0
  %2633 = vadd.xlane.f32.xlu0 %v2632
  %v2634 = vpop.xlane.xlu0 %2633
  %v2635 = vsel %vm64, %v2589, 0.0
  %2636 = vadd.xlane.f32.xlu0 %v2635
  %v2637 = vpop.xlane.xlu0 %2636
  %v2638 = vmul.f32 %v2592, %v113
  %v2639 = vmul.f32 %v2595, %v113
  %v2640 = vmul.f32 %v2598, %v113
  %v2641 = vmul.f32 %v2601, %v113
  %v2642 = vmul.f32 %v2604, %v113
  %v2643 = vmul.f32 %v2607, %v113
  %v2644 = vmul.f32 %v2610, %v113
  %v2645 = vmul.f32 %v2613, %v113
  %v2646 = vmul.f32 %v2616, %v113
  %v2647 = vmul.f32 %v2619, %v113
  %v2648 = vmul.f32 %v2622, %v113
  %v2649 = vmul.f32 %v2625, %v113
  %v2650 = vmul.f32 %v2628, %v113
  %v2651 = vmul.f32 %v2631, %v113
  %v2652 = vmul.f32 %v2634, %v113
  %v2653 = vmul.f32 %v2637, %v113
  %v2654 = vmul.f32 %v2574, %v2574
  %v2655 = vmul.f32 %v2575, %v2575
  %v2656 = vmul.f32 %v2576, %v2576
  %v2657 = vmul.f32 %v2577, %v2577
  %v2658 = vmul.f32 %v2578, %v2578
  %v2659 = vmul.f32 %v2579, %v2579
  %v2660 = vmul.f32 %v2580, %v2580
  %v2661 = vmul.f32 %v2581, %v2581
  %v2662 = vmul.f32 %v2582, %v2582
  %v2663 = vmul.f32 %v2583, %v2583
  %v2664 = vmul.f32 %v2584, %v2584
  %v2665 = vmul.f32 %v2585, %v2585
  %v2666 = vmul.f32 %v2586, %v2586
  %v2667 = vmul.f32 %v2587, %v2587
  %v2668 = vmul.f32 %v2588, %v2588
  %v2669 = vmul.f32 %v2589, %v2589
  %v2670 = vsel %vm64, %v2654, 0.0
  %2671 = vadd.xlane.f32.xlu0 %v2670
  %v2672 = vpop.xlane.xlu0 %2671
  %v2673 = vsel %vm64, %v2655, 0.0
  %2674 = vadd.xlane.f32.xlu0 %v2673
  %v2675 = vpop.xlane.xlu0 %2674
  %v2676 = vsel %vm64, %v2656, 0.0
  %2677 = vadd.xlane.f32.xlu0 %v2676
  %v2678 = vpop.xlane.xlu0 %2677
  %v2679 = vsel %vm64, %v2657, 0.0
  %2680 = vadd.xlane.f32.xlu0 %v2679
  %v2681 = vpop.xlane.xlu0 %2680
  %v2682 = vsel %vm64, %v2658, 0.0
  %2683 = vadd.xlane.f32.xlu0 %v2682
  %v2684 = vpop.xlane.xlu0 %2683
  %v2685 = vsel %vm64, %v2659, 0.0
  %2686 = vadd.xlane.f32.xlu0 %v2685
  %v2687 = vpop.xlane.xlu0 %2686
  %v2688 = vsel %vm64, %v2660, 0.0
  %2689 = vadd.xlane.f32.xlu0 %v2688
  %v2690 = vpop.xlane.xlu0 %2689
  %v2691 = vsel %vm64, %v2661, 0.0
  %2692 = vadd.xlane.f32.xlu0 %v2691
  %v2693 = vpop.xlane.xlu0 %2692
  %v2694 = vsel %vm64, %v2662, 0.0
  %2695 = vadd.xlane.f32.xlu0 %v2694
  %v2696 = vpop.xlane.xlu0 %2695
  %v2697 = vsel %vm64, %v2663, 0.0
  %2698 = vadd.xlane.f32.xlu0 %v2697
  %v2699 = vpop.xlane.xlu0 %2698
  %v2700 = vsel %vm64, %v2664, 0.0
  %2701 = vadd.xlane.f32.xlu0 %v2700
  %v2702 = vpop.xlane.xlu0 %2701
  %v2703 = vsel %vm64, %v2665, 0.0
  %2704 = vadd.xlane.f32.xlu0 %v2703
  %v2705 = vpop.xlane.xlu0 %2704
  %v2706 = vsel %vm64, %v2666, 0.0
  %2707 = vadd.xlane.f32.xlu0 %v2706
  %v2708 = vpop.xlane.xlu0 %2707
  %v2709 = vsel %vm64, %v2667, 0.0
  %2710 = vadd.xlane.f32.xlu0 %v2709
  %v2711 = vpop.xlane.xlu0 %2710
  %v2712 = vsel %vm64, %v2668, 0.0
  %2713 = vadd.xlane.f32.xlu0 %v2712
  %v2714 = vpop.xlane.xlu0 %2713
  %v2715 = vsel %vm64, %v2669, 0.0
  %2716 = vadd.xlane.f32.xlu0 %v2715
  %v2717 = vpop.xlane.xlu0 %2716
  %v2718 = vmul.f32 %v2672, %v113
  %v2719 = vmul.f32 %v2675, %v113
  %v2720 = vmul.f32 %v2678, %v113
  %v2721 = vmul.f32 %v2681, %v113
  %v2722 = vmul.f32 %v2684, %v113
  %v2723 = vmul.f32 %v2687, %v113
  %v2724 = vmul.f32 %v2690, %v113
  %v2725 = vmul.f32 %v2693, %v113
  %v2726 = vmul.f32 %v2696, %v113
  %v2727 = vmul.f32 %v2699, %v113
  %v2728 = vmul.f32 %v2702, %v113
  %v2729 = vmul.f32 %v2705, %v113
  %v2730 = vmul.f32 %v2708, %v113
  %v2731 = vmul.f32 %v2711, %v113
  %v2732 = vmul.f32 %v2714, %v113
  %v2733 = vmul.f32 %v2717, %v113
  %v2734 = vsub.f32 %v2574, %v2638
  %v2735 = vsub.f32 %v2575, %v2639
  %v2736 = vsub.f32 %v2576, %v2640
  %v2737 = vsub.f32 %v2577, %v2641
  %v2738 = vsub.f32 %v2578, %v2642
  %v2739 = vsub.f32 %v2579, %v2643
  %v2740 = vsub.f32 %v2580, %v2644
  %v2741 = vsub.f32 %v2581, %v2645
  %v2742 = vsub.f32 %v2582, %v2646
  %v2743 = vsub.f32 %v2583, %v2647
  %v2744 = vsub.f32 %v2584, %v2648
  %v2745 = vsub.f32 %v2585, %v2649
  %v2746 = vsub.f32 %v2586, %v2650
  %v2747 = vsub.f32 %v2587, %v2651
  %v2748 = vsub.f32 %v2588, %v2652
  %v2749 = vsub.f32 %v2589, %v2653
  %v2750 = vmul.f32 %v2638, %v2638
  %v2751 = vmul.f32 %v2639, %v2639
  %v2752 = vmul.f32 %v2640, %v2640
  %v2753 = vmul.f32 %v2641, %v2641
  %v2754 = vmul.f32 %v2642, %v2642
  %v2755 = vmul.f32 %v2643, %v2643
  %v2756 = vmul.f32 %v2644, %v2644
  %v2757 = vmul.f32 %v2645, %v2645
  %v2758 = vmul.f32 %v2646, %v2646
  %v2759 = vmul.f32 %v2647, %v2647
  %v2760 = vmul.f32 %v2648, %v2648
  %v2761 = vmul.f32 %v2649, %v2649
  %v2762 = vmul.f32 %v2650, %v2650
  %v2763 = vmul.f32 %v2651, %v2651
  %v2764 = vmul.f32 %v2652, %v2652
  %v2765 = vmul.f32 %v2653, %v2653
  %v2766 = vsub.f32 %v2718, %v2750
  %v2767 = vsub.f32 %v2719, %v2751
  %v2768 = vsub.f32 %v2720, %v2752
  %v2769 = vsub.f32 %v2721, %v2753
  %v2770 = vsub.f32 %v2722, %v2754
  %v2771 = vsub.f32 %v2723, %v2755
  %v2772 = vsub.f32 %v2724, %v2756
  %v2773 = vsub.f32 %v2725, %v2757
  %v2774 = vsub.f32 %v2726, %v2758
  %v2775 = vsub.f32 %v2727, %v2759
  %v2776 = vsub.f32 %v2728, %v2760
  %v2777 = vsub.f32 %v2729, %v2761
  %v2778 = vsub.f32 %v2730, %v2762
  %v2779 = vsub.f32 %v2731, %v2763
  %v2780 = vsub.f32 %v2732, %v2764
  %v2781 = vsub.f32 %v2733, %v2765
  %v2782 = vadd.f32 %v2766, 1e-05
  %v2783 = vadd.f32 %v2767, 1e-05
  %v2784 = vadd.f32 %v2768, 1e-05
  %v2785 = vadd.f32 %v2769, 1e-05
  %v2786 = vadd.f32 %v2770, 1e-05
  %v2787 = vadd.f32 %v2771, 1e-05
  %v2788 = vadd.f32 %v2772, 1e-05
  %v2789 = vadd.f32 %v2773, 1e-05
  %v2790 = vadd.f32 %v2774, 1e-05
  %v2791 = vadd.f32 %v2775, 1e-05
  %v2792 = vadd.f32 %v2776, 1e-05
  %v2793 = vadd.f32 %v2777, 1e-05
  %v2794 = vadd.f32 %v2778, 1e-05
  %v2795 = vadd.f32 %v2779, 1e-05
  %v2796 = vadd.f32 %v2780, 1e-05
  %v2797 = vadd.f32 %v2781, 1e-05
  %v2798 = vrsqrt.pop %v2782
  %v2799 = vrsqrt.pop %v2783
  %v2800 = vrsqrt.pop %v2784
  %v2801 = vrsqrt.pop %v2785
  %v2802 = vrsqrt.pop %v2786
  %v2803 = vrsqrt.pop %v2787
  %v2804 = vrsqrt.pop %v2788
  %v2805 = vrsqrt.pop %v2789
  %v2806 = vrsqrt.pop %v2790
  %v2807 = vrsqrt.pop %v2791
  %v2808 = vrsqrt.pop %v2792
  %v2809 = vrsqrt.pop %v2793
  %v2810 = vrsqrt.pop %v2794
  %v2811 = vrsqrt.pop %v2795
  %v2812 = vrsqrt.pop %v2796
  %v2813 = vrsqrt.pop %v2797
  %v2814 = vmul.f32 %v2734, %v2798
  %v2815 = vmul.f32 %v2735, %v2799
  %v2816 = vmul.f32 %v2736, %v2800
  %v2817 = vmul.f32 %v2737, %v2801
  %v2818 = vmul.f32 %v2738, %v2802
  %v2819 = vmul.f32 %v2739, %v2803
  %v2820 = vmul.f32 %v2740, %v2804
  %v2821 = vmul.f32 %v2741, %v2805
  %v2822 = vmul.f32 %v2742, %v2806
  %v2823 = vmul.f32 %v2743, %v2807
  %v2824 = vmul.f32 %v2744, %v2808
  %v2825 = vmul.f32 %v2745, %v2809
  %v2826 = vmul.f32 %v2746, %v2810
  %v2827 = vmul.f32 %v2747, %v2811
  %v2828 = vmul.f32 %v2748, %v2812
  %v2829 = vmul.f32 %v2749, %v2813
  %s2830 = scalar_lea.vmem %s1, 1
  %v2831 = vld [vmem:[%s2830] sm:$0x1]
  %v2833 = vlaneseq
  %v2834 = vshrl.u32 %v2833, 7
  %v2835 = vsub.s32 0, %v2834
  %v2836 = vrot.slane %v2831, %v2835
  %v2838 = vmul.f32 %v2814, %v2836
  %v2839 = vmul.f32 %v2815, %v2836
  %v2840 = vmul.f32 %v2816, %v2836
  %v2841 = vmul.f32 %v2817, %v2836
  %v2842 = vmul.f32 %v2818, %v2836
  %v2843 = vmul.f32 %v2819, %v2836
  %v2844 = vmul.f32 %v2820, %v2836
  %v2845 = vmul.f32 %v2821, %v2836
  %v2846 = vmul.f32 %v2822, %v2836
  %v2847 = vmul.f32 %v2823, %v2836
  %v2848 = vmul.f32 %v2824, %v2836
  %v2849 = vmul.f32 %v2825, %v2836
  %v2850 = vmul.f32 %v2826, %v2836
  %v2851 = vmul.f32 %v2827, %v2836
  %v2852 = vmul.f32 %v2828, %v2836
  %v2853 = vmul.f32 %v2829, %v2836
  %s2854 = scalar_lea.vmem %s2, 1
  %v2855 = vld [vmem:[%s2854] sm:$0x1]
  %v2857 = vlaneseq
  %v2858 = vshrl.u32 %v2857, 7
  %v2859 = vsub.s32 0, %v2858
  %v2860 = vrot.slane %v2855, %v2859
  %v2862 = vadd.f32 %v2838, %v2860
  %v2863 = vadd.f32 %v2839, %v2860
  %v2864 = vadd.f32 %v2840, %v2860
  %v2865 = vadd.f32 %v2841, %v2860
  %v2866 = vadd.f32 %v2842, %v2860
  %v2867 = vadd.f32 %v2843, %v2860
  %v2868 = vadd.f32 %v2844, %v2860
  %v2869 = vadd.f32 %v2845, %v2860
  %v2870 = vadd.f32 %v2846, %v2860
  %v2871 = vadd.f32 %v2847, %v2860
  %v2872 = vadd.f32 %v2848, %v2860
  %v2873 = vadd.f32 %v2849, %v2860
  %v2874 = vadd.f32 %v2850, %v2860
  %v2875 = vadd.f32 %v2851, %v2860
  %v2876 = vadd.f32 %v2852, %v2860
  %v2877 = vadd.f32 %v2853, %v2860
  %v2878 = vpack.c.bf16 %v2863, %v2862
  %v2879 = vpack.c.bf16 %v2865, %v2864
  %v2880 = vpack.c.bf16 %v2867, %v2866
  %v2881 = vpack.c.bf16 %v2869, %v2868
  %v2882 = vpack.c.bf16 %v2871, %v2870
  %v2883 = vpack.c.bf16 %v2873, %v2872
  %v2884 = vpack.c.bf16 %v2875, %v2874
  %v2885 = vpack.c.bf16 %v2877, %v2876
  %s2886 = scalar_lea.vmem %s3, 16
  %v2887 = vld [vmem:[%s2886] sm:$0xf]
  %v2888 = vld [vmem:[%s2886 + $0x4] sm:$0xf]
  %v2889 = vld [vmem:[%s2886 + $0x8] sm:$0xf]
  %v2890 = vld [vmem:[%s2886 + $0xc] sm:$0xf]
  %s2891 = scalar_lea.vmem %s4, 1
  %v2892 = vld [vmem:[%s2891] sm:$0x1]
  %v2894 = vlaneseq
  %v2895 = vshrl.u32 %v2894, 7
  %v2896 = vsub.s32 0, %v2895
  %v2897 = vrot.slane %v2892, %v2896
  %v2903 = vunpack.c.l.b16 %v2887
  %v2904 = vunpack.c.l.b16 %v2888
  %v2905 = vunpack.c.l.b16 %v2889
  %v2906 = vunpack.c.l.b16 %v2890
  %v2907 = vpack.c.b16 %v2904, %v2903
  %v2908 = vpack.c.b16 %v2906, %v2905
  %v2912 = vsel %vm64, %v2878, 0
  %v2915 = vsel %vm64, %v2879, 0
  %v2918 = vsel %vm64, %v2880, 0
  %v2921 = vsel %vm64, %v2881, 0
  %v2924 = vsel %vm64, %v2882, 0
  %v2927 = vsel %vm64, %v2883, 0
  %v2930 = vsel %vm64, %v2884, 0
  %v2933 = vsel %vm64, %v2885, 0
  %2935 = vmatprep.subr.bf16.mxu0 0
  %2936 = vmatpush1.bf16.msra.mxu0 %v2907
  %2937 = vmatprep.subr.bf16.mxu0 0
  %2938 = vmatpush1.bf16.msra.mxu0 %v2908
  %2939 = vmatprep.subr.bf16.mxu0 0
  %2940 = vmatpush1.bf16.msra.mxu0 0
  %2941 = vmatprep.subr.bf16.mxu0 0
  %2942 = vmatpush1.bf16.msra.mxu0 0
  %2943 = vmatprep.subr.bf16.mxu0 0
  %2944 = vmatpush1.bf16.msra.mxu0 0
  %2945 = vmatprep.subr.bf16.mxu0 0
  %2946 = vmatpush1.bf16.msra.mxu0 0
  %2947 = vmatprep.subr.bf16.mxu0 0
  %2948 = vmatpush1.bf16.msra.mxu0 0
  %2949 = vmatprep.subr.bf16.mxu0 0
  %2950 = vmatpush1.bf16.msra.mxu0 0
  %2951 = vmatprep.subr.bf16.mxu0 0
  %2952 = vmatpush1.bf16.msra.mxu0 0
  %2953 = vmatprep.subr.bf16.mxu0 0
  %2954 = vmatpush1.bf16.msra.mxu0 0
  %2955 = vmatprep.subr.bf16.mxu0 0
  %2956 = vmatpush1.bf16.msra.mxu0 0
  %2957 = vmatprep.subr.bf16.mxu0 0
  %2958 = vmatpush1.bf16.msra.mxu0 0
  %2959 = vmatprep.subr.bf16.mxu0 0
  %2960 = vmatpush1.bf16.msra.mxu0 0
  %2961 = vmatprep.subr.bf16.mxu0 0
  %2962 = vmatpush1.bf16.msra.mxu0 0
  %2963 = vmatprep.subr.bf16.mxu0 0
  %2964 = vmatpush1.bf16.msra.mxu0 0
  %2965 = vmatprep.subr.bf16.mxu0 0
  %2966 = vmatpush1.bf16.msra.mxu0 0
  %2967 = vmatprep.mubr.bf16.mxu0 0
  %2968 = vmatmul.mubr.bf16.gmra.mrb[0].mxu0 %v2912
  %v2969 = vpop.f32.mrb[0].mxu0
  %v2970 = vadd.f32 %v2897, %v2969
  %v2971 = vpop.f32.mrb[0].mxu0
  %v2972 = vpop.f32.mrb[0].mxu0
  %v2973 = vadd.f32 %v2897, %v2972
  %v2974 = vpop.f32.mrb[0].mxu0
  %2975 = vmatprep.mubr.bf16.mxu0 0
  %2976 = vmatmul.mubr.bf16.gmra.mrb[0].mxu0 %v2915
  %v2977 = vpop.f32.mrb[0].mxu0
  %v2978 = vadd.f32 %v2897, %v2977
  %v2979 = vpop.f32.mrb[0].mxu0
  %v2980 = vpop.f32.mrb[0].mxu0
  %v2981 = vadd.f32 %v2897, %v2980
  %v2982 = vpop.f32.mrb[0].mxu0
  %2983 = vmatprep.mubr.bf16.mxu0 0
  %2984 = vmatmul.mubr.bf16.gmra.mrb[0].mxu0 %v2918
  %v2985 = vpop.f32.mrb[0].mxu0
  %v2986 = vadd.f32 %v2897, %v2985
  %v2987 = vpop.f32.mrb[0].mxu0
  %v2988 = vpop.f32.mrb[0].mxu0
  %v2989 = vadd.f32 %v2897, %v2988
  %v2990 = vpop.f32.mrb[0].mxu0
  %2991 = vmatprep.mubr.bf16.mxu0 0
  %2992 = vmatmul.mubr.bf16.gmra.mrb[0].mxu0 %v2921
  %v2993 = vpop.f32.mrb[0].mxu0
  %v2994 = vadd.f32 %v2897, %v2993
  %v2995 = vpop.f32.mrb[0].mxu0
  %v2996 = vpop.f32.mrb[0].mxu0
  %v2997 = vadd.f32 %v2897, %v2996
  %v2998 = vpop.f32.mrb[0].mxu0
  %2999 = vmatprep.mubr.bf16.mxu0 0
  %3000 = vmatmul.mubr.bf16.gmra.mrb[0].mxu0 %v2924
  %v3001 = vpop.f32.mrb[0].mxu0
  %v3002 = vadd.f32 %v2897, %v3001
  %v3003 = vpop.f32.mrb[0].mxu0
  %v3004 = vpop.f32.mrb[0].mxu0
  %v3005 = vadd.f32 %v2897, %v3004
  %v3006 = vpop.f32.mrb[0].mxu0
  %3007 = vmatprep.mubr.bf16.mxu0 0
  %3008 = vmatmul.mubr.bf16.gmra.mrb[0].mxu0 %v2927
  %v3009 = vpop.f32.mrb[0].mxu0
  %v3010 = vadd.f32 %v2897, %v3009
  %v3011 = vpop.f32.mrb[0].mxu0
  %v3012 = vpop.f32.mrb[0].mxu0
  %v3013 = vadd.f32 %v2897, %v3012
  %v3014 = vpop.f32.mrb[0].mxu0
  %3015 = vmatprep.mubr.bf16.mxu0 0
  %3016 = vmatmul.mubr.bf16.gmra.mrb[0].mxu0 %v2930
  %v3017 = vpop.f32.mrb[0].mxu0
  %v3018 = vadd.f32 %v2897, %v3017
  %v3019 = vpop.f32.mrb[0].mxu0
  %v3020 = vpop.f32.mrb[0].mxu0
  %v3021 = vadd.f32 %v2897, %v3020
  %v3022 = vpop.f32.mrb[0].mxu0
  %3023 = vmatprep.mubr.bf16.mxu0 0
  %3024 = vmatmul.mubr.bf16.gmra.mrb[0].mxu0 %v2933
  %v3025 = vpop.f32.mrb[0].mxu0
  %v3026 = vadd.f32 %v2897, %v3025
  %v3027 = vpop.f32.mrb[0].mxu0
  %v3028 = vpop.f32.mrb[0].mxu0
  %v3029 = vadd.f32 %v2897, %v3028
  %v3030 = vpop.f32.mrb[0].mxu0
  %3031 = vdwg.mxu0
  %v3032 = vpack.c.bf16 %v2973, %v2970
  %v3033 = vpack.c.bf16 %v2981, %v2978
  %v3034 = vpack.c.bf16 %v2989, %v2986
  %v3035 = vpack.c.bf16 %v2997, %v2994
  %v3036 = vpack.c.bf16 %v3005, %v3002
  %v3037 = vpack.c.bf16 %v3013, %v3010
  %v3038 = vpack.c.bf16 %v3021, %v3018
  %v3039 = vpack.c.bf16 %v3029, %v3026
  %3048 = vrot.lane.b32.xlu0 %v3032, 96
  %v3049 = vpop.permute.xlu0 %3048
  %3050 = vrot.lane.b32.xlu0 %v3033, 96
  %v3051 = vpop.permute.xlu0 %3050
  %3052 = vrot.lane.b32.xlu0 %v3034, 96
  %v3053 = vpop.permute.xlu0 %3052
  %3054 = vrot.lane.b32.xlu0 %v3035, 96
  %v3055 = vpop.permute.xlu0 %3054
  %3056 = vrot.lane.b32.xlu0 %v3036, 96
  %v3057 = vpop.permute.xlu0 %3056
  %3058 = vrot.lane.b32.xlu0 %v3037, 96
  %v3059 = vpop.permute.xlu0 %3058
  %3060 = vrot.lane.b32.xlu0 %v3038, 96
  %v3061 = vpop.permute.xlu0 %3060
  %3062 = vrot.lane.b32.xlu0 %v3039, 96
  %v3063 = vpop.permute.xlu0 %3062
  %v3065 = vsel %vm536, %v3032, 0
  %v3068 = vsel %vm536, %v3033, 0
  %v3071 = vsel %vm536, %v3034, 0
  %v3074 = vsel %vm536, %v3035, 0
  %v3077 = vsel %vm536, %v3036, 0
  %v3080 = vsel %vm536, %v3037, 0
  %v3083 = vsel %vm536, %v3038, 0
  %v3086 = vsel %vm536, %v3039, 0
  %v3089 = vsel %vm536, %v3049, 0
  %v3092 = vsel %vm536, %v3051, 0
  %v3095 = vsel %vm536, %v3053, 0
  %v3098 = vsel %vm536, %v3055, 0
  %v3101 = vsel %vm536, %v3057, 0
  %v3104 = vsel %vm536, %v3059, 0
  %v3107 = vsel %vm536, %v3061, 0
  %v3110 = vsel %vm536, %v3063, 0
  %3112 = vmatprep.subr.bf16.mxu0 0
  %3113 = vmatpush1.bf16.xpose.msra.mxu0 %v3089
  %3114 = vmatprep.subr.bf16.mxu0 0
  %3115 = vmatpush1.bf16.xpose.msra.mxu0 %v3092
  %3116 = vmatprep.subr.bf16.mxu0 0
  %3117 = vmatpush1.bf16.xpose.msra.mxu0 %v3095
  %3118 = vmatprep.subr.bf16.mxu0 0
  %3119 = vmatpush1.bf16.xpose.msra.mxu0 %v3098
  %3120 = vmatprep.subr.bf16.mxu0 0
  %3121 = vmatpush1.bf16.xpose.msra.mxu0 %v3101
  %3122 = vmatprep.subr.bf16.mxu0 0
  %3123 = vmatpush1.bf16.xpose.msra.mxu0 %v3104
  %3124 = vmatprep.subr.bf16.mxu0 0
  %3125 = vmatpush1.bf16.xpose.msra.mxu0 %v3107
  %3126 = vmatprep.subr.bf16.mxu0 0
  %3127 = vmatpush1.bf16.xpose.msra.mxu0 %v3110
  %3128 = vmatprep.subr.bf16.mxu0 0
  %3129 = vmatpush1.bf16.xpose.msra.mxu0 0
  %3130 = vmatprep.subr.bf16.mxu0 0
  %3131 = vmatpush1.bf16.xpose.msra.mxu0 0
  %3132 = vmatprep.subr.bf16.mxu0 0
  %3133 = vmatpush1.bf16.xpose.msra.mxu0 0
  %3134 = vmatprep.subr.bf16.mxu0 0
  %3135 = vmatpush1.bf16.xpose.msra.mxu0 0
  %3136 = vmatprep.subr.bf16.mxu0 0
  %3137 = vmatpush1.bf16.xpose.msra.mxu0 0
  %3138 = vmatprep.subr.bf16.mxu0 0
  %3139 = vmatpush1.bf16.xpose.msra.mxu0 0
  %3140 = vmatprep.subr.bf16.mxu0 0
  %3141 = vmatpush1.bf16.xpose.msra.mxu0 0
  %3142 = vmatprep.subr.bf16.mxu0 0
  %3143 = vmatpush1.bf16.xpose.msra.mxu0 0
  %3144 = vmatprep.mubr.bf16.mxu0 0
  %3145 = vmatmul.mubr.bf16.gmra.mrb[0].mxu0 %v3065
  %v3146 = vpop.f32.mrb[0].mxu0
  %v3147 = vadd.f32 0.0, %v3146
  %v3148 = vpop.f32.mrb[0].mxu0
  %v3149 = vpop.f32.mrb[0].mxu0
  %v3150 = vadd.f32 0.0, %v3149
  %v3151 = vpop.f32.mrb[0].mxu0
  %3152 = vmatprep.mubr.bf16.mxu0 0
  %3153 = vmatmul.mubr.bf16.gmra.mrb[0].mxu0 %v3068
  %v3154 = vpop.f32.mrb[0].mxu0
  %v3155 = vadd.f32 0.0, %v3154
  %v3156 = vpop.f32.mrb[0].mxu0
  %v3157 = vpop.f32.mrb[0].mxu0
  %v3158 = vadd.f32 0.0, %v3157
  %v3159 = vpop.f32.mrb[0].mxu0
  %3160 = vmatprep.mubr.bf16.mxu0 0
  %3161 = vmatmul.mubr.bf16.gmra.mrb[0].mxu0 %v3071
  %v3162 = vpop.f32.mrb[0].mxu0
  %v3163 = vadd.f32 0.0, %v3162
  %v3164 = vpop.f32.mrb[0].mxu0
  %v3165 = vpop.f32.mrb[0].mxu0
  %v3166 = vadd.f32 0.0, %v3165
  %v3167 = vpop.f32.mrb[0].mxu0
  %3168 = vmatprep.mubr.bf16.mxu0 0
  %3169 = vmatmul.mubr.bf16.gmra.mrb[0].mxu0 %v3074
  %v3170 = vpop.f32.mrb[0].mxu0
  %v3171 = vadd.f32 0.0, %v3170
  %v3172 = vpop.f32.mrb[0].mxu0
  %v3173 = vpop.f32.mrb[0].mxu0
  %v3174 = vadd.f32 0.0, %v3173
  %v3175 = vpop.f32.mrb[0].mxu0
  %3176 = vmatprep.mubr.bf16.mxu0 0
  %3177 = vmatmul.mubr.bf16.gmra.mrb[0].mxu0 %v3077
  %v3178 = vpop.f32.mrb[0].mxu0
  %v3179 = vadd.f32 0.0, %v3178
  %v3180 = vpop.f32.mrb[0].mxu0
  %v3181 = vpop.f32.mrb[0].mxu0
  %v3182 = vadd.f32 0.0, %v3181
  %v3183 = vpop.f32.mrb[0].mxu0
  %3184 = vmatprep.mubr.bf16.mxu0 0
  %3185 = vmatmul.mubr.bf16.gmra.mrb[0].mxu0 %v3080
  %v3186 = vpop.f32.mrb[0].mxu0
  %v3187 = vadd.f32 0.0, %v3186
  %v3188 = vpop.f32.mrb[0].mxu0
  %v3189 = vpop.f32.mrb[0].mxu0
  %v3190 = vadd.f32 0.0, %v3189
  %v3191 = vpop.f32.mrb[0].mxu0
  %3192 = vmatprep.mubr.bf16.mxu0 0
  %3193 = vmatmul.mubr.bf16.gmra.mrb[0].mxu0 %v3083
  %v3194 = vpop.f32.mrb[0].mxu0
  %v3195 = vadd.f32 0.0, %v3194
  %v3196 = vpop.f32.mrb[0].mxu0
  %v3197 = vpop.f32.mrb[0].mxu0
  %v3198 = vadd.f32 0.0, %v3197
  %v3199 = vpop.f32.mrb[0].mxu0
  %3200 = vmatprep.mubr.bf16.mxu0 0
  %3201 = vmatmul.mubr.bf16.gmra.mrb[0].mxu0 %v3086
  %v3202 = vpop.f32.mrb[0].mxu0
  %v3203 = vadd.f32 0.0, %v3202
  %v3204 = vpop.f32.mrb[0].mxu0
  %v3205 = vpop.f32.mrb[0].mxu0
  %v3206 = vadd.f32 0.0, %v3205
  %v3207 = vpop.f32.mrb[0].mxu0
  %3208 = vdwg.mxu0
  %v3209 = vmul.f32 %v3147, 0.25
  %v3210 = vmul.f32 %v3150, 0.25
  %v3211 = vmul.f32 %v3155, 0.25
  %v3212 = vmul.f32 %v3158, 0.25
  %v3213 = vmul.f32 %v3163, 0.25
  %v3214 = vmul.f32 %v3166, 0.25
  %v3215 = vmul.f32 %v3171, 0.25
  %v3216 = vmul.f32 %v3174, 0.25
  %v3217 = vmul.f32 %v3179, 0.25
  %v3218 = vmul.f32 %v3182, 0.25
  %v3219 = vmul.f32 %v3187, 0.25
  %v3220 = vmul.f32 %v3190, 0.25
  %v3221 = vmul.f32 %v3195, 0.25
  %v3222 = vmul.f32 %v3198, 0.25
  %v3223 = vmul.f32 %v3203, 0.25
  %v3224 = vmul.f32 %v3206, 0.25
  %s3225 = scalar_lea.vmem %s7, 256
  %v3226 = vld [vmem:[%s3225] sm:$0xff]
  %v3227 = vld [vmem:[%s3225 + $0x8] sm:$0xff]
  %v3228 = vld [vmem:[%s3225 + $0x10] sm:$0xff]
  %v3229 = vld [vmem:[%s3225 + $0x18] sm:$0xff]
  %v3230 = vld [vmem:[%s3225 + $0x20] sm:$0xff]
  %v3231 = vld [vmem:[%s3225 + $0x28] sm:$0xff]
  %v3232 = vld [vmem:[%s3225 + $0x30] sm:$0xff]
  %v3233 = vld [vmem:[%s3225 + $0x38] sm:$0xff]
  %v3234 = vld [vmem:[%s3225 + $0x40] sm:$0xff]
  %v3235 = vld [vmem:[%s3225 + $0x48] sm:$0xff]
  %v3236 = vld [vmem:[%s3225 + $0x50] sm:$0xff]
  %v3237 = vld [vmem:[%s3225 + $0x58] sm:$0xff]
  %v3238 = vld [vmem:[%s3225 + $0x60] sm:$0xff]
  %v3239 = vld [vmem:[%s3225 + $0x68] sm:$0xff]
  %v3240 = vld [vmem:[%s3225 + $0x70] sm:$0xff]
  %v3241 = vld [vmem:[%s3225 + $0x78] sm:$0xff]
  %v3242 = vadd.f32 %v3209, %v3226
  %v3243 = vadd.f32 %v3210, %v3227
  %v3244 = vadd.f32 %v3211, %v3228
  %v3245 = vadd.f32 %v3212, %v3229
  %v3246 = vadd.f32 %v3213, %v3230
  %v3247 = vadd.f32 %v3214, %v3231
  %v3248 = vadd.f32 %v3215, %v3232
  %v3249 = vadd.f32 %v3216, %v3233
  %v3250 = vadd.f32 %v3217, %v3234
  %v3251 = vadd.f32 %v3218, %v3235
  %v3252 = vadd.f32 %v3219, %v3236
  %v3253 = vadd.f32 %v3220, %v3237
  %v3254 = vadd.f32 %v3221, %v3238
  %v3255 = vadd.f32 %v3222, %v3239
  %v3256 = vadd.f32 %v3223, %v3240
  %v3257 = vadd.f32 %v3224, %v3241
  %3258 = vmax.xlane.f32.xlu0 %v3242
  %v3259 = vpop.xlane.xlu0 %3258
  %3260 = vmax.xlane.f32.xlu0 %v3243
  %v3261 = vpop.xlane.xlu0 %3260
  %3262 = vmax.xlane.f32.xlu0 %v3244
  %v3263 = vpop.xlane.xlu0 %3262
  %3264 = vmax.xlane.f32.xlu0 %v3245
  %v3265 = vpop.xlane.xlu0 %3264
  %3266 = vmax.xlane.f32.xlu0 %v3246
  %v3267 = vpop.xlane.xlu0 %3266
  %3268 = vmax.xlane.f32.xlu0 %v3247
  %v3269 = vpop.xlane.xlu0 %3268
  %3270 = vmax.xlane.f32.xlu0 %v3248
  %v3271 = vpop.xlane.xlu0 %3270
  %3272 = vmax.xlane.f32.xlu0 %v3249
  %v3273 = vpop.xlane.xlu0 %3272
  %3274 = vmax.xlane.f32.xlu0 %v3250
  %v3275 = vpop.xlane.xlu0 %3274
  %3276 = vmax.xlane.f32.xlu0 %v3251
  %v3277 = vpop.xlane.xlu0 %3276
  %3278 = vmax.xlane.f32.xlu0 %v3252
  %v3279 = vpop.xlane.xlu0 %3278
  %3280 = vmax.xlane.f32.xlu0 %v3253
  %v3281 = vpop.xlane.xlu0 %3280
  %3282 = vmax.xlane.f32.xlu0 %v3254
  %v3283 = vpop.xlane.xlu0 %3282
  %3284 = vmax.xlane.f32.xlu0 %v3255
  %v3285 = vpop.xlane.xlu0 %3284
  %3286 = vmax.xlane.f32.xlu0 %v3256
  %v3287 = vpop.xlane.xlu0 %3286
  %3288 = vmax.xlane.f32.xlu0 %v3257
  %v3289 = vpop.xlane.xlu0 %3288
  %v3290 = vsub.f32 %v3242, %v3259
  %v3291 = vsub.f32 %v3243, %v3261
  %v3292 = vsub.f32 %v3244, %v3263
  %v3293 = vsub.f32 %v3245, %v3265
  %v3294 = vsub.f32 %v3246, %v3267
  %v3295 = vsub.f32 %v3247, %v3269
  %v3296 = vsub.f32 %v3248, %v3271
  %v3297 = vsub.f32 %v3249, %v3273
  %v3298 = vsub.f32 %v3250, %v3275
  %v3299 = vsub.f32 %v3251, %v3277
  %v3300 = vsub.f32 %v3252, %v3279
  %v3301 = vsub.f32 %v3253, %v3281
  %v3302 = vsub.f32 %v3254, %v3283
  %v3303 = vsub.f32 %v3255, %v3285
  %v3304 = vsub.f32 %v3256, %v3287
  %v3305 = vsub.f32 %v3257, %v3289
  %v3306 = vmul.f32 %v3290, 1.442695
  %v3307 = vpow.pop %v3306
  %v3308 = vmul.f32 %v3291, 1.442695
  %v3309 = vpow.pop %v3308
  %v3310 = vmul.f32 %v3292, 1.442695
  %v3311 = vpow.pop %v3310
  %v3312 = vmul.f32 %v3293, 1.442695
  %v3313 = vpow.pop %v3312
  %v3314 = vmul.f32 %v3294, 1.442695
  %v3315 = vpow.pop %v3314
  %v3316 = vmul.f32 %v3295, 1.442695
  %v3317 = vpow.pop %v3316
  %v3318 = vmul.f32 %v3296, 1.442695
  %v3319 = vpow.pop %v3318
  %v3320 = vmul.f32 %v3297, 1.442695
  %v3321 = vpow.pop %v3320
  %v3322 = vmul.f32 %v3298, 1.442695
  %v3323 = vpow.pop %v3322
  %v3324 = vmul.f32 %v3299, 1.442695
  %v3325 = vpow.pop %v3324
  %v3326 = vmul.f32 %v3300, 1.442695
  %v3327 = vpow.pop %v3326
  %v3328 = vmul.f32 %v3301, 1.442695
  %v3329 = vpow.pop %v3328
  %v3330 = vmul.f32 %v3302, 1.442695
  %v3331 = vpow.pop %v3330
  %v3332 = vmul.f32 %v3303, 1.442695
  %v3333 = vpow.pop %v3332
  %v3334 = vmul.f32 %v3304, 1.442695
  %v3335 = vpow.pop %v3334
  %v3336 = vmul.f32 %v3305, 1.442695
  %v3337 = vpow.pop %v3336
  %3338 = vadd.xlane.f32.xlu0 %v3307
  %v3339 = vpop.xlane.xlu0 %3338
  %3340 = vadd.xlane.f32.xlu0 %v3309
  %v3341 = vpop.xlane.xlu0 %3340
  %3342 = vadd.xlane.f32.xlu0 %v3311
  %v3343 = vpop.xlane.xlu0 %3342
  %3344 = vadd.xlane.f32.xlu0 %v3313
  %v3345 = vpop.xlane.xlu0 %3344
  %3346 = vadd.xlane.f32.xlu0 %v3315
  %v3347 = vpop.xlane.xlu0 %3346
  %3348 = vadd.xlane.f32.xlu0 %v3317
  %v3349 = vpop.xlane.xlu0 %3348
  %3350 = vadd.xlane.f32.xlu0 %v3319
  %v3351 = vpop.xlane.xlu0 %3350
  %3352 = vadd.xlane.f32.xlu0 %v3321
  %v3353 = vpop.xlane.xlu0 %3352
  %3354 = vadd.xlane.f32.xlu0 %v3323
  %v3355 = vpop.xlane.xlu0 %3354
  %3356 = vadd.xlane.f32.xlu0 %v3325
  %v3357 = vpop.xlane.xlu0 %3356
  %3358 = vadd.xlane.f32.xlu0 %v3327
  %v3359 = vpop.xlane.xlu0 %3358
  %3360 = vadd.xlane.f32.xlu0 %v3329
  %v3361 = vpop.xlane.xlu0 %3360
  %3362 = vadd.xlane.f32.xlu0 %v3331
  %v3363 = vpop.xlane.xlu0 %3362
  %3364 = vadd.xlane.f32.xlu0 %v3333
  %v3365 = vpop.xlane.xlu0 %3364
  %3366 = vadd.xlane.f32.xlu0 %v3335
  %v3367 = vpop.xlane.xlu0 %3366
  %3368 = vadd.xlane.f32.xlu0 %v3337
  %v3369 = vpop.xlane.xlu0 %3368
  %v3370 = vrcp.pop %v3339
  %v3371 = vrcp.pop %v3341
  %v3372 = vrcp.pop %v3343
  %v3373 = vrcp.pop %v3345
  %v3374 = vrcp.pop %v3347
  %v3375 = vrcp.pop %v3349
  %v3376 = vrcp.pop %v3351
  %v3377 = vrcp.pop %v3353
  %v3378 = vrcp.pop %v3355
  %v3379 = vrcp.pop %v3357
  %v3380 = vrcp.pop %v3359
  %v3381 = vrcp.pop %v3361
  %v3382 = vrcp.pop %v3363
  %v3383 = vrcp.pop %v3365
  %v3384 = vrcp.pop %v3367
  %v3385 = vrcp.pop %v3369
  %v3386 = vmul.f32 %v3307, %v3370
  %v3387 = vmul.f32 %v3309, %v3371
  %v3388 = vmul.f32 %v3311, %v3372
  %v3389 = vmul.f32 %v3313, %v3373
  %v3390 = vmul.f32 %v3315, %v3374
  %v3391 = vmul.f32 %v3317, %v3375
  %v3392 = vmul.f32 %v3319, %v3376
  %v3393 = vmul.f32 %v3321, %v3377
  %v3394 = vmul.f32 %v3323, %v3378
  %v3395 = vmul.f32 %v3325, %v3379
  %v3396 = vmul.f32 %v3327, %v3380
  %v3397 = vmul.f32 %v3329, %v3381
  %v3398 = vmul.f32 %v3331, %v3382
  %v3399 = vmul.f32 %v3333, %v3383
  %v3400 = vmul.f32 %v3335, %v3384
  %v3401 = vmul.f32 %v3337, %v3385
  %v3402 = vpack.c.bf16 %v3387, %v3386
  %v3403 = vpack.c.bf16 %v3389, %v3388
  %v3404 = vpack.c.bf16 %v3391, %v3390
  %v3405 = vpack.c.bf16 %v3393, %v3392
  %v3406 = vpack.c.bf16 %v3395, %v3394
  %v3407 = vpack.c.bf16 %v3397, %v3396
  %v3408 = vpack.c.bf16 %v3399, %v3398
  %v3409 = vpack.c.bf16 %v3401, %v3400
  %3410 = vrot.lane.b32.xlu0 %v3032, 64
  %v3411 = vpop.permute.xlu0 %3410
  %3412 = vrot.lane.b32.xlu0 %v3033, 64
  %v3413 = vpop.permute.xlu0 %3412
  %3414 = vrot.lane.b32.xlu0 %v3034, 64
  %v3415 = vpop.permute.xlu0 %3414
  %3416 = vrot.lane.b32.xlu0 %v3035, 64
  %v3417 = vpop.permute.xlu0 %3416
  %3418 = vrot.lane.b32.xlu0 %v3036, 64
  %v3419 = vpop.permute.xlu0 %3418
  %3420 = vrot.lane.b32.xlu0 %v3037, 64
  %v3421 = vpop.permute.xlu0 %3420
  %3422 = vrot.lane.b32.xlu0 %v3038, 64
  %v3423 = vpop.permute.xlu0 %3422
  %3424 = vrot.lane.b32.xlu0 %v3039, 64
  %v3425 = vpop.permute.xlu0 %3424
  %3434 = vmatprep.subr.bf16.mxu0 0
  %3435 = vmatpush1.bf16.msra.mxu0 %v3411
  %3436 = vmatprep.subr.bf16.mxu0 0
  %3437 = vmatpush1.bf16.msra.mxu0 %v3413
  %3438 = vmatprep.subr.bf16.mxu0 0
  %3439 = vmatpush1.bf16.msra.mxu0 %v3415
  %3440 = vmatprep.subr.bf16.mxu0 0
  %3441 = vmatpush1.bf16.msra.mxu0 %v3417
  %3442 = vmatprep.subr.bf16.mxu0 0
  %3443 = vmatpush1.bf16.msra.mxu0 %v3419
  %3444 = vmatprep.subr.bf16.mxu0 0
  %3445 = vmatpush1.bf16.msra.mxu0 %v3421
  %3446 = vmatprep.subr.bf16.mxu0 0
  %3447 = vmatpush1.bf16.msra.mxu0 %v3423
  %3448 = vmatprep.subr.bf16.mxu0 0
  %3449 = vmatpush1.bf16.msra.mxu0 %v3425
  %3450 = vmatprep.subr.bf16.mxu0 0
  %3451 = vmatpush1.bf16.msra.mxu0 0
  %3452 = vmatprep.subr.bf16.mxu0 0
  %3453 = vmatpush1.bf16.msra.mxu0 0
  %3454 = vmatprep.subr.bf16.mxu0 0
  %3455 = vmatpush1.bf16.msra.mxu0 0
  %3456 = vmatprep.subr.bf16.mxu0 0
  %3457 = vmatpush1.bf16.msra.mxu0 0
  %3458 = vmatprep.subr.bf16.mxu0 0
  %3459 = vmatpush1.bf16.msra.mxu0 0
  %3460 = vmatprep.subr.bf16.mxu0 0
  %3461 = vmatpush1.bf16.msra.mxu0 0
  %3462 = vmatprep.subr.bf16.mxu0 0
  %3463 = vmatpush1.bf16.msra.mxu0 0
  %3464 = vmatprep.subr.bf16.mxu0 0
  %3465 = vmatpush1.bf16.msra.mxu0 0
  %3466 = vmatprep.mubr.bf16.mxu0 0
  %3467 = vmatmul.mubr.bf16.gmra.mrb[0].mxu0 %v3402
  %v3468 = vpop.f32.mrb[0].mxu0
  %v3469 = vadd.f32 0.0, %v3468
  %v3470 = vpop.f32.mrb[0].mxu0
  %v3471 = vpop.f32.mrb[0].mxu0
  %v3472 = vadd.f32 0.0, %v3471
  %v3473 = vpop.f32.mrb[0].mxu0
  %3474 = vmatprep.mubr.bf16.mxu0 0
  %3475 = vmatmul.mubr.bf16.gmra.mrb[0].mxu0 %v3403
  %v3476 = vpop.f32.mrb[0].mxu0
  %v3477 = vadd.f32 0.0, %v3476
  %v3478 = vpop.f32.mrb[0].mxu0
  %v3479 = vpop.f32.mrb[0].mxu0
  %v3480 = vadd.f32 0.0, %v3479
  %v3481 = vpop.f32.mrb[0].mxu0
  %3482 = vmatprep.mubr.bf16.mxu0 0
  %3483 = vmatmul.mubr.bf16.gmra.mrb[0].mxu0 %v3404
  %v3484 = vpop.f32.mrb[0].mxu0
  %v3485 = vadd.f32 0.0, %v3484
  %v3486 = vpop.f32.mrb[0].mxu0
  %v3487 = vpop.f32.mrb[0].mxu0
  %v3488 = vadd.f32 0.0, %v3487
  %v3489 = vpop.f32.mrb[0].mxu0
  %3490 = vmatprep.mubr.bf16.mxu0 0
  %3491 = vmatmul.mubr.bf16.gmra.mrb[0].mxu0 %v3405
  %v3492 = vpop.f32.mrb[0].mxu0
  %v3493 = vadd.f32 0.0, %v3492
  %v3494 = vpop.f32.mrb[0].mxu0
  %v3495 = vpop.f32.mrb[0].mxu0
  %v3496 = vadd.f32 0.0, %v3495
  %v3497 = vpop.f32.mrb[0].mxu0
  %3498 = vmatprep.mubr.bf16.mxu0 0
  %3499 = vmatmul.mubr.bf16.gmra.mrb[0].mxu0 %v3406
  %v3500 = vpop.f32.mrb[0].mxu0
  %v3501 = vadd.f32 0.0, %v3500
  %v3502 = vpop.f32.mrb[0].mxu0
  %v3503 = vpop.f32.mrb[0].mxu0
  %v3504 = vadd.f32 0.0, %v3503
  %v3505 = vpop.f32.mrb[0].mxu0
  %3506 = vmatprep.mubr.bf16.mxu0 0
  %3507 = vmatmul.mubr.bf16.gmra.mrb[0].mxu0 %v3407
  %v3508 = vpop.f32.mrb[0].mxu0
  %v3509 = vadd.f32 0.0, %v3508
  %v3510 = vpop.f32.mrb[0].mxu0
  %v3511 = vpop.f32.mrb[0].mxu0
  %v3512 = vadd.f32 0.0, %v3511
  %v3513 = vpop.f32.mrb[0].mxu0
  %3514 = vmatprep.mubr.bf16.mxu0 0
  %3515 = vmatmul.mubr.bf16.gmra.mrb[0].mxu0 %v3408
  %v3516 = vpop.f32.mrb[0].mxu0
  %v3517 = vadd.f32 0.0, %v3516
  %v3518 = vpop.f32.mrb[0].mxu0
  %v3519 = vpop.f32.mrb[0].mxu0
  %v3520 = vadd.f32 0.0, %v3519
  %v3521 = vpop.f32.mrb[0].mxu0
  %3522 = vmatprep.mubr.bf16.mxu0 0
  %3523 = vmatmul.mubr.bf16.gmra.mrb[0].mxu0 %v3409
  %v3524 = vpop.f32.mrb[0].mxu0
  %v3525 = vadd.f32 0.0, %v3524
  %v3526 = vpop.f32.mrb[0].mxu0
  %v3527 = vpop.f32.mrb[0].mxu0
  %v3528 = vadd.f32 0.0, %v3527
  %v3529 = vpop.f32.mrb[0].mxu0
  %3530 = vdwg.mxu0
  %v3531 = vpack.c.bf16 %v3472, %v3469
  %v3532 = vpack.c.bf16 %v3480, %v3477
  %v3533 = vpack.c.bf16 %v3488, %v3485
  %v3534 = vpack.c.bf16 %v3496, %v3493
  %v3535 = vpack.c.bf16 %v3504, %v3501
  %v3536 = vpack.c.bf16 %v3512, %v3509
  %v3537 = vpack.c.bf16 %v3520, %v3517
  %v3538 = vpack.c.bf16 %v3528, %v3525
  %s3539 = scalar_lea.vmem %s5, 16
  %v3540 = vld [vmem:[%s3539] sm:$0xf]
  %v3541 = vld [vmem:[%s3539 + $0x4] sm:$0xf]
  %3542 = vrot.lane.b32.xlu0 %v3032, 112
  %v3543 = vpop.permute.xlu0 %3542
  %3544 = vrot.lane.b32.xlu0 %v3033, 112
  %v3545 = vpop.permute.xlu0 %3544
  %3546 = vrot.lane.b32.xlu0 %v3034, 112
  %v3547 = vpop.permute.xlu0 %3546
  %3548 = vrot.lane.b32.xlu0 %v3035, 112
  %v3549 = vpop.permute.xlu0 %3548
  %3550 = vrot.lane.b32.xlu0 %v3036, 112
  %v3551 = vpop.permute.xlu0 %3550
  %3552 = vrot.lane.b32.xlu0 %v3037, 112
  %v3553 = vpop.permute.xlu0 %3552
  %3554 = vrot.lane.b32.xlu0 %v3038, 112
  %v3555 = vpop.permute.xlu0 %3554
  %3556 = vrot.lane.b32.xlu0 %v3039, 112
  %v3557 = vpop.permute.xlu0 %3556
  %3558 = vrot.lane.b32.xlu0 %v3032, 80
  %v3559 = vpop.permute.xlu0 %3558
  %3560 = vrot.lane.b32.xlu0 %v3033, 80
  %v3561 = vpop.permute.xlu0 %3560
  %3562 = vrot.lane.b32.xlu0 %v3034, 80
  %v3563 = vpop.permute.xlu0 %3562
  %3564 = vrot.lane.b32.xlu0 %v3035, 80
  %v3565 = vpop.permute.xlu0 %3564
  %3566 = vrot.lane.b32.xlu0 %v3036, 80
  %v3567 = vpop.permute.xlu0 %3566
  %3568 = vrot.lane.b32.xlu0 %v3037, 80
  %v3569 = vpop.permute.xlu0 %3568
  %3570 = vrot.lane.b32.xlu0 %v3038, 80
  %v3571 = vpop.permute.xlu0 %3570
  %3572 = vrot.lane.b32.xlu0 %v3039, 80
  %v3573 = vpop.permute.xlu0 %3572
  %v3575 = vsel %vm536, %v3543, 0
  %v3578 = vsel %vm536, %v3545, 0
  %v3581 = vsel %vm536, %v3547, 0
  %v3584 = vsel %vm536, %v3549, 0
  %v3587 = vsel %vm536, %v3551, 0
  %v3590 = vsel %vm536, %v3553, 0
  %v3593 = vsel %vm536, %v3555, 0
  %v3596 = vsel %vm536, %v3557, 0
  %v3599 = vsel %vm536, %v3559, 0
  %v3602 = vsel %vm536, %v3561, 0
  %v3605 = vsel %vm536, %v3563, 0
  %v3608 = vsel %vm536, %v3565, 0
  %v3611 = vsel %vm536, %v3567, 0
  %v3614 = vsel %vm536, %v3569, 0
  %v3617 = vsel %vm536, %v3571, 0
  %v3620 = vsel %vm536, %v3573, 0
  %3622 = vmatprep.subr.bf16.mxu0 0
  %3623 = vmatpush1.bf16.xpose.msra.mxu0 %v3599
  %3624 = vmatprep.subr.bf16.mxu0 0
  %3625 = vmatpush1.bf16.xpose.msra.mxu0 %v3602
  %3626 = vmatprep.subr.bf16.mxu0 0
  %3627 = vmatpush1.bf16.xpose.msra.mxu0 %v3605
  %3628 = vmatprep.subr.bf16.mxu0 0
  %3629 = vmatpush1.bf16.xpose.msra.mxu0 %v3608
  %3630 = vmatprep.subr.bf16.mxu0 0
  %3631 = vmatpush1.bf16.xpose.msra.mxu0 %v3611
  %3632 = vmatprep.subr.bf16.mxu0 0
  %3633 = vmatpush1.bf16.xpose.msra.mxu0 %v3614
  %3634 = vmatprep.subr.bf16.mxu0 0
  %3635 = vmatpush1.bf16.xpose.msra.mxu0 %v3617
  %3636 = vmatprep.subr.bf16.mxu0 0
  %3637 = vmatpush1.bf16.xpose.msra.mxu0 %v3620
  %3638 = vmatprep.subr.bf16.mxu0 0
  %3639 = vmatpush1.bf16.xpose.msra.mxu0 0
  %3640 = vmatprep.subr.bf16.mxu0 0
  %3641 = vmatpush1.bf16.xpose.msra.mxu0 0
  %3642 = vmatprep.subr.bf16.mxu0 0
  %3643 = vmatpush1.bf16.xpose.msra.mxu0 0
  %3644 = vmatprep.subr.bf16.mxu0 0
  %3645 = vmatpush1.bf16.xpose.msra.mxu0 0
  %3646 = vmatprep.subr.bf16.mxu0 0
  %3647 = vmatpush1.bf16.xpose.msra.mxu0 0
  %3648 = vmatprep.subr.bf16.mxu0 0
  %3649 = vmatpush1.bf16.xpose.msra.mxu0 0
  %3650 = vmatprep.subr.bf16.mxu0 0
  %3651 = vmatpush1.bf16.xpose.msra.mxu0 0
  %3652 = vmatprep.subr.bf16.mxu0 0
  %3653 = vmatpush1.bf16.xpose.msra.mxu0 0
  %3654 = vmatprep.mubr.bf16.mxu0 0
  %3655 = vmatmul.mubr.bf16.gmra.mrb[0].mxu0 %v3575
  %v3656 = vpop.f32.mrb[0].mxu0
  %v3657 = vadd.f32 0.0, %v3656
  %v3658 = vpop.f32.mrb[0].mxu0
  %v3659 = vpop.f32.mrb[0].mxu0
  %v3660 = vadd.f32 0.0, %v3659
  %v3661 = vpop.f32.mrb[0].mxu0
  %3662 = vmatprep.mubr.bf16.mxu0 0
  %3663 = vmatmul.mubr.bf16.gmra.mrb[0].mxu0 %v3578
  %v3664 = vpop.f32.mrb[0].mxu0
  %v3665 = vadd.f32 0.0, %v3664
  %v3666 = vpop.f32.mrb[0].mxu0
  %v3667 = vpop.f32.mrb[0].mxu0
  %v3668 = vadd.f32 0.0, %v3667
  %v3669 = vpop.f32.mrb[0].mxu0
  %3670 = vmatprep.mubr.bf16.mxu0 0
  %3671 = vmatmul.mubr.bf16.gmra.mrb[0].mxu0 %v3581
  %v3672 = vpop.f32.mrb[0].mxu0
  %v3673 = vadd.f32 0.0, %v3672
  %v3674 = vpop.f32.mrb[0].mxu0
  %v3675 = vpop.f32.mrb[0].mxu0
  %v3676 = vadd.f32 0.0, %v3675
  %v3677 = vpop.f32.mrb[0].mxu0
  %3678 = vmatprep.mubr.bf16.mxu0 0
  %3679 = vmatmul.mubr.bf16.gmra.mrb[0].mxu0 %v3584
  %v3680 = vpop.f32.mrb[0].mxu0
  %v3681 = vadd.f32 0.0, %v3680
  %v3682 = vpop.f32.mrb[0].mxu0
  %v3683 = vpop.f32.mrb[0].mxu0
  %v3684 = vadd.f32 0.0, %v3683
  %v3685 = vpop.f32.mrb[0].mxu0
  %3686 = vmatprep.mubr.bf16.mxu0 0
  %3687 = vmatmul.mubr.bf16.gmra.mrb[0].mxu0 %v3587
  %v3688 = vpop.f32.mrb[0].mxu0
  %v3689 = vadd.f32 0.0, %v3688
  %v3690 = vpop.f32.mrb[0].mxu0
  %v3691 = vpop.f32.mrb[0].mxu0
  %v3692 = vadd.f32 0.0, %v3691
  %v3693 = vpop.f32.mrb[0].mxu0
  %3694 = vmatprep.mubr.bf16.mxu0 0
  %3695 = vmatmul.mubr.bf16.gmra.mrb[0].mxu0 %v3590
  %v3696 = vpop.f32.mrb[0].mxu0
  %v3697 = vadd.f32 0.0, %v3696
  %v3698 = vpop.f32.mrb[0].mxu0
  %v3699 = vpop.f32.mrb[0].mxu0
  %v3700 = vadd.f32 0.0, %v3699
  %v3701 = vpop.f32.mrb[0].mxu0
  %3702 = vmatprep.mubr.bf16.mxu0 0
  %3703 = vmatmul.mubr.bf16.gmra.mrb[0].mxu0 %v3593
  %v3704 = vpop.f32.mrb[0].mxu0
  %v3705 = vadd.f32 0.0, %v3704
  %v3706 = vpop.f32.mrb[0].mxu0
  %v3707 = vpop.f32.mrb[0].mxu0
  %v3708 = vadd.f32 0.0, %v3707
  %v3709 = vpop.f32.mrb[0].mxu0
  %3710 = vmatprep.mubr.bf16.mxu0 0
  %3711 = vmatmul.mubr.bf16.gmra.mrb[0].mxu0 %v3596
  %v3712 = vpop.f32.mrb[0].mxu0
  %v3713 = vadd.f32 0.0, %v3712
  %v3714 = vpop.f32.mrb[0].mxu0
  %v3715 = vpop.f32.mrb[0].mxu0
  %v3716 = vadd.f32 0.0, %v3715
  %v3717 = vpop.f32.mrb[0].mxu0
  %3718 = vdwg.mxu0
  %v3719 = vmul.f32 %v3657, 0.25
  %v3720 = vmul.f32 %v3660, 0.25
  %v3721 = vmul.f32 %v3665, 0.25
  %v3722 = vmul.f32 %v3668, 0.25
  %v3723 = vmul.f32 %v3673, 0.25
  %v3724 = vmul.f32 %v3676, 0.25
  %v3725 = vmul.f32 %v3681, 0.25
  %v3726 = vmul.f32 %v3684, 0.25
  %v3727 = vmul.f32 %v3689, 0.25
  %v3728 = vmul.f32 %v3692, 0.25
  %v3729 = vmul.f32 %v3697, 0.25
  %v3730 = vmul.f32 %v3700, 0.25
  %v3731 = vmul.f32 %v3705, 0.25
  %v3732 = vmul.f32 %v3708, 0.25
  %v3733 = vmul.f32 %v3713, 0.25
  %v3734 = vmul.f32 %v3716, 0.25
  %s3735 = scalar_lea.vmem %s7, 384
  %v3736 = vld [vmem:[%s3735] sm:$0xff]
  %v3737 = vld [vmem:[%s3735 + $0x8] sm:$0xff]
  %v3738 = vld [vmem:[%s3735 + $0x10] sm:$0xff]
  %v3739 = vld [vmem:[%s3735 + $0x18] sm:$0xff]
  %v3740 = vld [vmem:[%s3735 + $0x20] sm:$0xff]
  %v3741 = vld [vmem:[%s3735 + $0x28] sm:$0xff]
  %v3742 = vld [vmem:[%s3735 + $0x30] sm:$0xff]
  %v3743 = vld [vmem:[%s3735 + $0x38] sm:$0xff]
  %v3744 = vld [vmem:[%s3735 + $0x40] sm:$0xff]
  %v3745 = vld [vmem:[%s3735 + $0x48] sm:$0xff]
  %v3746 = vld [vmem:[%s3735 + $0x50] sm:$0xff]
  %v3747 = vld [vmem:[%s3735 + $0x58] sm:$0xff]
  %v3748 = vld [vmem:[%s3735 + $0x60] sm:$0xff]
  %v3749 = vld [vmem:[%s3735 + $0x68] sm:$0xff]
  %v3750 = vld [vmem:[%s3735 + $0x70] sm:$0xff]
  %v3751 = vld [vmem:[%s3735 + $0x78] sm:$0xff]
  %v3752 = vadd.f32 %v3719, %v3736
  %v3753 = vadd.f32 %v3720, %v3737
  %v3754 = vadd.f32 %v3721, %v3738
  %v3755 = vadd.f32 %v3722, %v3739
  %v3756 = vadd.f32 %v3723, %v3740
  %v3757 = vadd.f32 %v3724, %v3741
  %v3758 = vadd.f32 %v3725, %v3742
  %v3759 = vadd.f32 %v3726, %v3743
  %v3760 = vadd.f32 %v3727, %v3744
  %v3761 = vadd.f32 %v3728, %v3745
  %v3762 = vadd.f32 %v3729, %v3746
  %v3763 = vadd.f32 %v3730, %v3747
  %v3764 = vadd.f32 %v3731, %v3748
  %v3765 = vadd.f32 %v3732, %v3749
  %v3766 = vadd.f32 %v3733, %v3750
  %v3767 = vadd.f32 %v3734, %v3751
  %3768 = vmax.xlane.f32.xlu0 %v3752
  %v3769 = vpop.xlane.xlu0 %3768
  %3770 = vmax.xlane.f32.xlu0 %v3753
  %v3771 = vpop.xlane.xlu0 %3770
  %3772 = vmax.xlane.f32.xlu0 %v3754
  %v3773 = vpop.xlane.xlu0 %3772
  %3774 = vmax.xlane.f32.xlu0 %v3755
  %v3775 = vpop.xlane.xlu0 %3774
  %3776 = vmax.xlane.f32.xlu0 %v3756
  %v3777 = vpop.xlane.xlu0 %3776
  %3778 = vmax.xlane.f32.xlu0 %v3757
  %v3779 = vpop.xlane.xlu0 %3778
  %3780 = vmax.xlane.f32.xlu0 %v3758
  %v3781 = vpop.xlane.xlu0 %3780
  %3782 = vmax.xlane.f32.xlu0 %v3759
  %v3783 = vpop.xlane.xlu0 %3782
  %3784 = vmax.xlane.f32.xlu0 %v3760
  %v3785 = vpop.xlane.xlu0 %3784
  %3786 = vmax.xlane.f32.xlu0 %v3761
  %v3787 = vpop.xlane.xlu0 %3786
  %3788 = vmax.xlane.f32.xlu0 %v3762
  %v3789 = vpop.xlane.xlu0 %3788
  %3790 = vmax.xlane.f32.xlu0 %v3763
  %v3791 = vpop.xlane.xlu0 %3790
  %3792 = vmax.xlane.f32.xlu0 %v3764
  %v3793 = vpop.xlane.xlu0 %3792
  %3794 = vmax.xlane.f32.xlu0 %v3765
  %v3795 = vpop.xlane.xlu0 %3794
  %3796 = vmax.xlane.f32.xlu0 %v3766
  %v3797 = vpop.xlane.xlu0 %3796
  %3798 = vmax.xlane.f32.xlu0 %v3767
  %v3799 = vpop.xlane.xlu0 %3798
  %v3800 = vsub.f32 %v3752, %v3769
  %v3801 = vsub.f32 %v3753, %v3771
  %v3802 = vsub.f32 %v3754, %v3773
  %v3803 = vsub.f32 %v3755, %v3775
  %v3804 = vsub.f32 %v3756, %v3777
  %v3805 = vsub.f32 %v3757, %v3779
  %v3806 = vsub.f32 %v3758, %v3781
  %v3807 = vsub.f32 %v3759, %v3783
  %v3808 = vsub.f32 %v3760, %v3785
  %v3809 = vsub.f32 %v3761, %v3787
  %v3810 = vsub.f32 %v3762, %v3789
  %v3811 = vsub.f32 %v3763, %v3791
  %v3812 = vsub.f32 %v3764, %v3793
  %v3813 = vsub.f32 %v3765, %v3795
  %v3814 = vsub.f32 %v3766, %v3797
  %v3815 = vsub.f32 %v3767, %v3799
  %v3816 = vmul.f32 %v3800, 1.442695
  %v3817 = vpow.pop %v3816
  %v3818 = vmul.f32 %v3801, 1.442695
  %v3819 = vpow.pop %v3818
  %v3820 = vmul.f32 %v3802, 1.442695
  %v3821 = vpow.pop %v3820
  %v3822 = vmul.f32 %v3803, 1.442695
  %v3823 = vpow.pop %v3822
  %v3824 = vmul.f32 %v3804, 1.442695
  %v3825 = vpow.pop %v3824
  %v3826 = vmul.f32 %v3805, 1.442695
  %v3827 = vpow.pop %v3826
  %v3828 = vmul.f32 %v3806, 1.442695
  %v3829 = vpow.pop %v3828
  %v3830 = vmul.f32 %v3807, 1.442695
  %v3831 = vpow.pop %v3830
  %v3832 = vmul.f32 %v3808, 1.442695
  %v3833 = vpow.pop %v3832
  %v3834 = vmul.f32 %v3809, 1.442695
  %v3835 = vpow.pop %v3834
  %v3836 = vmul.f32 %v3810, 1.442695
  %v3837 = vpow.pop %v3836
  %v3838 = vmul.f32 %v3811, 1.442695
  %v3839 = vpow.pop %v3838
  %v3840 = vmul.f32 %v3812, 1.442695
  %v3841 = vpow.pop %v3840
  %v3842 = vmul.f32 %v3813, 1.442695
  %v3843 = vpow.pop %v3842
  %v3844 = vmul.f32 %v3814, 1.442695
  %v3845 = vpow.pop %v3844
  %v3846 = vmul.f32 %v3815, 1.442695
  %v3847 = vpow.pop %v3846
  %3848 = vadd.xlane.f32.xlu0 %v3817
  %v3849 = vpop.xlane.xlu0 %3848
  %3850 = vadd.xlane.f32.xlu0 %v3819
  %v3851 = vpop.xlane.xlu0 %3850
  %3852 = vadd.xlane.f32.xlu0 %v3821
  %v3853 = vpop.xlane.xlu0 %3852
  %3854 = vadd.xlane.f32.xlu0 %v3823
  %v3855 = vpop.xlane.xlu0 %3854
  %3856 = vadd.xlane.f32.xlu0 %v3825
  %v3857 = vpop.xlane.xlu0 %3856
  %3858 = vadd.xlane.f32.xlu0 %v3827
  %v3859 = vpop.xlane.xlu0 %3858
  %3860 = vadd.xlane.f32.xlu0 %v3829
  %v3861 = vpop.xlane.xlu0 %3860
  %3862 = vadd.xlane.f32.xlu0 %v3831
  %v3863 = vpop.xlane.xlu0 %3862
  %3864 = vadd.xlane.f32.xlu0 %v3833
  %v3865 = vpop.xlane.xlu0 %3864
  %3866 = vadd.xlane.f32.xlu0 %v3835
  %v3867 = vpop.xlane.xlu0 %3866
  %3868 = vadd.xlane.f32.xlu0 %v3837
  %v3869 = vpop.xlane.xlu0 %3868
  %3870 = vadd.xlane.f32.xlu0 %v3839
  %v3871 = vpop.xlane.xlu0 %3870
  %3872 = vadd.xlane.f32.xlu0 %v3841
  %v3873 = vpop.xlane.xlu0 %3872
  %3874 = vadd.xlane.f32.xlu0 %v3843
  %v3875 = vpop.xlane.xlu0 %3874
  %3876 = vadd.xlane.f32.xlu0 %v3845
  %v3877 = vpop.xlane.xlu0 %3876
  %3878 = vadd.xlane.f32.xlu0 %v3847
  %v3879 = vpop.xlane.xlu0 %3878
  %v3880 = vrcp.pop %v3849
  %v3881 = vrcp.pop %v3851
  %v3882 = vrcp.pop %v3853
  %v3883 = vrcp.pop %v3855
  %v3884 = vrcp.pop %v3857
  %v3885 = vrcp.pop %v3859
  %v3886 = vrcp.pop %v3861
  %v3887 = vrcp.pop %v3863
  %v3888 = vrcp.pop %v3865
  %v3889 = vrcp.pop %v3867
  %v3890 = vrcp.pop %v3869
  %v3891 = vrcp.pop %v3871
  %v3892 = vrcp.pop %v3873
  %v3893 = vrcp.pop %v3875
  %v3894 = vrcp.pop %v3877
  %v3895 = vrcp.pop %v3879
  %v3896 = vmul.f32 %v3817, %v3880
  %v3897 = vmul.f32 %v3819, %v3881
  %v3898 = vmul.f32 %v3821, %v3882
  %v3899 = vmul.f32 %v3823, %v3883
  %v3900 = vmul.f32 %v3825, %v3884
  %v3901 = vmul.f32 %v3827, %v3885
  %v3902 = vmul.f32 %v3829, %v3886
  %v3903 = vmul.f32 %v3831, %v3887
  %v3904 = vmul.f32 %v3833, %v3888
  %v3905 = vmul.f32 %v3835, %v3889
  %v3906 = vmul.f32 %v3837, %v3890
  %v3907 = vmul.f32 %v3839, %v3891
  %v3908 = vmul.f32 %v3841, %v3892
  %v3909 = vmul.f32 %v3843, %v3893
  %v3910 = vmul.f32 %v3845, %v3894
  %v3911 = vmul.f32 %v3847, %v3895
  %v3912 = vpack.c.bf16 %v3897, %v3896
  %v3913 = vpack.c.bf16 %v3899, %v3898
  %v3914 = vpack.c.bf16 %v3901, %v3900
  %v3915 = vpack.c.bf16 %v3903, %v3902
  %v3916 = vpack.c.bf16 %v3905, %v3904
  %v3917 = vpack.c.bf16 %v3907, %v3906
  %v3918 = vpack.c.bf16 %v3909, %v3908
  %v3919 = vpack.c.bf16 %v3911, %v3910
  %3920 = vrot.lane.b32.xlu0 %v3032, 48
  %v3921 = vpop.permute.xlu0 %3920
  %3922 = vrot.lane.b32.xlu0 %v3033, 48
  %v3923 = vpop.permute.xlu0 %3922
  %3924 = vrot.lane.b32.xlu0 %v3034, 48
  %v3925 = vpop.permute.xlu0 %3924
  %3926 = vrot.lane.b32.xlu0 %v3035, 48
  %v3927 = vpop.permute.xlu0 %3926
  %3928 = vrot.lane.b32.xlu0 %v3036, 48
  %v3929 = vpop.permute.xlu0 %3928
  %3930 = vrot.lane.b32.xlu0 %v3037, 48
  %v3931 = vpop.permute.xlu0 %3930
  %3932 = vrot.lane.b32.xlu0 %v3038, 48
  %v3933 = vpop.permute.xlu0 %3932
  %3934 = vrot.lane.b32.xlu0 %v3039, 48
  %v3935 = vpop.permute.xlu0 %3934
  %3944 = vmatprep.subr.bf16.mxu0 0
  %3945 = vmatpush1.bf16.msra.mxu0 %v3921
  %3946 = vmatprep.subr.bf16.mxu0 0
  %3947 = vmatpush1.bf16.msra.mxu0 %v3923
  %3948 = vmatprep.subr.bf16.mxu0 0
  %3949 = vmatpush1.bf16.msra.mxu0 %v3925
  %3950 = vmatprep.subr.bf16.mxu0 0
  %3951 = vmatpush1.bf16.msra.mxu0 %v3927
  %3952 = vmatprep.subr.bf16.mxu0 0
  %3953 = vmatpush1.bf16.msra.mxu0 %v3929
  %3954 = vmatprep.subr.bf16.mxu0 0
  %3955 = vmatpush1.bf16.msra.mxu0 %v3931
  %3956 = vmatprep.subr.bf16.mxu0 0
  %3957 = vmatpush1.bf16.msra.mxu0 %v3933
  %3958 = vmatprep.subr.bf16.mxu0 0
  %3959 = vmatpush1.bf16.msra.mxu0 %v3935
  %3960 = vmatprep.subr.bf16.mxu0 0
  %3961 = vmatpush1.bf16.msra.mxu0 0
  %3962 = vmatprep.subr.bf16.mxu0 0
  %3963 = vmatpush1.bf16.msra.mxu0 0
  %3964 = vmatprep.subr.bf16.mxu0 0
  %3965 = vmatpush1.bf16.msra.mxu0 0
  %3966 = vmatprep.subr.bf16.mxu0 0
  %3967 = vmatpush1.bf16.msra.mxu0 0
  %3968 = vmatprep.subr.bf16.mxu0 0
  %3969 = vmatpush1.bf16.msra.mxu0 0
  %3970 = vmatprep.subr.bf16.mxu0 0
  %3971 = vmatpush1.bf16.msra.mxu0 0
  %3972 = vmatprep.subr.bf16.mxu0 0
  %3973 = vmatpush1.bf16.msra.mxu0 0
  %3974 = vmatprep.subr.bf16.mxu0 0
  %3975 = vmatpush1.bf16.msra.mxu0 0
  %3976 = vmatprep.mubr.bf16.mxu0 0
  %3977 = vmatmul.mubr.bf16.gmra.mrb[0].mxu0 %v3912
  %v3978 = vpop.f32.mrb[0].mxu0
  %v3979 = vadd.f32 0.0, %v3978
  %v3980 = vpop.f32.mrb[0].mxu0
  %v3981 = vpop.f32.mrb[0].mxu0
  %v3982 = vadd.f32 0.0, %v3981
  %v3983 = vpop.f32.mrb[0].mxu0
  %3984 = vmatprep.mubr.bf16.mxu0 0
  %3985 = vmatmul.mubr.bf16.gmra.mrb[0].mxu0 %v3913
  %v3986 = vpop.f32.mrb[0].mxu0
  %v3987 = vadd.f32 0.0, %v3986
  %v3988 = vpop.f32.mrb[0].mxu0
  %v3989 = vpop.f32.mrb[0].mxu0
  %v3990 = vadd.f32 0.0, %v3989
  %v3991 = vpop.f32.mrb[0].mxu0
  %3992 = vmatprep.mubr.bf16.mxu0 0
  %3993 = vmatmul.mubr.bf16.gmra.mrb[0].mxu0 %v3914
  %v3994 = vpop.f32.mrb[0].mxu0
  %v3995 = vadd.f32 0.0, %v3994
  %v3996 = vpop.f32.mrb[0].mxu0
  %v3997 = vpop.f32.mrb[0].mxu0
  %v3998 = vadd.f32 0.0, %v3997
  %v3999 = vpop.f32.mrb[0].mxu0
  %4000 = vmatprep.mubr.bf16.mxu0 0
  %4001 = vmatmul.mubr.bf16.gmra.mrb[0].mxu0 %v3915
  %v4002 = vpop.f32.mrb[0].mxu0
  %v4003 = vadd.f32 0.0, %v4002
  %v4004 = vpop.f32.mrb[0].mxu0
  %v4005 = vpop.f32.mrb[0].mxu0
  %v4006 = vadd.f32 0.0, %v4005
  %v4007 = vpop.f32.mrb[0].mxu0
  %4008 = vmatprep.mubr.bf16.mxu0 0
  %4009 = vmatmul.mubr.bf16.gmra.mrb[0].mxu0 %v3916
  %v4010 = vpop.f32.mrb[0].mxu0
  %v4011 = vadd.f32 0.0, %v4010
  %v4012 = vpop.f32.mrb[0].mxu0
  %v4013 = vpop.f32.mrb[0].mxu0
  %v4014 = vadd.f32 0.0, %v4013
  %v4015 = vpop.f32.mrb[0].mxu0
  %4016 = vmatprep.mubr.bf16.mxu0 0
  %4017 = vmatmul.mubr.bf16.gmra.mrb[0].mxu0 %v3917
  %v4018 = vpop.f32.mrb[0].mxu0
  %v4019 = vadd.f32 0.0, %v4018
  %v4020 = vpop.f32.mrb[0].mxu0
  %v4021 = vpop.f32.mrb[0].mxu0
  %v4022 = vadd.f32 0.0, %v4021
  %v4023 = vpop.f32.mrb[0].mxu0
  %4024 = vmatprep.mubr.bf16.mxu0 0
  %4025 = vmatmul.mubr.bf16.gmra.mrb[0].mxu0 %v3918
  %v4026 = vpop.f32.mrb[0].mxu0
  %v4027 = vadd.f32 0.0, %v4026
  %v4028 = vpop.f32.mrb[0].mxu0
  %v4029 = vpop.f32.mrb[0].mxu0
  %v4030 = vadd.f32 0.0, %v4029
  %v4031 = vpop.f32.mrb[0].mxu0
  %4032 = vmatprep.mubr.bf16.mxu0 0
  %4033 = vmatmul.mubr.bf16.gmra.mrb[0].mxu0 %v3919
  %v4034 = vpop.f32.mrb[0].mxu0
  %v4035 = vadd.f32 0.0, %v4034
  %v4036 = vpop.f32.mrb[0].mxu0
  %v4037 = vpop.f32.mrb[0].mxu0
  %v4038 = vadd.f32 0.0, %v4037
  %v4039 = vpop.f32.mrb[0].mxu0
  %4040 = vdwg.mxu0
  %v4041 = vpack.c.bf16 %v3982, %v3979
  %v4042 = vpack.c.bf16 %v3990, %v3987
  %v4043 = vpack.c.bf16 %v3998, %v3995
  %v4044 = vpack.c.bf16 %v4006, %v4003
  %v4045 = vpack.c.bf16 %v4014, %v4011
  %v4046 = vpack.c.bf16 %v4022, %v4019
  %v4047 = vpack.c.bf16 %v4030, %v4027
  %v4048 = vpack.c.bf16 %v4038, %v4035
  %s4049 = scalar_lea.vmem %s5, 24
  %v4050 = vld [vmem:[%s4049] sm:$0xf]
  %v4051 = vld [vmem:[%s4049 + $0x4] sm:$0xf]
  %v4054 = vunpack.c.l.b16 %v4050
  %v4055 = vunpack.c.l.b16 %v4051
  %v4056 = vpack.c.b16 %v4055, %v4054
  %v4059 = vsel %vm536, %v4041, 0
  %v4062 = vsel %vm536, %v4042, 0
  %v4065 = vsel %vm536, %v4043, 0
  %v4068 = vsel %vm536, %v4044, 0
  %v4071 = vsel %vm536, %v4045, 0
  %v4074 = vsel %vm536, %v4046, 0
  %v4077 = vsel %vm536, %v4047, 0
  %v4080 = vsel %vm536, %v4048, 0
  %4082 = vmatprep.subr.bf16.mxu0 0
  %4083 = vmatpush1.bf16.msra.mxu0 %v4056
  %4084 = vmatprep.subr.bf16.mxu0 0
  %4085 = vmatpush1.bf16.msra.mxu0 0
  %4086 = vmatprep.subr.bf16.mxu0 0
  %4087 = vmatpush1.bf16.msra.mxu0 0
  %4088 = vmatprep.subr.bf16.mxu0 0
  %4089 = vmatpush1.bf16.msra.mxu0 0
  %4090 = vmatprep.subr.bf16.mxu0 0
  %4091 = vmatpush1.bf16.msra.mxu0 0
  %4092 = vmatprep.subr.bf16.mxu0 0
  %4093 = vmatpush1.bf16.msra.mxu0 0
  %4094 = vmatprep.subr.bf16.mxu0 0
  %4095 = vmatpush1.bf16.msra.mxu0 0
  %4096 = vmatprep.subr.bf16.mxu0 0
  %4097 = vmatpush1.bf16.msra.mxu0 0
  %4098 = vmatprep.subr.bf16.mxu0 0
  %4099 = vmatpush1.bf16.msra.mxu0 0
  %4100 = vmatprep.subr.bf16.mxu0 0
  %4101 = vmatpush1.bf16.msra.mxu0 0
  %4102 = vmatprep.subr.bf16.mxu0 0
  %4103 = vmatpush1.bf16.msra.mxu0 0
  %4104 = vmatprep.subr.bf16.mxu0 0
  %4105 = vmatpush1.bf16.msra.mxu0 0
  %4106 = vmatprep.subr.bf16.mxu0 0
  %4107 = vmatpush1.bf16.msra.mxu0 0
  %4108 = vmatprep.subr.bf16.mxu0 0
  %4109 = vmatpush1.bf16.msra.mxu0 0
  %4110 = vmatprep.subr.bf16.mxu0 0
  %4111 = vmatpush1.bf16.msra.mxu0 0
  %4112 = vmatprep.subr.bf16.mxu0 0
  %4113 = vmatpush1.bf16.msra.mxu0 0
  %4114 = vmatprep.mubr.bf16.mxu0 0
  %4115 = vmatmul.mubr.bf16.gmra.mrb[0].mxu0 %v4059
  %v4116 = vpop.f32.mrb[0].mxu0
  %v4117 = vadd.f32 0.0, %v4116
  %v4118 = vpop.f32.mrb[0].mxu0
  %v4119 = vpop.f32.mrb[0].mxu0
  %v4120 = vadd.f32 0.0, %v4119
  %v4121 = vpop.f32.mrb[0].mxu0
  %4122 = vmatprep.mubr.bf16.mxu0 0
  %4123 = vmatmul.mubr.bf16.gmra.mrb[0].mxu0 %v4062
  %v4124 = vpop.f32.mrb[0].mxu0
  %v4125 = vadd.f32 0.0, %v4124
  %v4126 = vpop.f32.mrb[0].mxu0
  %v4127 = vpop.f32.mrb[0].mxu0
  %v4128 = vadd.f32 0.0, %v4127
  %v4129 = vpop.f32.mrb[0].mxu0
  %4130 = vmatprep.mubr.bf16.mxu0 0
  %4131 = vmatmul.mubr.bf16.gmra.mrb[0].mxu0 %v4065
  %v4132 = vpop.f32.mrb[0].mxu0
  %v4133 = vadd.f32 0.0, %v4132
  %v4134 = vpop.f32.mrb[0].mxu0
  %v4135 = vpop.f32.mrb[0].mxu0
  %v4136 = vadd.f32 0.0, %v4135
  %v4137 = vpop.f32.mrb[0].mxu0
  %4138 = vmatprep.mubr.bf16.mxu0 0
  %4139 = vmatmul.mubr.bf16.gmra.mrb[0].mxu0 %v4068
  %v4140 = vpop.f32.mrb[0].mxu0
  %v4141 = vadd.f32 0.0, %v4140
  %v4142 = vpop.f32.mrb[0].mxu0
  %v4143 = vpop.f32.mrb[0].mxu0
  %v4144 = vadd.f32 0.0, %v4143
  %v4145 = vpop.f32.mrb[0].mxu0
  %4146 = vmatprep.mubr.bf16.mxu0 0
  %4147 = vmatmul.mubr.bf16.gmra.mrb[0].mxu0 %v4071
  %v4148 = vpop.f32.mrb[0].mxu0
  %v4149 = vadd.f32 0.0, %v4148
  %v4150 = vpop.f32.mrb[0].mxu0
  %v4151 = vpop.f32.mrb[0].mxu0
  %v4152 = vadd.f32 0.0, %v4151
  %v4153 = vpop.f32.mrb[0].mxu0
  %4154 = vmatprep.mubr.bf16.mxu0 0
  %4155 = vmatmul.mubr.bf16.gmra.mrb[0].mxu0 %v4074
  %v4156 = vpop.f32.mrb[0].mxu0
  %v4157 = vadd.f32 0.0, %v4156
  %v4158 = vpop.f32.mrb[0].mxu0
  %v4159 = vpop.f32.mrb[0].mxu0
  %v4160 = vadd.f32 0.0, %v4159
  %v4161 = vpop.f32.mrb[0].mxu0
  %4162 = vmatprep.mubr.bf16.mxu0 0
  %4163 = vmatmul.mubr.bf16.gmra.mrb[0].mxu0 %v4077
  %v4164 = vpop.f32.mrb[0].mxu0
  %v4165 = vadd.f32 0.0, %v4164
  %v4166 = vpop.f32.mrb[0].mxu0
  %v4167 = vpop.f32.mrb[0].mxu0
  %v4168 = vadd.f32 0.0, %v4167
  %v4169 = vpop.f32.mrb[0].mxu0
  %4170 = vmatprep.mubr.bf16.mxu0 0
  %4171 = vmatmul.mubr.bf16.gmra.mrb[0].mxu0 %v4080
  %v4172 = vpop.f32.mrb[0].mxu0
  %v4173 = vadd.f32 0.0, %v4172
  %v4174 = vpop.f32.mrb[0].mxu0
  %v4175 = vpop.f32.mrb[0].mxu0
  %v4176 = vadd.f32 0.0, %v4175
  %v4177 = vpop.f32.mrb[0].mxu0
  %4178 = vdwg.mxu0
  %v4181 = vunpack.c.l.b16 %v3540
  %v4182 = vunpack.c.l.b16 %v3541
  %v4183 = vpack.c.b16 %v4182, %v4181
  %v4186 = vsel %vm536, %v3531, 0
  %v4189 = vsel %vm536, %v3532, 0
  %v4192 = vsel %vm536, %v3533, 0
  %v4195 = vsel %vm536, %v3534, 0
  %v4198 = vsel %vm536, %v3535, 0
  %v4201 = vsel %vm536, %v3536, 0
  %v4204 = vsel %vm536, %v3537, 0
  %v4207 = vsel %vm536, %v3538, 0
  %4209 = vmatprep.subr.bf16.mxu0 0
  %4210 = vmatpush1.bf16.msra.mxu0 %v4183
  %4211 = vmatprep.subr.bf16.mxu0 0
  %4212 = vmatpush1.bf16.msra.mxu0 0
  %4213 = vmatprep.subr.bf16.mxu0 0
  %4214 = vmatpush1.bf16.msra.mxu0 0
  %4215 = vmatprep.subr.bf16.mxu0 0
  %4216 = vmatpush1.bf16.msra.mxu0 0
  %4217 = vmatprep.subr.bf16.mxu0 0
  %4218 = vmatpush1.bf16.msra.mxu0 0
  %4219 = vmatprep.subr.bf16.mxu0 0
  %4220 = vmatpush1.bf16.msra.mxu0 0
  %4221 = vmatprep.subr.bf16.mxu0 0
  %4222 = vmatpush1.bf16.msra.mxu0 0
  %4223 = vmatprep.subr.bf16.mxu0 0
  %4224 = vmatpush1.bf16.msra.mxu0 0
  %4225 = vmatprep.subr.bf16.mxu0 0
  %4226 = vmatpush1.bf16.msra.mxu0 0
  %4227 = vmatprep.subr.bf16.mxu0 0
  %4228 = vmatpush1.bf16.msra.mxu0 0
  %4229 = vmatprep.subr.bf16.mxu0 0
  %4230 = vmatpush1.bf16.msra.mxu0 0
  %4231 = vmatprep.subr.bf16.mxu0 0
  %4232 = vmatpush1.bf16.msra.mxu0 0
  %4233 = vmatprep.subr.bf16.mxu0 0
  %4234 = vmatpush1.bf16.msra.mxu0 0
  %4235 = vmatprep.subr.bf16.mxu0 0
  %4236 = vmatpush1.bf16.msra.mxu0 0
  %4237 = vmatprep.subr.bf16.mxu0 0
  %4238 = vmatpush1.bf16.msra.mxu0 0
  %4239 = vmatprep.subr.bf16.mxu0 0
  %4240 = vmatpush1.bf16.msra.mxu0 0
  %4241 = vmatprep.mubr.bf16.mxu0 0
  %4242 = vmatmul.mubr.bf16.gmra.mrb[0].mxu0 %v4186
  %v4243 = vpop.f32.mrb[0].mxu0
  %v4244 = vadd.f32 %v4117, %v4243
  %v4245 = vpop.f32.mrb[0].mxu0
  %v4246 = vpop.f32.mrb[0].mxu0
  %v4247 = vadd.f32 %v4120, %v4246
  %v4248 = vpop.f32.mrb[0].mxu0
  %4249 = vmatprep.mubr.bf16.mxu0 0
  %4250 = vmatmul.mubr.bf16.gmra.mrb[0].mxu0 %v4189
  %v4251 = vpop.f32.mrb[0].mxu0
  %v4252 = vadd.f32 %v4125, %v4251
  %v4253 = vpop.f32.mrb[0].mxu0
  %v4254 = vpop.f32.mrb[0].mxu0
  %v4255 = vadd.f32 %v4128, %v4254
  %v4256 = vpop.f32.mrb[0].mxu0
  %4257 = vmatprep.mubr.bf16.mxu0 0
  %4258 = vmatmul.mubr.bf16.gmra.mrb[0].mxu0 %v4192
  %v4259 = vpop.f32.mrb[0].mxu0
  %v4260 = vadd.f32 %v4133, %v4259
  %v4261 = vpop.f32.mrb[0].mxu0
  %v4262 = vpop.f32.mrb[0].mxu0
  %v4263 = vadd.f32 %v4136, %v4262
  %v4264 = vpop.f32.mrb[0].mxu0
  %4265 = vmatprep.mubr.bf16.mxu0 0
  %4266 = vmatmul.mubr.bf16.gmra.mrb[0].mxu0 %v4195
  %v4267 = vpop.f32.mrb[0].mxu0
  %v4268 = vadd.f32 %v4141, %v4267
  %v4269 = vpop.f32.mrb[0].mxu0
  %v4270 = vpop.f32.mrb[0].mxu0
  %v4271 = vadd.f32 %v4144, %v4270
  %v4272 = vpop.f32.mrb[0].mxu0
  %4273 = vmatprep.mubr.bf16.mxu0 0
  %4274 = vmatmul.mubr.bf16.gmra.mrb[0].mxu0 %v4198
  %v4275 = vpop.f32.mrb[0].mxu0
  %v4276 = vadd.f32 %v4149, %v4275
  %v4277 = vpop.f32.mrb[0].mxu0
  %v4278 = vpop.f32.mrb[0].mxu0
  %v4279 = vadd.f32 %v4152, %v4278
  %v4280 = vpop.f32.mrb[0].mxu0
  %4281 = vmatprep.mubr.bf16.mxu0 0
  %4282 = vmatmul.mubr.bf16.gmra.mrb[0].mxu0 %v4201
  %v4283 = vpop.f32.mrb[0].mxu0
  %v4284 = vadd.f32 %v4157, %v4283
  %v4285 = vpop.f32.mrb[0].mxu0
  %v4286 = vpop.f32.mrb[0].mxu0
  %v4287 = vadd.f32 %v4160, %v4286
  %v4288 = vpop.f32.mrb[0].mxu0
  %4289 = vmatprep.mubr.bf16.mxu0 0
  %4290 = vmatmul.mubr.bf16.gmra.mrb[0].mxu0 %v4204
  %v4291 = vpop.f32.mrb[0].mxu0
  %v4292 = vadd.f32 %v4165, %v4291
  %v4293 = vpop.f32.mrb[0].mxu0
  %v4294 = vpop.f32.mrb[0].mxu0
  %v4295 = vadd.f32 %v4168, %v4294
  %v4296 = vpop.f32.mrb[0].mxu0
  %4297 = vmatprep.mubr.bf16.mxu0 0
  %4298 = vmatmul.mubr.bf16.gmra.mrb[0].mxu0 %v4207
  %v4299 = vpop.f32.mrb[0].mxu0
  %v4300 = vadd.f32 %v4173, %v4299
  %v4301 = vpop.f32.mrb[0].mxu0
  %v4302 = vpop.f32.mrb[0].mxu0
  %v4303 = vadd.f32 %v4176, %v4302
  %v4304 = vpop.f32.mrb[0].mxu0
  %4305 = vdwg.mxu0
  %v4306 = vadd.f32 %v2574, %v4244
  %v4307 = vadd.f32 %v2575, %v4247
  %v4308 = vadd.f32 %v2576, %v4252
  %v4309 = vadd.f32 %v2577, %v4255
  %v4310 = vadd.f32 %v2578, %v4260
  %v4311 = vadd.f32 %v2579, %v4263
  %v4312 = vadd.f32 %v2580, %v4268
  %v4313 = vadd.f32 %v2581, %v4271
  %v4314 = vadd.f32 %v2582, %v4276
  %v4315 = vadd.f32 %v2583, %v4279
  %v4316 = vadd.f32 %v2584, %v4284
  %v4317 = vadd.f32 %v2585, %v4287
  %v4318 = vadd.f32 %v2586, %v4292
  %v4319 = vadd.f32 %v2587, %v4295
  %v4320 = vadd.f32 %v2588, %v4300
  %v4321 = vadd.f32 %v2589, %v4303
  %s4322 = scalar_lea.vmem %s6, 1
  %v4323 = vld [vmem:[%s4322] sm:$0x1]
  %v4325 = vlaneseq
  %v4326 = vshrl.u32 %v4325, 7
  %v4327 = vsub.s32 0, %v4326
  %v4328 = vrot.slane %v4323, %v4327
  %v4330 = vadd.f32 %v4306, %v4328
  %v4331 = vadd.f32 %v4307, %v4328
  %v4332 = vadd.f32 %v4308, %v4328
  %v4333 = vadd.f32 %v4309, %v4328
  %v4334 = vadd.f32 %v4310, %v4328
  %v4335 = vadd.f32 %v4311, %v4328
  %v4336 = vadd.f32 %v4312, %v4328
  %v4337 = vadd.f32 %v4313, %v4328
  %v4338 = vadd.f32 %v4314, %v4328
  %v4339 = vadd.f32 %v4315, %v4328
  %v4340 = vadd.f32 %v4316, %v4328
  %v4341 = vadd.f32 %v4317, %v4328
  %v4342 = vadd.f32 %v4318, %v4328
  %v4343 = vadd.f32 %v4319, %v4328
  %v4344 = vadd.f32 %v4320, %v4328
  %v4345 = vadd.f32 %v4321, %v4328
  %v4346 = vsel %vm64, %v4330, 0.0
  %4347 = vadd.xlane.f32.xlu0 %v4346
  %v4348 = vpop.xlane.xlu0 %4347
  %v4349 = vsel %vm64, %v4331, 0.0
  %4350 = vadd.xlane.f32.xlu0 %v4349
  %v4351 = vpop.xlane.xlu0 %4350
  %v4352 = vsel %vm64, %v4332, 0.0
  %4353 = vadd.xlane.f32.xlu0 %v4352
  %v4354 = vpop.xlane.xlu0 %4353
  %v4355 = vsel %vm64, %v4333, 0.0
  %4356 = vadd.xlane.f32.xlu0 %v4355
  %v4357 = vpop.xlane.xlu0 %4356
  %v4358 = vsel %vm64, %v4334, 0.0
  %4359 = vadd.xlane.f32.xlu0 %v4358
  %v4360 = vpop.xlane.xlu0 %4359
  %v4361 = vsel %vm64, %v4335, 0.0
  %4362 = vadd.xlane.f32.xlu0 %v4361
  %v4363 = vpop.xlane.xlu0 %4362
  %v4364 = vsel %vm64, %v4336, 0.0
  %4365 = vadd.xlane.f32.xlu0 %v4364
  %v4366 = vpop.xlane.xlu0 %4365
  %v4367 = vsel %vm64, %v4337, 0.0
  %4368 = vadd.xlane.f32.xlu0 %v4367
  %v4369 = vpop.xlane.xlu0 %4368
  %v4370 = vsel %vm64, %v4338, 0.0
  %4371 = vadd.xlane.f32.xlu0 %v4370
  %v4372 = vpop.xlane.xlu0 %4371
  %v4373 = vsel %vm64, %v4339, 0.0
  %4374 = vadd.xlane.f32.xlu0 %v4373
  %v4375 = vpop.xlane.xlu0 %4374
  %v4376 = vsel %vm64, %v4340, 0.0
  %4377 = vadd.xlane.f32.xlu0 %v4376
  %v4378 = vpop.xlane.xlu0 %4377
  %v4379 = vsel %vm64, %v4341, 0.0
  %4380 = vadd.xlane.f32.xlu0 %v4379
  %v4381 = vpop.xlane.xlu0 %4380
  %v4382 = vsel %vm64, %v4342, 0.0
  %4383 = vadd.xlane.f32.xlu0 %v4382
  %v4384 = vpop.xlane.xlu0 %4383
  %v4385 = vsel %vm64, %v4343, 0.0
  %4386 = vadd.xlane.f32.xlu0 %v4385
  %v4387 = vpop.xlane.xlu0 %4386
  %v4388 = vsel %vm64, %v4344, 0.0
  %4389 = vadd.xlane.f32.xlu0 %v4388
  %v4390 = vpop.xlane.xlu0 %4389
  %v4391 = vsel %vm64, %v4345, 0.0
  %4392 = vadd.xlane.f32.xlu0 %v4391
  %v4393 = vpop.xlane.xlu0 %4392
  %v4394 = vmul.f32 %v4348, %v113
  %v4395 = vmul.f32 %v4351, %v113
  %v4396 = vmul.f32 %v4354, %v113
  %v4397 = vmul.f32 %v4357, %v113
  %v4398 = vmul.f32 %v4360, %v113
  %v4399 = vmul.f32 %v4363, %v113
  %v4400 = vmul.f32 %v4366, %v113
  %v4401 = vmul.f32 %v4369, %v113
  %v4402 = vmul.f32 %v4372, %v113
  %v4403 = vmul.f32 %v4375, %v113
  %v4404 = vmul.f32 %v4378, %v113
  %v4405 = vmul.f32 %v4381, %v113
  %v4406 = vmul.f32 %v4384, %v113
  %v4407 = vmul.f32 %v4387, %v113
  %v4408 = vmul.f32 %v4390, %v113
  %v4409 = vmul.f32 %v4393, %v113
  %v4410 = vmul.f32 %v4330, %v4330
  %v4411 = vmul.f32 %v4331, %v4331
  %v4412 = vmul.f32 %v4332, %v4332
  %v4413 = vmul.f32 %v4333, %v4333
  %v4414 = vmul.f32 %v4334, %v4334
  %v4415 = vmul.f32 %v4335, %v4335
  %v4416 = vmul.f32 %v4336, %v4336
  %v4417 = vmul.f32 %v4337, %v4337
  %v4418 = vmul.f32 %v4338, %v4338
  %v4419 = vmul.f32 %v4339, %v4339
  %v4420 = vmul.f32 %v4340, %v4340
  %v4421 = vmul.f32 %v4341, %v4341
  %v4422 = vmul.f32 %v4342, %v4342
  %v4423 = vmul.f32 %v4343, %v4343
  %v4424 = vmul.f32 %v4344, %v4344
  %v4425 = vmul.f32 %v4345, %v4345
  %v4426 = vsel %vm64, %v4410, 0.0
  %4427 = vadd.xlane.f32.xlu0 %v4426
  %v4428 = vpop.xlane.xlu0 %4427
  %v4429 = vsel %vm64, %v4411, 0.0
  %4430 = vadd.xlane.f32.xlu0 %v4429
  %v4431 = vpop.xlane.xlu0 %4430
  %v4432 = vsel %vm64, %v4412, 0.0
  %4433 = vadd.xlane.f32.xlu0 %v4432
  %v4434 = vpop.xlane.xlu0 %4433
  %v4435 = vsel %vm64, %v4413, 0.0
  %4436 = vadd.xlane.f32.xlu0 %v4435
  %v4437 = vpop.xlane.xlu0 %4436
  %v4438 = vsel %vm64, %v4414, 0.0
  %4439 = vadd.xlane.f32.xlu0 %v4438
  %v4440 = vpop.xlane.xlu0 %4439
  %v4441 = vsel %vm64, %v4415, 0.0
  %4442 = vadd.xlane.f32.xlu0 %v4441
  %v4443 = vpop.xlane.xlu0 %4442
  %v4444 = vsel %vm64, %v4416, 0.0
  %4445 = vadd.xlane.f32.xlu0 %v4444
  %v4446 = vpop.xlane.xlu0 %4445
  %v4447 = vsel %vm64, %v4417, 0.0
  %4448 = vadd.xlane.f32.xlu0 %v4447
  %v4449 = vpop.xlane.xlu0 %4448
  %v4450 = vsel %vm64, %v4418, 0.0
  %4451 = vadd.xlane.f32.xlu0 %v4450
  %v4452 = vpop.xlane.xlu0 %4451
  %v4453 = vsel %vm64, %v4419, 0.0
  %4454 = vadd.xlane.f32.xlu0 %v4453
  %v4455 = vpop.xlane.xlu0 %4454
  %v4456 = vsel %vm64, %v4420, 0.0
  %4457 = vadd.xlane.f32.xlu0 %v4456
  %v4458 = vpop.xlane.xlu0 %4457
  %v4459 = vsel %vm64, %v4421, 0.0
  %4460 = vadd.xlane.f32.xlu0 %v4459
  %v4461 = vpop.xlane.xlu0 %4460
  %v4462 = vsel %vm64, %v4422, 0.0
  %4463 = vadd.xlane.f32.xlu0 %v4462
  %v4464 = vpop.xlane.xlu0 %4463
  %v4465 = vsel %vm64, %v4423, 0.0
  %4466 = vadd.xlane.f32.xlu0 %v4465
  %v4467 = vpop.xlane.xlu0 %4466
  %v4468 = vsel %vm64, %v4424, 0.0
  %4469 = vadd.xlane.f32.xlu0 %v4468
  %v4470 = vpop.xlane.xlu0 %4469
  %v4471 = vsel %vm64, %v4425, 0.0
  %4472 = vadd.xlane.f32.xlu0 %v4471
  %v4473 = vpop.xlane.xlu0 %4472
  %v4474 = vmul.f32 %v4428, %v113
  %v4475 = vmul.f32 %v4431, %v113
  %v4476 = vmul.f32 %v4434, %v113
  %v4477 = vmul.f32 %v4437, %v113
  %v4478 = vmul.f32 %v4440, %v113
  %v4479 = vmul.f32 %v4443, %v113
  %v4480 = vmul.f32 %v4446, %v113
  %v4481 = vmul.f32 %v4449, %v113
  %v4482 = vmul.f32 %v4452, %v113
  %v4483 = vmul.f32 %v4455, %v113
  %v4484 = vmul.f32 %v4458, %v113
  %v4485 = vmul.f32 %v4461, %v113
  %v4486 = vmul.f32 %v4464, %v113
  %v4487 = vmul.f32 %v4467, %v113
  %v4488 = vmul.f32 %v4470, %v113
  %v4489 = vmul.f32 %v4473, %v113
  %v4490 = vsub.f32 %v4330, %v4394
  %v4491 = vsub.f32 %v4331, %v4395
  %v4492 = vsub.f32 %v4332, %v4396
  %v4493 = vsub.f32 %v4333, %v4397
  %v4494 = vsub.f32 %v4334, %v4398
  %v4495 = vsub.f32 %v4335, %v4399
  %v4496 = vsub.f32 %v4336, %v4400
  %v4497 = vsub.f32 %v4337, %v4401
  %v4498 = vsub.f32 %v4338, %v4402
  %v4499 = vsub.f32 %v4339, %v4403
  %v4500 = vsub.f32 %v4340, %v4404
  %v4501 = vsub.f32 %v4341, %v4405
  %v4502 = vsub.f32 %v4342, %v4406
  %v4503 = vsub.f32 %v4343, %v4407
  %v4504 = vsub.f32 %v4344, %v4408
  %v4505 = vsub.f32 %v4345, %v4409
  %v4506 = vmul.f32 %v4394, %v4394
  %v4507 = vmul.f32 %v4395, %v4395
  %v4508 = vmul.f32 %v4396, %v4396
  %v4509 = vmul.f32 %v4397, %v4397
  %v4510 = vmul.f32 %v4398, %v4398
  %v4511 = vmul.f32 %v4399, %v4399
  %v4512 = vmul.f32 %v4400, %v4400
  %v4513 = vmul.f32 %v4401, %v4401
  %v4514 = vmul.f32 %v4402, %v4402
  %v4515 = vmul.f32 %v4403, %v4403
  %v4516 = vmul.f32 %v4404, %v4404
  %v4517 = vmul.f32 %v4405, %v4405
  %v4518 = vmul.f32 %v4406, %v4406
  %v4519 = vmul.f32 %v4407, %v4407
  %v4520 = vmul.f32 %v4408, %v4408
  %v4521 = vmul.f32 %v4409, %v4409
  %v4522 = vsub.f32 %v4474, %v4506
  %v4523 = vsub.f32 %v4475, %v4507
  %v4524 = vsub.f32 %v4476, %v4508
  %v4525 = vsub.f32 %v4477, %v4509
  %v4526 = vsub.f32 %v4478, %v4510
  %v4527 = vsub.f32 %v4479, %v4511
  %v4528 = vsub.f32 %v4480, %v4512
  %v4529 = vsub.f32 %v4481, %v4513
  %v4530 = vsub.f32 %v4482, %v4514
  %v4531 = vsub.f32 %v4483, %v4515
  %v4532 = vsub.f32 %v4484, %v4516
  %v4533 = vsub.f32 %v4485, %v4517
  %v4534 = vsub.f32 %v4486, %v4518
  %v4535 = vsub.f32 %v4487, %v4519
  %v4536 = vsub.f32 %v4488, %v4520
  %v4537 = vsub.f32 %v4489, %v4521
  %v4538 = vadd.f32 %v4522, 1e-05
  %v4539 = vadd.f32 %v4523, 1e-05
  %v4540 = vadd.f32 %v4524, 1e-05
  %v4541 = vadd.f32 %v4525, 1e-05
  %v4542 = vadd.f32 %v4526, 1e-05
  %v4543 = vadd.f32 %v4527, 1e-05
  %v4544 = vadd.f32 %v4528, 1e-05
  %v4545 = vadd.f32 %v4529, 1e-05
  %v4546 = vadd.f32 %v4530, 1e-05
  %v4547 = vadd.f32 %v4531, 1e-05
  %v4548 = vadd.f32 %v4532, 1e-05
  %v4549 = vadd.f32 %v4533, 1e-05
  %v4550 = vadd.f32 %v4534, 1e-05
  %v4551 = vadd.f32 %v4535, 1e-05
  %v4552 = vadd.f32 %v4536, 1e-05
  %v4553 = vadd.f32 %v4537, 1e-05
  %v4554 = vrsqrt.pop %v4538
  %v4555 = vrsqrt.pop %v4539
  %v4556 = vrsqrt.pop %v4540
  %v4557 = vrsqrt.pop %v4541
  %v4558 = vrsqrt.pop %v4542
  %v4559 = vrsqrt.pop %v4543
  %v4560 = vrsqrt.pop %v4544
  %v4561 = vrsqrt.pop %v4545
  %v4562 = vrsqrt.pop %v4546
  %v4563 = vrsqrt.pop %v4547
  %v4564 = vrsqrt.pop %v4548
  %v4565 = vrsqrt.pop %v4549
  %v4566 = vrsqrt.pop %v4550
  %v4567 = vrsqrt.pop %v4551
  %v4568 = vrsqrt.pop %v4552
  %v4569 = vrsqrt.pop %v4553
  %v4570 = vmul.f32 %v4490, %v4554
  %v4571 = vmul.f32 %v4491, %v4555
  %v4572 = vmul.f32 %v4492, %v4556
  %v4573 = vmul.f32 %v4493, %v4557
  %v4574 = vmul.f32 %v4494, %v4558
  %v4575 = vmul.f32 %v4495, %v4559
  %v4576 = vmul.f32 %v4496, %v4560
  %v4577 = vmul.f32 %v4497, %v4561
  %v4578 = vmul.f32 %v4498, %v4562
  %v4579 = vmul.f32 %v4499, %v4563
  %v4580 = vmul.f32 %v4500, %v4564
  %v4581 = vmul.f32 %v4501, %v4565
  %v4582 = vmul.f32 %v4502, %v4566
  %v4583 = vmul.f32 %v4503, %v4567
  %v4584 = vmul.f32 %v4504, %v4568
  %v4585 = vmul.f32 %v4505, %v4569
  %s4586 = scalar_lea.vmem %s8, 1
  %v4587 = vld [vmem:[%s4586] sm:$0x1]
  %v4589 = vlaneseq
  %v4590 = vshrl.u32 %v4589, 7
  %v4591 = vsub.s32 0, %v4590
  %v4592 = vrot.slane %v4587, %v4591
  %v4594 = vmul.f32 %v4570, %v4592
  %v4595 = vmul.f32 %v4571, %v4592
  %v4596 = vmul.f32 %v4572, %v4592
  %v4597 = vmul.f32 %v4573, %v4592
  %v4598 = vmul.f32 %v4574, %v4592
  %v4599 = vmul.f32 %v4575, %v4592
  %v4600 = vmul.f32 %v4576, %v4592
  %v4601 = vmul.f32 %v4577, %v4592
  %v4602 = vmul.f32 %v4578, %v4592
  %v4603 = vmul.f32 %v4579, %v4592
  %v4604 = vmul.f32 %v4580, %v4592
  %v4605 = vmul.f32 %v4581, %v4592
  %v4606 = vmul.f32 %v4582, %v4592
  %v4607 = vmul.f32 %v4583, %v4592
  %v4608 = vmul.f32 %v4584, %v4592
  %v4609 = vmul.f32 %v4585, %v4592
  %s4610 = scalar_lea.vmem %s9, 1
  %v4611 = vld [vmem:[%s4610] sm:$0x1]
  %v4613 = vlaneseq
  %v4614 = vshrl.u32 %v4613, 7
  %v4615 = vsub.s32 0, %v4614
  %v4616 = vrot.slane %v4611, %v4615
  %v4618 = vadd.f32 %v4594, %v4616
  %v4619 = vadd.f32 %v4595, %v4616
  %v4620 = vadd.f32 %v4596, %v4616
  %v4621 = vadd.f32 %v4597, %v4616
  %v4622 = vadd.f32 %v4598, %v4616
  %v4623 = vadd.f32 %v4599, %v4616
  %v4624 = vadd.f32 %v4600, %v4616
  %v4625 = vadd.f32 %v4601, %v4616
  %v4626 = vadd.f32 %v4602, %v4616
  %v4627 = vadd.f32 %v4603, %v4616
  %v4628 = vadd.f32 %v4604, %v4616
  %v4629 = vadd.f32 %v4605, %v4616
  %v4630 = vadd.f32 %v4606, %v4616
  %v4631 = vadd.f32 %v4607, %v4616
  %v4632 = vadd.f32 %v4608, %v4616
  %v4633 = vadd.f32 %v4609, %v4616
  %v4634 = vpack.c.bf16 %v4619, %v4618
  %v4635 = vpack.c.bf16 %v4621, %v4620
  %v4636 = vpack.c.bf16 %v4623, %v4622
  %v4637 = vpack.c.bf16 %v4625, %v4624
  %v4638 = vpack.c.bf16 %v4627, %v4626
  %v4639 = vpack.c.bf16 %v4629, %v4628
  %v4640 = vpack.c.bf16 %v4631, %v4630
  %v4641 = vpack.c.bf16 %v4633, %v4632
  %s4642 = scalar_lea.vmem %s10, 16
  %v4643 = vld [vmem:[%s4642] sm:$0xf]
  %v4644 = vld [vmem:[%s4642 + $0x4] sm:$0xf]
  %v4645 = vld [vmem:[%s4642 + $0x8] sm:$0xf]
  %v4646 = vld [vmem:[%s4642 + $0xc] sm:$0xf]
  %s4647 = scalar_lea.vmem %s11, 1
  %v4648 = vld [vmem:[%s4647] sm:$0x1]
  %v4650 = vlaneseq
  %v4651 = vshrl.u32 %v4650, 7
  %v4652 = vsub.s32 0, %v4651
  %v4653 = vrot.slane %v4648, %v4652
  %v4659 = vunpack.c.l.b16 %v4643
  %v4660 = vunpack.c.l.b16 %v4644
  %v4661 = vunpack.c.l.b16 %v4645
  %v4662 = vunpack.c.l.b16 %v4646
  %v4663 = vpack.c.b16 %v4660, %v4659
  %v4664 = vpack.c.b16 %v4662, %v4661
  %v4668 = vsel %vm64, %v4634, 0
  %v4671 = vsel %vm64, %v4635, 0
  %v4674 = vsel %vm64, %v4636, 0
  %v4677 = vsel %vm64, %v4637, 0
  %v4680 = vsel %vm64, %v4638, 0
  %v4683 = vsel %vm64, %v4639, 0
  %v4686 = vsel %vm64, %v4640, 0
  %v4689 = vsel %vm64, %v4641, 0
  %4691 = vmatprep.subr.bf16.mxu0 0
  %4692 = vmatpush1.bf16.msra.mxu0 %v4663
  %4693 = vmatprep.subr.bf16.mxu0 0
  %4694 = vmatpush1.bf16.msra.mxu0 %v4664
  %4695 = vmatprep.subr.bf16.mxu0 0
  %4696 = vmatpush1.bf16.msra.mxu0 0
  %4697 = vmatprep.subr.bf16.mxu0 0
  %4698 = vmatpush1.bf16.msra.mxu0 0
  %4699 = vmatprep.subr.bf16.mxu0 0
  %4700 = vmatpush1.bf16.msra.mxu0 0
  %4701 = vmatprep.subr.bf16.mxu0 0
  %4702 = vmatpush1.bf16.msra.mxu0 0
  %4703 = vmatprep.subr.bf16.mxu0 0
  %4704 = vmatpush1.bf16.msra.mxu0 0
  %4705 = vmatprep.subr.bf16.mxu0 0
  %4706 = vmatpush1.bf16.msra.mxu0 0
  %4707 = vmatprep.subr.bf16.mxu0 0
  %4708 = vmatpush1.bf16.msra.mxu0 0
  %4709 = vmatprep.subr.bf16.mxu0 0
  %4710 = vmatpush1.bf16.msra.mxu0 0
  %4711 = vmatprep.subr.bf16.mxu0 0
  %4712 = vmatpush1.bf16.msra.mxu0 0
  %4713 = vmatprep.subr.bf16.mxu0 0
  %4714 = vmatpush1.bf16.msra.mxu0 0
  %4715 = vmatprep.subr.bf16.mxu0 0
  %4716 = vmatpush1.bf16.msra.mxu0 0
  %4717 = vmatprep.subr.bf16.mxu0 0
  %4718 = vmatpush1.bf16.msra.mxu0 0
  %4719 = vmatprep.subr.bf16.mxu0 0
  %4720 = vmatpush1.bf16.msra.mxu0 0
  %4721 = vmatprep.subr.bf16.mxu0 0
  %4722 = vmatpush1.bf16.msra.mxu0 0
  %4723 = vmatprep.mubr.bf16.mxu0 0
  %4724 = vmatmul.mubr.bf16.gmra.mrb[0].mxu0 %v4668
  %v4725 = vpop.f32.mrb[0].mxu0
  %v4726 = vadd.f32 %v4653, %v4725
  %v4727 = vpop.f32.mrb[0].mxu0
  %v4728 = vpop.f32.mrb[0].mxu0
  %v4729 = vadd.f32 %v4653, %v4728
  %v4730 = vpop.f32.mrb[0].mxu0
  %4731 = vmatprep.mubr.bf16.mxu0 0
  %4732 = vmatmul.mubr.bf16.gmra.mrb[0].mxu0 %v4671
  %v4733 = vpop.f32.mrb[0].mxu0
  %v4734 = vadd.f32 %v4653, %v4733
  %v4735 = vpop.f32.mrb[0].mxu0
  %v4736 = vpop.f32.mrb[0].mxu0
  %v4737 = vadd.f32 %v4653, %v4736
  %v4738 = vpop.f32.mrb[0].mxu0
  %4739 = vmatprep.mubr.bf16.mxu0 0
  %4740 = vmatmul.mubr.bf16.gmra.mrb[0].mxu0 %v4674
  %v4741 = vpop.f32.mrb[0].mxu0
  %v4742 = vadd.f32 %v4653, %v4741
  %v4743 = vpop.f32.mrb[0].mxu0
  %v4744 = vpop.f32.mrb[0].mxu0
  %v4745 = vadd.f32 %v4653, %v4744
  %v4746 = vpop.f32.mrb[0].mxu0
  %4747 = vmatprep.mubr.bf16.mxu0 0
  %4748 = vmatmul.mubr.bf16.gmra.mrb[0].mxu0 %v4677
  %v4749 = vpop.f32.mrb[0].mxu0
  %v4750 = vadd.f32 %v4653, %v4749
  %v4751 = vpop.f32.mrb[0].mxu0
  %v4752 = vpop.f32.mrb[0].mxu0
  %v4753 = vadd.f32 %v4653, %v4752
  %v4754 = vpop.f32.mrb[0].mxu0
  %4755 = vmatprep.mubr.bf16.mxu0 0
  %4756 = vmatmul.mubr.bf16.gmra.mrb[0].mxu0 %v4680
  %v4757 = vpop.f32.mrb[0].mxu0
  %v4758 = vadd.f32 %v4653, %v4757
  %v4759 = vpop.f32.mrb[0].mxu0
  %v4760 = vpop.f32.mrb[0].mxu0
  %v4761 = vadd.f32 %v4653, %v4760
  %v4762 = vpop.f32.mrb[0].mxu0
  %4763 = vmatprep.mubr.bf16.mxu0 0
  %4764 = vmatmul.mubr.bf16.gmra.mrb[0].mxu0 %v4683
  %v4765 = vpop.f32.mrb[0].mxu0
  %v4766 = vadd.f32 %v4653, %v4765
  %v4767 = vpop.f32.mrb[0].mxu0
  %v4768 = vpop.f32.mrb[0].mxu0
  %v4769 = vadd.f32 %v4653, %v4768
  %v4770 = vpop.f32.mrb[0].mxu0
  %4771 = vmatprep.mubr.bf16.mxu0 0
  %4772 = vmatmul.mubr.bf16.gmra.mrb[0].mxu0 %v4686
  %v4773 = vpop.f32.mrb[0].mxu0
  %v4774 = vadd.f32 %v4653, %v4773
  %v4775 = vpop.f32.mrb[0].mxu0
  %v4776 = vpop.f32.mrb[0].mxu0
  %v4777 = vadd.f32 %v4653, %v4776
  %v4778 = vpop.f32.mrb[0].mxu0
  %4779 = vmatprep.mubr.bf16.mxu0 0
  %4780 = vmatmul.mubr.bf16.gmra.mrb[0].mxu0 %v4689
  %v4781 = vpop.f32.mrb[0].mxu0
  %v4782 = vadd.f32 %v4653, %v4781
  %v4783 = vpop.f32.mrb[0].mxu0
  %v4784 = vpop.f32.mrb[0].mxu0
  %v4785 = vadd.f32 %v4653, %v4784
  %v4786 = vpop.f32.mrb[0].mxu0
  %4787 = vdwg.mxu0
  %v4788 = vmul.f32 %v4726, %v4726
  %v4789 = vmul.f32 %v4729, %v4729
  %v4790 = vmul.f32 %v4734, %v4734
  %v4791 = vmul.f32 %v4737, %v4737
  %v4792 = vmul.f32 %v4742, %v4742
  %v4793 = vmul.f32 %v4745, %v4745
  %v4794 = vmul.f32 %v4750, %v4750
  %v4795 = vmul.f32 %v4753, %v4753
  %v4796 = vmul.f32 %v4758, %v4758
  %v4797 = vmul.f32 %v4761, %v4761
  %v4798 = vmul.f32 %v4766, %v4766
  %v4799 = vmul.f32 %v4769, %v4769
  %v4800 = vmul.f32 %v4774, %v4774
  %v4801 = vmul.f32 %v4777, %v4777
  %v4802 = vmul.f32 %v4782, %v4782
  %v4803 = vmul.f32 %v4785, %v4785
  %v4804 = vmul.f32 %v4726, %v4788
  %v4805 = vmul.f32 %v4729, %v4789
  %v4806 = vmul.f32 %v4734, %v4790
  %v4807 = vmul.f32 %v4737, %v4791
  %v4808 = vmul.f32 %v4742, %v4792
  %v4809 = vmul.f32 %v4745, %v4793
  %v4810 = vmul.f32 %v4750, %v4794
  %v4811 = vmul.f32 %v4753, %v4795
  %v4812 = vmul.f32 %v4758, %v4796
  %v4813 = vmul.f32 %v4761, %v4797
  %v4814 = vmul.f32 %v4766, %v4798
  %v4815 = vmul.f32 %v4769, %v4799
  %v4816 = vmul.f32 %v4774, %v4800
  %v4817 = vmul.f32 %v4777, %v4801
  %v4818 = vmul.f32 %v4782, %v4802
  %v4819 = vmul.f32 %v4785, %v4803
  %v4820 = vmul.f32 %v4804, 0.044715
  %v4821 = vmul.f32 %v4805, 0.044715
  %v4822 = vmul.f32 %v4806, 0.044715
  %v4823 = vmul.f32 %v4807, 0.044715
  %v4824 = vmul.f32 %v4808, 0.044715
  %v4825 = vmul.f32 %v4809, 0.044715
  %v4826 = vmul.f32 %v4810, 0.044715
  %v4827 = vmul.f32 %v4811, 0.044715
  %v4828 = vmul.f32 %v4812, 0.044715
  %v4829 = vmul.f32 %v4813, 0.044715
  %v4830 = vmul.f32 %v4814, 0.044715
  %v4831 = vmul.f32 %v4815, 0.044715
  %v4832 = vmul.f32 %v4816, 0.044715
  %v4833 = vmul.f32 %v4817, 0.044715
  %v4834 = vmul.f32 %v4818, 0.044715
  %v4835 = vmul.f32 %v4819, 0.044715
  %v4836 = vadd.f32 %v4726, %v4820
  %v4837 = vadd.f32 %v4729, %v4821
  %v4838 = vadd.f32 %v4734, %v4822
  %v4839 = vadd.f32 %v4737, %v4823
  %v4840 = vadd.f32 %v4742, %v4824
  %v4841 = vadd.f32 %v4745, %v4825
  %v4842 = vadd.f32 %v4750, %v4826
  %v4843 = vadd.f32 %v4753, %v4827
  %v4844 = vadd.f32 %v4758, %v4828
  %v4845 = vadd.f32 %v4761, %v4829
  %v4846 = vadd.f32 %v4766, %v4830
  %v4847 = vadd.f32 %v4769, %v4831
  %v4848 = vadd.f32 %v4774, %v4832
  %v4849 = vadd.f32 %v4777, %v4833
  %v4850 = vadd.f32 %v4782, %v4834
  %v4851 = vadd.f32 %v4785, %v4835
  %v4852 = vmul.f32 %v4836, 0.7978846
  %v4853 = vmul.f32 %v4837, 0.7978846
  %v4854 = vmul.f32 %v4838, 0.7978846
  %v4855 = vmul.f32 %v4839, 0.7978846
  %v4856 = vmul.f32 %v4840, 0.7978846
  %v4857 = vmul.f32 %v4841, 0.7978846
  %v4858 = vmul.f32 %v4842, 0.7978846
  %v4859 = vmul.f32 %v4843, 0.7978846
  %v4860 = vmul.f32 %v4844, 0.7978846
  %v4861 = vmul.f32 %v4845, 0.7978846
  %v4862 = vmul.f32 %v4846, 0.7978846
  %v4863 = vmul.f32 %v4847, 0.7978846
  %v4864 = vmul.f32 %v4848, 0.7978846
  %v4865 = vmul.f32 %v4849, 0.7978846
  %v4866 = vmul.f32 %v4850, 0.7978846
  %v4867 = vmul.f32 %v4851, 0.7978846
  %v4868 = vtanh.pop %v4852
  %v4869 = vtanh.pop %v4853
  %v4870 = vtanh.pop %v4854
  %v4871 = vtanh.pop %v4855
  %v4872 = vtanh.pop %v4856
  %v4873 = vtanh.pop %v4857
  %v4874 = vtanh.pop %v4858
  %v4875 = vtanh.pop %v4859
  %v4876 = vtanh.pop %v4860
  %v4877 = vtanh.pop %v4861
  %v4878 = vtanh.pop %v4862
  %v4879 = vtanh.pop %v4863
  %v4880 = vtanh.pop %v4864
  %v4881 = vtanh.pop %v4865
  %v4882 = vtanh.pop %v4866
  %v4883 = vtanh.pop %v4867
  %v4884 = vadd.f32 %v4868, 1.0
  %v4885 = vadd.f32 %v4869, 1.0
  %v4886 = vadd.f32 %v4870, 1.0
  %v4887 = vadd.f32 %v4871, 1.0
  %v4888 = vadd.f32 %v4872, 1.0
  %v4889 = vadd.f32 %v4873, 1.0
  %v4890 = vadd.f32 %v4874, 1.0
  %v4891 = vadd.f32 %v4875, 1.0
  %v4892 = vadd.f32 %v4876, 1.0
  %v4893 = vadd.f32 %v4877, 1.0
  %v4894 = vadd.f32 %v4878, 1.0
  %v4895 = vadd.f32 %v4879, 1.0
  %v4896 = vadd.f32 %v4880, 1.0
  %v4897 = vadd.f32 %v4881, 1.0
  %v4898 = vadd.f32 %v4882, 1.0
  %v4899 = vadd.f32 %v4883, 1.0
  %v4900 = vmul.f32 %v4884, 0.5
  %v4901 = vmul.f32 %v4885, 0.5
  %v4902 = vmul.f32 %v4886, 0.5
  %v4903 = vmul.f32 %v4887, 0.5
  %v4904 = vmul.f32 %v4888, 0.5
  %v4905 = vmul.f32 %v4889, 0.5
  %v4906 = vmul.f32 %v4890, 0.5
  %v4907 = vmul.f32 %v4891, 0.5
  %v4908 = vmul.f32 %v4892, 0.5
  %v4909 = vmul.f32 %v4893, 0.5
  %v4910 = vmul.f32 %v4894, 0.5
  %v4911 = vmul.f32 %v4895, 0.5
  %v4912 = vmul.f32 %v4896, 0.5
  %v4913 = vmul.f32 %v4897, 0.5
  %v4914 = vmul.f32 %v4898, 0.5
  %v4915 = vmul.f32 %v4899, 0.5
  %v4916 = vmul.f32 %v4726, %v4900
  %v4917 = vmul.f32 %v4729, %v4901
  %v4918 = vmul.f32 %v4734, %v4902
  %v4919 = vmul.f32 %v4737, %v4903
  %v4920 = vmul.f32 %v4742, %v4904
  %v4921 = vmul.f32 %v4745, %v4905
  %v4922 = vmul.f32 %v4750, %v4906
  %v4923 = vmul.f32 %v4753, %v4907
  %v4924 = vmul.f32 %v4758, %v4908
  %v4925 = vmul.f32 %v4761, %v4909
  %v4926 = vmul.f32 %v4766, %v4910
  %v4927 = vmul.f32 %v4769, %v4911
  %v4928 = vmul.f32 %v4774, %v4912
  %v4929 = vmul.f32 %v4777, %v4913
  %v4930 = vmul.f32 %v4782, %v4914
  %v4931 = vmul.f32 %v4785, %v4915
  %v4932 = vpack.c.bf16 %v4917, %v4916
  %v4933 = vpack.c.bf16 %v4919, %v4918
  %v4934 = vpack.c.bf16 %v4921, %v4920
  %v4935 = vpack.c.bf16 %v4923, %v4922
  %v4936 = vpack.c.bf16 %v4925, %v4924
  %v4937 = vpack.c.bf16 %v4927, %v4926
  %v4938 = vpack.c.bf16 %v4929, %v4928
  %v4939 = vpack.c.bf16 %v4931, %v4930
  %s4940 = scalar_lea.vmem %s12, 64
  %v4941 = vld [vmem:[%s4940] sm:$0xf]
  %v4942 = vld [vmem:[%s4940 + $0x4] sm:$0xf]
  %v4943 = vld [vmem:[%s4940 + $0x8] sm:$0xf]
  %v4944 = vld [vmem:[%s4940 + $0xc] sm:$0xf]
  %v4945 = vld [vmem:[%s4940 + $0x10] sm:$0xf]
  %v4946 = vld [vmem:[%s4940 + $0x14] sm:$0xf]
  %v4947 = vld [vmem:[%s4940 + $0x18] sm:$0xf]
  %v4948 = vld [vmem:[%s4940 + $0x1c] sm:$0xf]
  %v4949 = vld [vmem:[%s4940 + $0x20] sm:$0xf]
  %v4950 = vld [vmem:[%s4940 + $0x24] sm:$0xf]
  %v4951 = vld [vmem:[%s4940 + $0x28] sm:$0xf]
  %v4952 = vld [vmem:[%s4940 + $0x2c] sm:$0xf]
  %v4953 = vld [vmem:[%s4940 + $0x30] sm:$0xf]
  %v4954 = vld [vmem:[%s4940 + $0x34] sm:$0xf]
  %v4955 = vld [vmem:[%s4940 + $0x38] sm:$0xf]
  %v4956 = vld [vmem:[%s4940 + $0x3c] sm:$0xf]
  %s4957 = scalar_lea.vmem %s13, 1
  %v4958 = vld [vmem:[%s4957] sm:$0x1]
  %v4960 = vlaneseq
  %v4961 = vshrl.u32 %v4960, 7
  %v4962 = vsub.s32 0, %v4961
  %v4963 = vrot.slane %v4958, %v4962
  %v4981 = vunpack.c.l.b16 %v4941
  %v4982 = vunpack.c.l.b16 %v4942
  %v4983 = vunpack.c.l.b16 %v4943
  %v4984 = vunpack.c.l.b16 %v4944
  %v4985 = vunpack.c.l.b16 %v4945
  %v4986 = vunpack.c.l.b16 %v4946
  %v4987 = vunpack.c.l.b16 %v4947
  %v4988 = vunpack.c.l.b16 %v4948
  %v4989 = vunpack.c.l.b16 %v4949
  %v4990 = vunpack.c.l.b16 %v4950
  %v4991 = vunpack.c.l.b16 %v4951
  %v4992 = vunpack.c.l.b16 %v4952
  %v4993 = vunpack.c.l.b16 %v4953
  %v4994 = vunpack.c.l.b16 %v4954
  %v4995 = vunpack.c.l.b16 %v4955
  %v4996 = vunpack.c.l.b16 %v4956
  %v4997 = vpack.c.b16 %v4982, %v4981
  %v4998 = vpack.c.b16 %v4984, %v4983
  %v4999 = vpack.c.b16 %v4986, %v4985
  %v5000 = vpack.c.b16 %v4988, %v4987
  %v5001 = vpack.c.b16 %v4990, %v4989
  %v5002 = vpack.c.b16 %v4992, %v4991
  %v5003 = vpack.c.b16 %v4994, %v4993
  %v5004 = vpack.c.b16 %v4996, %v4995
  %5013 = vmatprep.subr.bf16.mxu0 0
  %5014 = vmatpush1.bf16.msra.mxu0 %v4997
  %5015 = vmatprep.subr.bf16.mxu0 0
  %5016 = vmatpush1.bf16.msra.mxu0 %v4998
  %5017 = vmatprep.subr.bf16.mxu0 0
  %5018 = vmatpush1.bf16.msra.mxu0 %v4999
  %5019 = vmatprep.subr.bf16.mxu0 0
  %5020 = vmatpush1.bf16.msra.mxu0 %v5000
  %5021 = vmatprep.subr.bf16.mxu0 0
  %5022 = vmatpush1.bf16.msra.mxu0 %v5001
  %5023 = vmatprep.subr.bf16.mxu0 0
  %5024 = vmatpush1.bf16.msra.mxu0 %v5002
  %5025 = vmatprep.subr.bf16.mxu0 0
  %5026 = vmatpush1.bf16.msra.mxu0 %v5003
  %5027 = vmatprep.subr.bf16.mxu0 0
  %5028 = vmatpush1.bf16.msra.mxu0 %v5004
  %5029 = vmatprep.subr.bf16.mxu0 0
  %5030 = vmatpush1.bf16.msra.mxu0 0
  %5031 = vmatprep.subr.bf16.mxu0 0
  %5032 = vmatpush1.bf16.msra.mxu0 0
  %5033 = vmatprep.subr.bf16.mxu0 0
  %5034 = vmatpush1.bf16.msra.mxu0 0
  %5035 = vmatprep.subr.bf16.mxu0 0
  %5036 = vmatpush1.bf16.msra.mxu0 0
  %5037 = vmatprep.subr.bf16.mxu0 0
  %5038 = vmatpush1.bf16.msra.mxu0 0
  %5039 = vmatprep.subr.bf16.mxu0 0
  %5040 = vmatpush1.bf16.msra.mxu0 0
  %5041 = vmatprep.subr.bf16.mxu0 0
  %5042 = vmatpush1.bf16.msra.mxu0 0
  %5043 = vmatprep.subr.bf16.mxu0 0
  %5044 = vmatpush1.bf16.msra.mxu0 0
  %5045 = vmatprep.mubr.bf16.mxu0 0
  %5046 = vmatmul.mubr.bf16.gmra.mrb[0].mxu0 %v4932
  %v5047 = vpop.f32.mrb[0].mxu0
  %v5048 = vadd.f32 %v4963, %v5047
  %v5049 = vpop.f32.mrb[0].mxu0
  %v5050 = vpop.f32.mrb[0].mxu0
  %v5051 = vadd.f32 %v4963, %v5050
  %v5052 = vpop.f32.mrb[0].mxu0
  %5053 = vmatprep.mubr.bf16.mxu0 0
  %5054 = vmatmul.mubr.bf16.gmra.mrb[0].mxu0 %v4933
  %v5055 = vpop.f32.mrb[0].mxu0
  %v5056 = vadd.f32 %v4963, %v5055
  %v5057 = vpop.f32.mrb[0].mxu0
  %v5058 = vpop.f32.mrb[0].mxu0
  %v5059 = vadd.f32 %v4963, %v5058
  %v5060 = vpop.f32.mrb[0].mxu0
  %5061 = vmatprep.mubr.bf16.mxu0 0
  %5062 = vmatmul.mubr.bf16.gmra.mrb[0].mxu0 %v4934
  %v5063 = vpop.f32.mrb[0].mxu0
  %v5064 = vadd.f32 %v4963, %v5063
  %v5065 = vpop.f32.mrb[0].mxu0
  %v5066 = vpop.f32.mrb[0].mxu0
  %v5067 = vadd.f32 %v4963, %v5066
  %v5068 = vpop.f32.mrb[0].mxu0
  %5069 = vmatprep.mubr.bf16.mxu0 0
  %5070 = vmatmul.mubr.bf16.gmra.mrb[0].mxu0 %v4935
  %v5071 = vpop.f32.mrb[0].mxu0
  %v5072 = vadd.f32 %v4963, %v5071
  %v5073 = vpop.f32.mrb[0].mxu0
  %v5074 = vpop.f32.mrb[0].mxu0
  %v5075 = vadd.f32 %v4963, %v5074
  %v5076 = vpop.f32.mrb[0].mxu0
  %5077 = vmatprep.mubr.bf16.mxu0 0
  %5078 = vmatmul.mubr.bf16.gmra.mrb[0].mxu0 %v4936
  %v5079 = vpop.f32.mrb[0].mxu0
  %v5080 = vadd.f32 %v4963, %v5079
  %v5081 = vpop.f32.mrb[0].mxu0
  %v5082 = vpop.f32.mrb[0].mxu0
  %v5083 = vadd.f32 %v4963, %v5082
  %v5084 = vpop.f32.mrb[0].mxu0
  %5085 = vmatprep.mubr.bf16.mxu0 0
  %5086 = vmatmul.mubr.bf16.gmra.mrb[0].mxu0 %v4937
  %v5087 = vpop.f32.mrb[0].mxu0
  %v5088 = vadd.f32 %v4963, %v5087
  %v5089 = vpop.f32.mrb[0].mxu0
  %v5090 = vpop.f32.mrb[0].mxu0
  %v5091 = vadd.f32 %v4963, %v5090
  %v5092 = vpop.f32.mrb[0].mxu0
  %5093 = vmatprep.mubr.bf16.mxu0 0
  %5094 = vmatmul.mubr.bf16.gmra.mrb[0].mxu0 %v4938
  %v5095 = vpop.f32.mrb[0].mxu0
  %v5096 = vadd.f32 %v4963, %v5095
  %v5097 = vpop.f32.mrb[0].mxu0
  %v5098 = vpop.f32.mrb[0].mxu0
  %v5099 = vadd.f32 %v4963, %v5098
  %v5100 = vpop.f32.mrb[0].mxu0
  %5101 = vmatprep.mubr.bf16.mxu0 0
  %5102 = vmatmul.mubr.bf16.gmra.mrb[0].mxu0 %v4939
  %v5103 = vpop.f32.mrb[0].mxu0
  %v5104 = vadd.f32 %v4963, %v5103
  %v5105 = vpop.f32.mrb[0].mxu0
  %v5106 = vpop.f32.mrb[0].mxu0
  %v5107 = vadd.f32 %v4963, %v5106
  %v5108 = vpop.f32.mrb[0].mxu0
  %5109 = vdwg.mxu0
  %v5110 = vadd.f32 %v4330, %v5048
  %v5111 = vadd.f32 %v4331, %v5051
  %v5112 = vadd.f32 %v4332, %v5056
  %v5113 = vadd.f32 %v4333, %v5059
  %v5114 = vadd.f32 %v4334, %v5064
  %v5115 = vadd.f32 %v4335, %v5067
  %v5116 = vadd.f32 %v4336, %v5072
  %v5117 = vadd.f32 %v4337, %v5075
  %v5118 = vadd.f32 %v4338, %v5080
  %v5119 = vadd.f32 %v4339, %v5083
  %v5120 = vadd.f32 %v4340, %v5088
  %v5121 = vadd.f32 %v4341, %v5091
  %v5122 = vadd.f32 %v4342, %v5096
  %v5123 = vadd.f32 %v4343, %v5099
  %v5124 = vadd.f32 %v4344, %v5104
  %v5125 = vadd.f32 %v4345, %v5107
  %5126 = vst.msk [vmem:[%s14] sm:$0xff] %vm64, %v5110
  %5127 = vst.msk [vmem:[%s14 + $0x8] sm:$0xff] %vm64, %v5111
  %5128 = vst.msk [vmem:[%s14 + $0x10] sm:$0xff] %vm64, %v5112
  %5129 = vst.msk [vmem:[%s14 + $0x18] sm:$0xff] %vm64, %v5113
  %5130 = vst.msk [vmem:[%s14 + $0x20] sm:$0xff] %vm64, %v5114
  %5131 = vst.msk [vmem:[%s14 + $0x28] sm:$0xff] %vm64, %v5115
  %5132 = vst.msk [vmem:[%s14 + $0x30] sm:$0xff] %vm64, %v5116
  %5133 = vst.msk [vmem:[%s14 + $0x38] sm:$0xff] %vm64, %v5117
  %5134 = vst.msk [vmem:[%s14 + $0x40] sm:$0xff] %vm64, %v5118
  %5135 = vst.msk [vmem:[%s14 + $0x48] sm:$0xff] %vm64, %v5119
  %5136 = vst.msk [vmem:[%s14 + $0x50] sm:$0xff] %vm64, %v5120
  %5137 = vst.msk [vmem:[%s14 + $0x58] sm:$0xff] %vm64, %v5121
  %5138 = vst.msk [vmem:[%s14 + $0x60] sm:$0xff] %vm64, %v5122
  %5139 = vst.msk [vmem:[%s14 + $0x68] sm:$0xff] %vm64, %v5123
  %5140 = vst.msk [vmem:[%s14 + $0x70] sm:$0xff] %vm64, %v5124
  %5141 = vst.msk [vmem:[%s14 + $0x78] sm:$0xff] %vm64, %v5125
  // Predicated region
  $region58: #{basic_layer_forward.1} parent=0 // pred_check
    _
  $region59: #{basic_layer_forward.1} parent=0 // pred_check_branch
    %5143 = sbr.rel (0) target = $region61
  $region60: #{basic_layer_forward.1} parent=0 // pred_region
    _
  $region61: #{basic_layer_forward.1} parent=0 // pred_fallthru
    _
  // Predicated region
  $region62: #{basic_layer_forward.1} parent=0 // pred_check
    _
  $region63: #{basic_layer_forward.1} parent=0 // pred_check_branch
    %5145 = sbr.rel (0) target = $region65
  $region64: #{basic_layer_forward.1} parent=0 // pred_region
    _
  $region65: #{basic_layer_forward.1} parent=0 // pred_fallthru
    _

</llo_original>
